<compile_context>
chip_gen: v7x
topology: tpu7x:2x2x1
jax: 0.10.0
libtpu: 0.0.40
codegen_flags: <defaults>
</compile_context>

<pallas_src>
import functools

import jax
import jax.numpy as jnp
from jax.experimental import pallas as pl
from jax.experimental.pallas import tpu as pltpu


# --------------------------------------------------------------------------- #
# helpers
# --------------------------------------------------------------------------- #

def _vmem_limit_bytes():
    # 32 MiB was too conservative on 128 MiB parts; v7x needs headroom < 64 MiB.
    try:
        cap = int(pltpu.get_tpu_info().vmem_capacity_bytes)
    except Exception:
        cap = 64 * 1024 * 1024
    return min((cap * 3) // 4, 100 * 1024 * 1024)


def _const_index_map(rank):
    return lambda b: (0,) * rank


def _layernorm(x, g, b, eps=1e-5):
    mu = jnp.mean(x, axis=-1, keepdims=True)
    var = jnp.mean(jnp.square(x - mu), axis=-1, keepdims=True)
    return (x - mu) * jax.lax.rsqrt(var + eps) * g + b


def _proj(x, w):
    """x: (N, K) f32, w: (K, M) bf16/f32 -> (N, M) f32.

    For tiny contraction dims (dim=2 context / queries_dim=2) use VPU
    broadcast MACs instead of a K=2 MXU matmul (>99% of the array idle);
    otherwise a bf16 MXU matmul with f32 accumulation.
    """
    K = w.shape[0]
    if K <= 4:
        wf = w.astype(jnp.float32)
        acc = x[:, 0:1] * wf[0:1, :]
        for k in range(1, K):
            acc = acc + x[:, k:k + 1] * wf[k:k + 1, :]
        return acc
    return jnp.dot(x.astype(jnp.bfloat16), w.astype(jnp.bfloat16),
                   preferred_element_type=jnp.float32)


def _attention(xq_n, xq_raw, xc_n, wq_of, wk_of, wv_of, wo_of, bo,
               heads, dim_head, residual):
    """Multi-head attention on already-normalized inputs.

    xq_n : (Nq, Dq) f32 normalized query input
    xq_raw: (Nq, Dq) f32 un-normalized query input for the residual (or None)
    xc_n : (Nk, Dc) f32 normalized context
    w*_of: callables h -> per-head weight tile (leading-axis head indexing;
           no lane-axis slicing and no lane concat)
    bo   : (1, Dq) output-projection bias
    """
    # TODO(synk): for production flat_dim / num_latents, tile the Nk axis with
    # an online-softmax (flash) accumulator on a trailing "arbitrary" grid axis
    # instead of materializing full-Nk scores in VMEM (needed for v7x 64 MiB).
    scale = dim_head ** -0.5
    acc = None
    for h in range(heads):                                  # static unroll
        qh = (_proj(xq_n, wq_of(h)) * scale).astype(jnp.bfloat16)   # (Nq, dh)
        kh = _proj(xc_n, wk_of(h)).astype(jnp.bfloat16)             # (Nk, dh)
        vh = _proj(xc_n, wv_of(h)).astype(jnp.bfloat16)             # (Nk, dh)
        s = jax.lax.dot_general(qh, kh, (((1,), (1,)), ((), ())),
                                preferred_element_type=jnp.float32)  # (Nq, Nk)
        s = s - jnp.max(s, axis=-1, keepdims=True)
        p = jnp.exp(s)
        p = p * pl.reciprocal(jnp.sum(p, axis=-1, keepdims=True), approx=True)
        oh = jnp.dot(p.astype(jnp.bfloat16), vh,
                     preferred_element_type=jnp.float32)             # (Nq, dh)
        yh = jnp.dot(oh.astype(jnp.bfloat16), wo_of(h),
                     preferred_element_type=jnp.float32)             # (Nq, Dq)
        acc = yh if acc is None else acc + yh
    y = acc + bo
    if residual:
        y = y + xq_raw
    return y


def _feedforward(x, ln_g, ln_b, w1, b1, w2, b2):
    """PreNorm + Linear(D -> 2h) + GEGLU + Linear(h -> D) + residual."""
    xn = _layernorm(x, ln_g, ln_b).astype(jnp.bfloat16)
    h = jnp.dot(xn, w1, preferred_element_type=jnp.float32) + b1     # (N, 2h)
    hidden = w2.shape[0]
    a = h[:, :hidden]                      # 128-aligned lane slices
    g = h[:, hidden:]
    # TODO(synk): torch F.gelu defaults to exact erf gelu; tanh approximation
    # used here for a Mosaic-friendly EUP lowering (~1e-3 difference).
    hg = (a * jax.nn.gelu(g, approximate=True)).astype(jnp.bfloat16)
    y = jnp.dot(hg, w2, preferred_element_type=jnp.float32) + b2
    return y + x


# --------------------------------------------------------------------------- #
# fused whole-model kernel (one grid step per batch element)
# --------------------------------------------------------------------------- #

def _perceiver_kernel(*refs, cross_heads, cross_dh, latent_heads, latent_dh,
                      depth):
    (data_ref, lat_ref,
     ca_lnq_g, ca_lnq_b, ca_lnc_g, ca_lnc_b, ca_wq, ca_wk, ca_wv, ca_wo, ca_bo,
     cf_ln_g, cf_ln_b, cf_w1, cf_b1, cf_w2, cf_b2,
     sa_ln_g, sa_ln_b, sa_wq, sa_wk, sa_wv, sa_wo, sa_bo,
     sf_ln_g, sf_ln_b, sf_w1, sf_b1, sf_w2, sf_b2,
     de_lnq_g, de_lnq_b, de_lnc_g, de_lnc_b, de_wq, de_wk, de_wv, de_wo, de_bo,
     tl_w, tl_b, o_ref) = refs

    data = data_ref[0].astype(jnp.float32)        # (S, d_in)   this batch elt
    x = lat_ref[...].astype(jnp.float32)          # (Nl, Dl)    shared latents

    # ---- encoder cross attention (PreNorm on latents and context) + residual
    xn = _layernorm(x, ca_lnq_g[...], ca_lnq_b[...])
    cn = _layernorm(data, ca_lnc_g[...], ca_lnc_b[...])
    x = _attention(xn, x, cn,
                   lambda h: ca_wq[h], lambda h: ca_wk[h],
                   lambda h: ca_wv[h], lambda h: ca_wo[h], ca_bo[...],
                   cross_heads, cross_dh, residual=True)
    x = _feedforward(x, cf_ln_g[...], cf_ln_b[...],
                     cf_w1[...], cf_b1[...], cf_w2[...], cf_b2[...])

    # ---- latent self-attention stack (fast path: one LN feeds Q, K and V) ---
    for d in range(depth):                        # static unroll over layers
        xn = _layernorm(x, sa_ln_g[d], sa_ln_b[d])
        x = _attention(xn, x, xn,
                       (lambda h, d=d: sa_wq[d, h]),
                       (lambda h, d=d: sa_wk[d, h]),
                       (lambda h, d=d: sa_wv[d, h]),
                       (lambda h, d=d: sa_wo[d, h]),
                       sa_bo[d], latent_heads, latent_dh, residual=True)
        x = _feedforward(x, sf_ln_g[d], sf_ln_b[d],
                         sf_w1[d], sf_b1[d], sf_w2[d], sf_b2[d])

    # ---- decoder cross attention (queries = input tokens; no residual) ------
    qn = _layernorm(data, de_lnq_g[...], de_lnq_b[...])
    cn = _layernorm(x, de_lnc_g[...], de_lnc_b[...])
    lat = _attention(qn, None, cn,
                     lambda h: de_wq[h], lambda h: de_wk[h],
                     lambda h: de_wv[h], lambda h: de_wo[h], de_bo[...],
                     cross_heads, cross_dh, residual=False)     # (S, q_dim)

    # ---- to_logits (logits_dim = 1): VPU dot over the tiny query dim --------
    logits = jnp.sum(lat * tl_w[...], axis=-1, keepdims=True) + tl_b[...]
    o_ref[0] = logits.astype(o_ref.dtype)                       # (S, 1)


def _fused_perceiver(params, data, cfg):
    B, S, Din = data.shape
    depth = cfg["depth"]

    ca, cf = params["cross_attn"], params["cross_ff"]
    lay, de, tl = params["layers"], params["dec"], params["to_logits"]

    inputs = [
        data,
        params["latents"],
        ca["lnq_g"], ca["lnq_b"], ca["lnc_g"], ca["lnc_b"],
        ca["wq"], ca["wk"], ca["wv"], ca["wo"], ca["bo"],
        cf["ln_g"], cf["ln_b"], cf["w1"], cf["b1"], cf["w2"], cf["b2"],
        lay["ln_g"], lay["ln_b"], lay["wq"], lay["wk"], lay["wv"],
        lay["wo"], lay["bo"],
        lay["ff_ln_g"], lay["ff_ln_b"], lay["ff_w1"], lay["ff_b1"],
        lay["ff_w2"], lay["ff_b2"],
        de["lnq_g"], de["lnq_b"], de["lnc_g"], de["lnc_b"],
        de["wq"], de["wk"], de["wv"], de["wo"], de["bo"],
        tl["w"], tl["b"],
    ]

    # TODO(synk): at production sizes, single-buffer the constant weight blocks
    # (pipeline_mode=pl.Buffered(1)) to halve weight-resident VMEM on v7x.
    in_specs = [pl.BlockSpec((1, S, Din), lambda b: (b, 0, 0))]
    for a in inputs[1:]:
        in_specs.append(pl.BlockSpec(a.shape, _const_index_map(a.ndim)))

    kernel = functools.partial(
        _perceiver_kernel,
        cross_heads=cfg["cross_heads"], cross_dh=cfg["cross_dim_head"],
        latent_heads=cfg["latent_heads"], latent_dh=cfg["latent_dim_head"],
        depth=depth)

    return pl.pallas_call(
        kernel,
        out_shape=jax.ShapeDtypeStruct((B, S, 1), jnp.float32),
        grid=(B,),
        in_specs=in_specs,
        out_specs=pl.BlockSpec((1, S, 1), lambda b: (b, 0, 0)),
        compiler_params=pltpu.CompilerParams(
            dimension_semantics=("parallel",),
            vmem_limit_bytes=_vmem_limit_bytes()),
    )(*inputs)


# --------------------------------------------------------------------------- #
# model forward (matches PerceiverOptimizer.forward)
# --------------------------------------------------------------------------- #

def perceiver_optimizer_forward(params, weights_flat, t_start, cfg, t_end=None):
    B, S = weights_flat.shape
    if t_end is None:
        time_tokens = jnp.broadcast_to(t_start[:, None, :],
                                       (B, S, t_start.shape[-1]))
    else:
        tt = jnp.stack([t_start, t_end], axis=-1)
        time_tokens = jnp.broadcast_to(tt[:, None, :], (B, S, tt.shape[-1]))
    # input token assembly stays in plain XLA (trivial data prep)
    input_seq = jnp.concatenate([weights_flat[..., None], time_tokens], axis=-1)
    out = _fused_perceiver(params, input_seq, cfg)        # (B, S, 1)
    return out[..., 0]


# --------------------------------------------------------------------------- #
# parameter init
# --------------------------------------------------------------------------- #

def init_params(key, cfg, ff_mult=4):
    keys = iter(jax.random.split(key, 512))
    f32 = jnp.float32

    def dense(shape, scale=0.02, dtype=jnp.bfloat16):
        # matmul weights stored bf16 once at init (MXU-native); f32 accumulation
        return (jax.random.normal(next(keys), shape, f32) * scale).astype(dtype)

    def ln_pair(d):
        return jnp.ones((1, d), f32), jnp.zeros((1, d), f32)

    def attn_params(q_dim, ctx_dim, heads, dh, with_ctx_ln=True):
        lnq_g, lnq_b = ln_pair(q_dim)
        p = dict(lnq_g=lnq_g, lnq_b=lnq_b,
                 wq=dense((heads, q_dim, dh)),
                 wk=dense((heads, ctx_dim, dh)),    # first half of torch to_kv
                 wv=dense((heads, ctx_dim, dh)),    # second half of torch to_kv
                 wo=dense((heads, dh, q_dim)),
                 bo=jnp.zeros((1, q_dim), f32))
        if with_ctx_ln:
            lnc_g, lnc_b = ln_pair(ctx_dim)
            p.update(lnc_g=lnc_g, lnc_b=lnc_b)
        return p

    def ff_params(d):
        h = d * ff_mult
        g, b = ln_pair(d)
        return dict(ln_g=g, ln_b=b,
                    w1=dense((d, 2 * h)), b1=jnp.zeros((1, 2 * h), f32),
                    w2=dense((h, d)), b2=jnp.zeros((1, d), f32))

    d_lat, d_in, d_q = cfg["latent_dim"], cfg["dim"], cfg["queries_dim"]

    layer_list = []
    for _ in range(cfg["depth"]):
        a = attn_params(d_lat, d_lat, cfg["latent_heads"],
                        cfg["latent_dim_head"], with_ctx_ln=False)
        f = ff_params(d_lat)
        layer_list.append(dict(
            ln_g=a["lnq_g"], ln_b=a["lnq_b"],
            wq=a["wq"], wk=a["wk"], wv=a["wv"], wo=a["wo"], bo=a["bo"],
            ff_ln_g=f["ln_g"], ff_ln_b=f["ln_b"],
            ff_w1=f["w1"], ff_b1=f["b1"], ff_w2=f["w2"], ff_b2=f["b2"]))
    layers = {k: jnp.stack([l[k] for l in layer_list], axis=0)
              for k in layer_list[0]}

    return dict(
        latents=jax.random.normal(next(keys), (cfg["num_latents"], d_lat), f32),
        cross_attn=attn_params(d_lat, d_in, cfg["cross_heads"],
                               cfg["cross_dim_head"]),
        cross_ff=ff_params(d_lat),
        layers=layers,
        dec=attn_params(d_q, d_lat, cfg["cross_heads"], cfg["cross_dim_head"]),
        to_logits=dict(w=dense((1, d_q), dtype=f32),    # Linear(q_dim -> 1), row form
                       b=jnp.zeros((1, 1), f32)),
    )


# --------------------------------------------------------------------------- #
# main
# --------------------------------------------------------------------------- #

CFG = dict(dim=2, queries_dim=2, num_latents=32, latent_dim=64,
           cross_heads=2, latent_heads=2, cross_dim_head=16,
           latent_dim_head=16, depth=2, logits_dim=1)

if __name__ == "__main__":
    key = jax.random.PRNGKey(0)
    pkey, wkey, tkey = jax.random.split(key, 3)

    params = init_params(pkey, CFG)

    B, flat_dim = 2, 8
    weights_flat = jax.random.normal(wkey, (B, flat_dim), jnp.float32)
    t_start = jax.random.uniform(tkey, (B, 1), jnp.float32)   # t_end=None (dim=2)

    fwd = jax.jit(lambda p, w, t: perceiver_optimizer_forward(p, w, t, CFG))
    out = jax.block_until_ready(fwd(params, weights_flat, t_start))

    assert out.shape == (B, flat_dim), out.shape
    assert jnp.all(jnp.isfinite(out))
    print("KERNEL_OK")
</pallas_src>

<mosaic_0001>
module attributes {stable_mosaic.version = 11 : i64} {
  func.func @_perceiver_kernel(%arg0: i32, %arg1: memref<1x8x2xf32, #tpu.memory_space<vmem>>, %arg2: memref<32x64xf32, #tpu.memory_space<vmem>>, %arg3: memref<1x64xf32, #tpu.memory_space<vmem>>, %arg4: memref<1x64xf32, #tpu.memory_space<vmem>>, %arg5: memref<1x2xf32, #tpu.memory_space<vmem>>, %arg6: memref<1x2xf32, #tpu.memory_space<vmem>>, %arg7: memref<2x64x16xbf16, #tpu.memory_space<vmem>>, %arg8: memref<2x2x16xbf16, #tpu.memory_space<vmem>>, %arg9: memref<2x2x16xbf16, #tpu.memory_space<vmem>>, %arg10: memref<2x16x64xbf16, #tpu.memory_space<vmem>>, %arg11: memref<1x64xf32, #tpu.memory_space<vmem>>, %arg12: memref<1x64xf32, #tpu.memory_space<vmem>>, %arg13: memref<1x64xf32, #tpu.memory_space<vmem>>, %arg14: memref<64x512xbf16, #tpu.memory_space<vmem>>, %arg15: memref<1x512xf32, #tpu.memory_space<vmem>>, %arg16: memref<256x64xbf16, #tpu.memory_space<vmem>>, %arg17: memref<1x64xf32, #tpu.memory_space<vmem>>, %arg18: memref<2x1x64xf32, #tpu.memory_space<vmem>>, %arg19: memref<2x1x64xf32, #tpu.memory_space<vmem>>, %arg20: memref<2x2x64x16xbf16, #tpu.memory_space<vmem>>, %arg21: memref<2x2x64x16xbf16, #tpu.memory_space<vmem>>, %arg22: memref<2x2x64x16xbf16, #tpu.memory_space<vmem>>, %arg23: memref<2x2x16x64xbf16, #tpu.memory_space<vmem>>, %arg24: memref<2x1x64xf32, #tpu.memory_space<vmem>>, %arg25: memref<2x1x64xf32, #tpu.memory_space<vmem>>, %arg26: memref<2x1x64xf32, #tpu.memory_space<vmem>>, %arg27: memref<2x64x512xbf16, #tpu.memory_space<vmem>>, %arg28: memref<2x1x512xf32, #tpu.memory_space<vmem>>, %arg29: memref<2x256x64xbf16, #tpu.memory_space<vmem>>, %arg30: memref<2x1x64xf32, #tpu.memory_space<vmem>>, %arg31: memref<1x2xf32, #tpu.memory_space<vmem>>, %arg32: memref<1x2xf32, #tpu.memory_space<vmem>>, %arg33: memref<1x64xf32, #tpu.memory_space<vmem>>, %arg34: memref<1x64xf32, #tpu.memory_space<vmem>>, %arg35: memref<2x2x16xbf16, #tpu.memory_space<vmem>>, %arg36: memref<2x64x16xbf16, #tpu.memory_space<vmem>>, %arg37: memref<2x64x16xbf16, #tpu.memory_space<vmem>>, %arg38: memref<2x16x2xbf16, #tpu.memory_space<vmem>>, %arg39: memref<1x2xf32, #tpu.memory_space<vmem>>, %arg40: memref<1x2xf32, #tpu.memory_space<vmem>>, %arg41: memref<1x1xf32, #tpu.memory_space<vmem>>, %arg42: memref<1x8x1xf32, #tpu.memory_space<vmem>>) attributes {dimension_semantics = [#tpu.dimension_semantics<parallel>], iteration_bounds = array<i64: 2>, scalar_prefetch = 0 : i64, scratch_operands = 0 : i64, tpu.core_type = #tpu.core_type<tc>, window_params = [{transform_indices = @transform_0, window_bounds = array<i64: 1, 8, 2>}, {pipeline_mode = #tpu.pipeline_mode<synchronous>, transform_indices = @transform_1, window_bounds = array<i64: 32, 64>}, {pipeline_mode = #tpu.pipeline_mode<synchronous>, transform_indices = @transform_2, window_bounds = array<i64: 1, 64>}, {pipeline_mode = #tpu.pipeline_mode<synchronous>, transform_indices = @transform_3, window_bounds = array<i64: 1, 64>}, {pipeline_mode = #tpu.pipeline_mode<synchronous>, transform_indices = @transform_4, window_bounds = array<i64: 1, 2>}, {pipeline_mode = #tpu.pipeline_mode<synchronous>, transform_indices = @transform_5, window_bounds = array<i64: 1, 2>}, {pipeline_mode = #tpu.pipeline_mode<synchronous>, transform_indices = @transform_6, window_bounds = array<i64: 2, 64, 16>}, {pipeline_mode = #tpu.pipeline_mode<synchronous>, transform_indices = @transform_7, window_bounds = array<i64: 2, 2, 16>}, {pipeline_mode = #tpu.pipeline_mode<synchronous>, transform_indices = @transform_8, window_bounds = array<i64: 2, 2, 16>}, {pipeline_mode = #tpu.pipeline_mode<synchronous>, transform_indices = @transform_9, window_bounds = array<i64: 2, 16, 64>}, {pipeline_mode = #tpu.pipeline_mode<synchronous>, transform_indices = @transform_10, window_bounds = array<i64: 1, 64>}, {pipeline_mode = #tpu.pipeline_mode<synchronous>, transform_indices = @transform_11, window_bounds = array<i64: 1, 64>}, {pipeline_mode = #tpu.pipeline_mode<synchronous>, transform_indices = @transform_12, window_bounds = array<i64: 1, 64>}, {pipeline_mode = #tpu.pipeline_mode<synchronous>, transform_indices = @transform_13, window_bounds = array<i64: 64, 512>}, {pipeline_mode = #tpu.pipeline_mode<synchronous>, transform_indices = @transform_14, window_bounds = array<i64: 1, 512>}, {pipeline_mode = #tpu.pipeline_mode<synchronous>, transform_indices = @transform_15, window_bounds = array<i64: 256, 64>}, {pipeline_mode = #tpu.pipeline_mode<synchronous>, transform_indices = @transform_16, window_bounds = array<i64: 1, 64>}, {pipeline_mode = #tpu.pipeline_mode<synchronous>, transform_indices = @transform_17, window_bounds = array<i64: 2, 1, 64>}, {pipeline_mode = #tpu.pipeline_mode<synchronous>, transform_indices = @transform_18, window_bounds = array<i64: 2, 1, 64>}, {pipeline_mode = #tpu.pipeline_mode<synchronous>, transform_indices = @transform_19, window_bounds = array<i64: 2, 2, 64, 16>}, {pipeline_mode = #tpu.pipeline_mode<synchronous>, transform_indices = @transform_20, window_bounds = array<i64: 2, 2, 64, 16>}, {pipeline_mode = #tpu.pipeline_mode<synchronous>, transform_indices = @transform_21, window_bounds = array<i64: 2, 2, 64, 16>}, {pipeline_mode = #tpu.pipeline_mode<synchronous>, transform_indices = @transform_22, window_bounds = array<i64: 2, 2, 16, 64>}, {pipeline_mode = #tpu.pipeline_mode<synchronous>, transform_indices = @transform_23, window_bounds = array<i64: 2, 1, 64>}, {pipeline_mode = #tpu.pipeline_mode<synchronous>, transform_indices = @transform_24, window_bounds = array<i64: 2, 1, 64>}, {pipeline_mode = #tpu.pipeline_mode<synchronous>, transform_indices = @transform_25, window_bounds = array<i64: 2, 1, 64>}, {pipeline_mode = #tpu.pipeline_mode<synchronous>, transform_indices = @transform_26, window_bounds = array<i64: 2, 64, 512>}, {pipeline_mode = #tpu.pipeline_mode<synchronous>, transform_indices = @transform_27, window_bounds = array<i64: 2, 1, 512>}, {pipeline_mode = #tpu.pipeline_mode<synchronous>, transform_indices = @transform_28, window_bounds = array<i64: 2, 256, 64>}, {pipeline_mode = #tpu.pipeline_mode<synchronous>, transform_indices = @transform_29, window_bounds = array<i64: 2, 1, 64>}, {pipeline_mode = #tpu.pipeline_mode<synchronous>, transform_indices = @transform_30, window_bounds = array<i64: 1, 2>}, {pipeline_mode = #tpu.pipeline_mode<synchronous>, transform_indices = @transform_31, window_bounds = array<i64: 1, 2>}, {pipeline_mode = #tpu.pipeline_mode<synchronous>, transform_indices = @transform_32, window_bounds = array<i64: 1, 64>}, {pipeline_mode = #tpu.pipeline_mode<synchronous>, transform_indices = @transform_33, window_bounds = array<i64: 1, 64>}, {pipeline_mode = #tpu.pipeline_mode<synchronous>, transform_indices = @transform_34, window_bounds = array<i64: 2, 2, 16>}, {pipeline_mode = #tpu.pipeline_mode<synchronous>, transform_indices = @transform_35, window_bounds = array<i64: 2, 64, 16>}, {pipeline_mode = #tpu.pipeline_mode<synchronous>, transform_indices = @transform_36, window_bounds = array<i64: 2, 64, 16>}, {pipeline_mode = #tpu.pipeline_mode<synchronous>, transform_indices = @transform_37, window_bounds = array<i64: 2, 16, 2>}, {pipeline_mode = #tpu.pipeline_mode<synchronous>, transform_indices = @transform_38, window_bounds = array<i64: 1, 2>}, {pipeline_mode = #tpu.pipeline_mode<synchronous>, transform_indices = @transform_39, window_bounds = array<i64: 1, 2>}, {pipeline_mode = #tpu.pipeline_mode<synchronous>, transform_indices = @transform_40, window_bounds = array<i64: 1, 1>}, {transform_indices = @transform_41, window_bounds = array<i64: 1, 8, 1>}]} {
    %c0 = arith.constant 0 : index
    %c0_0 = arith.constant 0 : index
    %c0_1 = arith.constant 0 : index
    %0 = vector.load %arg1[%c0, %c0_0, %c0_1] : memref<1x8x2xf32, #tpu.memory_space<vmem>>, vector<1x8x2xf32>
    %1 = vector.shape_cast %0 : vector<1x8x2xf32> to vector<8x2xf32>
    %c0_2 = arith.constant 0 : index
    %c0_3 = arith.constant 0 : index
    %2 = vector.load %arg2[%c0_2, %c0_3] : memref<32x64xf32, #tpu.memory_space<vmem>>, vector<32x64xf32>
    %c0_4 = arith.constant 0 : index
    %c0_5 = arith.constant 0 : index
    %3 = vector.load %arg3[%c0_4, %c0_5] : memref<1x64xf32, #tpu.memory_space<vmem>>, vector<1x64xf32>
    %c0_6 = arith.constant 0 : index
    %c0_7 = arith.constant 0 : index
    %4 = vector.load %arg4[%c0_6, %c0_7] : memref<1x64xf32, #tpu.memory_space<vmem>>, vector<1x64xf32>
    %cst = arith.constant dense<0.000000e+00> : vector<32xf32>
    %5 = vector.multi_reduction <add>, %2, %cst [1] : vector<32x64xf32> to vector<32xf32>
    %6 = vector.shape_cast %5 : vector<32xf32> to vector<32x1xf32>
    %cst_8 = arith.constant 6.400000e+01 : f32
    %7 = vector.broadcast %cst_8 : f32 to vector<32x1xf32>
    %8 = arith.divf %6, %7 : vector<32x1xf32>
    %9 = vector.broadcast %8 : vector<32x1xf32> to vector<32x64xf32>
    %10 = arith.subf %2, %9 : vector<32x64xf32>
    %11 = arith.mulf %10, %10 : vector<32x64xf32>
    %cst_9 = arith.constant dense<0.000000e+00> : vector<32xf32>
    %12 = vector.multi_reduction <add>, %11, %cst_9 [1] : vector<32x64xf32> to vector<32xf32>
    %13 = vector.shape_cast %12 : vector<32xf32> to vector<32x1xf32>
    %cst_10 = arith.constant 6.400000e+01 : f32
    %14 = vector.broadcast %cst_10 : f32 to vector<32x1xf32>
    %15 = arith.divf %13, %14 : vector<32x1xf32>
    %16 = vector.broadcast %8 : vector<32x1xf32> to vector<32x64xf32>
    %17 = arith.subf %2, %16 : vector<32x64xf32>
    %cst_11 = arith.constant 9.99999974E-6 : f32
    %18 = vector.broadcast %cst_11 : f32 to vector<32x1xf32>
    %19 = arith.addf %15, %18 : vector<32x1xf32>
    %20 = math.rsqrt %19 : vector<32x1xf32>
    %21 = vector.broadcast %20 : vector<32x1xf32> to vector<32x64xf32>
    %22 = arith.mulf %17, %21 : vector<32x64xf32>
    %23 = vector.broadcast %3 : vector<1x64xf32> to vector<32x64xf32>
    %24 = arith.mulf %22, %23 : vector<32x64xf32>
    %25 = vector.broadcast %4 : vector<1x64xf32> to vector<32x64xf32>
    %26 = arith.addf %24, %25 : vector<32x64xf32>
    %c0_12 = arith.constant 0 : index
    %c0_13 = arith.constant 0 : index
    %27 = vector.load %arg5[%c0_12, %c0_13] : memref<1x2xf32, #tpu.memory_space<vmem>>, vector<1x2xf32>
    %c0_14 = arith.constant 0 : index
    %c0_15 = arith.constant 0 : index
    %28 = vector.load %arg6[%c0_14, %c0_15] : memref<1x2xf32, #tpu.memory_space<vmem>>, vector<1x2xf32>
    %cst_16 = arith.constant dense<0.000000e+00> : vector<8xf32>
    %29 = vector.multi_reduction <add>, %1, %cst_16 [1] : vector<8x2xf32> to vector<8xf32>
    %30 = vector.shape_cast %29 : vector<8xf32> to vector<8x1xf32>
    %cst_17 = arith.constant 2.000000e+00 : f32
    %31 = vector.broadcast %cst_17 : f32 to vector<8x1xf32>
    %32 = arith.divf %30, %31 : vector<8x1xf32>
    %33 = vector.broadcast %32 : vector<8x1xf32> to vector<8x2xf32>
    %34 = arith.subf %1, %33 : vector<8x2xf32>
    %35 = arith.mulf %34, %34 : vector<8x2xf32>
    %cst_18 = arith.constant dense<0.000000e+00> : vector<8xf32>
    %36 = vector.multi_reduction <add>, %35, %cst_18 [1] : vector<8x2xf32> to vector<8xf32>
    %37 = vector.shape_cast %36 : vector<8xf32> to vector<8x1xf32>
    %cst_19 = arith.constant 2.000000e+00 : f32
    %38 = vector.broadcast %cst_19 : f32 to vector<8x1xf32>
    %39 = arith.divf %37, %38 : vector<8x1xf32>
    %40 = vector.broadcast %32 : vector<8x1xf32> to vector<8x2xf32>
    %41 = arith.subf %1, %40 : vector<8x2xf32>
    %cst_20 = arith.constant 9.99999974E-6 : f32
    %42 = vector.broadcast %cst_20 : f32 to vector<8x1xf32>
    %43 = arith.addf %39, %42 : vector<8x1xf32>
    %44 = math.rsqrt %43 : vector<8x1xf32>
    %45 = vector.broadcast %44 : vector<8x1xf32> to vector<8x2xf32>
    %46 = arith.mulf %41, %45 : vector<8x2xf32>
    %47 = vector.broadcast %27 : vector<1x2xf32> to vector<8x2xf32>
    %48 = arith.mulf %46, %47 : vector<8x2xf32>
    %49 = vector.broadcast %28 : vector<1x2xf32> to vector<8x2xf32>
    %50 = arith.addf %48, %49 : vector<8x2xf32>
    %c0_21 = arith.constant 0 : index
    %c0_22 = arith.constant 0 : index
    %51 = vector.load %arg11[%c0_21, %c0_22] : memref<1x64xf32, #tpu.memory_space<vmem>>, vector<1x64xf32>
    %c0_23 = arith.constant 0 : index
    %c0_24 = arith.constant 0 : index
    %c0_25 = arith.constant 0 : index
    %52 = vector.load %arg7[%c0_23, %c0_24, %c0_25] : memref<2x64x16xbf16, #tpu.memory_space<vmem>>, vector<1x64x16xbf16>
    %53 = vector.shape_cast %52 : vector<1x64x16xbf16> to vector<64x16xbf16>
    %54 = arith.truncf %26 : vector<32x64xf32> to vector<32x64xbf16>
    %cst_26 = arith.constant dense<0.000000e+00> : vector<32x16xf32>
    %55 = tpu.matmul %54, %53, %cst_26 {dimension_numbers = #tpu.dot_dimension_numbers<[1], [0], [0], [1], [0, 0, 1, 1], [], []>} : vector<32x64xbf16>, vector<64x16xbf16>, vector<32x16xf32> -> vector<32x16xf32>
    %cst_27 = arith.constant 2.500000e-01 : f32
    %56 = vector.broadcast %cst_27 : f32 to vector<32x16xf32>
    %57 = arith.mulf %55, %56 : vector<32x16xf32>
    %58 = arith.truncf %57 : vector<32x16xf32> to vector<32x16xbf16>
    %c0_28 = arith.constant 0 : index
    %c0_29 = arith.constant 0 : index
    %c0_30 = arith.constant 0 : index
    %59 = vector.load %arg8[%c0_28, %c0_29, %c0_30] : memref<2x2x16xbf16, #tpu.memory_space<vmem>>, vector<1x2x16xbf16>
    %60 = vector.shape_cast %59 : vector<1x2x16xbf16> to vector<2x16xbf16>
    %61 = arith.extf %60 : vector<2x16xbf16> to vector<2x16xf32>
    %62 = vector.extract_strided_slice %50 {offsets = [0, 0], sizes = [8, 1], strides = [1, 1]} : vector<8x2xf32> to vector<8x1xf32>
    %63 = vector.extract_strided_slice %61 {offsets = [0, 0], sizes = [1, 16], strides = [1, 1]} : vector<2x16xf32> to vector<1x16xf32>
    %64 = vector.broadcast %62 : vector<8x1xf32> to vector<8x16xf32>
    %65 = vector.broadcast %63 : vector<1x16xf32> to vector<8x16xf32>
    %66 = arith.mulf %64, %65 : vector<8x16xf32>
    %67 = vector.extract_strided_slice %50 {offsets = [0, 1], sizes = [8, 1], strides = [1, 1]} : vector<8x2xf32> to vector<8x1xf32>
    %68 = vector.extract_strided_slice %61 {offsets = [1, 0], sizes = [1, 16], strides = [1, 1]} : vector<2x16xf32> to vector<1x16xf32>
    %69 = vector.broadcast %67 : vector<8x1xf32> to vector<8x16xf32>
    %70 = vector.broadcast %68 : vector<1x16xf32> to vector<8x16xf32>
    %71 = arith.mulf %69, %70 : vector<8x16xf32>
    %72 = arith.addf %66, %71 : vector<8x16xf32>
    %73 = arith.truncf %72 : vector<8x16xf32> to vector<8x16xbf16>
    %c0_31 = arith.constant 0 : index
    %c0_32 = arith.constant 0 : index
    %c0_33 = arith.constant 0 : index
    %74 = vector.load %arg9[%c0_31, %c0_32, %c0_33] : memref<2x2x16xbf16, #tpu.memory_space<vmem>>, vector<1x2x16xbf16>
    %75 = vector.shape_cast %74 : vector<1x2x16xbf16> to vector<2x16xbf16>
    %76 = arith.extf %75 : vector<2x16xbf16> to vector<2x16xf32>
    %77 = vector.extract_strided_slice %50 {offsets = [0, 0], sizes = [8, 1], strides = [1, 1]} : vector<8x2xf32> to vector<8x1xf32>
    %78 = vector.extract_strided_slice %76 {offsets = [0, 0], sizes = [1, 16], strides = [1, 1]} : vector<2x16xf32> to vector<1x16xf32>
    %79 = vector.broadcast %77 : vector<8x1xf32> to vector<8x16xf32>
    %80 = vector.broadcast %78 : vector<1x16xf32> to vector<8x16xf32>
    %81 = arith.mulf %79, %80 : vector<8x16xf32>
    %82 = vector.extract_strided_slice %50 {offsets = [0, 1], sizes = [8, 1], strides = [1, 1]} : vector<8x2xf32> to vector<8x1xf32>
    %83 = vector.extract_strided_slice %76 {offsets = [1, 0], sizes = [1, 16], strides = [1, 1]} : vector<2x16xf32> to vector<1x16xf32>
    %84 = vector.broadcast %82 : vector<8x1xf32> to vector<8x16xf32>
    %85 = vector.broadcast %83 : vector<1x16xf32> to vector<8x16xf32>
    %86 = arith.mulf %84, %85 : vector<8x16xf32>
    %87 = arith.addf %81, %86 : vector<8x16xf32>
    %88 = arith.truncf %87 : vector<8x16xf32> to vector<8x16xbf16>
    %cst_34 = arith.constant dense<0.000000e+00> : vector<32x8xf32>
    %89 = tpu.matmul %58, %73, %cst_34 {dimension_numbers = #tpu.dot_dimension_numbers<[1], [1], [0], [0], [0, 0, 1, 0], [], []>} : vector<32x16xbf16>, vector<8x16xbf16>, vector<32x8xf32> -> vector<32x8xf32>
    %cst_35 = arith.constant dense<0xFF800000> : vector<32xf32>
    %90 = vector.multi_reduction <maximumf>, %89, %cst_35 [1] : vector<32x8xf32> to vector<32xf32>
    %91 = vector.shape_cast %90 : vector<32xf32> to vector<32x1xf32>
    %92 = vector.broadcast %91 : vector<32x1xf32> to vector<32x8xf32>
    %93 = arith.subf %89, %92 : vector<32x8xf32>
    %94 = math.exp %93 : vector<32x8xf32>
    %cst_36 = arith.constant dense<0.000000e+00> : vector<32xf32>
    %95 = vector.multi_reduction <add>, %94, %cst_36 [1] : vector<32x8xf32> to vector<32xf32>
    %96 = vector.shape_cast %95 : vector<32xf32> to vector<32x1xf32>
    %97 = tpu.reciprocal %96 {approx = true} : vector<32x1xf32> -> vector<32x1xf32>
    %98 = vector.broadcast %97 : vector<32x1xf32> to vector<32x8xf32>
    %99 = arith.mulf %94, %98 : vector<32x8xf32>
    %100 = arith.truncf %99 : vector<32x8xf32> to vector<32x8xbf16>
    %cst_37 = arith.constant dense<0.000000e+00> : vector<32x16xf32>
    %101 = tpu.matmul %100, %88, %cst_37 {dimension_numbers = #tpu.dot_dimension_numbers<[1], [0], [0], [1], [0, 0, 1, 1], [], []>} : vector<32x8xbf16>, vector<8x16xbf16>, vector<32x16xf32> -> vector<32x16xf32>
    %102 = arith.truncf %101 : vector<32x16xf32> to vector<32x16xbf16>
    %c0_38 = arith.constant 0 : index
    %c0_39 = arith.constant 0 : index
    %c0_40 = arith.constant 0 : index
    %103 = vector.load %arg10[%c0_38, %c0_39, %c0_40] : memref<2x16x64xbf16, #tpu.memory_space<vmem>>, vector<1x16x64xbf16>
    %104 = vector.shape_cast %103 : vector<1x16x64xbf16> to vector<16x64xbf16>
    %cst_41 = arith.constant dense<0.000000e+00> : vector<32x64xf32>
    %105 = tpu.matmul %102, %104, %cst_41 {dimension_numbers = #tpu.dot_dimension_numbers<[1], [0], [0], [1], [0, 0, 1, 1], [], []>} : vector<32x16xbf16>, vector<16x64xbf16>, vector<32x64xf32> -> vector<32x64xf32>
    %c1 = arith.constant 1 : index
    %c0_42 = arith.constant 0 : index
    %c0_43 = arith.constant 0 : index
    %106 = vector.load %arg7[%c1, %c0_42, %c0_43] : memref<2x64x16xbf16, #tpu.memory_space<vmem>>, vector<1x64x16xbf16>
    %107 = vector.shape_cast %106 : vector<1x64x16xbf16> to vector<64x16xbf16>
    %108 = arith.truncf %26 : vector<32x64xf32> to vector<32x64xbf16>
    %cst_44 = arith.constant dense<0.000000e+00> : vector<32x16xf32>
    %109 = tpu.matmul %108, %107, %cst_44 {dimension_numbers = #tpu.dot_dimension_numbers<[1], [0], [0], [1], [0, 0, 1, 1], [], []>} : vector<32x64xbf16>, vector<64x16xbf16>, vector<32x16xf32> -> vector<32x16xf32>
    %cst_45 = arith.constant 2.500000e-01 : f32
    %110 = vector.broadcast %cst_45 : f32 to vector<32x16xf32>
    %111 = arith.mulf %109, %110 : vector<32x16xf32>
    %112 = arith.truncf %111 : vector<32x16xf32> to vector<32x16xbf16>
    %c1_46 = arith.constant 1 : index
    %c0_47 = arith.constant 0 : index
    %c0_48 = arith.constant 0 : index
    %113 = vector.load %arg8[%c1_46, %c0_47, %c0_48] : memref<2x2x16xbf16, #tpu.memory_space<vmem>>, vector<1x2x16xbf16>
    %114 = vector.shape_cast %113 : vector<1x2x16xbf16> to vector<2x16xbf16>
    %115 = arith.extf %114 : vector<2x16xbf16> to vector<2x16xf32>
    %116 = vector.extract_strided_slice %50 {offsets = [0, 0], sizes = [8, 1], strides = [1, 1]} : vector<8x2xf32> to vector<8x1xf32>
    %117 = vector.extract_strided_slice %115 {offsets = [0, 0], sizes = [1, 16], strides = [1, 1]} : vector<2x16xf32> to vector<1x16xf32>
    %118 = vector.broadcast %116 : vector<8x1xf32> to vector<8x16xf32>
    %119 = vector.broadcast %117 : vector<1x16xf32> to vector<8x16xf32>
    %120 = arith.mulf %118, %119 : vector<8x16xf32>
    %121 = vector.extract_strided_slice %50 {offsets = [0, 1], sizes = [8, 1], strides = [1, 1]} : vector<8x2xf32> to vector<8x1xf32>
    %122 = vector.extract_strided_slice %115 {offsets = [1, 0], sizes = [1, 16], strides = [1, 1]} : vector<2x16xf32> to vector<1x16xf32>
    %123 = vector.broadcast %121 : vector<8x1xf32> to vector<8x16xf32>
    %124 = vector.broadcast %122 : vector<1x16xf32> to vector<8x16xf32>
    %125 = arith.mulf %123, %124 : vector<8x16xf32>
    %126 = arith.addf %120, %125 : vector<8x16xf32>
    %127 = arith.truncf %126 : vector<8x16xf32> to vector<8x16xbf16>
    %c1_49 = arith.constant 1 : index
    %c0_50 = arith.constant 0 : index
    %c0_51 = arith.constant 0 : index
    %128 = vector.load %arg9[%c1_49, %c0_50, %c0_51] : memref<2x2x16xbf16, #tpu.memory_space<vmem>>, vector<1x2x16xbf16>
    %129 = vector.shape_cast %128 : vector<1x2x16xbf16> to vector<2x16xbf16>
    %130 = arith.extf %129 : vector<2x16xbf16> to vector<2x16xf32>
    %131 = vector.extract_strided_slice %50 {offsets = [0, 0], sizes = [8, 1], strides = [1, 1]} : vector<8x2xf32> to vector<8x1xf32>
    %132 = vector.extract_strided_slice %130 {offsets = [0, 0], sizes = [1, 16], strides = [1, 1]} : vector<2x16xf32> to vector<1x16xf32>
    %133 = vector.broadcast %131 : vector<8x1xf32> to vector<8x16xf32>
    %134 = vector.broadcast %132 : vector<1x16xf32> to vector<8x16xf32>
    %135 = arith.mulf %133, %134 : vector<8x16xf32>
    %136 = vector.extract_strided_slice %50 {offsets = [0, 1], sizes = [8, 1], strides = [1, 1]} : vector<8x2xf32> to vector<8x1xf32>
    %137 = vector.extract_strided_slice %130 {offsets = [1, 0], sizes = [1, 16], strides = [1, 1]} : vector<2x16xf32> to vector<1x16xf32>
    %138 = vector.broadcast %136 : vector<8x1xf32> to vector<8x16xf32>
    %139 = vector.broadcast %137 : vector<1x16xf32> to vector<8x16xf32>
    %140 = arith.mulf %138, %139 : vector<8x16xf32>
    %141 = arith.addf %135, %140 : vector<8x16xf32>
    %142 = arith.truncf %141 : vector<8x16xf32> to vector<8x16xbf16>
    %cst_52 = arith.constant dense<0.000000e+00> : vector<32x8xf32>
    %143 = tpu.matmul %112, %127, %cst_52 {dimension_numbers = #tpu.dot_dimension_numbers<[1], [1], [0], [0], [0, 0, 1, 0], [], []>} : vector<32x16xbf16>, vector<8x16xbf16>, vector<32x8xf32> -> vector<32x8xf32>
    %cst_53 = arith.constant dense<0xFF800000> : vector<32xf32>
    %144 = vector.multi_reduction <maximumf>, %143, %cst_53 [1] : vector<32x8xf32> to vector<32xf32>
    %145 = vector.shape_cast %144 : vector<32xf32> to vector<32x1xf32>
    %146 = vector.broadcast %145 : vector<32x1xf32> to vector<32x8xf32>
    %147 = arith.subf %143, %146 : vector<32x8xf32>
    %148 = math.exp %147 : vector<32x8xf32>
    %cst_54 = arith.constant dense<0.000000e+00> : vector<32xf32>
    %149 = vector.multi_reduction <add>, %148, %cst_54 [1] : vector<32x8xf32> to vector<32xf32>
    %150 = vector.shape_cast %149 : vector<32xf32> to vector<32x1xf32>
    %151 = tpu.reciprocal %150 {approx = true} : vector<32x1xf32> -> vector<32x1xf32>
    %152 = vector.broadcast %151 : vector<32x1xf32> to vector<32x8xf32>
    %153 = arith.mulf %148, %152 : vector<32x8xf32>
    %154 = arith.truncf %153 : vector<32x8xf32> to vector<32x8xbf16>
    %cst_55 = arith.constant dense<0.000000e+00> : vector<32x16xf32>
    %155 = tpu.matmul %154, %142, %cst_55 {dimension_numbers = #tpu.dot_dimension_numbers<[1], [0], [0], [1], [0, 0, 1, 1], [], []>} : vector<32x8xbf16>, vector<8x16xbf16>, vector<32x16xf32> -> vector<32x16xf32>
    %156 = arith.truncf %155 : vector<32x16xf32> to vector<32x16xbf16>
    %c1_56 = arith.constant 1 : index
    %c0_57 = arith.constant 0 : index
    %c0_58 = arith.constant 0 : index
    %157 = vector.load %arg10[%c1_56, %c0_57, %c0_58] : memref<2x16x64xbf16, #tpu.memory_space<vmem>>, vector<1x16x64xbf16>
    %158 = vector.shape_cast %157 : vector<1x16x64xbf16> to vector<16x64xbf16>
    %cst_59 = arith.constant dense<0.000000e+00> : vector<32x64xf32>
    %159 = tpu.matmul %156, %158, %cst_59 {dimension_numbers = #tpu.dot_dimension_numbers<[1], [0], [0], [1], [0, 0, 1, 1], [], []>} : vector<32x16xbf16>, vector<16x64xbf16>, vector<32x64xf32> -> vector<32x64xf32>
    %160 = arith.addf %105, %159 : vector<32x64xf32>
    %161 = vector.broadcast %51 : vector<1x64xf32> to vector<32x64xf32>
    %162 = arith.addf %160, %161 : vector<32x64xf32>
    %163 = arith.addf %162, %2 : vector<32x64xf32>
    %c0_60 = arith.constant 0 : index
    %c0_61 = arith.constant 0 : index
    %164 = vector.load %arg12[%c0_60, %c0_61] : memref<1x64xf32, #tpu.memory_space<vmem>>, vector<1x64xf32>
    %c0_62 = arith.constant 0 : index
    %c0_63 = arith.constant 0 : index
    %165 = vector.load %arg13[%c0_62, %c0_63] : memref<1x64xf32, #tpu.memory_space<vmem>>, vector<1x64xf32>
    %c0_64 = arith.constant 0 : index
    %c0_65 = arith.constant 0 : index
    %166 = vector.load %arg14[%c0_64, %c0_65] : memref<64x512xbf16, #tpu.memory_space<vmem>>, vector<64x512xbf16>
    %c0_66 = arith.constant 0 : index
    %c0_67 = arith.constant 0 : index
    %167 = vector.load %arg15[%c0_66, %c0_67] : memref<1x512xf32, #tpu.memory_space<vmem>>, vector<1x512xf32>
    %c0_68 = arith.constant 0 : index
    %c0_69 = arith.constant 0 : index
    %168 = vector.load %arg16[%c0_68, %c0_69] : memref<256x64xbf16, #tpu.memory_space<vmem>>, vector<256x64xbf16>
    %c0_70 = arith.constant 0 : index
    %c0_71 = arith.constant 0 : index
    %169 = vector.load %arg17[%c0_70, %c0_71] : memref<1x64xf32, #tpu.memory_space<vmem>>, vector<1x64xf32>
    %cst_72 = arith.constant dense<0.000000e+00> : vector<32xf32>
    %170 = vector.multi_reduction <add>, %163, %cst_72 [1] : vector<32x64xf32> to vector<32xf32>
    %171 = vector.shape_cast %170 : vector<32xf32> to vector<32x1xf32>
    %cst_73 = arith.constant 6.400000e+01 : f32
    %172 = vector.broadcast %cst_73 : f32 to vector<32x1xf32>
    %173 = arith.divf %171, %172 : vector<32x1xf32>
    %174 = vector.broadcast %173 : vector<32x1xf32> to vector<32x64xf32>
    %175 = arith.subf %163, %174 : vector<32x64xf32>
    %176 = arith.mulf %175, %175 : vector<32x64xf32>
    %cst_74 = arith.constant dense<0.000000e+00> : vector<32xf32>
    %177 = vector.multi_reduction <add>, %176, %cst_74 [1] : vector<32x64xf32> to vector<32xf32>
    %178 = vector.shape_cast %177 : vector<32xf32> to vector<32x1xf32>
    %cst_75 = arith.constant 6.400000e+01 : f32
    %179 = vector.broadcast %cst_75 : f32 to vector<32x1xf32>
    %180 = arith.divf %178, %179 : vector<32x1xf32>
    %181 = vector.broadcast %173 : vector<32x1xf32> to vector<32x64xf32>
    %182 = arith.subf %163, %181 : vector<32x64xf32>
    %cst_76 = arith.constant 9.99999974E-6 : f32
    %183 = vector.broadcast %cst_76 : f32 to vector<32x1xf32>
    %184 = arith.addf %180, %183 : vector<32x1xf32>
    %185 = math.rsqrt %184 : vector<32x1xf32>
    %186 = vector.broadcast %185 : vector<32x1xf32> to vector<32x64xf32>
    %187 = arith.mulf %182, %186 : vector<32x64xf32>
    %188 = vector.broadcast %164 : vector<1x64xf32> to vector<32x64xf32>
    %189 = arith.mulf %187, %188 : vector<32x64xf32>
    %190 = vector.broadcast %165 : vector<1x64xf32> to vector<32x64xf32>
    %191 = arith.addf %189, %190 : vector<32x64xf32>
    %192 = arith.truncf %191 : vector<32x64xf32> to vector<32x64xbf16>
    %cst_77 = arith.constant dense<0.000000e+00> : vector<32x512xf32>
    %193 = tpu.matmul %192, %166, %cst_77 {dimension_numbers = #tpu.dot_dimension_numbers<[1], [0], [0], [1], [0, 0, 1, 1], [], []>} : vector<32x64xbf16>, vector<64x512xbf16>, vector<32x512xf32> -> vector<32x512xf32>
    %194 = vector.broadcast %167 : vector<1x512xf32> to vector<32x512xf32>
    %195 = arith.addf %193, %194 : vector<32x512xf32>
    %196 = vector.extract_strided_slice %195 {offsets = [0, 0], sizes = [32, 256], strides = [1, 1]} : vector<32x512xf32> to vector<32x256xf32>
    %197 = vector.extract_strided_slice %195 {offsets = [0, 256], sizes = [32, 256], strides = [1, 1]} : vector<32x512xf32> to vector<32x256xf32>
    %198 = arith.mulf %197, %197 : vector<32x256xf32>
    %199 = arith.mulf %197, %198 : vector<32x256xf32>
    %cst_78 = arith.constant 4.471500e-02 : f32
    %200 = vector.broadcast %cst_78 : f32 to vector<32x256xf32>
    %201 = arith.mulf %200, %199 : vector<32x256xf32>
    %202 = arith.addf %197, %201 : vector<32x256xf32>
    %cst_79 = arith.constant 0.797884583 : f32
    %203 = vector.broadcast %cst_79 : f32 to vector<32x256xf32>
    %204 = arith.mulf %203, %202 : vector<32x256xf32>
    %205 = math.tanh %204 : vector<32x256xf32>
    %cst_80 = arith.constant 1.000000e+00 : f32
    %206 = vector.broadcast %cst_80 : f32 to vector<32x256xf32>
    %207 = arith.addf %206, %205 : vector<32x256xf32>
    %cst_81 = arith.constant 5.000000e-01 : f32
    %208 = vector.broadcast %cst_81 : f32 to vector<32x256xf32>
    %209 = arith.mulf %208, %207 : vector<32x256xf32>
    %210 = arith.mulf %197, %209 : vector<32x256xf32>
    %211 = arith.mulf %196, %210 : vector<32x256xf32>
    %212 = arith.truncf %211 : vector<32x256xf32> to vector<32x256xbf16>
    %cst_82 = arith.constant dense<0.000000e+00> : vector<32x64xf32>
    %213 = tpu.matmul %212, %168, %cst_82 {dimension_numbers = #tpu.dot_dimension_numbers<[1], [0], [0], [1], [0, 0, 1, 1], [], []>} : vector<32x256xbf16>, vector<256x64xbf16>, vector<32x64xf32> -> vector<32x64xf32>
    %214 = vector.broadcast %169 : vector<1x64xf32> to vector<32x64xf32>
    %215 = arith.addf %213, %214 : vector<32x64xf32>
    %216 = arith.addf %215, %163 : vector<32x64xf32>
    %c0_83 = arith.constant 0 : index
    %c0_84 = arith.constant 0 : index
    %c0_85 = arith.constant 0 : index
    %217 = vector.load %arg18[%c0_83, %c0_84, %c0_85] : memref<2x1x64xf32, #tpu.memory_space<vmem>>, vector<1x1x64xf32>
    %218 = vector.shape_cast %217 : vector<1x1x64xf32> to vector<1x64xf32>
    %c0_86 = arith.constant 0 : index
    %c0_87 = arith.constant 0 : index
    %c0_88 = arith.constant 0 : index
    %219 = vector.load %arg19[%c0_86, %c0_87, %c0_88] : memref<2x1x64xf32, #tpu.memory_space<vmem>>, vector<1x1x64xf32>
    %220 = vector.shape_cast %219 : vector<1x1x64xf32> to vector<1x64xf32>
    %cst_89 = arith.constant dense<0.000000e+00> : vector<32xf32>
    %221 = vector.multi_reduction <add>, %216, %cst_89 [1] : vector<32x64xf32> to vector<32xf32>
    %222 = vector.shape_cast %221 : vector<32xf32> to vector<32x1xf32>
    %cst_90 = arith.constant 6.400000e+01 : f32
    %223 = vector.broadcast %cst_90 : f32 to vector<32x1xf32>
    %224 = arith.divf %222, %223 : vector<32x1xf32>
    %225 = vector.broadcast %224 : vector<32x1xf32> to vector<32x64xf32>
    %226 = arith.subf %216, %225 : vector<32x64xf32>
    %227 = arith.mulf %226, %226 : vector<32x64xf32>
    %cst_91 = arith.constant dense<0.000000e+00> : vector<32xf32>
    %228 = vector.multi_reduction <add>, %227, %cst_91 [1] : vector<32x64xf32> to vector<32xf32>
    %229 = vector.shape_cast %228 : vector<32xf32> to vector<32x1xf32>
    %cst_92 = arith.constant 6.400000e+01 : f32
    %230 = vector.broadcast %cst_92 : f32 to vector<32x1xf32>
    %231 = arith.divf %229, %230 : vector<32x1xf32>
    %232 = vector.broadcast %224 : vector<32x1xf32> to vector<32x64xf32>
    %233 = arith.subf %216, %232 : vector<32x64xf32>
    %cst_93 = arith.constant 9.99999974E-6 : f32
    %234 = vector.broadcast %cst_93 : f32 to vector<32x1xf32>
    %235 = arith.addf %231, %234 : vector<32x1xf32>
    %236 = math.rsqrt %235 : vector<32x1xf32>
    %237 = vector.broadcast %236 : vector<32x1xf32> to vector<32x64xf32>
    %238 = arith.mulf %233, %237 : vector<32x64xf32>
    %239 = vector.broadcast %218 : vector<1x64xf32> to vector<32x64xf32>
    %240 = arith.mulf %238, %239 : vector<32x64xf32>
    %241 = vector.broadcast %220 : vector<1x64xf32> to vector<32x64xf32>
    %242 = arith.addf %240, %241 : vector<32x64xf32>
    %c0_94 = arith.constant 0 : index
    %c0_95 = arith.constant 0 : index
    %c0_96 = arith.constant 0 : index
    %243 = vector.load %arg24[%c0_94, %c0_95, %c0_96] : memref<2x1x64xf32, #tpu.memory_space<vmem>>, vector<1x1x64xf32>
    %244 = vector.shape_cast %243 : vector<1x1x64xf32> to vector<1x64xf32>
    %c0_97 = arith.constant 0 : index
    %c0_98 = arith.constant 0 : index
    %c0_99 = arith.constant 0 : index
    %c0_100 = arith.constant 0 : index
    %245 = vector.load %arg20[%c0_97, %c0_98, %c0_99, %c0_100] : memref<2x2x64x16xbf16, #tpu.memory_space<vmem>>, vector<1x1x64x16xbf16>
    %246 = vector.shape_cast %245 : vector<1x1x64x16xbf16> to vector<64x16xbf16>
    %247 = arith.truncf %242 : vector<32x64xf32> to vector<32x64xbf16>
    %cst_101 = arith.constant dense<0.000000e+00> : vector<32x16xf32>
    %248 = tpu.matmul %247, %246, %cst_101 {dimension_numbers = #tpu.dot_dimension_numbers<[1], [0], [0], [1], [0, 0, 1, 1], [], []>} : vector<32x64xbf16>, vector<64x16xbf16>, vector<32x16xf32> -> vector<32x16xf32>
    %cst_102 = arith.constant 2.500000e-01 : f32
    %249 = vector.broadcast %cst_102 : f32 to vector<32x16xf32>
    %250 = arith.mulf %248, %249 : vector<32x16xf32>
    %251 = arith.truncf %250 : vector<32x16xf32> to vector<32x16xbf16>
    %c0_103 = arith.constant 0 : index
    %c0_104 = arith.constant 0 : index
    %c0_105 = arith.constant 0 : index
    %c0_106 = arith.constant 0 : index
    %252 = vector.load %arg21[%c0_103, %c0_104, %c0_105, %c0_106] : memref<2x2x64x16xbf16, #tpu.memory_space<vmem>>, vector<1x1x64x16xbf16>
    %253 = vector.shape_cast %252 : vector<1x1x64x16xbf16> to vector<64x16xbf16>
    %254 = arith.truncf %242 : vector<32x64xf32> to vector<32x64xbf16>
    %cst_107 = arith.constant dense<0.000000e+00> : vector<32x16xf32>
    %255 = tpu.matmul %254, %253, %cst_107 {dimension_numbers = #tpu.dot_dimension_numbers<[1], [0], [0], [1], [0, 0, 1, 1], [], []>} : vector<32x64xbf16>, vector<64x16xbf16>, vector<32x16xf32> -> vector<32x16xf32>
    %256 = arith.truncf %255 : vector<32x16xf32> to vector<32x16xbf16>
    %c0_108 = arith.constant 0 : index
    %c0_109 = arith.constant 0 : index
    %c0_110 = arith.constant 0 : index
    %c0_111 = arith.constant 0 : index
    %257 = vector.load %arg22[%c0_108, %c0_109, %c0_110, %c0_111] : memref<2x2x64x16xbf16, #tpu.memory_space<vmem>>, vector<1x1x64x16xbf16>
    %258 = vector.shape_cast %257 : vector<1x1x64x16xbf16> to vector<64x16xbf16>
    %259 = arith.truncf %242 : vector<32x64xf32> to vector<32x64xbf16>
    %cst_112 = arith.constant dense<0.000000e+00> : vector<32x16xf32>
    %260 = tpu.matmul %259, %258, %cst_112 {dimension_numbers = #tpu.dot_dimension_numbers<[1], [0], [0], [1], [0, 0, 1, 1], [], []>} : vector<32x64xbf16>, vector<64x16xbf16>, vector<32x16xf32> -> vector<32x16xf32>
    %261 = arith.truncf %260 : vector<32x16xf32> to vector<32x16xbf16>
    %cst_113 = arith.constant dense<0.000000e+00> : vector<32x32xf32>
    %262 = tpu.matmul %251, %256, %cst_113 {dimension_numbers = #tpu.dot_dimension_numbers<[1], [1], [0], [0], [0, 0, 1, 0], [], []>} : vector<32x16xbf16>, vector<32x16xbf16>, vector<32x32xf32> -> vector<32x32xf32>
    %cst_114 = arith.constant dense<0xFF800000> : vector<32xf32>
    %263 = vector.multi_reduction <maximumf>, %262, %cst_114 [1] : vector<32x32xf32> to vector<32xf32>
    %264 = vector.shape_cast %263 : vector<32xf32> to vector<32x1xf32>
    %265 = vector.broadcast %264 : vector<32x1xf32> to vector<32x32xf32>
    %266 = arith.subf %262, %265 : vector<32x32xf32>
    %267 = math.exp %266 : vector<32x32xf32>
    %cst_115 = arith.constant dense<0.000000e+00> : vector<32xf32>
    %268 = vector.multi_reduction <add>, %267, %cst_115 [1] : vector<32x32xf32> to vector<32xf32>
    %269 = vector.shape_cast %268 : vector<32xf32> to vector<32x1xf32>
    %270 = tpu.reciprocal %269 {approx = true} : vector<32x1xf32> -> vector<32x1xf32>
    %271 = vector.broadcast %270 : vector<32x1xf32> to vector<32x32xf32>
    %272 = arith.mulf %267, %271 : vector<32x32xf32>
    %273 = arith.truncf %272 : vector<32x32xf32> to vector<32x32xbf16>
    %cst_116 = arith.constant dense<0.000000e+00> : vector<32x16xf32>
    %274 = tpu.matmul %273, %261, %cst_116 {dimension_numbers = #tpu.dot_dimension_numbers<[1], [0], [0], [1], [0, 0, 1, 1], [], []>} : vector<32x32xbf16>, vector<32x16xbf16>, vector<32x16xf32> -> vector<32x16xf32>
    %275 = arith.truncf %274 : vector<32x16xf32> to vector<32x16xbf16>
    %c0_117 = arith.constant 0 : index
    %c0_118 = arith.constant 0 : index
    %c0_119 = arith.constant 0 : index
    %c0_120 = arith.constant 0 : index
    %276 = vector.load %arg23[%c0_117, %c0_118, %c0_119, %c0_120] : memref<2x2x16x64xbf16, #tpu.memory_space<vmem>>, vector<1x1x16x64xbf16>
    %277 = vector.shape_cast %276 : vector<1x1x16x64xbf16> to vector<16x64xbf16>
    %cst_121 = arith.constant dense<0.000000e+00> : vector<32x64xf32>
    %278 = tpu.matmul %275, %277, %cst_121 {dimension_numbers = #tpu.dot_dimension_numbers<[1], [0], [0], [1], [0, 0, 1, 1], [], []>} : vector<32x16xbf16>, vector<16x64xbf16>, vector<32x64xf32> -> vector<32x64xf32>
    %c0_122 = arith.constant 0 : index
    %c1_123 = arith.constant 1 : index
    %c0_124 = arith.constant 0 : index
    %c0_125 = arith.constant 0 : index
    %279 = vector.load %arg20[%c0_122, %c1_123, %c0_124, %c0_125] : memref<2x2x64x16xbf16, #tpu.memory_space<vmem>>, vector<1x1x64x16xbf16>
    %280 = vector.shape_cast %279 : vector<1x1x64x16xbf16> to vector<64x16xbf16>
    %281 = arith.truncf %242 : vector<32x64xf32> to vector<32x64xbf16>
    %cst_126 = arith.constant dense<0.000000e+00> : vector<32x16xf32>
    %282 = tpu.matmul %281, %280, %cst_126 {dimension_numbers = #tpu.dot_dimension_numbers<[1], [0], [0], [1], [0, 0, 1, 1], [], []>} : vector<32x64xbf16>, vector<64x16xbf16>, vector<32x16xf32> -> vector<32x16xf32>
    %cst_127 = arith.constant 2.500000e-01 : f32
    %283 = vector.broadcast %cst_127 : f32 to vector<32x16xf32>
    %284 = arith.mulf %282, %283 : vector<32x16xf32>
    %285 = arith.truncf %284 : vector<32x16xf32> to vector<32x16xbf16>
    %c0_128 = arith.constant 0 : index
    %c1_129 = arith.constant 1 : index
    %c0_130 = arith.constant 0 : index
    %c0_131 = arith.constant 0 : index
    %286 = vector.load %arg21[%c0_128, %c1_129, %c0_130, %c0_131] : memref<2x2x64x16xbf16, #tpu.memory_space<vmem>>, vector<1x1x64x16xbf16>
    %287 = vector.shape_cast %286 : vector<1x1x64x16xbf16> to vector<64x16xbf16>
    %288 = arith.truncf %242 : vector<32x64xf32> to vector<32x64xbf16>
    %cst_132 = arith.constant dense<0.000000e+00> : vector<32x16xf32>
    %289 = tpu.matmul %288, %287, %cst_132 {dimension_numbers = #tpu.dot_dimension_numbers<[1], [0], [0], [1], [0, 0, 1, 1], [], []>} : vector<32x64xbf16>, vector<64x16xbf16>, vector<32x16xf32> -> vector<32x16xf32>
    %290 = arith.truncf %289 : vector<32x16xf32> to vector<32x16xbf16>
    %c0_133 = arith.constant 0 : index
    %c1_134 = arith.constant 1 : index
    %c0_135 = arith.constant 0 : index
    %c0_136 = arith.constant 0 : index
    %291 = vector.load %arg22[%c0_133, %c1_134, %c0_135, %c0_136] : memref<2x2x64x16xbf16, #tpu.memory_space<vmem>>, vector<1x1x64x16xbf16>
    %292 = vector.shape_cast %291 : vector<1x1x64x16xbf16> to vector<64x16xbf16>
    %293 = arith.truncf %242 : vector<32x64xf32> to vector<32x64xbf16>
    %cst_137 = arith.constant dense<0.000000e+00> : vector<32x16xf32>
    %294 = tpu.matmul %293, %292, %cst_137 {dimension_numbers = #tpu.dot_dimension_numbers<[1], [0], [0], [1], [0, 0, 1, 1], [], []>} : vector<32x64xbf16>, vector<64x16xbf16>, vector<32x16xf32> -> vector<32x16xf32>
    %295 = arith.truncf %294 : vector<32x16xf32> to vector<32x16xbf16>
    %cst_138 = arith.constant dense<0.000000e+00> : vector<32x32xf32>
    %296 = tpu.matmul %285, %290, %cst_138 {dimension_numbers = #tpu.dot_dimension_numbers<[1], [1], [0], [0], [0, 0, 1, 0], [], []>} : vector<32x16xbf16>, vector<32x16xbf16>, vector<32x32xf32> -> vector<32x32xf32>
    %cst_139 = arith.constant dense<0xFF800000> : vector<32xf32>
    %297 = vector.multi_reduction <maximumf>, %296, %cst_139 [1] : vector<32x32xf32> to vector<32xf32>
    %298 = vector.shape_cast %297 : vector<32xf32> to vector<32x1xf32>
    %299 = vector.broadcast %298 : vector<32x1xf32> to vector<32x32xf32>
    %300 = arith.subf %296, %299 : vector<32x32xf32>
    %301 = math.exp %300 : vector<32x32xf32>
    %cst_140 = arith.constant dense<0.000000e+00> : vector<32xf32>
    %302 = vector.multi_reduction <add>, %301, %cst_140 [1] : vector<32x32xf32> to vector<32xf32>
    %303 = vector.shape_cast %302 : vector<32xf32> to vector<32x1xf32>
    %304 = tpu.reciprocal %303 {approx = true} : vector<32x1xf32> -> vector<32x1xf32>
    %305 = vector.broadcast %304 : vector<32x1xf32> to vector<32x32xf32>
    %306 = arith.mulf %301, %305 : vector<32x32xf32>
    %307 = arith.truncf %306 : vector<32x32xf32> to vector<32x32xbf16>
    %cst_141 = arith.constant dense<0.000000e+00> : vector<32x16xf32>
    %308 = tpu.matmul %307, %295, %cst_141 {dimension_numbers = #tpu.dot_dimension_numbers<[1], [0], [0], [1], [0, 0, 1, 1], [], []>} : vector<32x32xbf16>, vector<32x16xbf16>, vector<32x16xf32> -> vector<32x16xf32>
    %309 = arith.truncf %308 : vector<32x16xf32> to vector<32x16xbf16>
    %c0_142 = arith.constant 0 : index
    %c1_143 = arith.constant 1 : index
    %c0_144 = arith.constant 0 : index
    %c0_145 = arith.constant 0 : index
    %310 = vector.load %arg23[%c0_142, %c1_143, %c0_144, %c0_145] : memref<2x2x16x64xbf16, #tpu.memory_space<vmem>>, vector<1x1x16x64xbf16>
    %311 = vector.shape_cast %310 : vector<1x1x16x64xbf16> to vector<16x64xbf16>
    %cst_146 = arith.constant dense<0.000000e+00> : vector<32x64xf32>
    %312 = tpu.matmul %309, %311, %cst_146 {dimension_numbers = #tpu.dot_dimension_numbers<[1], [0], [0], [1], [0, 0, 1, 1], [], []>} : vector<32x16xbf16>, vector<16x64xbf16>, vector<32x64xf32> -> vector<32x64xf32>
    %313 = arith.addf %278, %312 : vector<32x64xf32>
    %314 = vector.broadcast %244 : vector<1x64xf32> to vector<32x64xf32>
    %315 = arith.addf %313, %314 : vector<32x64xf32>
    %316 = arith.addf %315, %216 : vector<32x64xf32>
    %c0_147 = arith.constant 0 : index
    %c0_148 = arith.constant 0 : index
    %c0_149 = arith.constant 0 : index
    %317 = vector.load %arg25[%c0_147, %c0_148, %c0_149] : memref<2x1x64xf32, #tpu.memory_space<vmem>>, vector<1x1x64xf32>
    %318 = vector.shape_cast %317 : vector<1x1x64xf32> to vector<1x64xf32>
    %c0_150 = arith.constant 0 : index
    %c0_151 = arith.constant 0 : index
    %c0_152 = arith.constant 0 : index
    %319 = vector.load %arg26[%c0_150, %c0_151, %c0_152] : memref<2x1x64xf32, #tpu.memory_space<vmem>>, vector<1x1x64xf32>
    %320 = vector.shape_cast %319 : vector<1x1x64xf32> to vector<1x64xf32>
    %c0_153 = arith.constant 0 : index
    %c0_154 = arith.constant 0 : index
    %c0_155 = arith.constant 0 : index
    %321 = vector.load %arg27[%c0_153, %c0_154, %c0_155] : memref<2x64x512xbf16, #tpu.memory_space<vmem>>, vector<1x64x512xbf16>
    %322 = vector.shape_cast %321 : vector<1x64x512xbf16> to vector<64x512xbf16>
    %c0_156 = arith.constant 0 : index
    %c0_157 = arith.constant 0 : index
    %c0_158 = arith.constant 0 : index
    %323 = vector.load %arg28[%c0_156, %c0_157, %c0_158] : memref<2x1x512xf32, #tpu.memory_space<vmem>>, vector<1x1x512xf32>
    %324 = vector.shape_cast %323 : vector<1x1x512xf32> to vector<1x512xf32>
    %c0_159 = arith.constant 0 : index
    %c0_160 = arith.constant 0 : index
    %c0_161 = arith.constant 0 : index
    %325 = vector.load %arg29[%c0_159, %c0_160, %c0_161] : memref<2x256x64xbf16, #tpu.memory_space<vmem>>, vector<1x256x64xbf16>
    %326 = vector.shape_cast %325 : vector<1x256x64xbf16> to vector<256x64xbf16>
    %c0_162 = arith.constant 0 : index
    %c0_163 = arith.constant 0 : index
    %c0_164 = arith.constant 0 : index
    %327 = vector.load %arg30[%c0_162, %c0_163, %c0_164] : memref<2x1x64xf32, #tpu.memory_space<vmem>>, vector<1x1x64xf32>
    %328 = vector.shape_cast %327 : vector<1x1x64xf32> to vector<1x64xf32>
    %cst_165 = arith.constant dense<0.000000e+00> : vector<32xf32>
    %329 = vector.multi_reduction <add>, %316, %cst_165 [1] : vector<32x64xf32> to vector<32xf32>
    %330 = vector.shape_cast %329 : vector<32xf32> to vector<32x1xf32>
    %cst_166 = arith.constant 6.400000e+01 : f32
    %331 = vector.broadcast %cst_166 : f32 to vector<32x1xf32>
    %332 = arith.divf %330, %331 : vector<32x1xf32>
    %333 = vector.broadcast %332 : vector<32x1xf32> to vector<32x64xf32>
    %334 = arith.subf %316, %333 : vector<32x64xf32>
    %335 = arith.mulf %334, %334 : vector<32x64xf32>
    %cst_167 = arith.constant dense<0.000000e+00> : vector<32xf32>
    %336 = vector.multi_reduction <add>, %335, %cst_167 [1] : vector<32x64xf32> to vector<32xf32>
    %337 = vector.shape_cast %336 : vector<32xf32> to vector<32x1xf32>
    %cst_168 = arith.constant 6.400000e+01 : f32
    %338 = vector.broadcast %cst_168 : f32 to vector<32x1xf32>
    %339 = arith.divf %337, %338 : vector<32x1xf32>
    %340 = vector.broadcast %332 : vector<32x1xf32> to vector<32x64xf32>
    %341 = arith.subf %316, %340 : vector<32x64xf32>
    %cst_169 = arith.constant 9.99999974E-6 : f32
    %342 = vector.broadcast %cst_169 : f32 to vector<32x1xf32>
    %343 = arith.addf %339, %342 : vector<32x1xf32>
    %344 = math.rsqrt %343 : vector<32x1xf32>
    %345 = vector.broadcast %344 : vector<32x1xf32> to vector<32x64xf32>
    %346 = arith.mulf %341, %345 : vector<32x64xf32>
    %347 = vector.broadcast %318 : vector<1x64xf32> to vector<32x64xf32>
    %348 = arith.mulf %346, %347 : vector<32x64xf32>
    %349 = vector.broadcast %320 : vector<1x64xf32> to vector<32x64xf32>
    %350 = arith.addf %348, %349 : vector<32x64xf32>
    %351 = arith.truncf %350 : vector<32x64xf32> to vector<32x64xbf16>
    %cst_170 = arith.constant dense<0.000000e+00> : vector<32x512xf32>
    %352 = tpu.matmul %351, %322, %cst_170 {dimension_numbers = #tpu.dot_dimension_numbers<[1], [0], [0], [1], [0, 0, 1, 1], [], []>} : vector<32x64xbf16>, vector<64x512xbf16>, vector<32x512xf32> -> vector<32x512xf32>
    %353 = vector.broadcast %324 : vector<1x512xf32> to vector<32x512xf32>
    %354 = arith.addf %352, %353 : vector<32x512xf32>
    %355 = vector.extract_strided_slice %354 {offsets = [0, 0], sizes = [32, 256], strides = [1, 1]} : vector<32x512xf32> to vector<32x256xf32>
    %356 = vector.extract_strided_slice %354 {offsets = [0, 256], sizes = [32, 256], strides = [1, 1]} : vector<32x512xf32> to vector<32x256xf32>
    %357 = arith.mulf %356, %356 : vector<32x256xf32>
    %358 = arith.mulf %356, %357 : vector<32x256xf32>
    %cst_171 = arith.constant 4.471500e-02 : f32
    %359 = vector.broadcast %cst_171 : f32 to vector<32x256xf32>
    %360 = arith.mulf %359, %358 : vector<32x256xf32>
    %361 = arith.addf %356, %360 : vector<32x256xf32>
    %cst_172 = arith.constant 0.797884583 : f32
    %362 = vector.broadcast %cst_172 : f32 to vector<32x256xf32>
    %363 = arith.mulf %362, %361 : vector<32x256xf32>
    %364 = math.tanh %363 : vector<32x256xf32>
    %cst_173 = arith.constant 1.000000e+00 : f32
    %365 = vector.broadcast %cst_173 : f32 to vector<32x256xf32>
    %366 = arith.addf %365, %364 : vector<32x256xf32>
    %cst_174 = arith.constant 5.000000e-01 : f32
    %367 = vector.broadcast %cst_174 : f32 to vector<32x256xf32>
    %368 = arith.mulf %367, %366 : vector<32x256xf32>
    %369 = arith.mulf %356, %368 : vector<32x256xf32>
    %370 = arith.mulf %355, %369 : vector<32x256xf32>
    %371 = arith.truncf %370 : vector<32x256xf32> to vector<32x256xbf16>
    %cst_175 = arith.constant dense<0.000000e+00> : vector<32x64xf32>
    %372 = tpu.matmul %371, %326, %cst_175 {dimension_numbers = #tpu.dot_dimension_numbers<[1], [0], [0], [1], [0, 0, 1, 1], [], []>} : vector<32x256xbf16>, vector<256x64xbf16>, vector<32x64xf32> -> vector<32x64xf32>
    %373 = vector.broadcast %328 : vector<1x64xf32> to vector<32x64xf32>
    %374 = arith.addf %372, %373 : vector<32x64xf32>
    %375 = arith.addf %374, %316 : vector<32x64xf32>
    %c1_176 = arith.constant 1 : index
    %c0_177 = arith.constant 0 : index
    %c0_178 = arith.constant 0 : index
    %376 = vector.load %arg18[%c1_176, %c0_177, %c0_178] : memref<2x1x64xf32, #tpu.memory_space<vmem>>, vector<1x1x64xf32>
    %377 = vector.shape_cast %376 : vector<1x1x64xf32> to vector<1x64xf32>
    %c1_179 = arith.constant 1 : index
    %c0_180 = arith.constant 0 : index
    %c0_181 = arith.constant 0 : index
    %378 = vector.load %arg19[%c1_179, %c0_180, %c0_181] : memref<2x1x64xf32, #tpu.memory_space<vmem>>, vector<1x1x64xf32>
    %379 = vector.shape_cast %378 : vector<1x1x64xf32> to vector<1x64xf32>
    %cst_182 = arith.constant dense<0.000000e+00> : vector<32xf32>
    %380 = vector.multi_reduction <add>, %375, %cst_182 [1] : vector<32x64xf32> to vector<32xf32>
    %381 = vector.shape_cast %380 : vector<32xf32> to vector<32x1xf32>
    %cst_183 = arith.constant 6.400000e+01 : f32
    %382 = vector.broadcast %cst_183 : f32 to vector<32x1xf32>
    %383 = arith.divf %381, %382 : vector<32x1xf32>
    %384 = vector.broadcast %383 : vector<32x1xf32> to vector<32x64xf32>
    %385 = arith.subf %375, %384 : vector<32x64xf32>
    %386 = arith.mulf %385, %385 : vector<32x64xf32>
    %cst_184 = arith.constant dense<0.000000e+00> : vector<32xf32>
    %387 = vector.multi_reduction <add>, %386, %cst_184 [1] : vector<32x64xf32> to vector<32xf32>
    %388 = vector.shape_cast %387 : vector<32xf32> to vector<32x1xf32>
    %cst_185 = arith.constant 6.400000e+01 : f32
    %389 = vector.broadcast %cst_185 : f32 to vector<32x1xf32>
    %390 = arith.divf %388, %389 : vector<32x1xf32>
    %391 = vector.broadcast %383 : vector<32x1xf32> to vector<32x64xf32>
    %392 = arith.subf %375, %391 : vector<32x64xf32>
    %cst_186 = arith.constant 9.99999974E-6 : f32
    %393 = vector.broadcast %cst_186 : f32 to vector<32x1xf32>
    %394 = arith.addf %390, %393 : vector<32x1xf32>
    %395 = math.rsqrt %394 : vector<32x1xf32>
    %396 = vector.broadcast %395 : vector<32x1xf32> to vector<32x64xf32>
    %397 = arith.mulf %392, %396 : vector<32x64xf32>
    %398 = vector.broadcast %377 : vector<1x64xf32> to vector<32x64xf32>
    %399 = arith.mulf %397, %398 : vector<32x64xf32>
    %400 = vector.broadcast %379 : vector<1x64xf32> to vector<32x64xf32>
    %401 = arith.addf %399, %400 : vector<32x64xf32>
    %c1_187 = arith.constant 1 : index
    %c0_188 = arith.constant 0 : index
    %c0_189 = arith.constant 0 : index
    %402 = vector.load %arg24[%c1_187, %c0_188, %c0_189] : memref<2x1x64xf32, #tpu.memory_space<vmem>>, vector<1x1x64xf32>
    %403 = vector.shape_cast %402 : vector<1x1x64xf32> to vector<1x64xf32>
    %c1_190 = arith.constant 1 : index
    %c0_191 = arith.constant 0 : index
    %c0_192 = arith.constant 0 : index
    %c0_193 = arith.constant 0 : index
    %404 = vector.load %arg20[%c1_190, %c0_191, %c0_192, %c0_193] : memref<2x2x64x16xbf16, #tpu.memory_space<vmem>>, vector<1x1x64x16xbf16>
    %405 = vector.shape_cast %404 : vector<1x1x64x16xbf16> to vector<64x16xbf16>
    %406 = arith.truncf %401 : vector<32x64xf32> to vector<32x64xbf16>
    %cst_194 = arith.constant dense<0.000000e+00> : vector<32x16xf32>
    %407 = tpu.matmul %406, %405, %cst_194 {dimension_numbers = #tpu.dot_dimension_numbers<[1], [0], [0], [1], [0, 0, 1, 1], [], []>} : vector<32x64xbf16>, vector<64x16xbf16>, vector<32x16xf32> -> vector<32x16xf32>
    %cst_195 = arith.constant 2.500000e-01 : f32
    %408 = vector.broadcast %cst_195 : f32 to vector<32x16xf32>
    %409 = arith.mulf %407, %408 : vector<32x16xf32>
    %410 = arith.truncf %409 : vector<32x16xf32> to vector<32x16xbf16>
    %c1_196 = arith.constant 1 : index
    %c0_197 = arith.constant 0 : index
    %c0_198 = arith.constant 0 : index
    %c0_199 = arith.constant 0 : index
    %411 = vector.load %arg21[%c1_196, %c0_197, %c0_198, %c0_199] : memref<2x2x64x16xbf16, #tpu.memory_space<vmem>>, vector<1x1x64x16xbf16>
    %412 = vector.shape_cast %411 : vector<1x1x64x16xbf16> to vector<64x16xbf16>
    %413 = arith.truncf %401 : vector<32x64xf32> to vector<32x64xbf16>
    %cst_200 = arith.constant dense<0.000000e+00> : vector<32x16xf32>
    %414 = tpu.matmul %413, %412, %cst_200 {dimension_numbers = #tpu.dot_dimension_numbers<[1], [0], [0], [1], [0, 0, 1, 1], [], []>} : vector<32x64xbf16>, vector<64x16xbf16>, vector<32x16xf32> -> vector<32x16xf32>
    %415 = arith.truncf %414 : vector<32x16xf32> to vector<32x16xbf16>
    %c1_201 = arith.constant 1 : index
    %c0_202 = arith.constant 0 : index
    %c0_203 = arith.constant 0 : index
    %c0_204 = arith.constant 0 : index
    %416 = vector.load %arg22[%c1_201, %c0_202, %c0_203, %c0_204] : memref<2x2x64x16xbf16, #tpu.memory_space<vmem>>, vector<1x1x64x16xbf16>
    %417 = vector.shape_cast %416 : vector<1x1x64x16xbf16> to vector<64x16xbf16>
    %418 = arith.truncf %401 : vector<32x64xf32> to vector<32x64xbf16>
    %cst_205 = arith.constant dense<0.000000e+00> : vector<32x16xf32>
    %419 = tpu.matmul %418, %417, %cst_205 {dimension_numbers = #tpu.dot_dimension_numbers<[1], [0], [0], [1], [0, 0, 1, 1], [], []>} : vector<32x64xbf16>, vector<64x16xbf16>, vector<32x16xf32> -> vector<32x16xf32>
    %420 = arith.truncf %419 : vector<32x16xf32> to vector<32x16xbf16>
    %cst_206 = arith.constant dense<0.000000e+00> : vector<32x32xf32>
    %421 = tpu.matmul %410, %415, %cst_206 {dimension_numbers = #tpu.dot_dimension_numbers<[1], [1], [0], [0], [0, 0, 1, 0], [], []>} : vector<32x16xbf16>, vector<32x16xbf16>, vector<32x32xf32> -> vector<32x32xf32>
    %cst_207 = arith.constant dense<0xFF800000> : vector<32xf32>
    %422 = vector.multi_reduction <maximumf>, %421, %cst_207 [1] : vector<32x32xf32> to vector<32xf32>
    %423 = vector.shape_cast %422 : vector<32xf32> to vector<32x1xf32>
    %424 = vector.broadcast %423 : vector<32x1xf32> to vector<32x32xf32>
    %425 = arith.subf %421, %424 : vector<32x32xf32>
    %426 = math.exp %425 : vector<32x32xf32>
    %cst_208 = arith.constant dense<0.000000e+00> : vector<32xf32>
    %427 = vector.multi_reduction <add>, %426, %cst_208 [1] : vector<32x32xf32> to vector<32xf32>
    %428 = vector.shape_cast %427 : vector<32xf32> to vector<32x1xf32>
    %429 = tpu.reciprocal %428 {approx = true} : vector<32x1xf32> -> vector<32x1xf32>
    %430 = vector.broadcast %429 : vector<32x1xf32> to vector<32x32xf32>
    %431 = arith.mulf %426, %430 : vector<32x32xf32>
    %432 = arith.truncf %431 : vector<32x32xf32> to vector<32x32xbf16>
    %cst_209 = arith.constant dense<0.000000e+00> : vector<32x16xf32>
    %433 = tpu.matmul %432, %420, %cst_209 {dimension_numbers = #tpu.dot_dimension_numbers<[1], [0], [0], [1], [0, 0, 1, 1], [], []>} : vector<32x32xbf16>, vector<32x16xbf16>, vector<32x16xf32> -> vector<32x16xf32>
    %434 = arith.truncf %433 : vector<32x16xf32> to vector<32x16xbf16>
    %c1_210 = arith.constant 1 : index
    %c0_211 = arith.constant 0 : index
    %c0_212 = arith.constant 0 : index
    %c0_213 = arith.constant 0 : index
    %435 = vector.load %arg23[%c1_210, %c0_211, %c0_212, %c0_213] : memref<2x2x16x64xbf16, #tpu.memory_space<vmem>>, vector<1x1x16x64xbf16>
    %436 = vector.shape_cast %435 : vector<1x1x16x64xbf16> to vector<16x64xbf16>
    %cst_214 = arith.constant dense<0.000000e+00> : vector<32x64xf32>
    %437 = tpu.matmul %434, %436, %cst_214 {dimension_numbers = #tpu.dot_dimension_numbers<[1], [0], [0], [1], [0, 0, 1, 1], [], []>} : vector<32x16xbf16>, vector<16x64xbf16>, vector<32x64xf32> -> vector<32x64xf32>
    %c1_215 = arith.constant 1 : index
    %c1_216 = arith.constant 1 : index
    %c0_217 = arith.constant 0 : index
    %c0_218 = arith.constant 0 : index
    %438 = vector.load %arg20[%c1_215, %c1_216, %c0_217, %c0_218] : memref<2x2x64x16xbf16, #tpu.memory_space<vmem>>, vector<1x1x64x16xbf16>
    %439 = vector.shape_cast %438 : vector<1x1x64x16xbf16> to vector<64x16xbf16>
    %440 = arith.truncf %401 : vector<32x64xf32> to vector<32x64xbf16>
    %cst_219 = arith.constant dense<0.000000e+00> : vector<32x16xf32>
    %441 = tpu.matmul %440, %439, %cst_219 {dimension_numbers = #tpu.dot_dimension_numbers<[1], [0], [0], [1], [0, 0, 1, 1], [], []>} : vector<32x64xbf16>, vector<64x16xbf16>, vector<32x16xf32> -> vector<32x16xf32>
    %cst_220 = arith.constant 2.500000e-01 : f32
    %442 = vector.broadcast %cst_220 : f32 to vector<32x16xf32>
    %443 = arith.mulf %441, %442 : vector<32x16xf32>
    %444 = arith.truncf %443 : vector<32x16xf32> to vector<32x16xbf16>
    %c1_221 = arith.constant 1 : index
    %c1_222 = arith.constant 1 : index
    %c0_223 = arith.constant 0 : index
    %c0_224 = arith.constant 0 : index
    %445 = vector.load %arg21[%c1_221, %c1_222, %c0_223, %c0_224] : memref<2x2x64x16xbf16, #tpu.memory_space<vmem>>, vector<1x1x64x16xbf16>
    %446 = vector.shape_cast %445 : vector<1x1x64x16xbf16> to vector<64x16xbf16>
    %447 = arith.truncf %401 : vector<32x64xf32> to vector<32x64xbf16>
    %cst_225 = arith.constant dense<0.000000e+00> : vector<32x16xf32>
    %448 = tpu.matmul %447, %446, %cst_225 {dimension_numbers = #tpu.dot_dimension_numbers<[1], [0], [0], [1], [0, 0, 1, 1], [], []>} : vector<32x64xbf16>, vector<64x16xbf16>, vector<32x16xf32> -> vector<32x16xf32>
    %449 = arith.truncf %448 : vector<32x16xf32> to vector<32x16xbf16>
    %c1_226 = arith.constant 1 : index
    %c1_227 = arith.constant 1 : index
    %c0_228 = arith.constant 0 : index
    %c0_229 = arith.constant 0 : index
    %450 = vector.load %arg22[%c1_226, %c1_227, %c0_228, %c0_229] : memref<2x2x64x16xbf16, #tpu.memory_space<vmem>>, vector<1x1x64x16xbf16>
    %451 = vector.shape_cast %450 : vector<1x1x64x16xbf16> to vector<64x16xbf16>
    %452 = arith.truncf %401 : vector<32x64xf32> to vector<32x64xbf16>
    %cst_230 = arith.constant dense<0.000000e+00> : vector<32x16xf32>
    %453 = tpu.matmul %452, %451, %cst_230 {dimension_numbers = #tpu.dot_dimension_numbers<[1], [0], [0], [1], [0, 0, 1, 1], [], []>} : vector<32x64xbf16>, vector<64x16xbf16>, vector<32x16xf32> -> vector<32x16xf32>
    %454 = arith.truncf %453 : vector<32x16xf32> to vector<32x16xbf16>
    %cst_231 = arith.constant dense<0.000000e+00> : vector<32x32xf32>
    %455 = tpu.matmul %444, %449, %cst_231 {dimension_numbers = #tpu.dot_dimension_numbers<[1], [1], [0], [0], [0, 0, 1, 0], [], []>} : vector<32x16xbf16>, vector<32x16xbf16>, vector<32x32xf32> -> vector<32x32xf32>
    %cst_232 = arith.constant dense<0xFF800000> : vector<32xf32>
    %456 = vector.multi_reduction <maximumf>, %455, %cst_232 [1] : vector<32x32xf32> to vector<32xf32>
    %457 = vector.shape_cast %456 : vector<32xf32> to vector<32x1xf32>
    %458 = vector.broadcast %457 : vector<32x1xf32> to vector<32x32xf32>
    %459 = arith.subf %455, %458 : vector<32x32xf32>
    %460 = math.exp %459 : vector<32x32xf32>
    %cst_233 = arith.constant dense<0.000000e+00> : vector<32xf32>
    %461 = vector.multi_reduction <add>, %460, %cst_233 [1] : vector<32x32xf32> to vector<32xf32>
    %462 = vector.shape_cast %461 : vector<32xf32> to vector<32x1xf32>
    %463 = tpu.reciprocal %462 {approx = true} : vector<32x1xf32> -> vector<32x1xf32>
    %464 = vector.broadcast %463 : vector<32x1xf32> to vector<32x32xf32>
    %465 = arith.mulf %460, %464 : vector<32x32xf32>
    %466 = arith.truncf %465 : vector<32x32xf32> to vector<32x32xbf16>
    %cst_234 = arith.constant dense<0.000000e+00> : vector<32x16xf32>
    %467 = tpu.matmul %466, %454, %cst_234 {dimension_numbers = #tpu.dot_dimension_numbers<[1], [0], [0], [1], [0, 0, 1, 1], [], []>} : vector<32x32xbf16>, vector<32x16xbf16>, vector<32x16xf32> -> vector<32x16xf32>
    %468 = arith.truncf %467 : vector<32x16xf32> to vector<32x16xbf16>
    %c1_235 = arith.constant 1 : index
    %c1_236 = arith.constant 1 : index
    %c0_237 = arith.constant 0 : index
    %c0_238 = arith.constant 0 : index
    %469 = vector.load %arg23[%c1_235, %c1_236, %c0_237, %c0_238] : memref<2x2x16x64xbf16, #tpu.memory_space<vmem>>, vector<1x1x16x64xbf16>
    %470 = vector.shape_cast %469 : vector<1x1x16x64xbf16> to vector<16x64xbf16>
    %cst_239 = arith.constant dense<0.000000e+00> : vector<32x64xf32>
    %471 = tpu.matmul %468, %470, %cst_239 {dimension_numbers = #tpu.dot_dimension_numbers<[1], [0], [0], [1], [0, 0, 1, 1], [], []>} : vector<32x16xbf16>, vector<16x64xbf16>, vector<32x64xf32> -> vector<32x64xf32>
    %472 = arith.addf %437, %471 : vector<32x64xf32>
    %473 = vector.broadcast %403 : vector<1x64xf32> to vector<32x64xf32>
    %474 = arith.addf %472, %473 : vector<32x64xf32>
    %475 = arith.addf %474, %375 : vector<32x64xf32>
    %c1_240 = arith.constant 1 : index
    %c0_241 = arith.constant 0 : index
    %c0_242 = arith.constant 0 : index
    %476 = vector.load %arg25[%c1_240, %c0_241, %c0_242] : memref<2x1x64xf32, #tpu.memory_space<vmem>>, vector<1x1x64xf32>
    %477 = vector.shape_cast %476 : vector<1x1x64xf32> to vector<1x64xf32>
    %c1_243 = arith.constant 1 : index
    %c0_244 = arith.constant 0 : index
    %c0_245 = arith.constant 0 : index
    %478 = vector.load %arg26[%c1_243, %c0_244, %c0_245] : memref<2x1x64xf32, #tpu.memory_space<vmem>>, vector<1x1x64xf32>
    %479 = vector.shape_cast %478 : vector<1x1x64xf32> to vector<1x64xf32>
    %c1_246 = arith.constant 1 : index
    %c0_247 = arith.constant 0 : index
    %c0_248 = arith.constant 0 : index
    %480 = vector.load %arg27[%c1_246, %c0_247, %c0_248] : memref<2x64x512xbf16, #tpu.memory_space<vmem>>, vector<1x64x512xbf16>
    %481 = vector.shape_cast %480 : vector<1x64x512xbf16> to vector<64x512xbf16>
    %c1_249 = arith.constant 1 : index
    %c0_250 = arith.constant 0 : index
    %c0_251 = arith.constant 0 : index
    %482 = vector.load %arg28[%c1_249, %c0_250, %c0_251] : memref<2x1x512xf32, #tpu.memory_space<vmem>>, vector<1x1x512xf32>
    %483 = vector.shape_cast %482 : vector<1x1x512xf32> to vector<1x512xf32>
    %c1_252 = arith.constant 1 : index
    %c0_253 = arith.constant 0 : index
    %c0_254 = arith.constant 0 : index
    %484 = vector.load %arg29[%c1_252, %c0_253, %c0_254] : memref<2x256x64xbf16, #tpu.memory_space<vmem>>, vector<1x256x64xbf16>
    %485 = vector.shape_cast %484 : vector<1x256x64xbf16> to vector<256x64xbf16>
    %c1_255 = arith.constant 1 : index
    %c0_256 = arith.constant 0 : index
    %c0_257 = arith.constant 0 : index
    %486 = vector.load %arg30[%c1_255, %c0_256, %c0_257] : memref<2x1x64xf32, #tpu.memory_space<vmem>>, vector<1x1x64xf32>
    %487 = vector.shape_cast %486 : vector<1x1x64xf32> to vector<1x64xf32>
    %cst_258 = arith.constant dense<0.000000e+00> : vector<32xf32>
    %488 = vector.multi_reduction <add>, %475, %cst_258 [1] : vector<32x64xf32> to vector<32xf32>
    %489 = vector.shape_cast %488 : vector<32xf32> to vector<32x1xf32>
    %cst_259 = arith.constant 6.400000e+01 : f32
    %490 = vector.broadcast %cst_259 : f32 to vector<32x1xf32>
    %491 = arith.divf %489, %490 : vector<32x1xf32>
    %492 = vector.broadcast %491 : vector<32x1xf32> to vector<32x64xf32>
    %493 = arith.subf %475, %492 : vector<32x64xf32>
    %494 = arith.mulf %493, %493 : vector<32x64xf32>
    %cst_260 = arith.constant dense<0.000000e+00> : vector<32xf32>
    %495 = vector.multi_reduction <add>, %494, %cst_260 [1] : vector<32x64xf32> to vector<32xf32>
    %496 = vector.shape_cast %495 : vector<32xf32> to vector<32x1xf32>
    %cst_261 = arith.constant 6.400000e+01 : f32
    %497 = vector.broadcast %cst_261 : f32 to vector<32x1xf32>
    %498 = arith.divf %496, %497 : vector<32x1xf32>
    %499 = vector.broadcast %491 : vector<32x1xf32> to vector<32x64xf32>
    %500 = arith.subf %475, %499 : vector<32x64xf32>
    %cst_262 = arith.constant 9.99999974E-6 : f32
    %501 = vector.broadcast %cst_262 : f32 to vector<32x1xf32>
    %502 = arith.addf %498, %501 : vector<32x1xf32>
    %503 = math.rsqrt %502 : vector<32x1xf32>
    %504 = vector.broadcast %503 : vector<32x1xf32> to vector<32x64xf32>
    %505 = arith.mulf %500, %504 : vector<32x64xf32>
    %506 = vector.broadcast %477 : vector<1x64xf32> to vector<32x64xf32>
    %507 = arith.mulf %505, %506 : vector<32x64xf32>
    %508 = vector.broadcast %479 : vector<1x64xf32> to vector<32x64xf32>
    %509 = arith.addf %507, %508 : vector<32x64xf32>
    %510 = arith.truncf %509 : vector<32x64xf32> to vector<32x64xbf16>
    %cst_263 = arith.constant dense<0.000000e+00> : vector<32x512xf32>
    %511 = tpu.matmul %510, %481, %cst_263 {dimension_numbers = #tpu.dot_dimension_numbers<[1], [0], [0], [1], [0, 0, 1, 1], [], []>} : vector<32x64xbf16>, vector<64x512xbf16>, vector<32x512xf32> -> vector<32x512xf32>
    %512 = vector.broadcast %483 : vector<1x512xf32> to vector<32x512xf32>
    %513 = arith.addf %511, %512 : vector<32x512xf32>
    %514 = vector.extract_strided_slice %513 {offsets = [0, 0], sizes = [32, 256], strides = [1, 1]} : vector<32x512xf32> to vector<32x256xf32>
    %515 = vector.extract_strided_slice %513 {offsets = [0, 256], sizes = [32, 256], strides = [1, 1]} : vector<32x512xf32> to vector<32x256xf32>
    %516 = arith.mulf %515, %515 : vector<32x256xf32>
    %517 = arith.mulf %515, %516 : vector<32x256xf32>
    %cst_264 = arith.constant 4.471500e-02 : f32
    %518 = vector.broadcast %cst_264 : f32 to vector<32x256xf32>
    %519 = arith.mulf %518, %517 : vector<32x256xf32>
    %520 = arith.addf %515, %519 : vector<32x256xf32>
    %cst_265 = arith.constant 0.797884583 : f32
    %521 = vector.broadcast %cst_265 : f32 to vector<32x256xf32>
    %522 = arith.mulf %521, %520 : vector<32x256xf32>
    %523 = math.tanh %522 : vector<32x256xf32>
    %cst_266 = arith.constant 1.000000e+00 : f32
    %524 = vector.broadcast %cst_266 : f32 to vector<32x256xf32>
    %525 = arith.addf %524, %523 : vector<32x256xf32>
    %cst_267 = arith.constant 5.000000e-01 : f32
    %526 = vector.broadcast %cst_267 : f32 to vector<32x256xf32>
    %527 = arith.mulf %526, %525 : vector<32x256xf32>
    %528 = arith.mulf %515, %527 : vector<32x256xf32>
    %529 = arith.mulf %514, %528 : vector<32x256xf32>
    %530 = arith.truncf %529 : vector<32x256xf32> to vector<32x256xbf16>
    %cst_268 = arith.constant dense<0.000000e+00> : vector<32x64xf32>
    %531 = tpu.matmul %530, %485, %cst_268 {dimension_numbers = #tpu.dot_dimension_numbers<[1], [0], [0], [1], [0, 0, 1, 1], [], []>} : vector<32x256xbf16>, vector<256x64xbf16>, vector<32x64xf32> -> vector<32x64xf32>
    %532 = vector.broadcast %487 : vector<1x64xf32> to vector<32x64xf32>
    %533 = arith.addf %531, %532 : vector<32x64xf32>
    %534 = arith.addf %533, %475 : vector<32x64xf32>
    %c0_269 = arith.constant 0 : index
    %c0_270 = arith.constant 0 : index
    %535 = vector.load %arg31[%c0_269, %c0_270] : memref<1x2xf32, #tpu.memory_space<vmem>>, vector<1x2xf32>
    %c0_271 = arith.constant 0 : index
    %c0_272 = arith.constant 0 : index
    %536 = vector.load %arg32[%c0_271, %c0_272] : memref<1x2xf32, #tpu.memory_space<vmem>>, vector<1x2xf32>
    %cst_273 = arith.constant dense<0.000000e+00> : vector<8xf32>
    %537 = vector.multi_reduction <add>, %1, %cst_273 [1] : vector<8x2xf32> to vector<8xf32>
    %538 = vector.shape_cast %537 : vector<8xf32> to vector<8x1xf32>
    %cst_274 = arith.constant 2.000000e+00 : f32
    %539 = vector.broadcast %cst_274 : f32 to vector<8x1xf32>
    %540 = arith.divf %538, %539 : vector<8x1xf32>
    %541 = vector.broadcast %540 : vector<8x1xf32> to vector<8x2xf32>
    %542 = arith.subf %1, %541 : vector<8x2xf32>
    %543 = arith.mulf %542, %542 : vector<8x2xf32>
    %cst_275 = arith.constant dense<0.000000e+00> : vector<8xf32>
    %544 = vector.multi_reduction <add>, %543, %cst_275 [1] : vector<8x2xf32> to vector<8xf32>
    %545 = vector.shape_cast %544 : vector<8xf32> to vector<8x1xf32>
    %cst_276 = arith.constant 2.000000e+00 : f32
    %546 = vector.broadcast %cst_276 : f32 to vector<8x1xf32>
    %547 = arith.divf %545, %546 : vector<8x1xf32>
    %548 = vector.broadcast %540 : vector<8x1xf32> to vector<8x2xf32>
    %549 = arith.subf %1, %548 : vector<8x2xf32>
    %cst_277 = arith.constant 9.99999974E-6 : f32
    %550 = vector.broadcast %cst_277 : f32 to vector<8x1xf32>
    %551 = arith.addf %547, %550 : vector<8x1xf32>
    %552 = math.rsqrt %551 : vector<8x1xf32>
    %553 = vector.broadcast %552 : vector<8x1xf32> to vector<8x2xf32>
    %554 = arith.mulf %549, %553 : vector<8x2xf32>
    %555 = vector.broadcast %535 : vector<1x2xf32> to vector<8x2xf32>
    %556 = arith.mulf %554, %555 : vector<8x2xf32>
    %557 = vector.broadcast %536 : vector<1x2xf32> to vector<8x2xf32>
    %558 = arith.addf %556, %557 : vector<8x2xf32>
    %c0_278 = arith.constant 0 : index
    %c0_279 = arith.constant 0 : index
    %559 = vector.load %arg33[%c0_278, %c0_279] : memref<1x64xf32, #tpu.memory_space<vmem>>, vector<1x64xf32>
    %c0_280 = arith.constant 0 : index
    %c0_281 = arith.constant 0 : index
    %560 = vector.load %arg34[%c0_280, %c0_281] : memref<1x64xf32, #tpu.memory_space<vmem>>, vector<1x64xf32>
    %cst_282 = arith.constant dense<0.000000e+00> : vector<32xf32>
    %561 = vector.multi_reduction <add>, %534, %cst_282 [1] : vector<32x64xf32> to vector<32xf32>
    %562 = vector.shape_cast %561 : vector<32xf32> to vector<32x1xf32>
    %cst_283 = arith.constant 6.400000e+01 : f32
    %563 = vector.broadcast %cst_283 : f32 to vector<32x1xf32>
    %564 = arith.divf %562, %563 : vector<32x1xf32>
    %565 = vector.broadcast %564 : vector<32x1xf32> to vector<32x64xf32>
    %566 = arith.subf %534, %565 : vector<32x64xf32>
    %567 = arith.mulf %566, %566 : vector<32x64xf32>
    %cst_284 = arith.constant dense<0.000000e+00> : vector<32xf32>
    %568 = vector.multi_reduction <add>, %567, %cst_284 [1] : vector<32x64xf32> to vector<32xf32>
    %569 = vector.shape_cast %568 : vector<32xf32> to vector<32x1xf32>
    %cst_285 = arith.constant 6.400000e+01 : f32
    %570 = vector.broadcast %cst_285 : f32 to vector<32x1xf32>
    %571 = arith.divf %569, %570 : vector<32x1xf32>
    %572 = vector.broadcast %564 : vector<32x1xf32> to vector<32x64xf32>
    %573 = arith.subf %534, %572 : vector<32x64xf32>
    %cst_286 = arith.constant 9.99999974E-6 : f32
    %574 = vector.broadcast %cst_286 : f32 to vector<32x1xf32>
    %575 = arith.addf %571, %574 : vector<32x1xf32>
    %576 = math.rsqrt %575 : vector<32x1xf32>
    %577 = vector.broadcast %576 : vector<32x1xf32> to vector<32x64xf32>
    %578 = arith.mulf %573, %577 : vector<32x64xf32>
    %579 = vector.broadcast %559 : vector<1x64xf32> to vector<32x64xf32>
    %580 = arith.mulf %578, %579 : vector<32x64xf32>
    %581 = vector.broadcast %560 : vector<1x64xf32> to vector<32x64xf32>
    %582 = arith.addf %580, %581 : vector<32x64xf32>
    %c0_287 = arith.constant 0 : index
    %c0_288 = arith.constant 0 : index
    %583 = vector.load %arg39[%c0_287, %c0_288] : memref<1x2xf32, #tpu.memory_space<vmem>>, vector<1x2xf32>
    %c0_289 = arith.constant 0 : index
    %c0_290 = arith.constant 0 : index
    %c0_291 = arith.constant 0 : index
    %584 = vector.load %arg35[%c0_289, %c0_290, %c0_291] : memref<2x2x16xbf16, #tpu.memory_space<vmem>>, vector<1x2x16xbf16>
    %585 = vector.shape_cast %584 : vector<1x2x16xbf16> to vector<2x16xbf16>
    %586 = arith.extf %585 : vector<2x16xbf16> to vector<2x16xf32>
    %587 = vector.extract_strided_slice %558 {offsets = [0, 0], sizes = [8, 1], strides = [1, 1]} : vector<8x2xf32> to vector<8x1xf32>
    %588 = vector.extract_strided_slice %586 {offsets = [0, 0], sizes = [1, 16], strides = [1, 1]} : vector<2x16xf32> to vector<1x16xf32>
    %589 = vector.broadcast %587 : vector<8x1xf32> to vector<8x16xf32>
    %590 = vector.broadcast %588 : vector<1x16xf32> to vector<8x16xf32>
    %591 = arith.mulf %589, %590 : vector<8x16xf32>
    %592 = vector.extract_strided_slice %558 {offsets = [0, 1], sizes = [8, 1], strides = [1, 1]} : vector<8x2xf32> to vector<8x1xf32>
    %593 = vector.extract_strided_slice %586 {offsets = [1, 0], sizes = [1, 16], strides = [1, 1]} : vector<2x16xf32> to vector<1x16xf32>
    %594 = vector.broadcast %592 : vector<8x1xf32> to vector<8x16xf32>
    %595 = vector.broadcast %593 : vector<1x16xf32> to vector<8x16xf32>
    %596 = arith.mulf %594, %595 : vector<8x16xf32>
    %597 = arith.addf %591, %596 : vector<8x16xf32>
    %cst_292 = arith.constant 2.500000e-01 : f32
    %598 = vector.broadcast %cst_292 : f32 to vector<8x16xf32>
    %599 = arith.mulf %597, %598 : vector<8x16xf32>
    %600 = arith.truncf %599 : vector<8x16xf32> to vector<8x16xbf16>
    %c0_293 = arith.constant 0 : index
    %c0_294 = arith.constant 0 : index
    %c0_295 = arith.constant 0 : index
    %601 = vector.load %arg36[%c0_293, %c0_294, %c0_295] : memref<2x64x16xbf16, #tpu.memory_space<vmem>>, vector<1x64x16xbf16>
    %602 = vector.shape_cast %601 : vector<1x64x16xbf16> to vector<64x16xbf16>
    %603 = arith.truncf %582 : vector<32x64xf32> to vector<32x64xbf16>
    %cst_296 = arith.constant dense<0.000000e+00> : vector<32x16xf32>
    %604 = tpu.matmul %603, %602, %cst_296 {dimension_numbers = #tpu.dot_dimension_numbers<[1], [0], [0], [1], [0, 0, 1, 1], [], []>} : vector<32x64xbf16>, vector<64x16xbf16>, vector<32x16xf32> -> vector<32x16xf32>
    %605 = arith.truncf %604 : vector<32x16xf32> to vector<32x16xbf16>
    %c0_297 = arith.constant 0 : index
    %c0_298 = arith.constant 0 : index
    %c0_299 = arith.constant 0 : index
    %606 = vector.load %arg37[%c0_297, %c0_298, %c0_299] : memref<2x64x16xbf16, #tpu.memory_space<vmem>>, vector<1x64x16xbf16>
    %607 = vector.shape_cast %606 : vector<1x64x16xbf16> to vector<64x16xbf16>
    %608 = arith.truncf %582 : vector<32x64xf32> to vector<32x64xbf16>
    %cst_300 = arith.constant dense<0.000000e+00> : vector<32x16xf32>
    %609 = tpu.matmul %608, %607, %cst_300 {dimension_numbers = #tpu.dot_dimension_numbers<[1], [0], [0], [1], [0, 0, 1, 1], [], []>} : vector<32x64xbf16>, vector<64x16xbf16>, vector<32x16xf32> -> vector<32x16xf32>
    %610 = arith.truncf %609 : vector<32x16xf32> to vector<32x16xbf16>
    %cst_301 = arith.constant dense<0.000000e+00> : vector<8x32xf32>
    %611 = tpu.matmul %600, %605, %cst_301 {dimension_numbers = #tpu.dot_dimension_numbers<[1], [1], [0], [0], [0, 0, 1, 0], [], []>} : vector<8x16xbf16>, vector<32x16xbf16>, vector<8x32xf32> -> vector<8x32xf32>
    %cst_302 = arith.constant dense<0xFF800000> : vector<8xf32>
    %612 = vector.multi_reduction <maximumf>, %611, %cst_302 [1] : vector<8x32xf32> to vector<8xf32>
    %613 = vector.shape_cast %612 : vector<8xf32> to vector<8x1xf32>
    %614 = vector.broadcast %613 : vector<8x1xf32> to vector<8x32xf32>
    %615 = arith.subf %611, %614 : vector<8x32xf32>
    %616 = math.exp %615 : vector<8x32xf32>
    %cst_303 = arith.constant dense<0.000000e+00> : vector<8xf32>
    %617 = vector.multi_reduction <add>, %616, %cst_303 [1] : vector<8x32xf32> to vector<8xf32>
    %618 = vector.shape_cast %617 : vector<8xf32> to vector<8x1xf32>
    %619 = tpu.reciprocal %618 {approx = true} : vector<8x1xf32> -> vector<8x1xf32>
    %620 = vector.broadcast %619 : vector<8x1xf32> to vector<8x32xf32>
    %621 = arith.mulf %616, %620 : vector<8x32xf32>
    %622 = arith.truncf %621 : vector<8x32xf32> to vector<8x32xbf16>
    %cst_304 = arith.constant dense<0.000000e+00> : vector<8x16xf32>
    %623 = tpu.matmul %622, %610, %cst_304 {dimension_numbers = #tpu.dot_dimension_numbers<[1], [0], [0], [1], [0, 0, 1, 1], [], []>} : vector<8x32xbf16>, vector<32x16xbf16>, vector<8x16xf32> -> vector<8x16xf32>
    %624 = arith.truncf %623 : vector<8x16xf32> to vector<8x16xbf16>
    %c0_305 = arith.constant 0 : index
    %c0_306 = arith.constant 0 : index
    %c0_307 = arith.constant 0 : index
    %625 = vector.load %arg38[%c0_305, %c0_306, %c0_307] : memref<2x16x2xbf16, #tpu.memory_space<vmem>>, vector<1x16x2xbf16>
    %626 = vector.shape_cast %625 : vector<1x16x2xbf16> to vector<16x2xbf16>
    %cst_308 = arith.constant dense<0.000000e+00> : vector<8x2xf32>
    %627 = tpu.matmul %624, %626, %cst_308 {dimension_numbers = #tpu.dot_dimension_numbers<[1], [0], [0], [1], [0, 0, 1, 1], [], []>} : vector<8x16xbf16>, vector<16x2xbf16>, vector<8x2xf32> -> vector<8x2xf32>
    %c1_309 = arith.constant 1 : index
    %c0_310 = arith.constant 0 : index
    %c0_311 = arith.constant 0 : index
    %628 = vector.load %arg35[%c1_309, %c0_310, %c0_311] : memref<2x2x16xbf16, #tpu.memory_space<vmem>>, vector<1x2x16xbf16>
    %629 = vector.shape_cast %628 : vector<1x2x16xbf16> to vector<2x16xbf16>
    %630 = arith.extf %629 : vector<2x16xbf16> to vector<2x16xf32>
    %631 = vector.extract_strided_slice %558 {offsets = [0, 0], sizes = [8, 1], strides = [1, 1]} : vector<8x2xf32> to vector<8x1xf32>
    %632 = vector.extract_strided_slice %630 {offsets = [0, 0], sizes = [1, 16], strides = [1, 1]} : vector<2x16xf32> to vector<1x16xf32>
    %633 = vector.broadcast %631 : vector<8x1xf32> to vector<8x16xf32>
    %634 = vector.broadcast %632 : vector<1x16xf32> to vector<8x16xf32>
    %635 = arith.mulf %633, %634 : vector<8x16xf32>
    %636 = vector.extract_strided_slice %558 {offsets = [0, 1], sizes = [8, 1], strides = [1, 1]} : vector<8x2xf32> to vector<8x1xf32>
    %637 = vector.extract_strided_slice %630 {offsets = [1, 0], sizes = [1, 16], strides = [1, 1]} : vector<2x16xf32> to vector<1x16xf32>
    %638 = vector.broadcast %636 : vector<8x1xf32> to vector<8x16xf32>
    %639 = vector.broadcast %637 : vector<1x16xf32> to vector<8x16xf32>
    %640 = arith.mulf %638, %639 : vector<8x16xf32>
    %641 = arith.addf %635, %640 : vector<8x16xf32>
    %cst_312 = arith.constant 2.500000e-01 : f32
    %642 = vector.broadcast %cst_312 : f32 to vector<8x16xf32>
    %643 = arith.mulf %641, %642 : vector<8x16xf32>
    %644 = arith.truncf %643 : vector<8x16xf32> to vector<8x16xbf16>
    %c1_313 = arith.constant 1 : index
    %c0_314 = arith.constant 0 : index
    %c0_315 = arith.constant 0 : index
    %645 = vector.load %arg36[%c1_313, %c0_314, %c0_315] : memref<2x64x16xbf16, #tpu.memory_space<vmem>>, vector<1x64x16xbf16>
    %646 = vector.shape_cast %645 : vector<1x64x16xbf16> to vector<64x16xbf16>
    %647 = arith.truncf %582 : vector<32x64xf32> to vector<32x64xbf16>
    %cst_316 = arith.constant dense<0.000000e+00> : vector<32x16xf32>
    %648 = tpu.matmul %647, %646, %cst_316 {dimension_numbers = #tpu.dot_dimension_numbers<[1], [0], [0], [1], [0, 0, 1, 1], [], []>} : vector<32x64xbf16>, vector<64x16xbf16>, vector<32x16xf32> -> vector<32x16xf32>
    %649 = arith.truncf %648 : vector<32x16xf32> to vector<32x16xbf16>
    %c1_317 = arith.constant 1 : index
    %c0_318 = arith.constant 0 : index
    %c0_319 = arith.constant 0 : index
    %650 = vector.load %arg37[%c1_317, %c0_318, %c0_319] : memref<2x64x16xbf16, #tpu.memory_space<vmem>>, vector<1x64x16xbf16>
    %651 = vector.shape_cast %650 : vector<1x64x16xbf16> to vector<64x16xbf16>
    %652 = arith.truncf %582 : vector<32x64xf32> to vector<32x64xbf16>
    %cst_320 = arith.constant dense<0.000000e+00> : vector<32x16xf32>
    %653 = tpu.matmul %652, %651, %cst_320 {dimension_numbers = #tpu.dot_dimension_numbers<[1], [0], [0], [1], [0, 0, 1, 1], [], []>} : vector<32x64xbf16>, vector<64x16xbf16>, vector<32x16xf32> -> vector<32x16xf32>
    %654 = arith.truncf %653 : vector<32x16xf32> to vector<32x16xbf16>
    %cst_321 = arith.constant dense<0.000000e+00> : vector<8x32xf32>
    %655 = tpu.matmul %644, %649, %cst_321 {dimension_numbers = #tpu.dot_dimension_numbers<[1], [1], [0], [0], [0, 0, 1, 0], [], []>} : vector<8x16xbf16>, vector<32x16xbf16>, vector<8x32xf32> -> vector<8x32xf32>
    %cst_322 = arith.constant dense<0xFF800000> : vector<8xf32>
    %656 = vector.multi_reduction <maximumf>, %655, %cst_322 [1] : vector<8x32xf32> to vector<8xf32>
    %657 = vector.shape_cast %656 : vector<8xf32> to vector<8x1xf32>
    %658 = vector.broadcast %657 : vector<8x1xf32> to vector<8x32xf32>
    %659 = arith.subf %655, %658 : vector<8x32xf32>
    %660 = math.exp %659 : vector<8x32xf32>
    %cst_323 = arith.constant dense<0.000000e+00> : vector<8xf32>
    %661 = vector.multi_reduction <add>, %660, %cst_323 [1] : vector<8x32xf32> to vector<8xf32>
    %662 = vector.shape_cast %661 : vector<8xf32> to vector<8x1xf32>
    %663 = tpu.reciprocal %662 {approx = true} : vector<8x1xf32> -> vector<8x1xf32>
    %664 = vector.broadcast %663 : vector<8x1xf32> to vector<8x32xf32>
    %665 = arith.mulf %660, %664 : vector<8x32xf32>
    %666 = arith.truncf %665 : vector<8x32xf32> to vector<8x32xbf16>
    %cst_324 = arith.constant dense<0.000000e+00> : vector<8x16xf32>
    %667 = tpu.matmul %666, %654, %cst_324 {dimension_numbers = #tpu.dot_dimension_numbers<[1], [0], [0], [1], [0, 0, 1, 1], [], []>} : vector<8x32xbf16>, vector<32x16xbf16>, vector<8x16xf32> -> vector<8x16xf32>
    %668 = arith.truncf %667 : vector<8x16xf32> to vector<8x16xbf16>
    %c1_325 = arith.constant 1 : index
    %c0_326 = arith.constant 0 : index
    %c0_327 = arith.constant 0 : index
    %669 = vector.load %arg38[%c1_325, %c0_326, %c0_327] : memref<2x16x2xbf16, #tpu.memory_space<vmem>>, vector<1x16x2xbf16>
    %670 = vector.shape_cast %669 : vector<1x16x2xbf16> to vector<16x2xbf16>
    %cst_328 = arith.constant dense<0.000000e+00> : vector<8x2xf32>
    %671 = tpu.matmul %668, %670, %cst_328 {dimension_numbers = #tpu.dot_dimension_numbers<[1], [0], [0], [1], [0, 0, 1, 1], [], []>} : vector<8x16xbf16>, vector<16x2xbf16>, vector<8x2xf32> -> vector<8x2xf32>
    %672 = arith.addf %627, %671 : vector<8x2xf32>
    %673 = vector.broadcast %583 : vector<1x2xf32> to vector<8x2xf32>
    %674 = arith.addf %672, %673 : vector<8x2xf32>
    %c0_329 = arith.constant 0 : index
    %c0_330 = arith.constant 0 : index
    %675 = vector.load %arg40[%c0_329, %c0_330] : memref<1x2xf32, #tpu.memory_space<vmem>>, vector<1x2xf32>
    %676 = vector.broadcast %675 : vector<1x2xf32> to vector<8x2xf32>
    %677 = arith.mulf %674, %676 : vector<8x2xf32>
    %cst_331 = arith.constant dense<0.000000e+00> : vector<8xf32>
    %678 = vector.multi_reduction <add>, %677, %cst_331 [1] : vector<8x2xf32> to vector<8xf32>
    %679 = vector.shape_cast %678 : vector<8xf32> to vector<8x1xf32>
    %c0_332 = arith.constant 0 : index
    %c0_333 = arith.constant 0 : index
    %680 = vector.load %arg41[%c0_332, %c0_333] : memref<1x1xf32, #tpu.memory_space<vmem>>, vector<1x1xf32>
    %681 = vector.broadcast %680 : vector<1x1xf32> to vector<8x1xf32>
    %682 = arith.addf %679, %681 : vector<8x1xf32>
    %c0_334 = arith.constant 0 : index
    %c0_335 = arith.constant 0 : index
    %c0_336 = arith.constant 0 : index
    %683 = vector.load %arg42[%c0_334, %c0_335, %c0_336] : memref<1x8x1xf32, #tpu.memory_space<vmem>>, vector<1x8x1xf32>
    %684 = vector.shape_cast %683 : vector<1x8x1xf32> to vector<8x1xf32>
    %685 = vector.shape_cast %682 : vector<8x1xf32> to vector<1x8x1xf32>
    tpu.vector_store %arg42[%c0_334, %c0_335, %c0_336], %685 {strides = array<i32>} : memref<1x8x1xf32, #tpu.memory_space<vmem>>, vector<1x8x1xf32>,
    return
  }
  func.func @transform_0(%arg0: i32) -> (i32, i32, i32) {
    %c0_i32 = arith.constant 0 : i32
    %c0_i32_0 = arith.constant 0 : i32
    %c0_i32_1 = arith.constant 0 : i32
    return %arg0, %c0_i32, %c0_i32_0 : i32, i32, i32
  }
  func.func @transform_1(%arg0: i32) -> (i32, i32) {
    %c0_i32 = arith.constant 0 : i32
    %c0_i32_0 = arith.constant 0 : i32
    %c0_i32_1 = arith.constant 0 : i32
    return %c0_i32, %c0_i32_0 : i32, i32
  }
  func.func @transform_2(%arg0: i32) -> (i32, i32) {
    %c0_i32 = arith.constant 0 : i32
    %c0_i32_0 = arith.constant 0 : i32
    %c0_i32_1 = arith.constant 0 : i32
    return %c0_i32, %c0_i32_0 : i32, i32
  }
  func.func @transform_3(%arg0: i32) -> (i32, i32) {
    %c0_i32 = arith.constant 0 : i32
    %c0_i32_0 = arith.constant 0 : i32
    %c0_i32_1 = arith.constant 0 : i32
    return %c0_i32, %c0_i32_0 : i32, i32
  }
  func.func @transform_4(%arg0: i32) -> (i32, i32) {
    %c0_i32 = arith.constant 0 : i32
    %c0_i32_0 = arith.constant 0 : i32
    %c0_i32_1 = arith.constant 0 : i32
    return %c0_i32, %c0_i32_0 : i32, i32
  }
  func.func @transform_5(%arg0: i32) -> (i32, i32) {
    %c0_i32 = arith.constant 0 : i32
    %c0_i32_0 = arith.constant 0 : i32
    %c0_i32_1 = arith.constant 0 : i32
    return %c0_i32, %c0_i32_0 : i32, i32
  }
  func.func @transform_6(%arg0: i32) -> (i32, i32, i32) {
    %c0_i32 = arith.constant 0 : i32
    %c0_i32_0 = arith.constant 0 : i32
    %c0_i32_1 = arith.constant 0 : i32
    %c0_i32_2 = arith.constant 0 : i32
    return %c0_i32, %c0_i32_0, %c0_i32_1 : i32, i32, i32
  }
  func.func @transform_7(%arg0: i32) -> (i32, i32, i32) {
    %c0_i32 = arith.constant 0 : i32
    %c0_i32_0 = arith.constant 0 : i32
    %c0_i32_1 = arith.constant 0 : i32
    %c0_i32_2 = arith.constant 0 : i32
    return %c0_i32, %c0_i32_0, %c0_i32_1 : i32, i32, i32
  }
  func.func @transform_8(%arg0: i32) -> (i32, i32, i32) {
    %c0_i32 = arith.constant 0 : i32
    %c0_i32_0 = arith.constant 0 : i32
    %c0_i32_1 = arith.constant 0 : i32
    %c0_i32_2 = arith.constant 0 : i32
    return %c0_i32, %c0_i32_0, %c0_i32_1 : i32, i32, i32
  }
  func.func @transform_9(%arg0: i32) -> (i32, i32, i32) {
    %c0_i32 = arith.constant 0 : i32
    %c0_i32_0 = arith.constant 0 : i32
    %c0_i32_1 = arith.constant 0 : i32
    %c0_i32_2 = arith.constant 0 : i32
    return %c0_i32, %c0_i32_0, %c0_i32_1 : i32, i32, i32
  }
  func.func @transform_10(%arg0: i32) -> (i32, i32) {
    %c0_i32 = arith.constant 0 : i32
    %c0_i32_0 = arith.constant 0 : i32
    %c0_i32_1 = arith.constant 0 : i32
    return %c0_i32, %c0_i32_0 : i32, i32
  }
  func.func @transform_11(%arg0: i32) -> (i32, i32) {
    %c0_i32 = arith.constant 0 : i32
    %c0_i32_0 = arith.constant 0 : i32
    %c0_i32_1 = arith.constant 0 : i32
    return %c0_i32, %c0_i32_0 : i32, i32
  }
  func.func @transform_12(%arg0: i32) -> (i32, i32) {
    %c0_i32 = arith.constant 0 : i32
    %c0_i32_0 = arith.constant 0 : i32
    %c0_i32_1 = arith.constant 0 : i32
    return %c0_i32, %c0_i32_0 : i32, i32
  }
  func.func @transform_13(%arg0: i32) -> (i32, i32) {
    %c0_i32 = arith.constant 0 : i32
    %c0_i32_0 = arith.constant 0 : i32
    %c0_i32_1 = arith.constant 0 : i32
    return %c0_i32, %c0_i32_0 : i32, i32
  }
  func.func @transform_14(%arg0: i32) -> (i32, i32) {
    %c0_i32 = arith.constant 0 : i32
    %c0_i32_0 = arith.constant 0 : i32
    %c0_i32_1 = arith.constant 0 : i32
    return %c0_i32, %c0_i32_0 : i32, i32
  }
  func.func @transform_15(%arg0: i32) -> (i32, i32) {
    %c0_i32 = arith.constant 0 : i32
    %c0_i32_0 = arith.constant 0 : i32
    %c0_i32_1 = arith.constant 0 : i32
    return %c0_i32, %c0_i32_0 : i32, i32
  }
  func.func @transform_16(%arg0: i32) -> (i32, i32) {
    %c0_i32 = arith.constant 0 : i32
    %c0_i32_0 = arith.constant 0 : i32
    %c0_i32_1 = arith.constant 0 : i32
    return %c0_i32, %c0_i32_0 : i32, i32
  }
  func.func @transform_17(%arg0: i32) -> (i32, i32, i32) {
    %c0_i32 = arith.constant 0 : i32
    %c0_i32_0 = arith.constant 0 : i32
    %c0_i32_1 = arith.constant 0 : i32
    %c0_i32_2 = arith.constant 0 : i32
    return %c0_i32, %c0_i32_0, %c0_i32_1 : i32, i32, i32
  }
  func.func @transform_18(%arg0: i32) -> (i32, i32, i32) {
    %c0_i32 = arith.constant 0 : i32
    %c0_i32_0 = arith.constant 0 : i32
    %c0_i32_1 = arith.constant 0 : i32
    %c0_i32_2 = arith.constant 0 : i32
    return %c0_i32, %c0_i32_0, %c0_i32_1 : i32, i32, i32
  }
  func.func @transform_19(%arg0: i32) -> (i32, i32, i32, i32) {
    %c0_i32 = arith.constant 0 : i32
    %c0_i32_0 = arith.constant 0 : i32
    %c0_i32_1 = arith.constant 0 : i32
    %c0_i32_2 = arith.constant 0 : i32
    %c0_i32_3 = arith.constant 0 : i32
    return %c0_i32, %c0_i32_0, %c0_i32_1, %c0_i32_2 : i32, i32, i32, i32
  }
  func.func @transform_20(%arg0: i32) -> (i32, i32, i32, i32) {
    %c0_i32 = arith.constant 0 : i32
    %c0_i32_0 = arith.constant 0 : i32
    %c0_i32_1 = arith.constant 0 : i32
    %c0_i32_2 = arith.constant 0 : i32
    %c0_i32_3 = arith.constant 0 : i32
    return %c0_i32, %c0_i32_0, %c0_i32_1, %c0_i32_2 : i32, i32, i32, i32
  }
  func.func @transform_21(%arg0: i32) -> (i32, i32, i32, i32) {
    %c0_i32 = arith.constant 0 : i32
    %c0_i32_0 = arith.constant 0 : i32
    %c0_i32_1 = arith.constant 0 : i32
    %c0_i32_2 = arith.constant 0 : i32
    %c0_i32_3 = arith.constant 0 : i32
    return %c0_i32, %c0_i32_0, %c0_i32_1, %c0_i32_2 : i32, i32, i32, i32
  }
  func.func @transform_22(%arg0: i32) -> (i32, i32, i32, i32) {
    %c0_i32 = arith.constant 0 : i32
    %c0_i32_0 = arith.constant 0 : i32
    %c0_i32_1 = arith.constant 0 : i32
    %c0_i32_2 = arith.constant 0 : i32
    %c0_i32_3 = arith.constant 0 : i32
    return %c0_i32, %c0_i32_0, %c0_i32_1, %c0_i32_2 : i32, i32, i32, i32
  }
  func.func @transform_23(%arg0: i32) -> (i32, i32, i32) {
    %c0_i32 = arith.constant 0 : i32
    %c0_i32_0 = arith.constant 0 : i32
    %c0_i32_1 = arith.constant 0 : i32
    %c0_i32_2 = arith.constant 0 : i32
    return %c0_i32, %c0_i32_0, %c0_i32_1 : i32, i32, i32
  }
  func.func @transform_24(%arg0: i32) -> (i32, i32, i32) {
    %c0_i32 = arith.constant 0 : i32
    %c0_i32_0 = arith.constant 0 : i32
    %c0_i32_1 = arith.constant 0 : i32
    %c0_i32_2 = arith.constant 0 : i32
    return %c0_i32, %c0_i32_0, %c0_i32_1 : i32, i32, i32
  }
  func.func @transform_25(%arg0: i32) -> (i32, i32, i32) {
    %c0_i32 = arith.constant 0 : i32
    %c0_i32_0 = arith.constant 0 : i32
    %c0_i32_1 = arith.constant 0 : i32
    %c0_i32_2 = arith.constant 0 : i32
    return %c0_i32, %c0_i32_0, %c0_i32_1 : i32, i32, i32
  }
  func.func @transform_26(%arg0: i32) -> (i32, i32, i32) {
    %c0_i32 = arith.constant 0 : i32
    %c0_i32_0 = arith.constant 0 : i32
    %c0_i32_1 = arith.constant 0 : i32
    %c0_i32_2 = arith.constant 0 : i32
    return %c0_i32, %c0_i32_0, %c0_i32_1 : i32, i32, i32
  }
  func.func @transform_27(%arg0: i32) -> (i32, i32, i32) {
    %c0_i32 = arith.constant 0 : i32
    %c0_i32_0 = arith.constant 0 : i32
    %c0_i32_1 = arith.constant 0 : i32
    %c0_i32_2 = arith.constant 0 : i32
    return %c0_i32, %c0_i32_0, %c0_i32_1 : i32, i32, i32
  }
  func.func @transform_28(%arg0: i32) -> (i32, i32, i32) {
    %c0_i32 = arith.constant 0 : i32
    %c0_i32_0 = arith.constant 0 : i32
    %c0_i32_1 = arith.constant 0 : i32
    %c0_i32_2 = arith.constant 0 : i32
    return %c0_i32, %c0_i32_0, %c0_i32_1 : i32, i32, i32
  }
  func.func @transform_29(%arg0: i32) -> (i32, i32, i32) {
    %c0_i32 = arith.constant 0 : i32
    %c0_i32_0 = arith.constant 0 : i32
    %c0_i32_1 = arith.constant 0 : i32
    %c0_i32_2 = arith.constant 0 : i32
    return %c0_i32, %c0_i32_0, %c0_i32_1 : i32, i32, i32
  }
  func.func @transform_30(%arg0: i32) -> (i32, i32) {
    %c0_i32 = arith.constant 0 : i32
    %c0_i32_0 = arith.constant 0 : i32
    %c0_i32_1 = arith.constant 0 : i32
    return %c0_i32, %c0_i32_0 : i32, i32
  }
  func.func @transform_31(%arg0: i32) -> (i32, i32) {
    %c0_i32 = arith.constant 0 : i32
    %c0_i32_0 = arith.constant 0 : i32
    %c0_i32_1 = arith.constant 0 : i32
    return %c0_i32, %c0_i32_0 : i32, i32
  }
  func.func @transform_32(%arg0: i32) -> (i32, i32) {
    %c0_i32 = arith.constant 0 : i32
    %c0_i32_0 = arith.constant 0 : i32
    %c0_i32_1 = arith.constant 0 : i32
    return %c0_i32, %c0_i32_0 : i32, i32
  }
  func.func @transform_33(%arg0: i32) -> (i32, i32) {
    %c0_i32 = arith.constant 0 : i32
    %c0_i32_0 = arith.constant 0 : i32
    %c0_i32_1 = arith.constant 0 : i32
    return %c0_i32, %c0_i32_0 : i32, i32
  }
  func.func @transform_34(%arg0: i32) -> (i32, i32, i32) {
    %c0_i32 = arith.constant 0 : i32
    %c0_i32_0 = arith.constant 0 : i32
    %c0_i32_1 = arith.constant 0 : i32
    %c0_i32_2 = arith.constant 0 : i32
    return %c0_i32, %c0_i32_0, %c0_i32_1 : i32, i32, i32
  }
  func.func @transform_35(%arg0: i32) -> (i32, i32, i32) {
    %c0_i32 = arith.constant 0 : i32
    %c0_i32_0 = arith.constant 0 : i32
    %c0_i32_1 = arith.constant 0 : i32
    %c0_i32_2 = arith.constant 0 : i32
    return %c0_i32, %c0_i32_0, %c0_i32_1 : i32, i32, i32
  }
  func.func @transform_36(%arg0: i32) -> (i32, i32, i32) {
    %c0_i32 = arith.constant 0 : i32
    %c0_i32_0 = arith.constant 0 : i32
    %c0_i32_1 = arith.constant 0 : i32
    %c0_i32_2 = arith.constant 0 : i32
    return %c0_i32, %c0_i32_0, %c0_i32_1 : i32, i32, i32
  }
  func.func @transform_37(%arg0: i32) -> (i32, i32, i32) {
    %c0_i32 = arith.constant 0 : i32
    %c0_i32_0 = arith.constant 0 : i32
    %c0_i32_1 = arith.constant 0 : i32
    %c0_i32_2 = arith.constant 0 : i32
    return %c0_i32, %c0_i32_0, %c0_i32_1 : i32, i32, i32
  }
  func.func @transform_38(%arg0: i32) -> (i32, i32) {
    %c0_i32 = arith.constant 0 : i32
    %c0_i32_0 = arith.constant 0 : i32
    %c0_i32_1 = arith.constant 0 : i32
    return %c0_i32, %c0_i32_0 : i32, i32
  }
  func.func @transform_39(%arg0: i32) -> (i32, i32) {
    %c0_i32 = arith.constant 0 : i32
    %c0_i32_0 = arith.constant 0 : i32
    %c0_i32_1 = arith.constant 0 : i32
    return %c0_i32, %c0_i32_0 : i32, i32
  }
  func.func @transform_40(%arg0: i32) -> (i32, i32) {
    %c0_i32 = arith.constant 0 : i32
    %c0_i32_0 = arith.constant 0 : i32
    %c0_i32_1 = arith.constant 0 : i32
    return %c0_i32, %c0_i32_0 : i32, i32
  }
  func.func @transform_41(%arg0: i32) -> (i32, i32, i32) {
    %c0_i32 = arith.constant 0 : i32
    %c0_i32_0 = arith.constant 0 : i32
    %c0_i32_1 = arith.constant 0 : i32
    return %arg0, %c0_i32, %c0_i32_0 : i32, i32, i32
  }
}

</mosaic_0001>

<llo_original>
// kernel: _lambda_.1
$region0: #{_lambda_.1}
  #allocation0 [shape = 'u32[]', space=smem, size = 0x4, offset = 0x4, fixed_abs, tag = 'smem constant byte address 0x4 - core index']
  #allocation1 [shape = 'u32[144,128]{1,0:T(1,128)}', space=vmem, size = 0x12000, scoped, tag = 'internal scratch']
  #allocation2 [shape = 'f32[1,1]{1,0:T(1,128)S(1)}', space=vmem, size = 0x200, scoped, tag = 'scoped memory for _lambda_.1']
  %s0 = inlined_call_operand.smem [shape: u32[42], index: -1, kind: input, shape index: {}]
  %s1 = sld [smem:[%s0]]
  %s2 = scalar_lea.smem %s0, 1
  %s3 = sld [smem:[%s2]]
  %s4 = scalar_lea.smem %s0, 2
  %s5 = sld [smem:[%s4]]
  %s6 = scalar_lea.smem %s0, 3
  %s7 = sld [smem:[%s6]]
  %s8 = scalar_lea.smem %s0, 4
  %s9 = sld [smem:[%s8]]
  %s10 = scalar_lea.smem %s0, 5
  %s11 = sld [smem:[%s10]]
  %s12 = scalar_lea.smem %s0, 6
  %s13 = sld [smem:[%s12]]
  %s14 = scalar_lea.smem %s0, 7
  %s15 = sld [smem:[%s14]]
  %s16 = scalar_lea.smem %s0, 8
  %s17 = sld [smem:[%s16]]
  %s18 = scalar_lea.smem %s0, 9
  %s19 = sld [smem:[%s18]]
  %s20 = scalar_lea.smem %s0, 10
  %s21 = sld [smem:[%s20]]
  %s22 = scalar_lea.smem %s0, 11
  %s23 = sld [smem:[%s22]]
  %s24 = scalar_lea.smem %s0, 12
  %s25 = sld [smem:[%s24]]
  %s26 = scalar_lea.smem %s0, 13
  %s27 = sld [smem:[%s26]]
  %s28 = scalar_lea.smem %s0, 14
  %s29 = sld [smem:[%s28]]
  %s30 = scalar_lea.smem %s0, 15
  %s31 = sld [smem:[%s30]]
  %s32 = scalar_lea.smem %s0, 16
  %s33 = sld [smem:[%s32]]
  %s34 = scalar_lea.smem %s0, 17
  %s35 = sld [smem:[%s34]]
  %s36 = scalar_lea.smem %s0, 18
  %s37 = sld [smem:[%s36]]
  %s38 = scalar_lea.smem %s0, 19
  %s39 = sld [smem:[%s38]]
  %s40 = scalar_lea.smem %s0, 20
  %s41 = sld [smem:[%s40]]
  %s42 = scalar_lea.smem %s0, 21
  %s43 = sld [smem:[%s42]]
  %s44 = scalar_lea.smem %s0, 22
  %s45 = sld [smem:[%s44]]
  %s46 = scalar_lea.smem %s0, 23
  %s47 = sld [smem:[%s46]]
  %s48 = scalar_lea.smem %s0, 24
  %s49 = sld [smem:[%s48]]
  %s50 = scalar_lea.smem %s0, 25
  %s51 = sld [smem:[%s50]]
  %s52 = scalar_lea.smem %s0, 26
  %s53 = sld [smem:[%s52]]
  %s54 = scalar_lea.smem %s0, 27
  %s55 = sld [smem:[%s54]]
  %s56 = scalar_lea.smem %s0, 28
  %s57 = sld [smem:[%s56]]
  %s58 = scalar_lea.smem %s0, 29
  %s59 = sld [smem:[%s58]]
  %s60 = scalar_lea.smem %s0, 30
  %s61 = sld [smem:[%s60]]
  %s62 = scalar_lea.smem %s0, 31
  %s63 = sld [smem:[%s62]]
  %s64 = scalar_lea.smem %s0, 32
  %s65 = sld [smem:[%s64]]
  %s66 = scalar_lea.smem %s0, 33
  %s67 = sld [smem:[%s66]]
  %s68 = scalar_lea.smem %s0, 34
  %s69 = sld [smem:[%s68]]
  %s70 = scalar_lea.smem %s0, 35
  %s71 = sld [smem:[%s70]]
  %s72 = scalar_lea.smem %s0, 36
  %s73 = sld [smem:[%s72]]
  %s74 = scalar_lea.smem %s0, 37
  %s75 = sld [smem:[%s74]]
  %s76 = scalar_lea.smem %s0, 38
  %s77 = sld [smem:[%s76]]
  %s78 = scalar_lea.smem %s0, 39
  %s79 = sld [smem:[%s78]]
  %s80 = scalar_lea.smem %s0, 40
  %s81 = sld [smem:[%s80]]
  %s82 = scalar_lea.smem %s0, 41
  %s83 = sld [smem:[%s82]]
  %s84 = sld [smem:[#allocation0]]
  $region197: #{_lambda_.1} parent=0
    _
  %s86 = ssub.s32 1, %s84
  %s87 = scalar_select 0, %s86, %s84
  %v88 = vstv %s81
  %89 = vst [vmem:[#allocation2] sm:$0x1] %v88
  loop: start=0, step=1, limit=4
  $region2: #{_lambda_.1} parent=0 // loop_pre_header
    _
  $region3: #{_lambda_.1} parent=0 // loop_header
    %s91 = sphi 0, %s95
    %p92 = scmp.ge.s32.totalorder %s91, 4
    %s101 = sphi 0, %s103
    %s104 = sphi 0, %s101
    %s105 = sphi 0, %s104
    %s121 = sphi 0, %s105
    %s125 = sphi 0, %s125
    %s127 = sphi 0, %s125
    %s128 = sphi 0, %s127
    %s142 = sphi 0, %s128
    %s146 = sphi 0, %s146
    %s148 = sphi 0, %s146
    %s149 = sphi 0, %s148
    %s163 = sphi 0, %s149
    %s167 = sphi 0, %s167
    %s169 = sphi 0, %s167
    %s170 = sphi 0, %s169
    %s184 = sphi 0, %s170
    %s188 = sphi 0, %s188
    %s190 = sphi 0, %s188
    %s191 = sphi 0, %s190
    %s205 = sphi 0, %s191
    %s209 = sphi 0, %s209
    %s211 = sphi 0, %s209
    %s212 = sphi 0, %s211
    %s226 = sphi 0, %s212
    %s230 = sphi 0, %s230
    %s232 = sphi 0, %s230
    %s233 = sphi 0, %s232
    %s247 = sphi 0, %s233
    %s251 = sphi 0, %s251
    %s253 = sphi 0, %s251
    %s254 = sphi 0, %s253
    %s268 = sphi 0, %s254
    %s272 = sphi 0, %s272
    %s274 = sphi 0, %s272
    %s275 = sphi 0, %s274
    %s289 = sphi 0, %s275
    %s293 = sphi 0, %s293
    %s295 = sphi 0, %s293
    %s296 = sphi 0, %s295
    %s310 = sphi 0, %s296
    %s314 = sphi 0, %s314
    %s316 = sphi 0, %s314
    %s317 = sphi 0, %s316
    %s331 = sphi 0, %s317
    %s335 = sphi 0, %s335
    %s337 = sphi 0, %s335
    %s338 = sphi 0, %s337
    %s352 = sphi 0, %s338
    %s356 = sphi 0, %s356
    %s358 = sphi 0, %s356
    %s359 = sphi 0, %s358
    %s373 = sphi 0, %s359
    %s377 = sphi 0, %s377
    %s379 = sphi 0, %s377
    %s380 = sphi 0, %s379
    %s394 = sphi 0, %s380
    %s398 = sphi 0, %s398
    %s400 = sphi 0, %s398
    %s401 = sphi 0, %s400
    %s415 = sphi 0, %s401
    %s419 = sphi 0, %s419
    %s421 = sphi 0, %s419
    %s422 = sphi 0, %s421
    %s436 = sphi 0, %s422
    %s440 = sphi 0, %s440
    %s442 = sphi 0, %s440
    %s443 = sphi 0, %s442
    %s457 = sphi 0, %s443
    %s461 = sphi 0, %s461
    %s463 = sphi 0, %s461
    %s464 = sphi 0, %s463
    %s478 = sphi 0, %s464
    %s482 = sphi 0, %s482
    %s484 = sphi 0, %s482
    %s485 = sphi 0, %s484
    %s499 = sphi 0, %s485
    %s503 = sphi 0, %s503
    %s505 = sphi 0, %s503
    %s506 = sphi 0, %s505
    %s520 = sphi 0, %s506
    %s524 = sphi 0, %s524
    %s526 = sphi 0, %s524
    %s527 = sphi 0, %s526
    %s541 = sphi 0, %s527
    %s545 = sphi 0, %s545
    %s547 = sphi 0, %s545
    %s548 = sphi 0, %s547
    %s562 = sphi 0, %s548
    %s566 = sphi 0, %s566
    %s568 = sphi 0, %s566
    %s569 = sphi 0, %s568
    %s583 = sphi 0, %s569
    %s587 = sphi 0, %s587
    %s589 = sphi 0, %s587
    %s590 = sphi 0, %s589
    %s604 = sphi 0, %s590
    %s608 = sphi 0, %s608
    %s610 = sphi 0, %s608
    %s611 = sphi 0, %s610
    %s625 = sphi 0, %s611
    %s629 = sphi 0, %s629
    %s631 = sphi 0, %s629
    %s632 = sphi 0, %s631
    %s646 = sphi 0, %s632
    %s650 = sphi 0, %s650
    %s652 = sphi 0, %s650
    %s653 = sphi 0, %s652
    %s667 = sphi 0, %s653
    %s671 = sphi 0, %s671
    %s673 = sphi 0, %s671
    %s674 = sphi 0, %s673
    %s688 = sphi 0, %s674
    %s692 = sphi 0, %s692
    %s694 = sphi 0, %s692
    %s695 = sphi 0, %s694
    %s709 = sphi 0, %s695
    %s713 = sphi 0, %s713
    %s715 = sphi 0, %s713
    %s716 = sphi 0, %s715
    %s730 = sphi 0, %s716
    %s734 = sphi 0, %s734
    %s736 = sphi 0, %s734
    %s737 = sphi 0, %s736
    %s751 = sphi 0, %s737
    %s755 = sphi 0, %s755
    %s757 = sphi 0, %s755
    %s758 = sphi 0, %s757
    %s772 = sphi 0, %s758
    %s776 = sphi 0, %s776
    %s778 = sphi 0, %s776
    %s779 = sphi 0, %s778
    %s793 = sphi 0, %s779
    %s797 = sphi 0, %s797
    %s799 = sphi 0, %s797
    %s800 = sphi 0, %s799
    %s814 = sphi 0, %s800
    %s818 = sphi 0, %s818
    %s820 = sphi 0, %s818
    %s821 = sphi 0, %s820
    %s835 = sphi 0, %s821
    %s839 = sphi 0, %s839
    %s841 = sphi 0, %s839
    %s842 = sphi 0, %s841
    %s856 = sphi 0, %s842
    %s860 = sphi 0, %s860
    %s862 = sphi 0, %s860
    %s863 = sphi 0, %s862
    %s877 = sphi 0, %s863
    %s881 = sphi 0, %s881
    %s883 = sphi 0, %s881
    %s884 = sphi 0, %s883
    %s898 = sphi 0, %s884
    %s902 = sphi 0, %s902
    %s904 = sphi 0, %s902
    %s905 = sphi 0, %s904
    %s919 = sphi 0, %s905
    %s923 = sphi 0, %s923
    %s925 = sphi 0, %s923
    %s926 = sphi 0, %s925
    %s940 = sphi 0, %s926
    %s944 = sphi 0, %s944
    %s946 = sphi 0, %s944
    %s947 = sphi 0, %s946
    %s961 = sphi 0, %s947
    %s967 = sphi 0, %s969
    %s970 = sphi 0, %s967
    %s971 = sphi 0, %s970
    %s987 = sphi 0, %s971
  $region4: #{_lambda_.1} parent=0 // loop_header_branch
    %94 = sbr.rel (%p92) target = $region8
  $region5: #{_lambda_.1} parent=0 // loop_body
    %s96 = ssub.s32 %s91, 1
    %s97 = ssub.s32 %s91, 2
    %s98 = sadd.s32 %s91, 1
    %s99 = ssub.s32 %s91, %s98
    %p100 = scmp.eq.s32.totalorder %s99, 0
    %s102 = sadd.s32 %s101, 1
    %s103 = scalar_select %p100, %s101, %s102
    %p106 = pneg %p100
    %p107 = scmp.eq.s32.totalorder %s91, 1
    %p108 = por %p106, %p107
    %p109 = scmp.ne.s32.totalorder %s101, %s104
    %p110 = scmp.eq.s32.totalorder %s91, 0
    %p111 = por %p109, %p110
    %p112 = scmp.ne.s32.totalorder %s101, %s104
    %p113 = scmp.eq.s32.totalorder %s96, 1
    %p114 = por %p112, %p113
    %p115 = scmp.ne.s32.totalorder %s104, %s105
    %p116 = scmp.eq.s32.totalorder %s96, 0
    %p117 = por %p115, %p116
    %p118 = scmp.ne.s32.totalorder %s104, %s105
    %p119 = scmp.eq.s32.totalorder %s97, 1
    %p120 = por %p118, %p119
    %p122 = scmp.ne.s32.totalorder %s105, %s121
    %p123 = scmp.eq.s32.totalorder %s97, 0
    %p124 = por %p122, %p123
    %s126 = sadd.s32 %s125, 1
    %p129 = scmp.eq.s32.totalorder %s91, 1
    %p130 = scmp.ne.s32.totalorder %s125, %s127
    %p131 = scmp.eq.s32.totalorder %s91, 0
    %p132 = por %p130, %p131
    %p133 = scmp.ne.s32.totalorder %s125, %s127
    %p134 = scmp.eq.s32.totalorder %s96, 1
    %p135 = por %p133, %p134
    %p136 = scmp.ne.s32.totalorder %s127, %s128
    %p137 = scmp.eq.s32.totalorder %s96, 0
    %p138 = por %p136, %p137
    %p139 = scmp.ne.s32.totalorder %s127, %s128
    %p140 = scmp.eq.s32.totalorder %s97, 1
    %p141 = por %p139, %p140
    %p143 = scmp.ne.s32.totalorder %s128, %s142
    %p144 = scmp.eq.s32.totalorder %s97, 0
    %p145 = por %p143, %p144
    %s147 = sadd.s32 %s146, 1
    %p150 = scmp.eq.s32.totalorder %s91, 1
    %p151 = scmp.ne.s32.totalorder %s146, %s148
    %p152 = scmp.eq.s32.totalorder %s91, 0
    %p153 = por %p151, %p152
    %p154 = scmp.ne.s32.totalorder %s146, %s148
    %p155 = scmp.eq.s32.totalorder %s96, 1
    %p156 = por %p154, %p155
    %p157 = scmp.ne.s32.totalorder %s148, %s149
    %p158 = scmp.eq.s32.totalorder %s96, 0
    %p159 = por %p157, %p158
    %p160 = scmp.ne.s32.totalorder %s148, %s149
    %p161 = scmp.eq.s32.totalorder %s97, 1
    %p162 = por %p160, %p161
    %p164 = scmp.ne.s32.totalorder %s149, %s163
    %p165 = scmp.eq.s32.totalorder %s97, 0
    %p166 = por %p164, %p165
    %s168 = sadd.s32 %s167, 1
    %p171 = scmp.eq.s32.totalorder %s91, 1
    %p172 = scmp.ne.s32.totalorder %s167, %s169
    %p173 = scmp.eq.s32.totalorder %s91, 0
    %p174 = por %p172, %p173
    %p175 = scmp.ne.s32.totalorder %s167, %s169
    %p176 = scmp.eq.s32.totalorder %s96, 1
    %p177 = por %p175, %p176
    %p178 = scmp.ne.s32.totalorder %s169, %s170
    %p179 = scmp.eq.s32.totalorder %s96, 0
    %p180 = por %p178, %p179
    %p181 = scmp.ne.s32.totalorder %s169, %s170
    %p182 = scmp.eq.s32.totalorder %s97, 1
    %p183 = por %p181, %p182
    %p185 = scmp.ne.s32.totalorder %s170, %s184
    %p186 = scmp.eq.s32.totalorder %s97, 0
    %p187 = por %p185, %p186
    %s189 = sadd.s32 %s188, 1
    %p192 = scmp.eq.s32.totalorder %s91, 1
    %p193 = scmp.ne.s32.totalorder %s188, %s190
    %p194 = scmp.eq.s32.totalorder %s91, 0
    %p195 = por %p193, %p194
    %p196 = scmp.ne.s32.totalorder %s188, %s190
    %p197 = scmp.eq.s32.totalorder %s96, 1
    %p198 = por %p196, %p197
    %p199 = scmp.ne.s32.totalorder %s190, %s191
    %p200 = scmp.eq.s32.totalorder %s96, 0
    %p201 = por %p199, %p200
    %p202 = scmp.ne.s32.totalorder %s190, %s191
    %p203 = scmp.eq.s32.totalorder %s97, 1
    %p204 = por %p202, %p203
    %p206 = scmp.ne.s32.totalorder %s191, %s205
    %p207 = scmp.eq.s32.totalorder %s97, 0
    %p208 = por %p206, %p207
    %s210 = sadd.s32 %s209, 1
    %p213 = scmp.eq.s32.totalorder %s91, 1
    %p214 = scmp.ne.s32.totalorder %s209, %s211
    %p215 = scmp.eq.s32.totalorder %s91, 0
    %p216 = por %p214, %p215
    %p217 = scmp.ne.s32.totalorder %s209, %s211
    %p218 = scmp.eq.s32.totalorder %s96, 1
    %p219 = por %p217, %p218
    %p220 = scmp.ne.s32.totalorder %s211, %s212
    %p221 = scmp.eq.s32.totalorder %s96, 0
    %p222 = por %p220, %p221
    %p223 = scmp.ne.s32.totalorder %s211, %s212
    %p224 = scmp.eq.s32.totalorder %s97, 1
    %p225 = por %p223, %p224
    %p227 = scmp.ne.s32.totalorder %s212, %s226
    %p228 = scmp.eq.s32.totalorder %s97, 0
    %p229 = por %p227, %p228
    %s231 = sadd.s32 %s230, 1
    %p234 = scmp.eq.s32.totalorder %s91, 1
    %p235 = scmp.ne.s32.totalorder %s230, %s232
    %p236 = scmp.eq.s32.totalorder %s91, 0
    %p237 = por %p235, %p236
    %p238 = scmp.ne.s32.totalorder %s230, %s232
    %p239 = scmp.eq.s32.totalorder %s96, 1
    %p240 = por %p238, %p239
    %p241 = scmp.ne.s32.totalorder %s232, %s233
    %p242 = scmp.eq.s32.totalorder %s96, 0
    %p243 = por %p241, %p242
    %p244 = scmp.ne.s32.totalorder %s232, %s233
    %p245 = scmp.eq.s32.totalorder %s97, 1
    %p246 = por %p244, %p245
    %p248 = scmp.ne.s32.totalorder %s233, %s247
    %p249 = scmp.eq.s32.totalorder %s97, 0
    %p250 = por %p248, %p249
    %s252 = sadd.s32 %s251, 1
    %p255 = scmp.eq.s32.totalorder %s91, 1
    %p256 = scmp.ne.s32.totalorder %s251, %s253
    %p257 = scmp.eq.s32.totalorder %s91, 0
    %p258 = por %p256, %p257
    %p259 = scmp.ne.s32.totalorder %s251, %s253
    %p260 = scmp.eq.s32.totalorder %s96, 1
    %p261 = por %p259, %p260
    %p262 = scmp.ne.s32.totalorder %s253, %s254
    %p263 = scmp.eq.s32.totalorder %s96, 0
    %p264 = por %p262, %p263
    %p265 = scmp.ne.s32.totalorder %s253, %s254
    %p266 = scmp.eq.s32.totalorder %s97, 1
    %p267 = por %p265, %p266
    %p269 = scmp.ne.s32.totalorder %s254, %s268
    %p270 = scmp.eq.s32.totalorder %s97, 0
    %p271 = por %p269, %p270
    %s273 = sadd.s32 %s272, 1
    %p276 = scmp.eq.s32.totalorder %s91, 1
    %p277 = scmp.ne.s32.totalorder %s272, %s274
    %p278 = scmp.eq.s32.totalorder %s91, 0
    %p279 = por %p277, %p278
    %p280 = scmp.ne.s32.totalorder %s272, %s274
    %p281 = scmp.eq.s32.totalorder %s96, 1
    %p282 = por %p280, %p281
    %p283 = scmp.ne.s32.totalorder %s274, %s275
    %p284 = scmp.eq.s32.totalorder %s96, 0
    %p285 = por %p283, %p284
    %p286 = scmp.ne.s32.totalorder %s274, %s275
    %p287 = scmp.eq.s32.totalorder %s97, 1
    %p288 = por %p286, %p287
    %p290 = scmp.ne.s32.totalorder %s275, %s289
    %p291 = scmp.eq.s32.totalorder %s97, 0
    %p292 = por %p290, %p291
    %s294 = sadd.s32 %s293, 1
    %p297 = scmp.eq.s32.totalorder %s91, 1
    %p298 = scmp.ne.s32.totalorder %s293, %s295
    %p299 = scmp.eq.s32.totalorder %s91, 0
    %p300 = por %p298, %p299
    %p301 = scmp.ne.s32.totalorder %s293, %s295
    %p302 = scmp.eq.s32.totalorder %s96, 1
    %p303 = por %p301, %p302
    %p304 = scmp.ne.s32.totalorder %s295, %s296
    %p305 = scmp.eq.s32.totalorder %s96, 0
    %p306 = por %p304, %p305
    %p307 = scmp.ne.s32.totalorder %s295, %s296
    %p308 = scmp.eq.s32.totalorder %s97, 1
    %p309 = por %p307, %p308
    %p311 = scmp.ne.s32.totalorder %s296, %s310
    %p312 = scmp.eq.s32.totalorder %s97, 0
    %p313 = por %p311, %p312
    %s315 = sadd.s32 %s314, 1
    %p318 = scmp.eq.s32.totalorder %s91, 1
    %p319 = scmp.ne.s32.totalorder %s314, %s316
    %p320 = scmp.eq.s32.totalorder %s91, 0
    %p321 = por %p319, %p320
    %p322 = scmp.ne.s32.totalorder %s314, %s316
    %p323 = scmp.eq.s32.totalorder %s96, 1
    %p324 = por %p322, %p323
    %p325 = scmp.ne.s32.totalorder %s316, %s317
    %p326 = scmp.eq.s32.totalorder %s96, 0
    %p327 = por %p325, %p326
    %p328 = scmp.ne.s32.totalorder %s316, %s317
    %p329 = scmp.eq.s32.totalorder %s97, 1
    %p330 = por %p328, %p329
    %p332 = scmp.ne.s32.totalorder %s317, %s331
    %p333 = scmp.eq.s32.totalorder %s97, 0
    %p334 = por %p332, %p333
    %s336 = sadd.s32 %s335, 1
    %p339 = scmp.eq.s32.totalorder %s91, 1
    %p340 = scmp.ne.s32.totalorder %s335, %s337
    %p341 = scmp.eq.s32.totalorder %s91, 0
    %p342 = por %p340, %p341
    %p343 = scmp.ne.s32.totalorder %s335, %s337
    %p344 = scmp.eq.s32.totalorder %s96, 1
    %p345 = por %p343, %p344
    %p346 = scmp.ne.s32.totalorder %s337, %s338
    %p347 = scmp.eq.s32.totalorder %s96, 0
    %p348 = por %p346, %p347
    %p349 = scmp.ne.s32.totalorder %s337, %s338
    %p350 = scmp.eq.s32.totalorder %s97, 1
    %p351 = por %p349, %p350
    %p353 = scmp.ne.s32.totalorder %s338, %s352
    %p354 = scmp.eq.s32.totalorder %s97, 0
    %p355 = por %p353, %p354
    %s357 = sadd.s32 %s356, 1
    %p360 = scmp.eq.s32.totalorder %s91, 1
    %p361 = scmp.ne.s32.totalorder %s356, %s358
    %p362 = scmp.eq.s32.totalorder %s91, 0
    %p363 = por %p361, %p362
    %p364 = scmp.ne.s32.totalorder %s356, %s358
    %p365 = scmp.eq.s32.totalorder %s96, 1
    %p366 = por %p364, %p365
    %p367 = scmp.ne.s32.totalorder %s358, %s359
    %p368 = scmp.eq.s32.totalorder %s96, 0
    %p369 = por %p367, %p368
    %p370 = scmp.ne.s32.totalorder %s358, %s359
    %p371 = scmp.eq.s32.totalorder %s97, 1
    %p372 = por %p370, %p371
    %p374 = scmp.ne.s32.totalorder %s359, %s373
    %p375 = scmp.eq.s32.totalorder %s97, 0
    %p376 = por %p374, %p375
    %s378 = sadd.s32 %s377, 1
    %p381 = scmp.eq.s32.totalorder %s91, 1
    %p382 = scmp.ne.s32.totalorder %s377, %s379
    %p383 = scmp.eq.s32.totalorder %s91, 0
    %p384 = por %p382, %p383
    %p385 = scmp.ne.s32.totalorder %s377, %s379
    %p386 = scmp.eq.s32.totalorder %s96, 1
    %p387 = por %p385, %p386
    %p388 = scmp.ne.s32.totalorder %s379, %s380
    %p389 = scmp.eq.s32.totalorder %s96, 0
    %p390 = por %p388, %p389
    %p391 = scmp.ne.s32.totalorder %s379, %s380
    %p392 = scmp.eq.s32.totalorder %s97, 1
    %p393 = por %p391, %p392
    %p395 = scmp.ne.s32.totalorder %s380, %s394
    %p396 = scmp.eq.s32.totalorder %s97, 0
    %p397 = por %p395, %p396
    %s399 = sadd.s32 %s398, 1
    %p402 = scmp.eq.s32.totalorder %s91, 1
    %p403 = scmp.ne.s32.totalorder %s398, %s400
    %p404 = scmp.eq.s32.totalorder %s91, 0
    %p405 = por %p403, %p404
    %p406 = scmp.ne.s32.totalorder %s398, %s400
    %p407 = scmp.eq.s32.totalorder %s96, 1
    %p408 = por %p406, %p407
    %p409 = scmp.ne.s32.totalorder %s400, %s401
    %p410 = scmp.eq.s32.totalorder %s96, 0
    %p411 = por %p409, %p410
    %p412 = scmp.ne.s32.totalorder %s400, %s401
    %p413 = scmp.eq.s32.totalorder %s97, 1
    %p414 = por %p412, %p413
    %p416 = scmp.ne.s32.totalorder %s401, %s415
    %p417 = scmp.eq.s32.totalorder %s97, 0
    %p418 = por %p416, %p417
    %s420 = sadd.s32 %s419, 1
    %p423 = scmp.eq.s32.totalorder %s91, 1
    %p424 = scmp.ne.s32.totalorder %s419, %s421
    %p425 = scmp.eq.s32.totalorder %s91, 0
    %p426 = por %p424, %p425
    %p427 = scmp.ne.s32.totalorder %s419, %s421
    %p428 = scmp.eq.s32.totalorder %s96, 1
    %p429 = por %p427, %p428
    %p430 = scmp.ne.s32.totalorder %s421, %s422
    %p431 = scmp.eq.s32.totalorder %s96, 0
    %p432 = por %p430, %p431
    %p433 = scmp.ne.s32.totalorder %s421, %s422
    %p434 = scmp.eq.s32.totalorder %s97, 1
    %p435 = por %p433, %p434
    %p437 = scmp.ne.s32.totalorder %s422, %s436
    %p438 = scmp.eq.s32.totalorder %s97, 0
    %p439 = por %p437, %p438
    %s441 = sadd.s32 %s440, 1
    %p444 = scmp.eq.s32.totalorder %s91, 1
    %p445 = scmp.ne.s32.totalorder %s440, %s442
    %p446 = scmp.eq.s32.totalorder %s91, 0
    %p447 = por %p445, %p446
    %p448 = scmp.ne.s32.totalorder %s440, %s442
    %p449 = scmp.eq.s32.totalorder %s96, 1
    %p450 = por %p448, %p449
    %p451 = scmp.ne.s32.totalorder %s442, %s443
    %p452 = scmp.eq.s32.totalorder %s96, 0
    %p453 = por %p451, %p452
    %p454 = scmp.ne.s32.totalorder %s442, %s443
    %p455 = scmp.eq.s32.totalorder %s97, 1
    %p456 = por %p454, %p455
    %p458 = scmp.ne.s32.totalorder %s443, %s457
    %p459 = scmp.eq.s32.totalorder %s97, 0
    %p460 = por %p458, %p459
    %s462 = sadd.s32 %s461, 1
    %p465 = scmp.eq.s32.totalorder %s91, 1
    %p466 = scmp.ne.s32.totalorder %s461, %s463
    %p467 = scmp.eq.s32.totalorder %s91, 0
    %p468 = por %p466, %p467
    %p469 = scmp.ne.s32.totalorder %s461, %s463
    %p470 = scmp.eq.s32.totalorder %s96, 1
    %p471 = por %p469, %p470
    %p472 = scmp.ne.s32.totalorder %s463, %s464
    %p473 = scmp.eq.s32.totalorder %s96, 0
    %p474 = por %p472, %p473
    %p475 = scmp.ne.s32.totalorder %s463, %s464
    %p476 = scmp.eq.s32.totalorder %s97, 1
    %p477 = por %p475, %p476
    %p479 = scmp.ne.s32.totalorder %s464, %s478
    %p480 = scmp.eq.s32.totalorder %s97, 0
    %p481 = por %p479, %p480
    %s483 = sadd.s32 %s482, 1
    %p486 = scmp.eq.s32.totalorder %s91, 1
    %p487 = scmp.ne.s32.totalorder %s482, %s484
    %p488 = scmp.eq.s32.totalorder %s91, 0
    %p489 = por %p487, %p488
    %p490 = scmp.ne.s32.totalorder %s482, %s484
    %p491 = scmp.eq.s32.totalorder %s96, 1
    %p492 = por %p490, %p491
    %p493 = scmp.ne.s32.totalorder %s484, %s485
    %p494 = scmp.eq.s32.totalorder %s96, 0
    %p495 = por %p493, %p494
    %p496 = scmp.ne.s32.totalorder %s484, %s485
    %p497 = scmp.eq.s32.totalorder %s97, 1
    %p498 = por %p496, %p497
    %p500 = scmp.ne.s32.totalorder %s485, %s499
    %p501 = scmp.eq.s32.totalorder %s97, 0
    %p502 = por %p500, %p501
    %s504 = sadd.s32 %s503, 1
    %p507 = scmp.eq.s32.totalorder %s91, 1
    %p508 = scmp.ne.s32.totalorder %s503, %s505
    %p509 = scmp.eq.s32.totalorder %s91, 0
    %p510 = por %p508, %p509
    %p511 = scmp.ne.s32.totalorder %s503, %s505
    %p512 = scmp.eq.s32.totalorder %s96, 1
    %p513 = por %p511, %p512
    %p514 = scmp.ne.s32.totalorder %s505, %s506
    %p515 = scmp.eq.s32.totalorder %s96, 0
    %p516 = por %p514, %p515
    %p517 = scmp.ne.s32.totalorder %s505, %s506
    %p518 = scmp.eq.s32.totalorder %s97, 1
    %p519 = por %p517, %p518
    %p521 = scmp.ne.s32.totalorder %s506, %s520
    %p522 = scmp.eq.s32.totalorder %s97, 0
    %p523 = por %p521, %p522
    %s525 = sadd.s32 %s524, 1
    %p528 = scmp.eq.s32.totalorder %s91, 1
    %p529 = scmp.ne.s32.totalorder %s524, %s526
    %p530 = scmp.eq.s32.totalorder %s91, 0
    %p531 = por %p529, %p530
    %p532 = scmp.ne.s32.totalorder %s524, %s526
    %p533 = scmp.eq.s32.totalorder %s96, 1
    %p534 = por %p532, %p533
    %p535 = scmp.ne.s32.totalorder %s526, %s527
    %p536 = scmp.eq.s32.totalorder %s96, 0
    %p537 = por %p535, %p536
    %p538 = scmp.ne.s32.totalorder %s526, %s527
    %p539 = scmp.eq.s32.totalorder %s97, 1
    %p540 = por %p538, %p539
    %p542 = scmp.ne.s32.totalorder %s527, %s541
    %p543 = scmp.eq.s32.totalorder %s97, 0
    %p544 = por %p542, %p543
    %s546 = sadd.s32 %s545, 1
    %p549 = scmp.eq.s32.totalorder %s91, 1
    %p550 = scmp.ne.s32.totalorder %s545, %s547
    %p551 = scmp.eq.s32.totalorder %s91, 0
    %p552 = por %p550, %p551
    %p553 = scmp.ne.s32.totalorder %s545, %s547
    %p554 = scmp.eq.s32.totalorder %s96, 1
    %p555 = por %p553, %p554
    %p556 = scmp.ne.s32.totalorder %s547, %s548
    %p557 = scmp.eq.s32.totalorder %s96, 0
    %p558 = por %p556, %p557
    %p559 = scmp.ne.s32.totalorder %s547, %s548
    %p560 = scmp.eq.s32.totalorder %s97, 1
    %p561 = por %p559, %p560
    %p563 = scmp.ne.s32.totalorder %s548, %s562
    %p564 = scmp.eq.s32.totalorder %s97, 0
    %p565 = por %p563, %p564
    %s567 = sadd.s32 %s566, 1
    %p570 = scmp.eq.s32.totalorder %s91, 1
    %p571 = scmp.ne.s32.totalorder %s566, %s568
    %p572 = scmp.eq.s32.totalorder %s91, 0
    %p573 = por %p571, %p572
    %p574 = scmp.ne.s32.totalorder %s566, %s568
    %p575 = scmp.eq.s32.totalorder %s96, 1
    %p576 = por %p574, %p575
    %p577 = scmp.ne.s32.totalorder %s568, %s569
    %p578 = scmp.eq.s32.totalorder %s96, 0
    %p579 = por %p577, %p578
    %p580 = scmp.ne.s32.totalorder %s568, %s569
    %p581 = scmp.eq.s32.totalorder %s97, 1
    %p582 = por %p580, %p581
    %p584 = scmp.ne.s32.totalorder %s569, %s583
    %p585 = scmp.eq.s32.totalorder %s97, 0
    %p586 = por %p584, %p585
    %s588 = sadd.s32 %s587, 1
    %p591 = scmp.eq.s32.totalorder %s91, 1
    %p592 = scmp.ne.s32.totalorder %s587, %s589
    %p593 = scmp.eq.s32.totalorder %s91, 0
    %p594 = por %p592, %p593
    %p595 = scmp.ne.s32.totalorder %s587, %s589
    %p596 = scmp.eq.s32.totalorder %s96, 1
    %p597 = por %p595, %p596
    %p598 = scmp.ne.s32.totalorder %s589, %s590
    %p599 = scmp.eq.s32.totalorder %s96, 0
    %p600 = por %p598, %p599
    %p601 = scmp.ne.s32.totalorder %s589, %s590
    %p602 = scmp.eq.s32.totalorder %s97, 1
    %p603 = por %p601, %p602
    %p605 = scmp.ne.s32.totalorder %s590, %s604
    %p606 = scmp.eq.s32.totalorder %s97, 0
    %p607 = por %p605, %p606
    %s609 = sadd.s32 %s608, 1
    %p612 = scmp.eq.s32.totalorder %s91, 1
    %p613 = scmp.ne.s32.totalorder %s608, %s610
    %p614 = scmp.eq.s32.totalorder %s91, 0
    %p615 = por %p613, %p614
    %p616 = scmp.ne.s32.totalorder %s608, %s610
    %p617 = scmp.eq.s32.totalorder %s96, 1
    %p618 = por %p616, %p617
    %p619 = scmp.ne.s32.totalorder %s610, %s611
    %p620 = scmp.eq.s32.totalorder %s96, 0
    %p621 = por %p619, %p620
    %p622 = scmp.ne.s32.totalorder %s610, %s611
    %p623 = scmp.eq.s32.totalorder %s97, 1
    %p624 = por %p622, %p623
    %p626 = scmp.ne.s32.totalorder %s611, %s625
    %p627 = scmp.eq.s32.totalorder %s97, 0
    %p628 = por %p626, %p627
    %s630 = sadd.s32 %s629, 1
    %p633 = scmp.eq.s32.totalorder %s91, 1
    %p634 = scmp.ne.s32.totalorder %s629, %s631
    %p635 = scmp.eq.s32.totalorder %s91, 0
    %p636 = por %p634, %p635
    %p637 = scmp.ne.s32.totalorder %s629, %s631
    %p638 = scmp.eq.s32.totalorder %s96, 1
    %p639 = por %p637, %p638
    %p640 = scmp.ne.s32.totalorder %s631, %s632
    %p641 = scmp.eq.s32.totalorder %s96, 0
    %p642 = por %p640, %p641
    %p643 = scmp.ne.s32.totalorder %s631, %s632
    %p644 = scmp.eq.s32.totalorder %s97, 1
    %p645 = por %p643, %p644
    %p647 = scmp.ne.s32.totalorder %s632, %s646
    %p648 = scmp.eq.s32.totalorder %s97, 0
    %p649 = por %p647, %p648
    %s651 = sadd.s32 %s650, 1
    %p654 = scmp.eq.s32.totalorder %s91, 1
    %p655 = scmp.ne.s32.totalorder %s650, %s652
    %p656 = scmp.eq.s32.totalorder %s91, 0
    %p657 = por %p655, %p656
    %p658 = scmp.ne.s32.totalorder %s650, %s652
    %p659 = scmp.eq.s32.totalorder %s96, 1
    %p660 = por %p658, %p659
    %p661 = scmp.ne.s32.totalorder %s652, %s653
    %p662 = scmp.eq.s32.totalorder %s96, 0
    %p663 = por %p661, %p662
    %p664 = scmp.ne.s32.totalorder %s652, %s653
    %p665 = scmp.eq.s32.totalorder %s97, 1
    %p666 = por %p664, %p665
    %p668 = scmp.ne.s32.totalorder %s653, %s667
    %p669 = scmp.eq.s32.totalorder %s97, 0
    %p670 = por %p668, %p669
    %s672 = sadd.s32 %s671, 1
    %p675 = scmp.eq.s32.totalorder %s91, 1
    %p676 = scmp.ne.s32.totalorder %s671, %s673
    %p677 = scmp.eq.s32.totalorder %s91, 0
    %p678 = por %p676, %p677
    %p679 = scmp.ne.s32.totalorder %s671, %s673
    %p680 = scmp.eq.s32.totalorder %s96, 1
    %p681 = por %p679, %p680
    %p682 = scmp.ne.s32.totalorder %s673, %s674
    %p683 = scmp.eq.s32.totalorder %s96, 0
    %p684 = por %p682, %p683
    %p685 = scmp.ne.s32.totalorder %s673, %s674
    %p686 = scmp.eq.s32.totalorder %s97, 1
    %p687 = por %p685, %p686
    %p689 = scmp.ne.s32.totalorder %s674, %s688
    %p690 = scmp.eq.s32.totalorder %s97, 0
    %p691 = por %p689, %p690
    %s693 = sadd.s32 %s692, 1
    %p696 = scmp.eq.s32.totalorder %s91, 1
    %p697 = scmp.ne.s32.totalorder %s692, %s694
    %p698 = scmp.eq.s32.totalorder %s91, 0
    %p699 = por %p697, %p698
    %p700 = scmp.ne.s32.totalorder %s692, %s694
    %p701 = scmp.eq.s32.totalorder %s96, 1
    %p702 = por %p700, %p701
    %p703 = scmp.ne.s32.totalorder %s694, %s695
    %p704 = scmp.eq.s32.totalorder %s96, 0
    %p705 = por %p703, %p704
    %p706 = scmp.ne.s32.totalorder %s694, %s695
    %p707 = scmp.eq.s32.totalorder %s97, 1
    %p708 = por %p706, %p707
    %p710 = scmp.ne.s32.totalorder %s695, %s709
    %p711 = scmp.eq.s32.totalorder %s97, 0
    %p712 = por %p710, %p711
    %s714 = sadd.s32 %s713, 1
    %p717 = scmp.eq.s32.totalorder %s91, 1
    %p718 = scmp.ne.s32.totalorder %s713, %s715
    %p719 = scmp.eq.s32.totalorder %s91, 0
    %p720 = por %p718, %p719
    %p721 = scmp.ne.s32.totalorder %s713, %s715
    %p722 = scmp.eq.s32.totalorder %s96, 1
    %p723 = por %p721, %p722
    %p724 = scmp.ne.s32.totalorder %s715, %s716
    %p725 = scmp.eq.s32.totalorder %s96, 0
    %p726 = por %p724, %p725
    %p727 = scmp.ne.s32.totalorder %s715, %s716
    %p728 = scmp.eq.s32.totalorder %s97, 1
    %p729 = por %p727, %p728
    %p731 = scmp.ne.s32.totalorder %s716, %s730
    %p732 = scmp.eq.s32.totalorder %s97, 0
    %p733 = por %p731, %p732
    %s735 = sadd.s32 %s734, 1
    %p738 = scmp.eq.s32.totalorder %s91, 1
    %p739 = scmp.ne.s32.totalorder %s734, %s736
    %p740 = scmp.eq.s32.totalorder %s91, 0
    %p741 = por %p739, %p740
    %p742 = scmp.ne.s32.totalorder %s734, %s736
    %p743 = scmp.eq.s32.totalorder %s96, 1
    %p744 = por %p742, %p743
    %p745 = scmp.ne.s32.totalorder %s736, %s737
    %p746 = scmp.eq.s32.totalorder %s96, 0
    %p747 = por %p745, %p746
    %p748 = scmp.ne.s32.totalorder %s736, %s737
    %p749 = scmp.eq.s32.totalorder %s97, 1
    %p750 = por %p748, %p749
    %p752 = scmp.ne.s32.totalorder %s737, %s751
    %p753 = scmp.eq.s32.totalorder %s97, 0
    %p754 = por %p752, %p753
    %s756 = sadd.s32 %s755, 1
    %p759 = scmp.eq.s32.totalorder %s91, 1
    %p760 = scmp.ne.s32.totalorder %s755, %s757
    %p761 = scmp.eq.s32.totalorder %s91, 0
    %p762 = por %p760, %p761
    %p763 = scmp.ne.s32.totalorder %s755, %s757
    %p764 = scmp.eq.s32.totalorder %s96, 1
    %p765 = por %p763, %p764
    %p766 = scmp.ne.s32.totalorder %s757, %s758
    %p767 = scmp.eq.s32.totalorder %s96, 0
    %p768 = por %p766, %p767
    %p769 = scmp.ne.s32.totalorder %s757, %s758
    %p770 = scmp.eq.s32.totalorder %s97, 1
    %p771 = por %p769, %p770
    %p773 = scmp.ne.s32.totalorder %s758, %s772
    %p774 = scmp.eq.s32.totalorder %s97, 0
    %p775 = por %p773, %p774
    %s777 = sadd.s32 %s776, 1
    %p780 = scmp.eq.s32.totalorder %s91, 1
    %p781 = scmp.ne.s32.totalorder %s776, %s778
    %p782 = scmp.eq.s32.totalorder %s91, 0
    %p783 = por %p781, %p782
    %p784 = scmp.ne.s32.totalorder %s776, %s778
    %p785 = scmp.eq.s32.totalorder %s96, 1
    %p786 = por %p784, %p785
    %p787 = scmp.ne.s32.totalorder %s778, %s779
    %p788 = scmp.eq.s32.totalorder %s96, 0
    %p789 = por %p787, %p788
    %p790 = scmp.ne.s32.totalorder %s778, %s779
    %p791 = scmp.eq.s32.totalorder %s97, 1
    %p792 = por %p790, %p791
    %p794 = scmp.ne.s32.totalorder %s779, %s793
    %p795 = scmp.eq.s32.totalorder %s97, 0
    %p796 = por %p794, %p795
    %s798 = sadd.s32 %s797, 1
    %p801 = scmp.eq.s32.totalorder %s91, 1
    %p802 = scmp.ne.s32.totalorder %s797, %s799
    %p803 = scmp.eq.s32.totalorder %s91, 0
    %p804 = por %p802, %p803
    %p805 = scmp.ne.s32.totalorder %s797, %s799
    %p806 = scmp.eq.s32.totalorder %s96, 1
    %p807 = por %p805, %p806
    %p808 = scmp.ne.s32.totalorder %s799, %s800
    %p809 = scmp.eq.s32.totalorder %s96, 0
    %p810 = por %p808, %p809
    %p811 = scmp.ne.s32.totalorder %s799, %s800
    %p812 = scmp.eq.s32.totalorder %s97, 1
    %p813 = por %p811, %p812
    %p815 = scmp.ne.s32.totalorder %s800, %s814
    %p816 = scmp.eq.s32.totalorder %s97, 0
    %p817 = por %p815, %p816
    %s819 = sadd.s32 %s818, 1
    %p822 = scmp.eq.s32.totalorder %s91, 1
    %p823 = scmp.ne.s32.totalorder %s818, %s820
    %p824 = scmp.eq.s32.totalorder %s91, 0
    %p825 = por %p823, %p824
    %p826 = scmp.ne.s32.totalorder %s818, %s820
    %p827 = scmp.eq.s32.totalorder %s96, 1
    %p828 = por %p826, %p827
    %p829 = scmp.ne.s32.totalorder %s820, %s821
    %p830 = scmp.eq.s32.totalorder %s96, 0
    %p831 = por %p829, %p830
    %p832 = scmp.ne.s32.totalorder %s820, %s821
    %p833 = scmp.eq.s32.totalorder %s97, 1
    %p834 = por %p832, %p833
    %p836 = scmp.ne.s32.totalorder %s821, %s835
    %p837 = scmp.eq.s32.totalorder %s97, 0
    %p838 = por %p836, %p837
    %s840 = sadd.s32 %s839, 1
    %p843 = scmp.eq.s32.totalorder %s91, 1
    %p844 = scmp.ne.s32.totalorder %s839, %s841
    %p845 = scmp.eq.s32.totalorder %s91, 0
    %p846 = por %p844, %p845
    %p847 = scmp.ne.s32.totalorder %s839, %s841
    %p848 = scmp.eq.s32.totalorder %s96, 1
    %p849 = por %p847, %p848
    %p850 = scmp.ne.s32.totalorder %s841, %s842
    %p851 = scmp.eq.s32.totalorder %s96, 0
    %p852 = por %p850, %p851
    %p853 = scmp.ne.s32.totalorder %s841, %s842
    %p854 = scmp.eq.s32.totalorder %s97, 1
    %p855 = por %p853, %p854
    %p857 = scmp.ne.s32.totalorder %s842, %s856
    %p858 = scmp.eq.s32.totalorder %s97, 0
    %p859 = por %p857, %p858
    %s861 = sadd.s32 %s860, 1
    %p864 = scmp.eq.s32.totalorder %s91, 1
    %p865 = scmp.ne.s32.totalorder %s860, %s862
    %p866 = scmp.eq.s32.totalorder %s91, 0
    %p867 = por %p865, %p866
    %p868 = scmp.ne.s32.totalorder %s860, %s862
    %p869 = scmp.eq.s32.totalorder %s96, 1
    %p870 = por %p868, %p869
    %p871 = scmp.ne.s32.totalorder %s862, %s863
    %p872 = scmp.eq.s32.totalorder %s96, 0
    %p873 = por %p871, %p872
    %p874 = scmp.ne.s32.totalorder %s862, %s863
    %p875 = scmp.eq.s32.totalorder %s97, 1
    %p876 = por %p874, %p875
    %p878 = scmp.ne.s32.totalorder %s863, %s877
    %p879 = scmp.eq.s32.totalorder %s97, 0
    %p880 = por %p878, %p879
    %s882 = sadd.s32 %s881, 1
    %p885 = scmp.eq.s32.totalorder %s91, 1
    %p886 = scmp.ne.s32.totalorder %s881, %s883
    %p887 = scmp.eq.s32.totalorder %s91, 0
    %p888 = por %p886, %p887
    %p889 = scmp.ne.s32.totalorder %s881, %s883
    %p890 = scmp.eq.s32.totalorder %s96, 1
    %p891 = por %p889, %p890
    %p892 = scmp.ne.s32.totalorder %s883, %s884
    %p893 = scmp.eq.s32.totalorder %s96, 0
    %p894 = por %p892, %p893
    %p895 = scmp.ne.s32.totalorder %s883, %s884
    %p896 = scmp.eq.s32.totalorder %s97, 1
    %p897 = por %p895, %p896
    %p899 = scmp.ne.s32.totalorder %s884, %s898
    %p900 = scmp.eq.s32.totalorder %s97, 0
    %p901 = por %p899, %p900
    %s903 = sadd.s32 %s902, 1
    %p906 = scmp.eq.s32.totalorder %s91, 1
    %p907 = scmp.ne.s32.totalorder %s902, %s904
    %p908 = scmp.eq.s32.totalorder %s91, 0
    %p909 = por %p907, %p908
    %p910 = scmp.ne.s32.totalorder %s902, %s904
    %p911 = scmp.eq.s32.totalorder %s96, 1
    %p912 = por %p910, %p911
    %p913 = scmp.ne.s32.totalorder %s904, %s905
    %p914 = scmp.eq.s32.totalorder %s96, 0
    %p915 = por %p913, %p914
    %p916 = scmp.ne.s32.totalorder %s904, %s905
    %p917 = scmp.eq.s32.totalorder %s97, 1
    %p918 = por %p916, %p917
    %p920 = scmp.ne.s32.totalorder %s905, %s919
    %p921 = scmp.eq.s32.totalorder %s97, 0
    %p922 = por %p920, %p921
    %s924 = sadd.s32 %s923, 1
    %p927 = scmp.eq.s32.totalorder %s91, 1
    %p928 = scmp.ne.s32.totalorder %s923, %s925
    %p929 = scmp.eq.s32.totalorder %s91, 0
    %p930 = por %p928, %p929
    %p931 = scmp.ne.s32.totalorder %s923, %s925
    %p932 = scmp.eq.s32.totalorder %s96, 1
    %p933 = por %p931, %p932
    %p934 = scmp.ne.s32.totalorder %s925, %s926
    %p935 = scmp.eq.s32.totalorder %s96, 0
    %p936 = por %p934, %p935
    %p937 = scmp.ne.s32.totalorder %s925, %s926
    %p938 = scmp.eq.s32.totalorder %s97, 1
    %p939 = por %p937, %p938
    %p941 = scmp.ne.s32.totalorder %s926, %s940
    %p942 = scmp.eq.s32.totalorder %s97, 0
    %p943 = por %p941, %p942
    %s945 = sadd.s32 %s944, 1
    %p948 = scmp.eq.s32.totalorder %s91, 1
    %p949 = scmp.ne.s32.totalorder %s944, %s946
    %p950 = scmp.eq.s32.totalorder %s91, 0
    %p951 = por %p949, %p950
    %p952 = scmp.ne.s32.totalorder %s944, %s946
    %p953 = scmp.eq.s32.totalorder %s96, 1
    %p954 = por %p952, %p953
    %p955 = scmp.ne.s32.totalorder %s946, %s947
    %p956 = scmp.eq.s32.totalorder %s96, 0
    %p957 = por %p955, %p956
    %p958 = scmp.ne.s32.totalorder %s946, %s947
    %p959 = scmp.eq.s32.totalorder %s97, 1
    %p960 = por %p958, %p959
    %p962 = scmp.ne.s32.totalorder %s947, %s961
    %p963 = scmp.eq.s32.totalorder %s97, 0
    %p964 = por %p962, %p963
    %s965 = ssub.s32 %s91, %s98
    %p966 = scmp.eq.s32.totalorder %s965, 0
    %s968 = sadd.s32 %s967, 1
    %s969 = scalar_select %p966, %s967, %s968
    %p972 = pneg %p966
    %p973 = scmp.eq.s32.totalorder %s91, 1
    %p974 = por %p972, %p973
    %p975 = scmp.ne.s32.totalorder %s967, %s970
    %p976 = scmp.eq.s32.totalorder %s91, 0
    %p977 = por %p975, %p976
    %p978 = scmp.ne.s32.totalorder %s967, %s970
    %p979 = scmp.eq.s32.totalorder %s96, 1
    %p980 = por %p978, %p979
    %p981 = scmp.ne.s32.totalorder %s970, %s971
    %p982 = scmp.eq.s32.totalorder %s96, 0
    %p983 = por %p981, %p982
    %p984 = scmp.ne.s32.totalorder %s970, %s971
    %p985 = scmp.eq.s32.totalorder %s97, 1
    %p986 = por %p984, %p985
    %p988 = scmp.ne.s32.totalorder %s971, %s987
    %p989 = scmp.eq.s32.totalorder %s97, 0
    %p990 = por %p988, %p989
    %p991 = scmp.le.s32.totalorder 1, %s91
    %p992 = scmp.lt.s32.totalorder %s91, 3
    %p993 = pnand %p991, %p992
    %p994 = pneg %p993
    // Predicated region
    $region9: #{_lambda_.1} parent=5 // pred_check
      _
    $region10: #{_lambda_.1} parent=5 // pred_check_branch
      %996 = sbr.rel (%p993) target = $region12
    $region11: #{_lambda_.1} parent=5 // pred_region
      %s997 = ssub.s32 %s91, 1
      // Predicated region
      $region13: #{_lambda_.1} parent=11 // pred_check
        %p998 = pneg %p138
      $region14: #{_lambda_.1} parent=11 // pred_check_branch
        %1000 = sbr.rel (%p998) target = $region16
      $region15: #{_lambda_.1} parent=11 // pred_region
        _
      $region16: #{_lambda_.1} parent=11 // pred_fallthru
        _
      // Predicated region
      $region17: #{_lambda_.1} parent=11 // pred_check
        %p1001 = pneg %p159
      $region18: #{_lambda_.1} parent=11 // pred_check_branch
        %1003 = sbr.rel (%p1001) target = $region20
      $region19: #{_lambda_.1} parent=11 // pred_region
        _
      $region20: #{_lambda_.1} parent=11 // pred_fallthru
        _
      // Predicated region
      $region21: #{_lambda_.1} parent=11 // pred_check
        %p1004 = pneg %p180
      $region22: #{_lambda_.1} parent=11 // pred_check_branch
        %1006 = sbr.rel (%p1004) target = $region24
      $region23: #{_lambda_.1} parent=11 // pred_region
        _
      $region24: #{_lambda_.1} parent=11 // pred_fallthru
        _
      // Predicated region
      $region25: #{_lambda_.1} parent=11 // pred_check
        %p1007 = pneg %p201
      $region26: #{_lambda_.1} parent=11 // pred_check_branch
        %1009 = sbr.rel (%p1007) target = $region28
      $region27: #{_lambda_.1} parent=11 // pred_region
        _
      $region28: #{_lambda_.1} parent=11 // pred_fallthru
        _
      // Predicated region
      $region29: #{_lambda_.1} parent=11 // pred_check
        %p1010 = pneg %p222
      $region30: #{_lambda_.1} parent=11 // pred_check_branch
        %1012 = sbr.rel (%p1010) target = $region32
      $region31: #{_lambda_.1} parent=11 // pred_region
        _
      $region32: #{_lambda_.1} parent=11 // pred_fallthru
        _
      // Predicated region
      $region33: #{_lambda_.1} parent=11 // pred_check
        %p1013 = pneg %p243
      $region34: #{_lambda_.1} parent=11 // pred_check_branch
        %1015 = sbr.rel (%p1013) target = $region36
      $region35: #{_lambda_.1} parent=11 // pred_region
        _
      $region36: #{_lambda_.1} parent=11 // pred_fallthru
        _
      // Predicated region
      $region37: #{_lambda_.1} parent=11 // pred_check
        %p1016 = pneg %p264
      $region38: #{_lambda_.1} parent=11 // pred_check_branch
        %1018 = sbr.rel (%p1016) target = $region40
      $region39: #{_lambda_.1} parent=11 // pred_region
        _
      $region40: #{_lambda_.1} parent=11 // pred_fallthru
        _
      // Predicated region
      $region41: #{_lambda_.1} parent=11 // pred_check
        %p1019 = pneg %p285
      $region42: #{_lambda_.1} parent=11 // pred_check_branch
        %1021 = sbr.rel (%p1019) target = $region44
      $region43: #{_lambda_.1} parent=11 // pred_region
        _
      $region44: #{_lambda_.1} parent=11 // pred_fallthru
        _
      // Predicated region
      $region45: #{_lambda_.1} parent=11 // pred_check
        %p1022 = pneg %p306
      $region46: #{_lambda_.1} parent=11 // pred_check_branch
        %1024 = sbr.rel (%p1022) target = $region48
      $region47: #{_lambda_.1} parent=11 // pred_region
        _
      $region48: #{_lambda_.1} parent=11 // pred_fallthru
        _
      // Predicated region
      $region49: #{_lambda_.1} parent=11 // pred_check
        %p1025 = pneg %p327
      $region50: #{_lambda_.1} parent=11 // pred_check_branch
        %1027 = sbr.rel (%p1025) target = $region52
      $region51: #{_lambda_.1} parent=11 // pred_region
        _
      $region52: #{_lambda_.1} parent=11 // pred_fallthru
        _
      // Predicated region
      $region53: #{_lambda_.1} parent=11 // pred_check
        %p1028 = pneg %p348
      $region54: #{_lambda_.1} parent=11 // pred_check_branch
        %1030 = sbr.rel (%p1028) target = $region56
      $region55: #{_lambda_.1} parent=11 // pred_region
        _
      $region56: #{_lambda_.1} parent=11 // pred_fallthru
        _
      // Predicated region
      $region57: #{_lambda_.1} parent=11 // pred_check
        %p1031 = pneg %p369
      $region58: #{_lambda_.1} parent=11 // pred_check_branch
        %1033 = sbr.rel (%p1031) target = $region60
      $region59: #{_lambda_.1} parent=11 // pred_region
        _
      $region60: #{_lambda_.1} parent=11 // pred_fallthru
        _
      // Predicated region
      $region61: #{_lambda_.1} parent=11 // pred_check
        %p1034 = pneg %p390
      $region62: #{_lambda_.1} parent=11 // pred_check_branch
        %1036 = sbr.rel (%p1034) target = $region64
      $region63: #{_lambda_.1} parent=11 // pred_region
        _
      $region64: #{_lambda_.1} parent=11 // pred_fallthru
        _
      // Predicated region
      $region65: #{_lambda_.1} parent=11 // pred_check
        %p1037 = pneg %p411
      $region66: #{_lambda_.1} parent=11 // pred_check_branch
        %1039 = sbr.rel (%p1037) target = $region68
      $region67: #{_lambda_.1} parent=11 // pred_region
        _
      $region68: #{_lambda_.1} parent=11 // pred_fallthru
        _
      // Predicated region
      $region69: #{_lambda_.1} parent=11 // pred_check
        %p1040 = pneg %p432
      $region70: #{_lambda_.1} parent=11 // pred_check_branch
        %1042 = sbr.rel (%p1040) target = $region72
      $region71: #{_lambda_.1} parent=11 // pred_region
        _
      $region72: #{_lambda_.1} parent=11 // pred_fallthru
        _
      // Predicated region
      $region73: #{_lambda_.1} parent=11 // pred_check
        %p1043 = pneg %p453
      $region74: #{_lambda_.1} parent=11 // pred_check_branch
        %1045 = sbr.rel (%p1043) target = $region76
      $region75: #{_lambda_.1} parent=11 // pred_region
        _
      $region76: #{_lambda_.1} parent=11 // pred_fallthru
        _
      // Predicated region
      $region77: #{_lambda_.1} parent=11 // pred_check
        %p1046 = pneg %p474
      $region78: #{_lambda_.1} parent=11 // pred_check_branch
        %1048 = sbr.rel (%p1046) target = $region80
      $region79: #{_lambda_.1} parent=11 // pred_region
        _
      $region80: #{_lambda_.1} parent=11 // pred_fallthru
        _
      // Predicated region
      $region81: #{_lambda_.1} parent=11 // pred_check
        %p1049 = pneg %p495
      $region82: #{_lambda_.1} parent=11 // pred_check_branch
        %1051 = sbr.rel (%p1049) target = $region84
      $region83: #{_lambda_.1} parent=11 // pred_region
        _
      $region84: #{_lambda_.1} parent=11 // pred_fallthru
        _
      // Predicated region
      $region85: #{_lambda_.1} parent=11 // pred_check
        %p1052 = pneg %p516
      $region86: #{_lambda_.1} parent=11 // pred_check_branch
        %1054 = sbr.rel (%p1052) target = $region88
      $region87: #{_lambda_.1} parent=11 // pred_region
        _
      $region88: #{_lambda_.1} parent=11 // pred_fallthru
        _
      // Predicated region
      $region89: #{_lambda_.1} parent=11 // pred_check
        %p1055 = pneg %p537
      $region90: #{_lambda_.1} parent=11 // pred_check_branch
        %1057 = sbr.rel (%p1055) target = $region92
      $region91: #{_lambda_.1} parent=11 // pred_region
        _
      $region92: #{_lambda_.1} parent=11 // pred_fallthru
        _
      // Predicated region
      $region93: #{_lambda_.1} parent=11 // pred_check
        %p1058 = pneg %p558
      $region94: #{_lambda_.1} parent=11 // pred_check_branch
        %1060 = sbr.rel (%p1058) target = $region96
      $region95: #{_lambda_.1} parent=11 // pred_region
        _
      $region96: #{_lambda_.1} parent=11 // pred_fallthru
        _
      // Predicated region
      $region97: #{_lambda_.1} parent=11 // pred_check
        %p1061 = pneg %p579
      $region98: #{_lambda_.1} parent=11 // pred_check_branch
        %1063 = sbr.rel (%p1061) target = $region100
      $region99: #{_lambda_.1} parent=11 // pred_region
        _
      $region100: #{_lambda_.1} parent=11 // pred_fallthru
        _
      // Predicated region
      $region101: #{_lambda_.1} parent=11 // pred_check
        %p1064 = pneg %p600
      $region102: #{_lambda_.1} parent=11 // pred_check_branch
        %1066 = sbr.rel (%p1064) target = $region104
      $region103: #{_lambda_.1} parent=11 // pred_region
        _
      $region104: #{_lambda_.1} parent=11 // pred_fallthru
        _
      // Predicated region
      $region105: #{_lambda_.1} parent=11 // pred_check
        %p1067 = pneg %p621
      $region106: #{_lambda_.1} parent=11 // pred_check_branch
        %1069 = sbr.rel (%p1067) target = $region108
      $region107: #{_lambda_.1} parent=11 // pred_region
        _
      $region108: #{_lambda_.1} parent=11 // pred_fallthru
        _
      // Predicated region
      $region109: #{_lambda_.1} parent=11 // pred_check
        %p1070 = pneg %p642
      $region110: #{_lambda_.1} parent=11 // pred_check_branch
        %1072 = sbr.rel (%p1070) target = $region112
      $region111: #{_lambda_.1} parent=11 // pred_region
        _
      $region112: #{_lambda_.1} parent=11 // pred_fallthru
        _
      // Predicated region
      $region113: #{_lambda_.1} parent=11 // pred_check
        %p1073 = pneg %p663
      $region114: #{_lambda_.1} parent=11 // pred_check_branch
        %1075 = sbr.rel (%p1073) target = $region116
      $region115: #{_lambda_.1} parent=11 // pred_region
        _
      $region116: #{_lambda_.1} parent=11 // pred_fallthru
        _
      // Predicated region
      $region117: #{_lambda_.1} parent=11 // pred_check
        %p1076 = pneg %p684
      $region118: #{_lambda_.1} parent=11 // pred_check_branch
        %1078 = sbr.rel (%p1076) target = $region120
      $region119: #{_lambda_.1} parent=11 // pred_region
        _
      $region120: #{_lambda_.1} parent=11 // pred_fallthru
        _
      // Predicated region
      $region121: #{_lambda_.1} parent=11 // pred_check
        %p1079 = pneg %p705
      $region122: #{_lambda_.1} parent=11 // pred_check_branch
        %1081 = sbr.rel (%p1079) target = $region124
      $region123: #{_lambda_.1} parent=11 // pred_region
        _
      $region124: #{_lambda_.1} parent=11 // pred_fallthru
        _
      // Predicated region
      $region125: #{_lambda_.1} parent=11 // pred_check
        %p1082 = pneg %p726
      $region126: #{_lambda_.1} parent=11 // pred_check_branch
        %1084 = sbr.rel (%p1082) target = $region128
      $region127: #{_lambda_.1} parent=11 // pred_region
        _
      $region128: #{_lambda_.1} parent=11 // pred_fallthru
        _
      // Predicated region
      $region129: #{_lambda_.1} parent=11 // pred_check
        %p1085 = pneg %p747
      $region130: #{_lambda_.1} parent=11 // pred_check_branch
        %1087 = sbr.rel (%p1085) target = $region132
      $region131: #{_lambda_.1} parent=11 // pred_region
        _
      $region132: #{_lambda_.1} parent=11 // pred_fallthru
        _
      // Predicated region
      $region133: #{_lambda_.1} parent=11 // pred_check
        %p1088 = pneg %p768
      $region134: #{_lambda_.1} parent=11 // pred_check_branch
        %1090 = sbr.rel (%p1088) target = $region136
      $region135: #{_lambda_.1} parent=11 // pred_region
        _
      $region136: #{_lambda_.1} parent=11 // pred_fallthru
        _
      // Predicated region
      $region137: #{_lambda_.1} parent=11 // pred_check
        %p1091 = pneg %p789
      $region138: #{_lambda_.1} parent=11 // pred_check_branch
        %1093 = sbr.rel (%p1091) target = $region140
      $region139: #{_lambda_.1} parent=11 // pred_region
        _
      $region140: #{_lambda_.1} parent=11 // pred_fallthru
        _
      // Predicated region
      $region141: #{_lambda_.1} parent=11 // pred_check
        %p1094 = pneg %p810
      $region142: #{_lambda_.1} parent=11 // pred_check_branch
        %1096 = sbr.rel (%p1094) target = $region144
      $region143: #{_lambda_.1} parent=11 // pred_region
        _
      $region144: #{_lambda_.1} parent=11 // pred_fallthru
        _
      // Predicated region
      $region145: #{_lambda_.1} parent=11 // pred_check
        %p1097 = pneg %p831
      $region146: #{_lambda_.1} parent=11 // pred_check_branch
        %1099 = sbr.rel (%p1097) target = $region148
      $region147: #{_lambda_.1} parent=11 // pred_region
        _
      $region148: #{_lambda_.1} parent=11 // pred_fallthru
        _
      // Predicated region
      $region149: #{_lambda_.1} parent=11 // pred_check
        %p1100 = pneg %p852
      $region150: #{_lambda_.1} parent=11 // pred_check_branch
        %1102 = sbr.rel (%p1100) target = $region152
      $region151: #{_lambda_.1} parent=11 // pred_region
        _
      $region152: #{_lambda_.1} parent=11 // pred_fallthru
        _
      // Predicated region
      $region153: #{_lambda_.1} parent=11 // pred_check
        %p1103 = pneg %p873
      $region154: #{_lambda_.1} parent=11 // pred_check_branch
        %1105 = sbr.rel (%p1103) target = $region156
      $region155: #{_lambda_.1} parent=11 // pred_region
        _
      $region156: #{_lambda_.1} parent=11 // pred_fallthru
        _
      // Predicated region
      $region157: #{_lambda_.1} parent=11 // pred_check
        %p1106 = pneg %p894
      $region158: #{_lambda_.1} parent=11 // pred_check_branch
        %1108 = sbr.rel (%p1106) target = $region160
      $region159: #{_lambda_.1} parent=11 // pred_region
        _
      $region160: #{_lambda_.1} parent=11 // pred_fallthru
        _
      // Predicated region
      $region161: #{_lambda_.1} parent=11 // pred_check
        %p1109 = pneg %p915
      $region162: #{_lambda_.1} parent=11 // pred_check_branch
        %1111 = sbr.rel (%p1109) target = $region164
      $region163: #{_lambda_.1} parent=11 // pred_region
        _
      $region164: #{_lambda_.1} parent=11 // pred_fallthru
        _
      // Predicated region
      $region165: #{_lambda_.1} parent=11 // pred_check
        %p1112 = pneg %p936
      $region166: #{_lambda_.1} parent=11 // pred_check_branch
        %1114 = sbr.rel (%p1112) target = $region168
      $region167: #{_lambda_.1} parent=11 // pred_region
        _
      $region168: #{_lambda_.1} parent=11 // pred_fallthru
        _
      // Predicated region
      $region169: #{_lambda_.1} parent=11 // pred_check
        %p1115 = pneg %p957
      $region170: #{_lambda_.1} parent=11 // pred_check_branch
        %1117 = sbr.rel (%p1115) target = $region172
      $region171: #{_lambda_.1} parent=11 // pred_region
        _
      $region172: #{_lambda_.1} parent=11 // pred_fallthru
        _
    $region12: #{_lambda_.1} parent=5 // pred_fallthru
      _
    %p1118 = scmp.lt.s32.totalorder %s91, 2
    // Predicated region
    $region173: #{_lambda_.1} parent=5 // pred_check
      %p1119 = pneg %p1118
    $region174: #{_lambda_.1} parent=5 // pred_check_branch
      %1121 = sbr.rel (%p1119) target = $region176
    $region175: #{_lambda_.1} parent=5 // pred_region
      // Predicated region
      $region177: #{_lambda_.1} parent=175 // pred_check
        %p1122 = pneg %p111
      $region178: #{_lambda_.1} parent=175 // pred_check_branch
        %1124 = sbr.rel (%p1122) target = $region180
      $region179: #{_lambda_.1} parent=175 // pred_region
        %p1125 = scmp.lt.s32.totalorder %s91, 1
        %s1126 = scalar_select %p1125, %s91, 1
        %s1127 = smul.addr %s1126, 8
        %s1128 = scalar_lea.vmem %s1, %s1127
      $region180: #{_lambda_.1} parent=175 // pred_fallthru
        _
    $region176: #{_lambda_.1} parent=5 // pred_fallthru
      _
    %p1129 = scmp.le.s32.totalorder 1, %s91
    %p1130 = scmp.lt.s32.totalorder %s91, 3
    %p1131 = pnand %p1129, %p1130
    %p1132 = pneg %p1131
    // Predicated region
    $region181: #{_lambda_.1} parent=5 // pred_check
      _
    $region182: #{_lambda_.1} parent=5 // pred_check_branch
      %1134 = sbr.rel (%p1131) target = $region184
    $region183: #{_lambda_.1} parent=5 // pred_region
      %s1135 = ssub.s32 %s91, 1
      %p1136 = scmp.lt.s32.totalorder %s96, 1
      %s1137 = scalar_select %p1136, %s96, 1
      %s1138 = smul.addr %s1137, 8
      %s1139 = scalar_lea.vmem %s1, %s1138
      %p1140 = pneg %p117
      %p1141 = pneg %p114
      %p1142 = pneg %p138
      %p1143 = pneg %p135
      %p1144 = pneg %p159
      %p1145 = pneg %p156
      %p1146 = pneg %p180
      %p1147 = pneg %p177
      %p1148 = pneg %p201
      %p1149 = pneg %p198
      %p1150 = pneg %p222
      %p1151 = pneg %p219
      %p1152 = pneg %p243
      %p1153 = pneg %p240
      %p1154 = pneg %p264
      %p1155 = pneg %p261
      %p1156 = pneg %p285
      %p1157 = pneg %p282
      %p1158 = pneg %p306
      %p1159 = pneg %p303
      %p1160 = pneg %p327
      %p1161 = pneg %p324
      %p1162 = pneg %p348
      %p1163 = pneg %p345
      %p1164 = pneg %p369
      %p1165 = pneg %p366
      %p1166 = pneg %p390
      %p1167 = pneg %p387
      %p1168 = pneg %p411
      %p1169 = pneg %p408
      %p1170 = pneg %p432
      %p1171 = pneg %p429
      %p1172 = pneg %p453
      %p1173 = pneg %p450
      %p1174 = pneg %p474
      %p1175 = pneg %p471
      %p1176 = pneg %p495
      %p1177 = pneg %p492
      %p1178 = pneg %p516
      %p1179 = pneg %p513
      %p1180 = pneg %p537
      %p1181 = pneg %p534
      %p1182 = pneg %p558
      %p1183 = pneg %p555
      %p1184 = pneg %p579
      %p1185 = pneg %p576
      %p1186 = pneg %p600
      %p1187 = pneg %p597
      %p1188 = pneg %p621
      %p1189 = pneg %p618
      %p1190 = pneg %p642
      %p1191 = pneg %p639
      %p1192 = pneg %p663
      %p1193 = pneg %p660
      %p1194 = pneg %p684
      %p1195 = pneg %p681
      %p1196 = pneg %p705
      %p1197 = pneg %p702
      %p1198 = pneg %p726
      %p1199 = pneg %p723
      %p1200 = pneg %p747
      %p1201 = pneg %p744
      %p1202 = pneg %p768
      %p1203 = pneg %p765
      %p1204 = pneg %p789
      %p1205 = pneg %p786
      %p1206 = pneg %p810
      %p1207 = pneg %p807
      %p1208 = pneg %p831
      %p1209 = pneg %p828
      %p1210 = pneg %p852
      %p1211 = pneg %p849
      %p1212 = pneg %p873
      %p1213 = pneg %p870
      %p1214 = pneg %p894
      %p1215 = pneg %p891
      %p1216 = pneg %p915
      %p1217 = pneg %p912
      %p1218 = pneg %p936
      %p1219 = pneg %p933
      %p1220 = pneg %p957
      %p1221 = pneg %p954
      %p1222 = pneg %p983
      %p1223 = pneg %p980
      %p1224 = scmp.lt.s32.totalorder %s96, 1
      %s1225 = scalar_select %p1224, %s96, 1
      %s1226 = smul.addr %s1225, 8
      %s1227 = scalar_lea.vmem %s83, %s1226
      %p1228 = scmp.lt.s32.totalorder %s96, 1
      %s1229 = scalar_select %p1228, %s96, 1
      %s1230 = smul.addr %s1229, 8
      %s1231 = scalar_lea.vmem %s1, %s1230
      %p1232 = scmp.lt.s32.totalorder %s96, 1
      %s1233 = scalar_select %p1232, %s96, 1
      %s1234 = smul.addr %s1233, 8
      %s1235 = scalar_lea.vmem %s83, %s1234
      %v1237 = vld [vmem:[%s1231] sm:$0xff]
      %v1238 = vld [vmem:[%s3] sm:$0xff]
      %v1239 = vld [vmem:[%s3 + $0x8] sm:$0xff]
      %v1240 = vld [vmem:[%s3 + $0x10] sm:$0xff]
      %v1241 = vld [vmem:[%s3 + $0x18] sm:$0xff]
      %v1242 = vld [vmem:[%s5] sm:$0x1]
      %v1243 = vld [vmem:[%s7] sm:$0x1]
      %vm1244 = vcmask 523264
      %v1245 = vsel %vm1244, %v1238, 0.0
      %1246 = vadd.xlane.f32.xlu0 %v1245
      %v1247 = vpop.xlane.xlu0 %1246
      %v1248 = vsel %vm1244, %v1239, 0.0
      %1249 = vadd.xlane.f32.xlu0 %v1248
      %v1250 = vpop.xlane.xlu0 %1249
      %v1251 = vsel %vm1244, %v1240, 0.0
      %1252 = vadd.xlane.f32.xlu0 %v1251
      %v1253 = vpop.xlane.xlu0 %1252
      %v1254 = vsel %vm1244, %v1241, 0.0
      %1255 = vadd.xlane.f32.xlu0 %v1254
      %v1256 = vpop.xlane.xlu0 %1255
      %v1257 = vrcp.pop 64.0
      %v1258 = vmul.f32 %v1247, %v1257
      %v1259 = vmul.f32 %v1250, %v1257
      %v1260 = vmul.f32 %v1253, %v1257
      %v1261 = vmul.f32 %v1256, %v1257
      %v1262 = vsub.f32 %v1238, %v1258
      %v1263 = vsub.f32 %v1239, %v1259
      %v1264 = vsub.f32 %v1240, %v1260
      %v1265 = vsub.f32 %v1241, %v1261
      %v1266 = vmul.f32 %v1262, %v1262
      %v1267 = vmul.f32 %v1263, %v1263
      %v1268 = vmul.f32 %v1264, %v1264
      %v1269 = vmul.f32 %v1265, %v1265
      %v1270 = vsel %vm1244, %v1266, 0.0
      %1271 = vadd.xlane.f32.xlu0 %v1270
      %v1272 = vpop.xlane.xlu0 %1271
      %v1273 = vsel %vm1244, %v1267, 0.0
      %1274 = vadd.xlane.f32.xlu0 %v1273
      %v1275 = vpop.xlane.xlu0 %1274
      %v1276 = vsel %vm1244, %v1268, 0.0
      %1277 = vadd.xlane.f32.xlu0 %v1276
      %v1278 = vpop.xlane.xlu0 %1277
      %v1279 = vsel %vm1244, %v1269, 0.0
      %1280 = vadd.xlane.f32.xlu0 %v1279
      %v1281 = vpop.xlane.xlu0 %1280
      %v1282 = vmul.f32 %v1272, %v1257
      %v1283 = vmul.f32 %v1275, %v1257
      %v1284 = vmul.f32 %v1278, %v1257
      %v1285 = vmul.f32 %v1281, %v1257
      %v1286 = vadd.f32 %v1282, 1e-05
      %v1287 = vadd.f32 %v1283, 1e-05
      %v1288 = vadd.f32 %v1284, 1e-05
      %v1289 = vadd.f32 %v1285, 1e-05
      %v1290 = vrsqrt.pop %v1286
      %v1291 = vrsqrt.pop %v1287
      %v1292 = vrsqrt.pop %v1288
      %v1293 = vrsqrt.pop %v1289
      %v1294 = vmul.f32 %v1262, %v1290
      %v1295 = vmul.f32 %v1263, %v1291
      %v1296 = vmul.f32 %v1264, %v1292
      %v1297 = vmul.f32 %v1265, %v1293
      %v1299 = vlaneseq
      %v1300 = vshrl.u32 %v1299, 7
      %v1301 = vsub.s32 0, %v1300
      %v1302 = vrot.slane %v1242, %v1301
      %v1304 = vmul.f32 %v1294, %v1302
      %v1305 = vmul.f32 %v1295, %v1302
      %v1306 = vmul.f32 %v1296, %v1302
      %v1307 = vmul.f32 %v1297, %v1302
      %v1309 = vlaneseq
      %v1310 = vshrl.u32 %v1309, 7
      %v1311 = vsub.s32 0, %v1310
      %v1312 = vrot.slane %v1243, %v1311
      %v1314 = vadd.f32 %v1304, %v1312
      %v1315 = vadd.f32 %v1305, %v1312
      %v1316 = vadd.f32 %v1306, %v1312
      %v1317 = vadd.f32 %v1307, %v1312
      %v1318 = vld [vmem:[%s9] sm:$0x1]
      %v1319 = vld [vmem:[%s11] sm:$0x1]
      %vm1320 = vcmask 15360
      %v1321 = vsel %vm1320, %v1237, 0.0
      %1322 = vadd.xlane.f32.xlu0 %v1321
      %v1323 = vpop.xlane.xlu0 %1322
      %v1324 = vrcp.pop 2.0
      %v1325 = vmul.f32 %v1323, %v1324
      %v1326 = vsub.f32 %v1237, %v1325
      %v1327 = vmul.f32 %v1326, %v1326
      %v1328 = vsel %vm1320, %v1327, 0.0
      %1329 = vadd.xlane.f32.xlu0 %v1328
      %v1330 = vpop.xlane.xlu0 %1329
      %v1331 = vmul.f32 %v1330, %v1324
      %v1332 = vadd.f32 %v1331, 1e-05
      %v1333 = vrsqrt.pop %v1332
      %v1334 = vmul.f32 %v1326, %v1333
      %v1336 = vlaneseq
      %v1337 = vshrl.u32 %v1336, 7
      %v1338 = vsub.s32 0, %v1337
      %v1339 = vrot.slane %v1318, %v1338
      %v1341 = vmul.f32 %v1334, %v1339
      %v1343 = vlaneseq
      %v1344 = vshrl.u32 %v1343, 7
      %v1345 = vsub.s32 0, %v1344
      %v1346 = vrot.slane %v1319, %v1345
      %v1348 = vadd.f32 %v1341, %v1346
      %v1349 = vld [vmem:[%s21] sm:$0x1]
      %v1350 = vld [vmem:[%s13] sm:$0xf]
      %v1351 = vld [vmem:[%s13 + $0x4] sm:$0xf]
      %v1352 = vld [vmem:[%s13 + $0x8] sm:$0xf]
      %v1353 = vld [vmem:[%s13 + $0xc] sm:$0xf]
      %v1354 = vld [vmem:[%s13 + $0x10] sm:$0xf]
      %v1355 = vld [vmem:[%s13 + $0x14] sm:$0xf]
      %v1356 = vld [vmem:[%s13 + $0x18] sm:$0xf]
      %v1357 = vld [vmem:[%s13 + $0x1c] sm:$0xf]
      %v1358 = vpack.c.bf16 %v1315, %v1314
      %v1359 = vpack.c.bf16 %v1317, %v1316
      %v1368 = vunpack.c.l.b16 %v1350
      %v1369 = vunpack.c.l.b16 %v1351
      %v1370 = vunpack.c.l.b16 %v1352
      %v1371 = vunpack.c.l.b16 %v1353
      %v1372 = vunpack.c.l.b16 %v1354
      %v1373 = vunpack.c.l.b16 %v1355
      %v1374 = vunpack.c.l.b16 %v1356
      %v1375 = vunpack.c.l.b16 %v1357
      %v1376 = vpack.c.b16 %v1369, %v1368
      %v1377 = vpack.c.b16 %v1371, %v1370
      %v1378 = vpack.c.b16 %v1373, %v1372
      %v1379 = vpack.c.b16 %v1375, %v1374
      %v1385 = vsel %vm1244, %v1358, 0
      %v1388 = vsel %vm1244, %v1359, 0
      %1390 = vmatprep.subr.bf16.mxu0 0
      %1391 = vmatpush1.bf16.msra.mxu0 %v1376
      %1392 = vmatprep.subr.bf16.mxu0 0
      %1393 = vmatpush1.bf16.msra.mxu0 %v1377
      %1394 = vmatprep.subr.bf16.mxu0 0
      %1395 = vmatpush1.bf16.msra.mxu0 %v1378
      %1396 = vmatprep.subr.bf16.mxu0 0
      %1397 = vmatpush1.bf16.msra.mxu0 %v1379
      %1398 = vmatprep.subr.bf16.mxu0 0
      %1399 = vmatpush1.bf16.msra.mxu0 0
      %1400 = vmatprep.subr.bf16.mxu0 0
      %1401 = vmatpush1.bf16.msra.mxu0 0
      %1402 = vmatprep.subr.bf16.mxu0 0
      %1403 = vmatpush1.bf16.msra.mxu0 0
      %1404 = vmatprep.subr.bf16.mxu0 0
      %1405 = vmatpush1.bf16.msra.mxu0 0
      %1406 = vmatprep.subr.bf16.mxu0 0
      %1407 = vmatpush1.bf16.msra.mxu0 0
      %1408 = vmatprep.subr.bf16.mxu0 0
      %1409 = vmatpush1.bf16.msra.mxu0 0
      %1410 = vmatprep.subr.bf16.mxu0 0
      %1411 = vmatpush1.bf16.msra.mxu0 0
      %1412 = vmatprep.subr.bf16.mxu0 0
      %1413 = vmatpush1.bf16.msra.mxu0 0
      %1414 = vmatprep.subr.bf16.mxu0 0
      %1415 = vmatpush1.bf16.msra.mxu0 0
      %1416 = vmatprep.subr.bf16.mxu0 0
      %1417 = vmatpush1.bf16.msra.mxu0 0
      %1418 = vmatprep.subr.bf16.mxu0 0
      %1419 = vmatpush1.bf16.msra.mxu0 0
      %1420 = vmatprep.subr.bf16.mxu0 0
      %1421 = vmatpush1.bf16.msra.mxu0 0
      %1422 = vmatprep.mubr.bf16.mxu0 0
      %1423 = vmatmul.mubr.bf16.gmra.mrb[0].mxu0 %v1385
      %v1424 = vpop.f32.mrb[0].mxu0
      %v1425 = vadd.f32 0.0, %v1424
      %v1426 = vpop.f32.mrb[0].mxu0
      %v1427 = vpop.f32.mrb[0].mxu0
      %v1428 = vadd.f32 0.0, %v1427
      %v1429 = vpop.f32.mrb[0].mxu0
      %1430 = vmatprep.mubr.bf16.mxu0 0
      %1431 = vmatmul.mubr.bf16.gmra.mrb[0].mxu0 %v1388
      %v1432 = vpop.f32.mrb[0].mxu0
      %v1433 = vadd.f32 0.0, %v1432
      %v1434 = vpop.f32.mrb[0].mxu0
      %v1435 = vpop.f32.mrb[0].mxu0
      %v1436 = vadd.f32 0.0, %v1435
      %v1437 = vpop.f32.mrb[0].mxu0
      %1438 = vdwg.mxu0
      %v1439 = vmul.f32 %v1425, 0.25
      %v1440 = vmul.f32 %v1428, 0.25
      %v1441 = vmul.f32 %v1433, 0.25
      %v1442 = vmul.f32 %v1436, 0.25
      %v1443 = vpack.c.bf16 %v1440, %v1439
      %v1444 = vpack.c.bf16 %v1442, %v1441
      %v1445 = vld [vmem:[%s15] sm:$0x1]
      %v1446 = vunpack.c.l.bf16 %v1445
      %1448 = vset.pattern.permute.xlu0 0
      %1449 = vperm.xlu0 %1448, %v1348
      %v1450 = vpop.permute.xlu0 %1449
      %v1452 = vlaneseq
      %v1453 = vshrl.u32 %v1452, 7
      %v1454 = vsub.s32 0, %v1453
      %v1455 = vrot.slane %v1446, %v1454
      %v1456 = vmul.f32 %v1450, %v1455
      %1457 = vset.pattern.permute.xlu0 1
      %1458 = vperm.xlu0 %1457, %v1348
      %v1459 = vpop.permute.xlu0 %1458
      %v1461 = vlaneseq
      %v1462 = vshrl.u32 %v1461, 7
      %v1463 = vsub.s32 1, %v1462
      %v1464 = vrot.slane %v1446, %v1463
      %v1465 = vmul.f32 %v1459, %v1464
      %v1466 = vadd.f32 %v1456, %v1465
      %v1467 = vpack.c.bf16 %v1466, %v1466
      %v1468 = vld [vmem:[%s17] sm:$0x1]
      %v1469 = vunpack.c.l.bf16 %v1468
      %v1470 = vlaneseq
      %v1471 = vshrl.u32 %v1470, 7
      %v1472 = vsub.s32 0, %v1471
      %v1473 = vrot.slane %v1469, %v1472
      %v1474 = vmul.f32 %v1450, %v1473
      %v1475 = vlaneseq
      %v1476 = vshrl.u32 %v1475, 7
      %v1477 = vsub.s32 1, %v1476
      %v1478 = vrot.slane %v1469, %v1477
      %v1479 = vmul.f32 %v1459, %v1478
      %v1480 = vadd.f32 %v1474, %v1479
      %v1481 = vpack.c.bf16 %v1480, %v1480
      %vm1482 = vcmask 130048
      %v1484 = vsel %vm1482, %v1443, 0
      %v1487 = vsel %vm1482, %v1444, 0
      %v1490 = vsel %vm1482, %v1467, 0
      %1492 = vmatprep.subr.bf16.mxu0 0
      %1493 = vmatpush1.bf16.xpose.msra.mxu0 %v1490
      %1494 = vmatprep.subr.bf16.mxu0 0
      %1495 = vmatpush1.bf16.xpose.msra.mxu0 0
      %1496 = vmatprep.subr.bf16.mxu0 0
      %1497 = vmatpush1.bf16.xpose.msra.mxu0 0
      %1498 = vmatprep.subr.bf16.mxu0 0
      %1499 = vmatpush1.bf16.xpose.msra.mxu0 0
      %1500 = vmatprep.subr.bf16.mxu0 0
      %1501 = vmatpush1.bf16.xpose.msra.mxu0 0
      %1502 = vmatprep.subr.bf16.mxu0 0
      %1503 = vmatpush1.bf16.xpose.msra.mxu0 0
      %1504 = vmatprep.subr.bf16.mxu0 0
      %1505 = vmatpush1.bf16.xpose.msra.mxu0 0
      %1506 = vmatprep.subr.bf16.mxu0 0
      %1507 = vmatpush1.bf16.xpose.msra.mxu0 0
      %1508 = vmatprep.subr.bf16.mxu0 0
      %1509 = vmatpush1.bf16.xpose.msra.mxu0 0
      %1510 = vmatprep.subr.bf16.mxu0 0
      %1511 = vmatpush1.bf16.xpose.msra.mxu0 0
      %1512 = vmatprep.subr.bf16.mxu0 0
      %1513 = vmatpush1.bf16.xpose.msra.mxu0 0
      %1514 = vmatprep.subr.bf16.mxu0 0
      %1515 = vmatpush1.bf16.xpose.msra.mxu0 0
      %1516 = vmatprep.subr.bf16.mxu0 0
      %1517 = vmatpush1.bf16.xpose.msra.mxu0 0
      %1518 = vmatprep.subr.bf16.mxu0 0
      %1519 = vmatpush1.bf16.xpose.msra.mxu0 0
      %1520 = vmatprep.subr.bf16.mxu0 0
      %1521 = vmatpush1.bf16.xpose.msra.mxu0 0
      %1522 = vmatprep.subr.bf16.mxu0 0
      %1523 = vmatpush1.bf16.xpose.msra.mxu0 0
      %1524 = vmatprep.mubr.bf16.mxu0 0
      %1525 = vmatmul.mubr.bf16.gmra.mrb[0].mxu0 %v1484
      %v1526 = vpop.f32.mrb[0].mxu0
      %v1527 = vadd.f32 0.0, %v1526
      %v1528 = vpop.f32.mrb[0].mxu0
      %v1529 = vpop.f32.mrb[0].mxu0
      %v1530 = vadd.f32 0.0, %v1529
      %v1531 = vpop.f32.mrb[0].mxu0
      %1532 = vmatprep.mubr.bf16.mxu0 0
      %1533 = vmatmul.mubr.bf16.gmra.mrb[0].mxu0 %v1487
      %v1534 = vpop.f32.mrb[0].mxu0
      %v1535 = vadd.f32 0.0, %v1534
      %v1536 = vpop.f32.mrb[0].mxu0
      %v1537 = vpop.f32.mrb[0].mxu0
      %v1538 = vadd.f32 0.0, %v1537
      %v1539 = vpop.f32.mrb[0].mxu0
      %1540 = vdwg.mxu0
      %vm1541 = vcmask 64512
      %v1542 = vsel %vm1541, %v1527, -inf
      %1543 = vmax.xlane.f32.xlu0 %v1542
      %v1544 = vpop.xlane.xlu0 %1543
      %v1545 = vsel %vm1541, %v1530, -inf
      %1546 = vmax.xlane.f32.xlu0 %v1545
      %v1547 = vpop.xlane.xlu0 %1546
      %v1548 = vsel %vm1541, %v1535, -inf
      %1549 = vmax.xlane.f32.xlu0 %v1548
      %v1550 = vpop.xlane.xlu0 %1549
      %v1551 = vsel %vm1541, %v1538, -inf
      %1552 = vmax.xlane.f32.xlu0 %v1551
      %v1553 = vpop.xlane.xlu0 %1552
      %v1554 = vsub.f32 %v1527, %v1544
      %v1555 = vsub.f32 %v1530, %v1547
      %v1556 = vsub.f32 %v1535, %v1550
      %v1557 = vsub.f32 %v1538, %v1553
      %v1558 = vmul.f32 %v1554, 1.442695
      %v1559 = vpow.pop %v1558
      %v1560 = vmul.f32 %v1555, 1.442695
      %v1561 = vpow.pop %v1560
      %v1562 = vmul.f32 %v1556, 1.442695
      %v1563 = vpow.pop %v1562
      %v1564 = vmul.f32 %v1557, 1.442695
      %v1565 = vpow.pop %v1564
      %v1566 = vsel %vm1541, %v1559, 0.0
      %1567 = vadd.xlane.f32.xlu0 %v1566
      %v1568 = vpop.xlane.xlu0 %1567
      %v1569 = vsel %vm1541, %v1561, 0.0
      %1570 = vadd.xlane.f32.xlu0 %v1569
      %v1571 = vpop.xlane.xlu0 %1570
      %v1572 = vsel %vm1541, %v1563, 0.0
      %1573 = vadd.xlane.f32.xlu0 %v1572
      %v1574 = vpop.xlane.xlu0 %1573
      %v1575 = vsel %vm1541, %v1565, 0.0
      %1576 = vadd.xlane.f32.xlu0 %v1575
      %v1577 = vpop.xlane.xlu0 %1576
      %v1578 = vrcp.pop %v1568
      %v1579 = vrcp.pop %v1571
      %v1580 = vrcp.pop %v1574
      %v1581 = vrcp.pop %v1577
      %v1582 = vmul.f32 %v1559, %v1578
      %v1583 = vmul.f32 %v1561, %v1579
      %v1584 = vmul.f32 %v1563, %v1580
      %v1585 = vmul.f32 %v1565, %v1581
      %v1586 = vpack.c.bf16 %v1583, %v1582
      %v1587 = vpack.c.bf16 %v1585, %v1584
      %v1589 = vsel %vm1541, %v1586, 0
      %v1592 = vsel %vm1541, %v1587, 0
      %vm1594 = vcmask 1043456
      %v1596 = vsel %vm1594, %v1481, 0
      %1598 = vmatprep.subr.bf16.mxu0 0
      %1599 = vmatpush1.bf16.msra.mxu0 %v1596
      %1600 = vmatprep.subr.bf16.mxu0 0
      %1601 = vmatpush1.bf16.msra.mxu0 0
      %1602 = vmatprep.subr.bf16.mxu0 0
      %1603 = vmatpush1.bf16.msra.mxu0 0
      %1604 = vmatprep.subr.bf16.mxu0 0
      %1605 = vmatpush1.bf16.msra.mxu0 0
      %1606 = vmatprep.subr.bf16.mxu0 0
      %1607 = vmatpush1.bf16.msra.mxu0 0
      %1608 = vmatprep.subr.bf16.mxu0 0
      %1609 = vmatpush1.bf16.msra.mxu0 0
      %1610 = vmatprep.subr.bf16.mxu0 0
      %1611 = vmatpush1.bf16.msra.mxu0 0
      %1612 = vmatprep.subr.bf16.mxu0 0
      %1613 = vmatpush1.bf16.msra.mxu0 0
      %1614 = vmatprep.subr.bf16.mxu0 0
      %1615 = vmatpush1.bf16.msra.mxu0 0
      %1616 = vmatprep.subr.bf16.mxu0 0
      %1617 = vmatpush1.bf16.msra.mxu0 0
      %1618 = vmatprep.subr.bf16.mxu0 0
      %1619 = vmatpush1.bf16.msra.mxu0 0
      %1620 = vmatprep.subr.bf16.mxu0 0
      %1621 = vmatpush1.bf16.msra.mxu0 0
      %1622 = vmatprep.subr.bf16.mxu0 0
      %1623 = vmatpush1.bf16.msra.mxu0 0
      %1624 = vmatprep.subr.bf16.mxu0 0
      %1625 = vmatpush1.bf16.msra.mxu0 0
      %1626 = vmatprep.subr.bf16.mxu0 0
      %1627 = vmatpush1.bf16.msra.mxu0 0
      %1628 = vmatprep.subr.bf16.mxu0 0
      %1629 = vmatpush1.bf16.msra.mxu0 0
      %1630 = vmatprep.mubr.bf16.mxu0 0
      %1631 = vmatmul.mubr.bf16.gmra.mrb[0].mxu0 %v1589
      %v1632 = vpop.f32.mrb[0].mxu0
      %v1633 = vadd.f32 0.0, %v1632
      %v1634 = vpop.f32.mrb[0].mxu0
      %v1635 = vpop.f32.mrb[0].mxu0
      %v1636 = vadd.f32 0.0, %v1635
      %v1637 = vpop.f32.mrb[0].mxu0
      %1638 = vmatprep.mubr.bf16.mxu0 0
      %1639 = vmatmul.mubr.bf16.gmra.mrb[0].mxu0 %v1592
      %v1640 = vpop.f32.mrb[0].mxu0
      %v1641 = vadd.f32 0.0, %v1640
      %v1642 = vpop.f32.mrb[0].mxu0
      %v1643 = vpop.f32.mrb[0].mxu0
      %v1644 = vadd.f32 0.0, %v1643
      %v1645 = vpop.f32.mrb[0].mxu0
      %1646 = vdwg.mxu0
      %v1647 = vpack.c.bf16 %v1636, %v1633
      %v1648 = vpack.c.bf16 %v1644, %v1641
      %v1649 = vld [vmem:[%s19] sm:$0xf]
      %v1650 = vld [vmem:[%s19 + $0x4] sm:$0xf]
      %s1651 = scalar_lea.vmem %s13, 32
      %v1652 = vld [vmem:[%s1651] sm:$0xf]
      %v1653 = vld [vmem:[%s1651 + $0x4] sm:$0xf]
      %v1654 = vld [vmem:[%s1651 + $0x8] sm:$0xf]
      %v1655 = vld [vmem:[%s1651 + $0xc] sm:$0xf]
      %v1656 = vld [vmem:[%s1651 + $0x10] sm:$0xf]
      %v1657 = vld [vmem:[%s1651 + $0x14] sm:$0xf]
      %v1658 = vld [vmem:[%s1651 + $0x18] sm:$0xf]
      %v1659 = vld [vmem:[%s1651 + $0x1c] sm:$0xf]
      %v1668 = vunpack.c.l.b16 %v1652
      %v1669 = vunpack.c.l.b16 %v1653
      %v1670 = vunpack.c.l.b16 %v1654
      %v1671 = vunpack.c.l.b16 %v1655
      %v1672 = vunpack.c.l.b16 %v1656
      %v1673 = vunpack.c.l.b16 %v1657
      %v1674 = vunpack.c.l.b16 %v1658
      %v1675 = vunpack.c.l.b16 %v1659
      %v1676 = vpack.c.b16 %v1669, %v1668
      %v1677 = vpack.c.b16 %v1671, %v1670
      %v1678 = vpack.c.b16 %v1673, %v1672
      %v1679 = vpack.c.b16 %v1675, %v1674
      %1684 = vmatprep.subr.bf16.mxu0 0
      %1685 = vmatpush1.bf16.msra.mxu0 %v1676
      %1686 = vmatprep.subr.bf16.mxu0 0
      %1687 = vmatpush1.bf16.msra.mxu0 %v1677
      %1688 = vmatprep.subr.bf16.mxu0 0
      %1689 = vmatpush1.bf16.msra.mxu0 %v1678
      %1690 = vmatprep.subr.bf16.mxu0 0
      %1691 = vmatpush1.bf16.msra.mxu0 %v1679
      %1692 = vmatprep.subr.bf16.mxu0 0
      %1693 = vmatpush1.bf16.msra.mxu0 0
      %1694 = vmatprep.subr.bf16.mxu0 0
      %1695 = vmatpush1.bf16.msra.mxu0 0
      %1696 = vmatprep.subr.bf16.mxu0 0
      %1697 = vmatpush1.bf16.msra.mxu0 0
      %1698 = vmatprep.subr.bf16.mxu0 0
      %1699 = vmatpush1.bf16.msra.mxu0 0
      %1700 = vmatprep.subr.bf16.mxu0 0
      %1701 = vmatpush1.bf16.msra.mxu0 0
      %1702 = vmatprep.subr.bf16.mxu0 0
      %1703 = vmatpush1.bf16.msra.mxu0 0
      %1704 = vmatprep.subr.bf16.mxu0 0
      %1705 = vmatpush1.bf16.msra.mxu0 0
      %1706 = vmatprep.subr.bf16.mxu0 0
      %1707 = vmatpush1.bf16.msra.mxu0 0
      %1708 = vmatprep.subr.bf16.mxu0 0
      %1709 = vmatpush1.bf16.msra.mxu0 0
      %1710 = vmatprep.subr.bf16.mxu0 0
      %1711 = vmatpush1.bf16.msra.mxu0 0
      %1712 = vmatprep.subr.bf16.mxu0 0
      %1713 = vmatpush1.bf16.msra.mxu0 0
      %1714 = vmatprep.subr.bf16.mxu0 0
      %1715 = vmatpush1.bf16.msra.mxu0 0
      %1716 = vmatprep.mubr.bf16.mxu0 0
      %1717 = vmatmul.mubr.bf16.gmra.mrb[0].mxu0 %v1385
      %v1718 = vpop.f32.mrb[0].mxu0
      %v1719 = vadd.f32 0.0, %v1718
      %v1720 = vpop.f32.mrb[0].mxu0
      %v1721 = vpop.f32.mrb[0].mxu0
      %v1722 = vadd.f32 0.0, %v1721
      %v1723 = vpop.f32.mrb[0].mxu0
      %1724 = vmatprep.mubr.bf16.mxu0 0
      %1725 = vmatmul.mubr.bf16.gmra.mrb[0].mxu0 %v1388
      %v1726 = vpop.f32.mrb[0].mxu0
      %v1727 = vadd.f32 0.0, %v1726
      %v1728 = vpop.f32.mrb[0].mxu0
      %v1729 = vpop.f32.mrb[0].mxu0
      %v1730 = vadd.f32 0.0, %v1729
      %v1731 = vpop.f32.mrb[0].mxu0
      %1732 = vdwg.mxu0
      %v1733 = vmul.f32 %v1719, 0.25
      %v1734 = vmul.f32 %v1722, 0.25
      %v1735 = vmul.f32 %v1727, 0.25
      %v1736 = vmul.f32 %v1730, 0.25
      %v1737 = vpack.c.bf16 %v1734, %v1733
      %v1738 = vpack.c.bf16 %v1736, %v1735
      %s1739 = scalar_lea.vmem %s15, 1
      %v1740 = vld [vmem:[%s1739] sm:$0x1]
      %v1741 = vunpack.c.l.bf16 %v1740
      %v1742 = vlaneseq
      %v1743 = vshrl.u32 %v1742, 7
      %v1744 = vsub.s32 0, %v1743
      %v1745 = vrot.slane %v1741, %v1744
      %v1746 = vmul.f32 %v1450, %v1745
      %v1747 = vlaneseq
      %v1748 = vshrl.u32 %v1747, 7
      %v1749 = vsub.s32 1, %v1748
      %v1750 = vrot.slane %v1741, %v1749
      %v1751 = vmul.f32 %v1459, %v1750
      %v1752 = vadd.f32 %v1746, %v1751
      %v1753 = vpack.c.bf16 %v1752, %v1752
      %s1754 = scalar_lea.vmem %s17, 1
      %v1755 = vld [vmem:[%s1754] sm:$0x1]
      %v1756 = vunpack.c.l.bf16 %v1755
      %v1757 = vlaneseq
      %v1758 = vshrl.u32 %v1757, 7
      %v1759 = vsub.s32 0, %v1758
      %v1760 = vrot.slane %v1756, %v1759
      %v1761 = vmul.f32 %v1450, %v1760
      %v1762 = vlaneseq
      %v1763 = vshrl.u32 %v1762, 7
      %v1764 = vsub.s32 1, %v1763
      %v1765 = vrot.slane %v1756, %v1764
      %v1766 = vmul.f32 %v1459, %v1765
      %v1767 = vadd.f32 %v1761, %v1766
      %v1768 = vpack.c.bf16 %v1767, %v1767
      %v1770 = vsel %vm1482, %v1737, 0
      %v1773 = vsel %vm1482, %v1738, 0
      %v1776 = vsel %vm1482, %v1753, 0
      %1778 = vmatprep.subr.bf16.mxu0 0
      %1779 = vmatpush1.bf16.xpose.msra.mxu0 %v1776
      %1780 = vmatprep.subr.bf16.mxu0 0
      %1781 = vmatpush1.bf16.xpose.msra.mxu0 0
      %1782 = vmatprep.subr.bf16.mxu0 0
      %1783 = vmatpush1.bf16.xpose.msra.mxu0 0
      %1784 = vmatprep.subr.bf16.mxu0 0
      %1785 = vmatpush1.bf16.xpose.msra.mxu0 0
      %1786 = vmatprep.subr.bf16.mxu0 0
      %1787 = vmatpush1.bf16.xpose.msra.mxu0 0
      %1788 = vmatprep.subr.bf16.mxu0 0
      %1789 = vmatpush1.bf16.xpose.msra.mxu0 0
      %1790 = vmatprep.subr.bf16.mxu0 0
      %1791 = vmatpush1.bf16.xpose.msra.mxu0 0
      %1792 = vmatprep.subr.bf16.mxu0 0
      %1793 = vmatpush1.bf16.xpose.msra.mxu0 0
      %1794 = vmatprep.subr.bf16.mxu0 0
      %1795 = vmatpush1.bf16.xpose.msra.mxu0 0
      %1796 = vmatprep.subr.bf16.mxu0 0
      %1797 = vmatpush1.bf16.xpose.msra.mxu0 0
      %1798 = vmatprep.subr.bf16.mxu0 0
      %1799 = vmatpush1.bf16.xpose.msra.mxu0 0
      %1800 = vmatprep.subr.bf16.mxu0 0
      %1801 = vmatpush1.bf16.xpose.msra.mxu0 0
      %1802 = vmatprep.subr.bf16.mxu0 0
      %1803 = vmatpush1.bf16.xpose.msra.mxu0 0
      %1804 = vmatprep.subr.bf16.mxu0 0
      %1805 = vmatpush1.bf16.xpose.msra.mxu0 0
      %1806 = vmatprep.subr.bf16.mxu0 0
      %1807 = vmatpush1.bf16.xpose.msra.mxu0 0
      %1808 = vmatprep.subr.bf16.mxu0 0
      %1809 = vmatpush1.bf16.xpose.msra.mxu0 0
      %1810 = vmatprep.mubr.bf16.mxu0 0
      %1811 = vmatmul.mubr.bf16.gmra.mrb[0].mxu0 %v1770
      %v1812 = vpop.f32.mrb[0].mxu0
      %v1813 = vadd.f32 0.0, %v1812
      %v1814 = vpop.f32.mrb[0].mxu0
      %v1815 = vpop.f32.mrb[0].mxu0
      %v1816 = vadd.f32 0.0, %v1815
      %v1817 = vpop.f32.mrb[0].mxu0
      %1818 = vmatprep.mubr.bf16.mxu0 0
      %1819 = vmatmul.mubr.bf16.gmra.mrb[0].mxu0 %v1773
      %v1820 = vpop.f32.mrb[0].mxu0
      %v1821 = vadd.f32 0.0, %v1820
      %v1822 = vpop.f32.mrb[0].mxu0
      %v1823 = vpop.f32.mrb[0].mxu0
      %v1824 = vadd.f32 0.0, %v1823
      %v1825 = vpop.f32.mrb[0].mxu0
      %1826 = vdwg.mxu0
      %v1827 = vsel %vm1541, %v1813, -inf
      %1828 = vmax.xlane.f32.xlu0 %v1827
      %v1829 = vpop.xlane.xlu0 %1828
      %v1830 = vsel %vm1541, %v1816, -inf
      %1831 = vmax.xlane.f32.xlu0 %v1830
      %v1832 = vpop.xlane.xlu0 %1831
      %v1833 = vsel %vm1541, %v1821, -inf
      %1834 = vmax.xlane.f32.xlu0 %v1833
      %v1835 = vpop.xlane.xlu0 %1834
      %v1836 = vsel %vm1541, %v1824, -inf
      %1837 = vmax.xlane.f32.xlu0 %v1836
      %v1838 = vpop.xlane.xlu0 %1837
      %v1839 = vsub.f32 %v1813, %v1829
      %v1840 = vsub.f32 %v1816, %v1832
      %v1841 = vsub.f32 %v1821, %v1835
      %v1842 = vsub.f32 %v1824, %v1838
      %v1843 = vmul.f32 %v1839, 1.442695
      %v1844 = vpow.pop %v1843
      %v1845 = vmul.f32 %v1840, 1.442695
      %v1846 = vpow.pop %v1845
      %v1847 = vmul.f32 %v1841, 1.442695
      %v1848 = vpow.pop %v1847
      %v1849 = vmul.f32 %v1842, 1.442695
      %v1850 = vpow.pop %v1849
      %v1851 = vsel %vm1541, %v1844, 0.0
      %1852 = vadd.xlane.f32.xlu0 %v1851
      %v1853 = vpop.xlane.xlu0 %1852
      %v1854 = vsel %vm1541, %v1846, 0.0
      %1855 = vadd.xlane.f32.xlu0 %v1854
      %v1856 = vpop.xlane.xlu0 %1855
      %v1857 = vsel %vm1541, %v1848, 0.0
      %1858 = vadd.xlane.f32.xlu0 %v1857
      %v1859 = vpop.xlane.xlu0 %1858
      %v1860 = vsel %vm1541, %v1850, 0.0
      %1861 = vadd.xlane.f32.xlu0 %v1860
      %v1862 = vpop.xlane.xlu0 %1861
      %v1863 = vrcp.pop %v1853
      %v1864 = vrcp.pop %v1856
      %v1865 = vrcp.pop %v1859
      %v1866 = vrcp.pop %v1862
      %v1867 = vmul.f32 %v1844, %v1863
      %v1868 = vmul.f32 %v1846, %v1864
      %v1869 = vmul.f32 %v1848, %v1865
      %v1870 = vmul.f32 %v1850, %v1866
      %v1871 = vpack.c.bf16 %v1868, %v1867
      %v1872 = vpack.c.bf16 %v1870, %v1869
      %v1874 = vsel %vm1541, %v1871, 0
      %v1877 = vsel %vm1541, %v1872, 0
      %v1880 = vsel %vm1594, %v1768, 0
      %1882 = vmatprep.subr.bf16.mxu0 0
      %1883 = vmatpush1.bf16.msra.mxu0 %v1880
      %1884 = vmatprep.subr.bf16.mxu0 0
      %1885 = vmatpush1.bf16.msra.mxu0 0
      %1886 = vmatprep.subr.bf16.mxu0 0
      %1887 = vmatpush1.bf16.msra.mxu0 0
      %1888 = vmatprep.subr.bf16.mxu0 0
      %1889 = vmatpush1.bf16.msra.mxu0 0
      %1890 = vmatprep.subr.bf16.mxu0 0
      %1891 = vmatpush1.bf16.msra.mxu0 0
      %1892 = vmatprep.subr.bf16.mxu0 0
      %1893 = vmatpush1.bf16.msra.mxu0 0
      %1894 = vmatprep.subr.bf16.mxu0 0
      %1895 = vmatpush1.bf16.msra.mxu0 0
      %1896 = vmatprep.subr.bf16.mxu0 0
      %1897 = vmatpush1.bf16.msra.mxu0 0
      %1898 = vmatprep.subr.bf16.mxu0 0
      %1899 = vmatpush1.bf16.msra.mxu0 0
      %1900 = vmatprep.subr.bf16.mxu0 0
      %1901 = vmatpush1.bf16.msra.mxu0 0
      %1902 = vmatprep.subr.bf16.mxu0 0
      %1903 = vmatpush1.bf16.msra.mxu0 0
      %1904 = vmatprep.subr.bf16.mxu0 0
      %1905 = vmatpush1.bf16.msra.mxu0 0
      %1906 = vmatprep.subr.bf16.mxu0 0
      %1907 = vmatpush1.bf16.msra.mxu0 0
      %1908 = vmatprep.subr.bf16.mxu0 0
      %1909 = vmatpush1.bf16.msra.mxu0 0
      %1910 = vmatprep.subr.bf16.mxu0 0
      %1911 = vmatpush1.bf16.msra.mxu0 0
      %1912 = vmatprep.subr.bf16.mxu0 0
      %1913 = vmatpush1.bf16.msra.mxu0 0
      %1914 = vmatprep.mubr.bf16.mxu0 0
      %1915 = vmatmul.mubr.bf16.gmra.mrb[0].mxu0 %v1874
      %v1916 = vpop.f32.mrb[0].mxu0
      %v1917 = vadd.f32 0.0, %v1916
      %v1918 = vpop.f32.mrb[0].mxu0
      %v1919 = vpop.f32.mrb[0].mxu0
      %v1920 = vadd.f32 0.0, %v1919
      %v1921 = vpop.f32.mrb[0].mxu0
      %1922 = vmatprep.mubr.bf16.mxu0 0
      %1923 = vmatmul.mubr.bf16.gmra.mrb[0].mxu0 %v1877
      %v1924 = vpop.f32.mrb[0].mxu0
      %v1925 = vadd.f32 0.0, %v1924
      %v1926 = vpop.f32.mrb[0].mxu0
      %v1927 = vpop.f32.mrb[0].mxu0
      %v1928 = vadd.f32 0.0, %v1927
      %v1929 = vpop.f32.mrb[0].mxu0
      %1930 = vdwg.mxu0
      %v1931 = vpack.c.bf16 %v1920, %v1917
      %v1932 = vpack.c.bf16 %v1928, %v1925
      %s1933 = scalar_lea.vmem %s19, 8
      %v1934 = vld [vmem:[%s1933] sm:$0xf]
      %v1935 = vld [vmem:[%s1933 + $0x4] sm:$0xf]
      %v1938 = vunpack.c.l.b16 %v1934
      %v1939 = vunpack.c.l.b16 %v1935
      %v1940 = vpack.c.b16 %v1939, %v1938
      %v1943 = vsel %vm1482, %v1931, 0
      %v1946 = vsel %vm1482, %v1932, 0
      %1948 = vmatprep.subr.bf16.mxu0 0
      %1949 = vmatpush1.bf16.msra.mxu0 %v1940
      %1950 = vmatprep.subr.bf16.mxu0 0
      %1951 = vmatpush1.bf16.msra.mxu0 0
      %1952 = vmatprep.subr.bf16.mxu0 0
      %1953 = vmatpush1.bf16.msra.mxu0 0
      %1954 = vmatprep.subr.bf16.mxu0 0
      %1955 = vmatpush1.bf16.msra.mxu0 0
      %1956 = vmatprep.subr.bf16.mxu0 0
      %1957 = vmatpush1.bf16.msra.mxu0 0
      %1958 = vmatprep.subr.bf16.mxu0 0
      %1959 = vmatpush1.bf16.msra.mxu0 0
      %1960 = vmatprep.subr.bf16.mxu0 0
      %1961 = vmatpush1.bf16.msra.mxu0 0
      %1962 = vmatprep.subr.bf16.mxu0 0
      %1963 = vmatpush1.bf16.msra.mxu0 0
      %1964 = vmatprep.subr.bf16.mxu0 0
      %1965 = vmatpush1.bf16.msra.mxu0 0
      %1966 = vmatprep.subr.bf16.mxu0 0
      %1967 = vmatpush1.bf16.msra.mxu0 0
      %1968 = vmatprep.subr.bf16.mxu0 0
      %1969 = vmatpush1.bf16.msra.mxu0 0
      %1970 = vmatprep.subr.bf16.mxu0 0
      %1971 = vmatpush1.bf16.msra.mxu0 0
      %1972 = vmatprep.subr.bf16.mxu0 0
      %1973 = vmatpush1.bf16.msra.mxu0 0
      %1974 = vmatprep.subr.bf16.mxu0 0
      %1975 = vmatpush1.bf16.msra.mxu0 0
      %1976 = vmatprep.subr.bf16.mxu0 0
      %1977 = vmatpush1.bf16.msra.mxu0 0
      %1978 = vmatprep.subr.bf16.mxu0 0
      %1979 = vmatpush1.bf16.msra.mxu0 0
      %1980 = vmatprep.mubr.bf16.mxu0 0
      %1981 = vmatmul.mubr.bf16.gmra.mrb[0].mxu0 %v1943
      %v1982 = vpop.f32.mrb[0].mxu0
      %v1983 = vadd.f32 0.0, %v1982
      %v1984 = vpop.f32.mrb[0].mxu0
      %v1985 = vpop.f32.mrb[0].mxu0
      %v1986 = vadd.f32 0.0, %v1985
      %v1987 = vpop.f32.mrb[0].mxu0
      %1988 = vmatprep.mubr.bf16.mxu0 0
      %1989 = vmatmul.mubr.bf16.gmra.mrb[0].mxu0 %v1946
      %v1990 = vpop.f32.mrb[0].mxu0
      %v1991 = vadd.f32 0.0, %v1990
      %v1992 = vpop.f32.mrb[0].mxu0
      %v1993 = vpop.f32.mrb[0].mxu0
      %v1994 = vadd.f32 0.0, %v1993
      %v1995 = vpop.f32.mrb[0].mxu0
      %1996 = vdwg.mxu0
      %v1999 = vunpack.c.l.b16 %v1649
      %v2000 = vunpack.c.l.b16 %v1650
      %v2001 = vpack.c.b16 %v2000, %v1999
      %v2004 = vsel %vm1482, %v1647, 0
      %v2007 = vsel %vm1482, %v1648, 0
      %2009 = vmatprep.subr.bf16.mxu0 0
      %2010 = vmatpush1.bf16.msra.mxu0 %v2001
      %2011 = vmatprep.subr.bf16.mxu0 0
      %2012 = vmatpush1.bf16.msra.mxu0 0
      %2013 = vmatprep.subr.bf16.mxu0 0
      %2014 = vmatpush1.bf16.msra.mxu0 0
      %2015 = vmatprep.subr.bf16.mxu0 0
      %2016 = vmatpush1.bf16.msra.mxu0 0
      %2017 = vmatprep.subr.bf16.mxu0 0
      %2018 = vmatpush1.bf16.msra.mxu0 0
      %2019 = vmatprep.subr.bf16.mxu0 0
      %2020 = vmatpush1.bf16.msra.mxu0 0
      %2021 = vmatprep.subr.bf16.mxu0 0
      %2022 = vmatpush1.bf16.msra.mxu0 0
      %2023 = vmatprep.subr.bf16.mxu0 0
      %2024 = vmatpush1.bf16.msra.mxu0 0
      %2025 = vmatprep.subr.bf16.mxu0 0
      %2026 = vmatpush1.bf16.msra.mxu0 0
      %2027 = vmatprep.subr.bf16.mxu0 0
      %2028 = vmatpush1.bf16.msra.mxu0 0
      %2029 = vmatprep.subr.bf16.mxu0 0
      %2030 = vmatpush1.bf16.msra.mxu0 0
      %2031 = vmatprep.subr.bf16.mxu0 0
      %2032 = vmatpush1.bf16.msra.mxu0 0
      %2033 = vmatprep.subr.bf16.mxu0 0
      %2034 = vmatpush1.bf16.msra.mxu0 0
      %2035 = vmatprep.subr.bf16.mxu0 0
      %2036 = vmatpush1.bf16.msra.mxu0 0
      %2037 = vmatprep.subr.bf16.mxu0 0
      %2038 = vmatpush1.bf16.msra.mxu0 0
      %2039 = vmatprep.subr.bf16.mxu0 0
      %2040 = vmatpush1.bf16.msra.mxu0 0
      %2041 = vmatprep.mubr.bf16.mxu0 0
      %2042 = vmatmul.mubr.bf16.gmra.mrb[0].mxu0 %v2004
      %v2043 = vpop.f32.mrb[0].mxu0
      %v2044 = vadd.f32 %v1983, %v2043
      %v2045 = vpop.f32.mrb[0].mxu0
      %v2046 = vpop.f32.mrb[0].mxu0
      %v2047 = vadd.f32 %v1986, %v2046
      %v2048 = vpop.f32.mrb[0].mxu0
      %2049 = vmatprep.mubr.bf16.mxu0 0
      %2050 = vmatmul.mubr.bf16.gmra.mrb[0].mxu0 %v2007
      %v2051 = vpop.f32.mrb[0].mxu0
      %v2052 = vadd.f32 %v1991, %v2051
      %v2053 = vpop.f32.mrb[0].mxu0
      %v2054 = vpop.f32.mrb[0].mxu0
      %v2055 = vadd.f32 %v1994, %v2054
      %v2056 = vpop.f32.mrb[0].mxu0
      %2057 = vdwg.mxu0
      %v2059 = vlaneseq
      %v2060 = vshrl.u32 %v2059, 7
      %v2061 = vsub.s32 0, %v2060
      %v2062 = vrot.slane %v1349, %v2061
      %v2064 = vadd.f32 %v2044, %v2062
      %v2065 = vadd.f32 %v2047, %v2062
      %v2066 = vadd.f32 %v2052, %v2062
      %v2067 = vadd.f32 %v2055, %v2062
      %v2068 = vadd.f32 %v2064, %v1238
      %v2069 = vadd.f32 %v2065, %v1239
      %v2070 = vadd.f32 %v2066, %v1240
      %v2071 = vadd.f32 %v2067, %v1241
      %v2072 = vld [vmem:[%s23] sm:$0x1]
      %v2073 = vld [vmem:[%s25] sm:$0x1]
      %v2074 = vld [vmem:[%s27] sm:$0xff]
      %v2075 = vld [vmem:[%s27 + $0x8] sm:$0xff]
      %v2076 = vld [vmem:[%s27 + $0x10] sm:$0xff]
      %v2077 = vld [vmem:[%s27 + $0x18] sm:$0xff]
      %v2078 = vld [vmem:[%s27 + $0x20] sm:$0xff]
      %v2079 = vld [vmem:[%s27 + $0x28] sm:$0xff]
      %v2080 = vld [vmem:[%s27 + $0x30] sm:$0xff]
      %v2081 = vld [vmem:[%s27 + $0x38] sm:$0xff]
      %v2082 = vld [vmem:[%s27 + $0x40] sm:$0xff]
      %v2083 = vld [vmem:[%s27 + $0x48] sm:$0xff]
      %v2084 = vld [vmem:[%s27 + $0x50] sm:$0xff]
      %v2085 = vld [vmem:[%s27 + $0x58] sm:$0xff]
      %v2086 = vld [vmem:[%s27 + $0x60] sm:$0xff]
      %v2087 = vld [vmem:[%s27 + $0x68] sm:$0xff]
      %v2088 = vld [vmem:[%s27 + $0x70] sm:$0xff]
      %v2089 = vld [vmem:[%s27 + $0x78] sm:$0xff]
      %v2090 = vld [vmem:[%s29] sm:$0xf]
      %v2091 = vld [vmem:[%s31] sm:$0xf]
      %v2092 = vld [vmem:[%s31 + $0x4] sm:$0xf]
      %v2093 = vld [vmem:[%s31 + $0x8] sm:$0xf]
      %v2094 = vld [vmem:[%s31 + $0xc] sm:$0xf]
      %v2095 = vld [vmem:[%s31 + $0x10] sm:$0xf]
      %v2096 = vld [vmem:[%s31 + $0x14] sm:$0xf]
      %v2097 = vld [vmem:[%s31 + $0x18] sm:$0xf]
      %v2098 = vld [vmem:[%s31 + $0x1c] sm:$0xf]
      %v2099 = vld [vmem:[%s31 + $0x20] sm:$0xf]
      %v2100 = vld [vmem:[%s31 + $0x24] sm:$0xf]
      %v2101 = vld [vmem:[%s31 + $0x28] sm:$0xf]
      %v2102 = vld [vmem:[%s31 + $0x2c] sm:$0xf]
      %v2103 = vld [vmem:[%s31 + $0x30] sm:$0xf]
      %v2104 = vld [vmem:[%s31 + $0x34] sm:$0xf]
      %v2105 = vld [vmem:[%s31 + $0x38] sm:$0xf]
      %v2106 = vld [vmem:[%s31 + $0x3c] sm:$0xf]
      %v2107 = vld [vmem:[%s31 + $0x40] sm:$0xf]
      %v2108 = vld [vmem:[%s31 + $0x44] sm:$0xf]
      %v2109 = vld [vmem:[%s31 + $0x48] sm:$0xf]
      %v2110 = vld [vmem:[%s31 + $0x4c] sm:$0xf]
      %v2111 = vld [vmem:[%s31 + $0x50] sm:$0xf]
      %v2112 = vld [vmem:[%s31 + $0x54] sm:$0xf]
      %v2113 = vld [vmem:[%s31 + $0x58] sm:$0xf]
      %v2114 = vld [vmem:[%s31 + $0x5c] sm:$0xf]
      %v2115 = vld [vmem:[%s31 + $0x60] sm:$0xf]
      %v2116 = vld [vmem:[%s31 + $0x64] sm:$0xf]
      %v2117 = vld [vmem:[%s31 + $0x68] sm:$0xf]
      %v2118 = vld [vmem:[%s31 + $0x6c] sm:$0xf]
      %v2119 = vld [vmem:[%s31 + $0x70] sm:$0xf]
      %v2120 = vld [vmem:[%s31 + $0x74] sm:$0xf]
      %v2121 = vld [vmem:[%s31 + $0x78] sm:$0xf]
      %v2122 = vld [vmem:[%s31 + $0x7c] sm:$0xf]
      %v2123 = vld [vmem:[%s33] sm:$0x1]
      %v2124 = vsel %vm1244, %v2068, 0.0
      %2125 = vadd.xlane.f32.xlu0 %v2124
      %v2126 = vpop.xlane.xlu0 %2125
      %v2127 = vsel %vm1244, %v2069, 0.0
      %2128 = vadd.xlane.f32.xlu0 %v2127
      %v2129 = vpop.xlane.xlu0 %2128
      %v2130 = vsel %vm1244, %v2070, 0.0
      %2131 = vadd.xlane.f32.xlu0 %v2130
      %v2132 = vpop.xlane.xlu0 %2131
      %v2133 = vsel %vm1244, %v2071, 0.0
      %2134 = vadd.xlane.f32.xlu0 %v2133
      %v2135 = vpop.xlane.xlu0 %2134
      %v2136 = vmul.f32 %v2126, %v1257
      %v2137 = vmul.f32 %v2129, %v1257
      %v2138 = vmul.f32 %v2132, %v1257
      %v2139 = vmul.f32 %v2135, %v1257
      %v2140 = vsub.f32 %v2068, %v2136
      %v2141 = vsub.f32 %v2069, %v2137
      %v2142 = vsub.f32 %v2070, %v2138
      %v2143 = vsub.f32 %v2071, %v2139
      %v2144 = vmul.f32 %v2140, %v2140
      %v2145 = vmul.f32 %v2141, %v2141
      %v2146 = vmul.f32 %v2142, %v2142
      %v2147 = vmul.f32 %v2143, %v2143
      %v2148 = vsel %vm1244, %v2144, 0.0
      %2149 = vadd.xlane.f32.xlu0 %v2148
      %v2150 = vpop.xlane.xlu0 %2149
      %v2151 = vsel %vm1244, %v2145, 0.0
      %2152 = vadd.xlane.f32.xlu0 %v2151
      %v2153 = vpop.xlane.xlu0 %2152
      %v2154 = vsel %vm1244, %v2146, 0.0
      %2155 = vadd.xlane.f32.xlu0 %v2154
      %v2156 = vpop.xlane.xlu0 %2155
      %v2157 = vsel %vm1244, %v2147, 0.0
      %2158 = vadd.xlane.f32.xlu0 %v2157
      %v2159 = vpop.xlane.xlu0 %2158
      %v2160 = vmul.f32 %v2150, %v1257
      %v2161 = vmul.f32 %v2153, %v1257
      %v2162 = vmul.f32 %v2156, %v1257
      %v2163 = vmul.f32 %v2159, %v1257
      %v2164 = vadd.f32 %v2160, 1e-05
      %v2165 = vadd.f32 %v2161, 1e-05
      %v2166 = vadd.f32 %v2162, 1e-05
      %v2167 = vadd.f32 %v2163, 1e-05
      %v2168 = vrsqrt.pop %v2164
      %v2169 = vrsqrt.pop %v2165
      %v2170 = vrsqrt.pop %v2166
      %v2171 = vrsqrt.pop %v2167
      %v2172 = vmul.f32 %v2140, %v2168
      %v2173 = vmul.f32 %v2141, %v2169
      %v2174 = vmul.f32 %v2142, %v2170
      %v2175 = vmul.f32 %v2143, %v2171
      %v2177 = vlaneseq
      %v2178 = vshrl.u32 %v2177, 7
      %v2179 = vsub.s32 0, %v2178
      %v2180 = vrot.slane %v2072, %v2179
      %v2182 = vmul.f32 %v2172, %v2180
      %v2183 = vmul.f32 %v2173, %v2180
      %v2184 = vmul.f32 %v2174, %v2180
      %v2185 = vmul.f32 %v2175, %v2180
      %v2187 = vlaneseq
      %v2188 = vshrl.u32 %v2187, 7
      %v2189 = vsub.s32 0, %v2188
      %v2190 = vrot.slane %v2073, %v2189
      %v2192 = vadd.f32 %v2182, %v2190
      %v2193 = vadd.f32 %v2183, %v2190
      %v2194 = vadd.f32 %v2184, %v2190
      %v2195 = vadd.f32 %v2185, %v2190
      %v2196 = vpack.c.bf16 %v2193, %v2192
      %v2197 = vpack.c.bf16 %v2195, %v2194
      %v2199 = vlaneseq
      %v2200 = vshrl.u32 %v2199, 7
      %v2201 = vsub.s32 0, %v2200
      %v2202 = vrot.slane %v2090, %v2201
      %v2203 = vlaneseq
      %v2204 = vshrl.u32 %v2203, 7
      %v2205 = vsub.s32 1, %v2204
      %v2206 = vrot.slane %v2090, %v2205
      %v2207 = vlaneseq
      %v2208 = vshrl.u32 %v2207, 7
      %v2209 = vsub.s32 2, %v2208
      %v2210 = vrot.slane %v2090, %v2209
      %v2211 = vlaneseq
      %v2212 = vshrl.u32 %v2211, 7
      %v2213 = vsub.s32 3, %v2212
      %v2214 = vrot.slane %v2090, %v2213
      %v2235 = vunpack.c.l.b16 %v2074
      %v2236 = vunpack.c.h.b16 %v2074
      %v2237 = vunpack.c.l.b16 %v2075
      %v2238 = vunpack.c.h.b16 %v2075
      %v2239 = vunpack.c.l.b16 %v2076
      %v2240 = vunpack.c.h.b16 %v2076
      %v2241 = vunpack.c.l.b16 %v2077
      %v2242 = vunpack.c.h.b16 %v2077
      %v2243 = vunpack.c.l.b16 %v2078
      %v2244 = vunpack.c.h.b16 %v2078
      %v2245 = vunpack.c.l.b16 %v2079
      %v2246 = vunpack.c.h.b16 %v2079
      %v2247 = vunpack.c.l.b16 %v2080
      %v2248 = vunpack.c.h.b16 %v2080
      %v2249 = vunpack.c.l.b16 %v2081
      %v2250 = vunpack.c.h.b16 %v2081
      %v2251 = vunpack.c.l.b16 %v2082
      %v2252 = vunpack.c.h.b16 %v2082
      %v2253 = vunpack.c.l.b16 %v2083
      %v2254 = vunpack.c.h.b16 %v2083
      %v2255 = vunpack.c.l.b16 %v2084
      %v2256 = vunpack.c.h.b16 %v2084
      %v2257 = vunpack.c.l.b16 %v2085
      %v2258 = vunpack.c.h.b16 %v2085
      %v2259 = vunpack.c.l.b16 %v2086
      %v2260 = vunpack.c.h.b16 %v2086
      %v2261 = vunpack.c.l.b16 %v2087
      %v2262 = vunpack.c.h.b16 %v2087
      %v2263 = vunpack.c.l.b16 %v2088
      %v2264 = vunpack.c.h.b16 %v2088
      %v2265 = vunpack.c.l.b16 %v2089
      %v2266 = vunpack.c.h.b16 %v2089
      %v2267 = vpack.c.b16 %v2239, %v2235
      %v2268 = vpack.c.b16 %v2240, %v2236
      %v2269 = vpack.c.b16 %v2241, %v2237
      %v2270 = vpack.c.b16 %v2242, %v2238
      %v2271 = vpack.c.b16 %v2247, %v2243
      %v2272 = vpack.c.b16 %v2248, %v2244
      %v2273 = vpack.c.b16 %v2249, %v2245
      %v2274 = vpack.c.b16 %v2250, %v2246
      %v2275 = vpack.c.b16 %v2255, %v2251
      %v2276 = vpack.c.b16 %v2256, %v2252
      %v2277 = vpack.c.b16 %v2257, %v2253
      %v2278 = vpack.c.b16 %v2258, %v2254
      %v2279 = vpack.c.b16 %v2263, %v2259
      %v2280 = vpack.c.b16 %v2264, %v2260
      %v2281 = vpack.c.b16 %v2265, %v2261
      %v2282 = vpack.c.b16 %v2266, %v2262
      %v2300 = vsel %vm1244, %v2196, 0
      %v2303 = vsel %vm1244, %v2197, 0
      %2305 = vmatprep.subr.bf16.mxu0 %v2268
      %2306 = vmatpush1.bf16.msra.mxu0 %v2267
      %2307 = vmatprep.subr.bf16.mxu0 %v2272
      %2308 = vmatpush1.bf16.msra.mxu0 %v2271
      %2309 = vmatprep.subr.bf16.mxu0 %v2276
      %2310 = vmatpush1.bf16.msra.mxu0 %v2275
      %2311 = vmatprep.subr.bf16.mxu0 %v2280
      %2312 = vmatpush1.bf16.msra.mxu0 %v2279
      %2313 = vmatprep.subr.bf16.mxu0 0
      %2314 = vmatpush1.bf16.msra.mxu0 0
      %2315 = vmatprep.subr.bf16.mxu0 0
      %2316 = vmatpush1.bf16.msra.mxu0 0
      %2317 = vmatprep.subr.bf16.mxu0 0
      %2318 = vmatpush1.bf16.msra.mxu0 0
      %2319 = vmatprep.subr.bf16.mxu0 0
      %2320 = vmatpush1.bf16.msra.mxu0 0
      %2321 = vmatprep.subr.bf16.mxu0 0
      %2322 = vmatpush1.bf16.msra.mxu0 0
      %2323 = vmatprep.subr.bf16.mxu0 0
      %2324 = vmatpush1.bf16.msra.mxu0 0
      %2325 = vmatprep.subr.bf16.mxu0 0
      %2326 = vmatpush1.bf16.msra.mxu0 0
      %2327 = vmatprep.subr.bf16.mxu0 0
      %2328 = vmatpush1.bf16.msra.mxu0 0
      %2329 = vmatprep.subr.bf16.mxu0 0
      %2330 = vmatpush1.bf16.msra.mxu0 0
      %2331 = vmatprep.subr.bf16.mxu0 0
      %2332 = vmatpush1.bf16.msra.mxu0 0
      %2333 = vmatprep.subr.bf16.mxu0 0
      %2334 = vmatpush1.bf16.msra.mxu0 0
      %2335 = vmatprep.subr.bf16.mxu0 0
      %2336 = vmatpush1.bf16.msra.mxu0 0
      %2337 = vmatprep.mubr.bf16.mxu0 0
      %2338 = vmatmul.mubr.bf16.gmra.mrb[0].mxu0 %v2300
      %v2339 = vpop.f32.mrb[0].mxu0
      %v2340 = vadd.f32 %v2202, %v2339
      %v2341 = vpop.f32.mrb[0].mxu0
      %v2342 = vadd.f32 %v2206, %v2341
      %v2343 = vpop.f32.mrb[0].mxu0
      %v2344 = vadd.f32 %v2202, %v2343
      %v2345 = vpop.f32.mrb[0].mxu0
      %v2346 = vadd.f32 %v2206, %v2345
      %2347 = vmatprep.mubr.bf16.mxu0 0
      %2348 = vmatmul.mubr.bf16.gmra.mrb[0].mxu0 %v2303
      %v2349 = vpop.f32.mrb[0].mxu0
      %v2350 = vadd.f32 %v2202, %v2349
      %v2351 = vpop.f32.mrb[0].mxu0
      %v2352 = vadd.f32 %v2206, %v2351
      %v2353 = vpop.f32.mrb[0].mxu0
      %v2354 = vadd.f32 %v2202, %v2353
      %v2355 = vpop.f32.mrb[0].mxu0
      %v2356 = vadd.f32 %v2206, %v2355
      %2357 = vdwg.mxu0
      %2358 = vmatprep.subr.bf16.mxu0 %v2270
      %2359 = vmatpush1.bf16.msra.mxu0 %v2269
      %2360 = vmatprep.subr.bf16.mxu0 %v2274
      %2361 = vmatpush1.bf16.msra.mxu0 %v2273
      %2362 = vmatprep.subr.bf16.mxu0 %v2278
      %2363 = vmatpush1.bf16.msra.mxu0 %v2277
      %2364 = vmatprep.subr.bf16.mxu0 %v2282
      %2365 = vmatpush1.bf16.msra.mxu0 %v2281
      %2366 = vmatprep.subr.bf16.mxu0 0
      %2367 = vmatpush1.bf16.msra.mxu0 0
      %2368 = vmatprep.subr.bf16.mxu0 0
      %2369 = vmatpush1.bf16.msra.mxu0 0
      %2370 = vmatprep.subr.bf16.mxu0 0
      %2371 = vmatpush1.bf16.msra.mxu0 0
      %2372 = vmatprep.subr.bf16.mxu0 0
      %2373 = vmatpush1.bf16.msra.mxu0 0
      %2374 = vmatprep.subr.bf16.mxu0 0
      %2375 = vmatpush1.bf16.msra.mxu0 0
      %2376 = vmatprep.subr.bf16.mxu0 0
      %2377 = vmatpush1.bf16.msra.mxu0 0
      %2378 = vmatprep.subr.bf16.mxu0 0
      %2379 = vmatpush1.bf16.msra.mxu0 0
      %2380 = vmatprep.subr.bf16.mxu0 0
      %2381 = vmatpush1.bf16.msra.mxu0 0
      %2382 = vmatprep.subr.bf16.mxu0 0
      %2383 = vmatpush1.bf16.msra.mxu0 0
      %2384 = vmatprep.subr.bf16.mxu0 0
      %2385 = vmatpush1.bf16.msra.mxu0 0
      %2386 = vmatprep.subr.bf16.mxu0 0
      %2387 = vmatpush1.bf16.msra.mxu0 0
      %2388 = vmatprep.subr.bf16.mxu0 0
      %2389 = vmatpush1.bf16.msra.mxu0 0
      %2390 = vmatprep.mubr.bf16.mxu0 0
      %2391 = vmatmul.mubr.bf16.gmra.mrb[0].mxu0 %v2300
      %v2392 = vpop.f32.mrb[0].mxu0
      %v2393 = vadd.f32 %v2210, %v2392
      %v2394 = vpop.f32.mrb[0].mxu0
      %v2395 = vadd.f32 %v2214, %v2394
      %v2396 = vpop.f32.mrb[0].mxu0
      %v2397 = vadd.f32 %v2210, %v2396
      %v2398 = vpop.f32.mrb[0].mxu0
      %v2399 = vadd.f32 %v2214, %v2398
      %2400 = vmatprep.mubr.bf16.mxu0 0
      %2401 = vmatmul.mubr.bf16.gmra.mrb[0].mxu0 %v2303
      %v2402 = vpop.f32.mrb[0].mxu0
      %v2403 = vadd.f32 %v2210, %v2402
      %v2404 = vpop.f32.mrb[0].mxu0
      %v2405 = vadd.f32 %v2214, %v2404
      %v2406 = vpop.f32.mrb[0].mxu0
      %v2407 = vadd.f32 %v2210, %v2406
      %v2408 = vpop.f32.mrb[0].mxu0
      %v2409 = vadd.f32 %v2214, %v2408
      %2410 = vdwg.mxu0
      %v2411 = vmul.f32 %v2393, %v2393
      %v2412 = vmul.f32 %v2395, %v2395
      %v2413 = vmul.f32 %v2397, %v2397
      %v2414 = vmul.f32 %v2399, %v2399
      %v2415 = vmul.f32 %v2403, %v2403
      %v2416 = vmul.f32 %v2405, %v2405
      %v2417 = vmul.f32 %v2407, %v2407
      %v2418 = vmul.f32 %v2409, %v2409
      %v2419 = vmul.f32 %v2393, %v2411
      %v2420 = vmul.f32 %v2395, %v2412
      %v2421 = vmul.f32 %v2397, %v2413
      %v2422 = vmul.f32 %v2399, %v2414
      %v2423 = vmul.f32 %v2403, %v2415
      %v2424 = vmul.f32 %v2405, %v2416
      %v2425 = vmul.f32 %v2407, %v2417
      %v2426 = vmul.f32 %v2409, %v2418
      %v2427 = vmul.f32 %v2419, 0.044715
      %v2428 = vmul.f32 %v2420, 0.044715
      %v2429 = vmul.f32 %v2421, 0.044715
      %v2430 = vmul.f32 %v2422, 0.044715
      %v2431 = vmul.f32 %v2423, 0.044715
      %v2432 = vmul.f32 %v2424, 0.044715
      %v2433 = vmul.f32 %v2425, 0.044715
      %v2434 = vmul.f32 %v2426, 0.044715
      %v2435 = vadd.f32 %v2393, %v2427
      %v2436 = vadd.f32 %v2395, %v2428
      %v2437 = vadd.f32 %v2397, %v2429
      %v2438 = vadd.f32 %v2399, %v2430
      %v2439 = vadd.f32 %v2403, %v2431
      %v2440 = vadd.f32 %v2405, %v2432
      %v2441 = vadd.f32 %v2407, %v2433
      %v2442 = vadd.f32 %v2409, %v2434
      %v2443 = vmul.f32 %v2435, 0.7978846
      %v2444 = vmul.f32 %v2436, 0.7978846
      %v2445 = vmul.f32 %v2437, 0.7978846
      %v2446 = vmul.f32 %v2438, 0.7978846
      %v2447 = vmul.f32 %v2439, 0.7978846
      %v2448 = vmul.f32 %v2440, 0.7978846
      %v2449 = vmul.f32 %v2441, 0.7978846
      %v2450 = vmul.f32 %v2442, 0.7978846
      %v2451 = vtanh.pop %v2443
      %v2452 = vtanh.pop %v2444
      %v2453 = vtanh.pop %v2445
      %v2454 = vtanh.pop %v2446
      %v2455 = vtanh.pop %v2447
      %v2456 = vtanh.pop %v2448
      %v2457 = vtanh.pop %v2449
      %v2458 = vtanh.pop %v2450
      %v2459 = vadd.f32 %v2451, 1.0
      %v2460 = vadd.f32 %v2452, 1.0
      %v2461 = vadd.f32 %v2453, 1.0
      %v2462 = vadd.f32 %v2454, 1.0
      %v2463 = vadd.f32 %v2455, 1.0
      %v2464 = vadd.f32 %v2456, 1.0
      %v2465 = vadd.f32 %v2457, 1.0
      %v2466 = vadd.f32 %v2458, 1.0
      %v2467 = vmul.f32 %v2459, 0.5
      %v2468 = vmul.f32 %v2460, 0.5
      %v2469 = vmul.f32 %v2461, 0.5
      %v2470 = vmul.f32 %v2462, 0.5
      %v2471 = vmul.f32 %v2463, 0.5
      %v2472 = vmul.f32 %v2464, 0.5
      %v2473 = vmul.f32 %v2465, 0.5
      %v2474 = vmul.f32 %v2466, 0.5
      %v2475 = vmul.f32 %v2393, %v2467
      %v2476 = vmul.f32 %v2395, %v2468
      %v2477 = vmul.f32 %v2397, %v2469
      %v2478 = vmul.f32 %v2399, %v2470
      %v2479 = vmul.f32 %v2403, %v2471
      %v2480 = vmul.f32 %v2405, %v2472
      %v2481 = vmul.f32 %v2407, %v2473
      %v2482 = vmul.f32 %v2409, %v2474
      %v2483 = vmul.f32 %v2340, %v2475
      %v2484 = vmul.f32 %v2342, %v2476
      %v2485 = vmul.f32 %v2344, %v2477
      %v2486 = vmul.f32 %v2346, %v2478
      %v2487 = vmul.f32 %v2350, %v2479
      %v2488 = vmul.f32 %v2352, %v2480
      %v2489 = vmul.f32 %v2354, %v2481
      %v2490 = vmul.f32 %v2356, %v2482
      %v2491 = vpack.c.bf16 %v2485, %v2483
      %v2492 = vpack.c.bf16 %v2486, %v2484
      %v2493 = vpack.c.bf16 %v2489, %v2487
      %v2494 = vpack.c.bf16 %v2490, %v2488
      %v2496 = vlaneseq
      %v2497 = vshrl.u32 %v2496, 7
      %v2498 = vsub.s32 0, %v2497
      %v2499 = vrot.slane %v2123, %v2498
      %v2533 = vunpack.c.l.b16 %v2091
      %v2534 = vunpack.c.l.b16 %v2092
      %v2535 = vunpack.c.l.b16 %v2093
      %v2536 = vunpack.c.l.b16 %v2094
      %v2537 = vunpack.c.l.b16 %v2095
      %v2538 = vunpack.c.l.b16 %v2096
      %v2539 = vunpack.c.l.b16 %v2097
      %v2540 = vunpack.c.l.b16 %v2098
      %v2541 = vunpack.c.l.b16 %v2099
      %v2542 = vunpack.c.l.b16 %v2100
      %v2543 = vunpack.c.l.b16 %v2101
      %v2544 = vunpack.c.l.b16 %v2102
      %v2545 = vunpack.c.l.b16 %v2103
      %v2546 = vunpack.c.l.b16 %v2104
      %v2547 = vunpack.c.l.b16 %v2105
      %v2548 = vunpack.c.l.b16 %v2106
      %v2549 = vunpack.c.l.b16 %v2107
      %v2550 = vunpack.c.l.b16 %v2108
      %v2551 = vunpack.c.l.b16 %v2109
      %v2552 = vunpack.c.l.b16 %v2110
      %v2553 = vunpack.c.l.b16 %v2111
      %v2554 = vunpack.c.l.b16 %v2112
      %v2555 = vunpack.c.l.b16 %v2113
      %v2556 = vunpack.c.l.b16 %v2114
      %v2557 = vunpack.c.l.b16 %v2115
      %v2558 = vunpack.c.l.b16 %v2116
      %v2559 = vunpack.c.l.b16 %v2117
      %v2560 = vunpack.c.l.b16 %v2118
      %v2561 = vunpack.c.l.b16 %v2119
      %v2562 = vunpack.c.l.b16 %v2120
      %v2563 = vunpack.c.l.b16 %v2121
      %v2564 = vunpack.c.l.b16 %v2122
      %v2565 = vpack.c.b16 %v2534, %v2533
      %v2566 = vpack.c.b16 %v2536, %v2535
      %v2567 = vpack.c.b16 %v2538, %v2537
      %v2568 = vpack.c.b16 %v2540, %v2539
      %v2569 = vpack.c.b16 %v2542, %v2541
      %v2570 = vpack.c.b16 %v2544, %v2543
      %v2571 = vpack.c.b16 %v2546, %v2545
      %v2572 = vpack.c.b16 %v2548, %v2547
      %v2573 = vpack.c.b16 %v2550, %v2549
      %v2574 = vpack.c.b16 %v2552, %v2551
      %v2575 = vpack.c.b16 %v2554, %v2553
      %v2576 = vpack.c.b16 %v2556, %v2555
      %v2577 = vpack.c.b16 %v2558, %v2557
      %v2578 = vpack.c.b16 %v2560, %v2559
      %v2579 = vpack.c.b16 %v2562, %v2561
      %v2580 = vpack.c.b16 %v2564, %v2563
      %2597 = vmatprep.subr.bf16.mxu0 0
      %2598 = vmatpush1.bf16.msra.mxu0 %v2565
      %2599 = vmatprep.subr.bf16.mxu0 0
      %2600 = vmatpush1.bf16.msra.mxu0 %v2566
      %2601 = vmatprep.subr.bf16.mxu0 0
      %2602 = vmatpush1.bf16.msra.mxu0 %v2567
      %2603 = vmatprep.subr.bf16.mxu0 0
      %2604 = vmatpush1.bf16.msra.mxu0 %v2568
      %2605 = vmatprep.subr.bf16.mxu0 0
      %2606 = vmatpush1.bf16.msra.mxu0 %v2569
      %2607 = vmatprep.subr.bf16.mxu0 0
      %2608 = vmatpush1.bf16.msra.mxu0 %v2570
      %2609 = vmatprep.subr.bf16.mxu0 0
      %2610 = vmatpush1.bf16.msra.mxu0 %v2571
      %2611 = vmatprep.subr.bf16.mxu0 0
      %2612 = vmatpush1.bf16.msra.mxu0 %v2572
      %2613 = vmatprep.subr.bf16.mxu0 0
      %2614 = vmatpush1.bf16.msra.mxu0 %v2573
      %2615 = vmatprep.subr.bf16.mxu0 0
      %2616 = vmatpush1.bf16.msra.mxu0 %v2574
      %2617 = vmatprep.subr.bf16.mxu0 0
      %2618 = vmatpush1.bf16.msra.mxu0 %v2575
      %2619 = vmatprep.subr.bf16.mxu0 0
      %2620 = vmatpush1.bf16.msra.mxu0 %v2576
      %2621 = vmatprep.subr.bf16.mxu0 0
      %2622 = vmatpush1.bf16.msra.mxu0 %v2577
      %2623 = vmatprep.subr.bf16.mxu0 0
      %2624 = vmatpush1.bf16.msra.mxu0 %v2578
      %2625 = vmatprep.subr.bf16.mxu0 0
      %2626 = vmatpush1.bf16.msra.mxu0 %v2579
      %2627 = vmatprep.subr.bf16.mxu0 0
      %2628 = vmatpush1.bf16.msra.mxu0 %v2580
      %2629 = vmatprep.mubr.bf16.mxu0 %v2492
      %2630 = vmatmul.mubr.bf16.gmra.mrb[0].mxu0 %v2491
      %v2631 = vpop.f32.mrb[0].mxu0
      %v2632 = vadd.f32 %v2499, %v2631
      %v2633 = vpop.f32.mrb[0].mxu0
      %v2634 = vpop.f32.mrb[0].mxu0
      %v2635 = vadd.f32 %v2499, %v2634
      %v2636 = vpop.f32.mrb[0].mxu0
      %2637 = vmatprep.mubr.bf16.mxu0 %v2494
      %2638 = vmatmul.mubr.bf16.gmra.mrb[0].mxu0 %v2493
      %v2639 = vpop.f32.mrb[0].mxu0
      %v2640 = vadd.f32 %v2499, %v2639
      %v2641 = vpop.f32.mrb[0].mxu0
      %v2642 = vpop.f32.mrb[0].mxu0
      %v2643 = vadd.f32 %v2499, %v2642
      %v2644 = vpop.f32.mrb[0].mxu0
      %2645 = vdwg.mxu0
      %v2646 = vadd.f32 %v2632, %v2068
      %v2647 = vadd.f32 %v2635, %v2069
      %v2648 = vadd.f32 %v2640, %v2070
      %v2649 = vadd.f32 %v2643, %v2071
      %v2650 = vld [vmem:[%s35] sm:$0x1]
      %v2651 = vld [vmem:[%s37] sm:$0x1]
      %v2652 = vsel %vm1244, %v2646, 0.0
      %2653 = vadd.xlane.f32.xlu0 %v2652
      %v2654 = vpop.xlane.xlu0 %2653
      %v2655 = vsel %vm1244, %v2647, 0.0
      %2656 = vadd.xlane.f32.xlu0 %v2655
      %v2657 = vpop.xlane.xlu0 %2656
      %v2658 = vsel %vm1244, %v2648, 0.0
      %2659 = vadd.xlane.f32.xlu0 %v2658
      %v2660 = vpop.xlane.xlu0 %2659
      %v2661 = vsel %vm1244, %v2649, 0.0
      %2662 = vadd.xlane.f32.xlu0 %v2661
      %v2663 = vpop.xlane.xlu0 %2662
      %v2664 = vmul.f32 %v2654, %v1257
      %v2665 = vmul.f32 %v2657, %v1257
      %v2666 = vmul.f32 %v2660, %v1257
      %v2667 = vmul.f32 %v2663, %v1257
      %v2668 = vsub.f32 %v2646, %v2664
      %v2669 = vsub.f32 %v2647, %v2665
      %v2670 = vsub.f32 %v2648, %v2666
      %v2671 = vsub.f32 %v2649, %v2667
      %v2672 = vmul.f32 %v2668, %v2668
      %v2673 = vmul.f32 %v2669, %v2669
      %v2674 = vmul.f32 %v2670, %v2670
      %v2675 = vmul.f32 %v2671, %v2671
      %v2676 = vsel %vm1244, %v2672, 0.0
      %2677 = vadd.xlane.f32.xlu0 %v2676
      %v2678 = vpop.xlane.xlu0 %2677
      %v2679 = vsel %vm1244, %v2673, 0.0
      %2680 = vadd.xlane.f32.xlu0 %v2679
      %v2681 = vpop.xlane.xlu0 %2680
      %v2682 = vsel %vm1244, %v2674, 0.0
      %2683 = vadd.xlane.f32.xlu0 %v2682
      %v2684 = vpop.xlane.xlu0 %2683
      %v2685 = vsel %vm1244, %v2675, 0.0
      %2686 = vadd.xlane.f32.xlu0 %v2685
      %v2687 = vpop.xlane.xlu0 %2686
      %v2688 = vmul.f32 %v2678, %v1257
      %v2689 = vmul.f32 %v2681, %v1257
      %v2690 = vmul.f32 %v2684, %v1257
      %v2691 = vmul.f32 %v2687, %v1257
      %v2692 = vadd.f32 %v2688, 1e-05
      %v2693 = vadd.f32 %v2689, 1e-05
      %v2694 = vadd.f32 %v2690, 1e-05
      %v2695 = vadd.f32 %v2691, 1e-05
      %v2696 = vrsqrt.pop %v2692
      %v2697 = vrsqrt.pop %v2693
      %v2698 = vrsqrt.pop %v2694
      %v2699 = vrsqrt.pop %v2695
      %v2700 = vmul.f32 %v2668, %v2696
      %v2701 = vmul.f32 %v2669, %v2697
      %v2702 = vmul.f32 %v2670, %v2698
      %v2703 = vmul.f32 %v2671, %v2699
      %v2705 = vlaneseq
      %v2706 = vshrl.u32 %v2705, 7
      %v2707 = vsub.s32 0, %v2706
      %v2708 = vrot.slane %v2650, %v2707
      %v2710 = vmul.f32 %v2700, %v2708
      %v2711 = vmul.f32 %v2701, %v2708
      %v2712 = vmul.f32 %v2702, %v2708
      %v2713 = vmul.f32 %v2703, %v2708
      %v2715 = vlaneseq
      %v2716 = vshrl.u32 %v2715, 7
      %v2717 = vsub.s32 0, %v2716
      %v2718 = vrot.slane %v2651, %v2717
      %v2720 = vadd.f32 %v2710, %v2718
      %v2721 = vadd.f32 %v2711, %v2718
      %v2722 = vadd.f32 %v2712, %v2718
      %v2723 = vadd.f32 %v2713, %v2718
      %v2724 = vld [vmem:[%s47] sm:$0x1]
      %v2725 = vld [vmem:[%s39] sm:$0xf]
      %v2726 = vld [vmem:[%s39 + $0x4] sm:$0xf]
      %v2727 = vld [vmem:[%s39 + $0x8] sm:$0xf]
      %v2728 = vld [vmem:[%s39 + $0xc] sm:$0xf]
      %v2729 = vld [vmem:[%s39 + $0x10] sm:$0xf]
      %v2730 = vld [vmem:[%s39 + $0x14] sm:$0xf]
      %v2731 = vld [vmem:[%s39 + $0x18] sm:$0xf]
      %v2732 = vld [vmem:[%s39 + $0x1c] sm:$0xf]
      %v2733 = vpack.c.bf16 %v2721, %v2720
      %v2734 = vpack.c.bf16 %v2723, %v2722
      %v2743 = vunpack.c.l.b16 %v2725
      %v2744 = vunpack.c.l.b16 %v2726
      %v2745 = vunpack.c.l.b16 %v2727
      %v2746 = vunpack.c.l.b16 %v2728
      %v2747 = vunpack.c.l.b16 %v2729
      %v2748 = vunpack.c.l.b16 %v2730
      %v2749 = vunpack.c.l.b16 %v2731
      %v2750 = vunpack.c.l.b16 %v2732
      %v2751 = vpack.c.b16 %v2744, %v2743
      %v2752 = vpack.c.b16 %v2746, %v2745
      %v2753 = vpack.c.b16 %v2748, %v2747
      %v2754 = vpack.c.b16 %v2750, %v2749
      %v2760 = vsel %vm1244, %v2733, 0
      %v2763 = vsel %vm1244, %v2734, 0
      %2765 = vmatprep.subr.bf16.mxu0 0
      %2766 = vmatpush1.bf16.msra.mxu0 %v2751
      %2767 = vmatprep.subr.bf16.mxu0 0
      %2768 = vmatpush1.bf16.msra.mxu0 %v2752
      %2769 = vmatprep.subr.bf16.mxu0 0
      %2770 = vmatpush1.bf16.msra.mxu0 %v2753
      %2771 = vmatprep.subr.bf16.mxu0 0
      %2772 = vmatpush1.bf16.msra.mxu0 %v2754
      %2773 = vmatprep.subr.bf16.mxu0 0
      %2774 = vmatpush1.bf16.msra.mxu0 0
      %2775 = vmatprep.subr.bf16.mxu0 0
      %2776 = vmatpush1.bf16.msra.mxu0 0
      %2777 = vmatprep.subr.bf16.mxu0 0
      %2778 = vmatpush1.bf16.msra.mxu0 0
      %2779 = vmatprep.subr.bf16.mxu0 0
      %2780 = vmatpush1.bf16.msra.mxu0 0
      %2781 = vmatprep.subr.bf16.mxu0 0
      %2782 = vmatpush1.bf16.msra.mxu0 0
      %2783 = vmatprep.subr.bf16.mxu0 0
      %2784 = vmatpush1.bf16.msra.mxu0 0
      %2785 = vmatprep.subr.bf16.mxu0 0
      %2786 = vmatpush1.bf16.msra.mxu0 0
      %2787 = vmatprep.subr.bf16.mxu0 0
      %2788 = vmatpush1.bf16.msra.mxu0 0
      %2789 = vmatprep.subr.bf16.mxu0 0
      %2790 = vmatpush1.bf16.msra.mxu0 0
      %2791 = vmatprep.subr.bf16.mxu0 0
      %2792 = vmatpush1.bf16.msra.mxu0 0
      %2793 = vmatprep.subr.bf16.mxu0 0
      %2794 = vmatpush1.bf16.msra.mxu0 0
      %2795 = vmatprep.subr.bf16.mxu0 0
      %2796 = vmatpush1.bf16.msra.mxu0 0
      %2797 = vmatprep.mubr.bf16.mxu0 0
      %2798 = vmatmul.mubr.bf16.gmra.mrb[0].mxu0 %v2760
      %v2799 = vpop.f32.mrb[0].mxu0
      %v2800 = vadd.f32 0.0, %v2799
      %v2801 = vpop.f32.mrb[0].mxu0
      %v2802 = vpop.f32.mrb[0].mxu0
      %v2803 = vadd.f32 0.0, %v2802
      %v2804 = vpop.f32.mrb[0].mxu0
      %2805 = vmatprep.mubr.bf16.mxu0 0
      %2806 = vmatmul.mubr.bf16.gmra.mrb[0].mxu0 %v2763
      %v2807 = vpop.f32.mrb[0].mxu0
      %v2808 = vadd.f32 0.0, %v2807
      %v2809 = vpop.f32.mrb[0].mxu0
      %v2810 = vpop.f32.mrb[0].mxu0
      %v2811 = vadd.f32 0.0, %v2810
      %v2812 = vpop.f32.mrb[0].mxu0
      %2813 = vdwg.mxu0
      %v2814 = vmul.f32 %v2800, 0.25
      %v2815 = vmul.f32 %v2803, 0.25
      %v2816 = vmul.f32 %v2808, 0.25
      %v2817 = vmul.f32 %v2811, 0.25
      %v2818 = vpack.c.bf16 %v2815, %v2814
      %v2819 = vpack.c.bf16 %v2817, %v2816
      %v2820 = vld [vmem:[%s41] sm:$0xf]
      %v2821 = vld [vmem:[%s41 + $0x4] sm:$0xf]
      %v2822 = vld [vmem:[%s41 + $0x8] sm:$0xf]
      %v2823 = vld [vmem:[%s41 + $0xc] sm:$0xf]
      %v2824 = vld [vmem:[%s41 + $0x10] sm:$0xf]
      %v2825 = vld [vmem:[%s41 + $0x14] sm:$0xf]
      %v2826 = vld [vmem:[%s41 + $0x18] sm:$0xf]
      %v2827 = vld [vmem:[%s41 + $0x1c] sm:$0xf]
      %v2836 = vunpack.c.l.b16 %v2820
      %v2837 = vunpack.c.l.b16 %v2821
      %v2838 = vunpack.c.l.b16 %v2822
      %v2839 = vunpack.c.l.b16 %v2823
      %v2840 = vunpack.c.l.b16 %v2824
      %v2841 = vunpack.c.l.b16 %v2825
      %v2842 = vunpack.c.l.b16 %v2826
      %v2843 = vunpack.c.l.b16 %v2827
      %v2844 = vpack.c.b16 %v2837, %v2836
      %v2845 = vpack.c.b16 %v2839, %v2838
      %v2846 = vpack.c.b16 %v2841, %v2840
      %v2847 = vpack.c.b16 %v2843, %v2842
      %2852 = vmatprep.subr.bf16.mxu0 0
      %2853 = vmatpush1.bf16.msra.mxu0 %v2844
      %2854 = vmatprep.subr.bf16.mxu0 0
      %2855 = vmatpush1.bf16.msra.mxu0 %v2845
      %2856 = vmatprep.subr.bf16.mxu0 0
      %2857 = vmatpush1.bf16.msra.mxu0 %v2846
      %2858 = vmatprep.subr.bf16.mxu0 0
      %2859 = vmatpush1.bf16.msra.mxu0 %v2847
      %2860 = vmatprep.subr.bf16.mxu0 0
      %2861 = vmatpush1.bf16.msra.mxu0 0
      %2862 = vmatprep.subr.bf16.mxu0 0
      %2863 = vmatpush1.bf16.msra.mxu0 0
      %2864 = vmatprep.subr.bf16.mxu0 0
      %2865 = vmatpush1.bf16.msra.mxu0 0
      %2866 = vmatprep.subr.bf16.mxu0 0
      %2867 = vmatpush1.bf16.msra.mxu0 0
      %2868 = vmatprep.subr.bf16.mxu0 0
      %2869 = vmatpush1.bf16.msra.mxu0 0
      %2870 = vmatprep.subr.bf16.mxu0 0
      %2871 = vmatpush1.bf16.msra.mxu0 0
      %2872 = vmatprep.subr.bf16.mxu0 0
      %2873 = vmatpush1.bf16.msra.mxu0 0
      %2874 = vmatprep.subr.bf16.mxu0 0
      %2875 = vmatpush1.bf16.msra.mxu0 0
      %2876 = vmatprep.subr.bf16.mxu0 0
      %2877 = vmatpush1.bf16.msra.mxu0 0
      %2878 = vmatprep.subr.bf16.mxu0 0
      %2879 = vmatpush1.bf16.msra.mxu0 0
      %2880 = vmatprep.subr.bf16.mxu0 0
      %2881 = vmatpush1.bf16.msra.mxu0 0
      %2882 = vmatprep.subr.bf16.mxu0 0
      %2883 = vmatpush1.bf16.msra.mxu0 0
      %2884 = vmatprep.mubr.bf16.mxu0 0
      %2885 = vmatmul.mubr.bf16.gmra.mrb[0].mxu0 %v2760
      %v2886 = vpop.f32.mrb[0].mxu0
      %v2887 = vadd.f32 0.0, %v2886
      %v2888 = vpop.f32.mrb[0].mxu0
      %v2889 = vpop.f32.mrb[0].mxu0
      %v2890 = vadd.f32 0.0, %v2889
      %v2891 = vpop.f32.mrb[0].mxu0
      %2892 = vmatprep.mubr.bf16.mxu0 0
      %2893 = vmatmul.mubr.bf16.gmra.mrb[0].mxu0 %v2763
      %v2894 = vpop.f32.mrb[0].mxu0
      %v2895 = vadd.f32 0.0, %v2894
      %v2896 = vpop.f32.mrb[0].mxu0
      %v2897 = vpop.f32.mrb[0].mxu0
      %v2898 = vadd.f32 0.0, %v2897
      %v2899 = vpop.f32.mrb[0].mxu0
      %2900 = vdwg.mxu0
      %v2901 = vpack.c.bf16 %v2890, %v2887
      %v2902 = vpack.c.bf16 %v2898, %v2895
      %v2903 = vld [vmem:[%s43] sm:$0xf]
      %v2904 = vld [vmem:[%s43 + $0x4] sm:$0xf]
      %v2905 = vld [vmem:[%s43 + $0x8] sm:$0xf]
      %v2906 = vld [vmem:[%s43 + $0xc] sm:$0xf]
      %v2907 = vld [vmem:[%s43 + $0x10] sm:$0xf]
      %v2908 = vld [vmem:[%s43 + $0x14] sm:$0xf]
      %v2909 = vld [vmem:[%s43 + $0x18] sm:$0xf]
      %v2910 = vld [vmem:[%s43 + $0x1c] sm:$0xf]
      %v2919 = vunpack.c.l.b16 %v2903
      %v2920 = vunpack.c.l.b16 %v2904
      %v2921 = vunpack.c.l.b16 %v2905
      %v2922 = vunpack.c.l.b16 %v2906
      %v2923 = vunpack.c.l.b16 %v2907
      %v2924 = vunpack.c.l.b16 %v2908
      %v2925 = vunpack.c.l.b16 %v2909
      %v2926 = vunpack.c.l.b16 %v2910
      %v2927 = vpack.c.b16 %v2920, %v2919
      %v2928 = vpack.c.b16 %v2922, %v2921
      %v2929 = vpack.c.b16 %v2924, %v2923
      %v2930 = vpack.c.b16 %v2926, %v2925
      %2935 = vmatprep.subr.bf16.mxu0 0
      %2936 = vmatpush1.bf16.msra.mxu0 %v2927
      %2937 = vmatprep.subr.bf16.mxu0 0
      %2938 = vmatpush1.bf16.msra.mxu0 %v2928
      %2939 = vmatprep.subr.bf16.mxu0 0
      %2940 = vmatpush1.bf16.msra.mxu0 %v2929
      %2941 = vmatprep.subr.bf16.mxu0 0
      %2942 = vmatpush1.bf16.msra.mxu0 %v2930
      %2943 = vmatprep.subr.bf16.mxu0 0
      %2944 = vmatpush1.bf16.msra.mxu0 0
      %2945 = vmatprep.subr.bf16.mxu0 0
      %2946 = vmatpush1.bf16.msra.mxu0 0
      %2947 = vmatprep.subr.bf16.mxu0 0
      %2948 = vmatpush1.bf16.msra.mxu0 0
      %2949 = vmatprep.subr.bf16.mxu0 0
      %2950 = vmatpush1.bf16.msra.mxu0 0
      %2951 = vmatprep.subr.bf16.mxu0 0
      %2952 = vmatpush1.bf16.msra.mxu0 0
      %2953 = vmatprep.subr.bf16.mxu0 0
      %2954 = vmatpush1.bf16.msra.mxu0 0
      %2955 = vmatprep.subr.bf16.mxu0 0
      %2956 = vmatpush1.bf16.msra.mxu0 0
      %2957 = vmatprep.subr.bf16.mxu0 0
      %2958 = vmatpush1.bf16.msra.mxu0 0
      %2959 = vmatprep.subr.bf16.mxu0 0
      %2960 = vmatpush1.bf16.msra.mxu0 0
      %2961 = vmatprep.subr.bf16.mxu0 0
      %2962 = vmatpush1.bf16.msra.mxu0 0
      %2963 = vmatprep.subr.bf16.mxu0 0
      %2964 = vmatpush1.bf16.msra.mxu0 0
      %2965 = vmatprep.subr.bf16.mxu0 0
      %2966 = vmatpush1.bf16.msra.mxu0 0
      %2967 = vmatprep.mubr.bf16.mxu0 0
      %2968 = vmatmul.mubr.bf16.gmra.mrb[0].mxu0 %v2760
      %v2969 = vpop.f32.mrb[0].mxu0
      %v2970 = vadd.f32 0.0, %v2969
      %v2971 = vpop.f32.mrb[0].mxu0
      %v2972 = vpop.f32.mrb[0].mxu0
      %v2973 = vadd.f32 0.0, %v2972
      %v2974 = vpop.f32.mrb[0].mxu0
      %2975 = vmatprep.mubr.bf16.mxu0 0
      %2976 = vmatmul.mubr.bf16.gmra.mrb[0].mxu0 %v2763
      %v2977 = vpop.f32.mrb[0].mxu0
      %v2978 = vadd.f32 0.0, %v2977
      %v2979 = vpop.f32.mrb[0].mxu0
      %v2980 = vpop.f32.mrb[0].mxu0
      %v2981 = vadd.f32 0.0, %v2980
      %v2982 = vpop.f32.mrb[0].mxu0
      %2983 = vdwg.mxu0
      %v2984 = vpack.c.bf16 %v2973, %v2970
      %v2985 = vpack.c.bf16 %v2981, %v2978
      %v2987 = vsel %vm1482, %v2818, 0
      %v2990 = vsel %vm1482, %v2819, 0
      %v2993 = vsel %vm1482, %v2901, 0
      %v2996 = vsel %vm1482, %v2902, 0
      %2998 = vmatprep.subr.bf16.mxu0 0
      %2999 = vmatpush1.bf16.xpose.msra.mxu0 %v2993
      %3000 = vmatprep.subr.bf16.mxu0 0
      %3001 = vmatpush1.bf16.xpose.msra.mxu0 %v2996
      %3002 = vmatprep.subr.bf16.mxu0 0
      %3003 = vmatpush1.bf16.xpose.msra.mxu0 0
      %3004 = vmatprep.subr.bf16.mxu0 0
      %3005 = vmatpush1.bf16.xpose.msra.mxu0 0
      %3006 = vmatprep.subr.bf16.mxu0 0
      %3007 = vmatpush1.bf16.xpose.msra.mxu0 0
      %3008 = vmatprep.subr.bf16.mxu0 0
      %3009 = vmatpush1.bf16.xpose.msra.mxu0 0
      %3010 = vmatprep.subr.bf16.mxu0 0
      %3011 = vmatpush1.bf16.xpose.msra.mxu0 0
      %3012 = vmatprep.subr.bf16.mxu0 0
      %3013 = vmatpush1.bf16.xpose.msra.mxu0 0
      %3014 = vmatprep.subr.bf16.mxu0 0
      %3015 = vmatpush1.bf16.xpose.msra.mxu0 0
      %3016 = vmatprep.subr.bf16.mxu0 0
      %3017 = vmatpush1.bf16.xpose.msra.mxu0 0
      %3018 = vmatprep.subr.bf16.mxu0 0
      %3019 = vmatpush1.bf16.xpose.msra.mxu0 0
      %3020 = vmatprep.subr.bf16.mxu0 0
      %3021 = vmatpush1.bf16.xpose.msra.mxu0 0
      %3022 = vmatprep.subr.bf16.mxu0 0
      %3023 = vmatpush1.bf16.xpose.msra.mxu0 0
      %3024 = vmatprep.subr.bf16.mxu0 0
      %3025 = vmatpush1.bf16.xpose.msra.mxu0 0
      %3026 = vmatprep.subr.bf16.mxu0 0
      %3027 = vmatpush1.bf16.xpose.msra.mxu0 0
      %3028 = vmatprep.subr.bf16.mxu0 0
      %3029 = vmatpush1.bf16.xpose.msra.mxu0 0
      %3030 = vmatprep.mubr.bf16.mxu0 0
      %3031 = vmatmul.mubr.bf16.gmra.mrb[0].mxu0 %v2987
      %v3032 = vpop.f32.mrb[0].mxu0
      %v3033 = vadd.f32 0.0, %v3032
      %v3034 = vpop.f32.mrb[0].mxu0
      %v3035 = vpop.f32.mrb[0].mxu0
      %v3036 = vadd.f32 0.0, %v3035
      %v3037 = vpop.f32.mrb[0].mxu0
      %3038 = vmatprep.mubr.bf16.mxu0 0
      %3039 = vmatmul.mubr.bf16.gmra.mrb[0].mxu0 %v2990
      %v3040 = vpop.f32.mrb[0].mxu0
      %v3041 = vadd.f32 0.0, %v3040
      %v3042 = vpop.f32.mrb[0].mxu0
      %v3043 = vpop.f32.mrb[0].mxu0
      %v3044 = vadd.f32 0.0, %v3043
      %v3045 = vpop.f32.mrb[0].mxu0
      %3046 = vdwg.mxu0
      %vm3047 = vcmask 261120
      %v3048 = vsel %vm3047, %v3033, -inf
      %3049 = vmax.xlane.f32.xlu0 %v3048
      %v3050 = vpop.xlane.xlu0 %3049
      %v3051 = vsel %vm3047, %v3036, -inf
      %3052 = vmax.xlane.f32.xlu0 %v3051
      %v3053 = vpop.xlane.xlu0 %3052
      %v3054 = vsel %vm3047, %v3041, -inf
      %3055 = vmax.xlane.f32.xlu0 %v3054
      %v3056 = vpop.xlane.xlu0 %3055
      %v3057 = vsel %vm3047, %v3044, -inf
      %3058 = vmax.xlane.f32.xlu0 %v3057
      %v3059 = vpop.xlane.xlu0 %3058
      %v3060 = vsub.f32 %v3033, %v3050
      %v3061 = vsub.f32 %v3036, %v3053
      %v3062 = vsub.f32 %v3041, %v3056
      %v3063 = vsub.f32 %v3044, %v3059
      %v3064 = vmul.f32 %v3060, 1.442695
      %v3065 = vpow.pop %v3064
      %v3066 = vmul.f32 %v3061, 1.442695
      %v3067 = vpow.pop %v3066
      %v3068 = vmul.f32 %v3062, 1.442695
      %v3069 = vpow.pop %v3068
      %v3070 = vmul.f32 %v3063, 1.442695
      %v3071 = vpow.pop %v3070
      %v3072 = vsel %vm3047, %v3065, 0.0
      %3073 = vadd.xlane.f32.xlu0 %v3072
      %v3074 = vpop.xlane.xlu0 %3073
      %v3075 = vsel %vm3047, %v3067, 0.0
      %3076 = vadd.xlane.f32.xlu0 %v3075
      %v3077 = vpop.xlane.xlu0 %3076
      %v3078 = vsel %vm3047, %v3069, 0.0
      %3079 = vadd.xlane.f32.xlu0 %v3078
      %v3080 = vpop.xlane.xlu0 %3079
      %v3081 = vsel %vm3047, %v3071, 0.0
      %3082 = vadd.xlane.f32.xlu0 %v3081
      %v3083 = vpop.xlane.xlu0 %3082
      %v3084 = vrcp.pop %v3074
      %v3085 = vrcp.pop %v3077
      %v3086 = vrcp.pop %v3080
      %v3087 = vrcp.pop %v3083
      %v3088 = vmul.f32 %v3065, %v3084
      %v3089 = vmul.f32 %v3067, %v3085
      %v3090 = vmul.f32 %v3069, %v3086
      %v3091 = vmul.f32 %v3071, %v3087
      %v3092 = vpack.c.bf16 %v3089, %v3088
      %v3093 = vpack.c.bf16 %v3091, %v3090
      %v3095 = vsel %vm3047, %v3092, 0
      %v3098 = vsel %vm3047, %v3093, 0
      %3100 = vmatprep.subr.bf16.mxu0 0
      %3101 = vmatpush1.bf16.msra.mxu0 %v2984
      %3102 = vmatprep.subr.bf16.mxu0 0
      %3103 = vmatpush1.bf16.msra.mxu0 %v2985
      %3104 = vmatprep.subr.bf16.mxu0 0
      %3105 = vmatpush1.bf16.msra.mxu0 0
      %3106 = vmatprep.subr.bf16.mxu0 0
      %3107 = vmatpush1.bf16.msra.mxu0 0
      %3108 = vmatprep.subr.bf16.mxu0 0
      %3109 = vmatpush1.bf16.msra.mxu0 0
      %3110 = vmatprep.subr.bf16.mxu0 0
      %3111 = vmatpush1.bf16.msra.mxu0 0
      %3112 = vmatprep.subr.bf16.mxu0 0
      %3113 = vmatpush1.bf16.msra.mxu0 0
      %3114 = vmatprep.subr.bf16.mxu0 0
      %3115 = vmatpush1.bf16.msra.mxu0 0
      %3116 = vmatprep.subr.bf16.mxu0 0
      %3117 = vmatpush1.bf16.msra.mxu0 0
      %3118 = vmatprep.subr.bf16.mxu0 0
      %3119 = vmatpush1.bf16.msra.mxu0 0
      %3120 = vmatprep.subr.bf16.mxu0 0
      %3121 = vmatpush1.bf16.msra.mxu0 0
      %3122 = vmatprep.subr.bf16.mxu0 0
      %3123 = vmatpush1.bf16.msra.mxu0 0
      %3124 = vmatprep.subr.bf16.mxu0 0
      %3125 = vmatpush1.bf16.msra.mxu0 0
      %3126 = vmatprep.subr.bf16.mxu0 0
      %3127 = vmatpush1.bf16.msra.mxu0 0
      %3128 = vmatprep.subr.bf16.mxu0 0
      %3129 = vmatpush1.bf16.msra.mxu0 0
      %3130 = vmatprep.subr.bf16.mxu0 0
      %3131 = vmatpush1.bf16.msra.mxu0 0
      %3132 = vmatprep.mubr.bf16.mxu0 0
      %3133 = vmatmul.mubr.bf16.gmra.mrb[0].mxu0 %v3095
      %v3134 = vpop.f32.mrb[0].mxu0
      %v3135 = vadd.f32 0.0, %v3134
      %v3136 = vpop.f32.mrb[0].mxu0
      %v3137 = vpop.f32.mrb[0].mxu0
      %v3138 = vadd.f32 0.0, %v3137
      %v3139 = vpop.f32.mrb[0].mxu0
      %3140 = vmatprep.mubr.bf16.mxu0 0
      %3141 = vmatmul.mubr.bf16.gmra.mrb[0].mxu0 %v3098
      %v3142 = vpop.f32.mrb[0].mxu0
      %v3143 = vadd.f32 0.0, %v3142
      %v3144 = vpop.f32.mrb[0].mxu0
      %v3145 = vpop.f32.mrb[0].mxu0
      %v3146 = vadd.f32 0.0, %v3145
      %v3147 = vpop.f32.mrb[0].mxu0
      %3148 = vdwg.mxu0
      %v3149 = vpack.c.bf16 %v3138, %v3135
      %v3150 = vpack.c.bf16 %v3146, %v3143
      %v3151 = vld [vmem:[%s45] sm:$0xf]
      %v3152 = vld [vmem:[%s45 + $0x4] sm:$0xf]
      %s3153 = scalar_lea.vmem %s39, 32
      %v3154 = vld [vmem:[%s3153] sm:$0xf]
      %v3155 = vld [vmem:[%s3153 + $0x4] sm:$0xf]
      %v3156 = vld [vmem:[%s3153 + $0x8] sm:$0xf]
      %v3157 = vld [vmem:[%s3153 + $0xc] sm:$0xf]
      %v3158 = vld [vmem:[%s3153 + $0x10] sm:$0xf]
      %v3159 = vld [vmem:[%s3153 + $0x14] sm:$0xf]
      %v3160 = vld [vmem:[%s3153 + $0x18] sm:$0xf]
      %v3161 = vld [vmem:[%s3153 + $0x1c] sm:$0xf]
      %v3170 = vunpack.c.l.b16 %v3154
      %v3171 = vunpack.c.l.b16 %v3155
      %v3172 = vunpack.c.l.b16 %v3156
      %v3173 = vunpack.c.l.b16 %v3157
      %v3174 = vunpack.c.l.b16 %v3158
      %v3175 = vunpack.c.l.b16 %v3159
      %v3176 = vunpack.c.l.b16 %v3160
      %v3177 = vunpack.c.l.b16 %v3161
      %v3178 = vpack.c.b16 %v3171, %v3170
      %v3179 = vpack.c.b16 %v3173, %v3172
      %v3180 = vpack.c.b16 %v3175, %v3174
      %v3181 = vpack.c.b16 %v3177, %v3176
      %3186 = vmatprep.subr.bf16.mxu0 0
      %3187 = vmatpush1.bf16.msra.mxu0 %v3178
      %3188 = vmatprep.subr.bf16.mxu0 0
      %3189 = vmatpush1.bf16.msra.mxu0 %v3179
      %3190 = vmatprep.subr.bf16.mxu0 0
      %3191 = vmatpush1.bf16.msra.mxu0 %v3180
      %3192 = vmatprep.subr.bf16.mxu0 0
      %3193 = vmatpush1.bf16.msra.mxu0 %v3181
      %3194 = vmatprep.subr.bf16.mxu0 0
      %3195 = vmatpush1.bf16.msra.mxu0 0
      %3196 = vmatprep.subr.bf16.mxu0 0
      %3197 = vmatpush1.bf16.msra.mxu0 0
      %3198 = vmatprep.subr.bf16.mxu0 0
      %3199 = vmatpush1.bf16.msra.mxu0 0
      %3200 = vmatprep.subr.bf16.mxu0 0
      %3201 = vmatpush1.bf16.msra.mxu0 0
      %3202 = vmatprep.subr.bf16.mxu0 0
      %3203 = vmatpush1.bf16.msra.mxu0 0
      %3204 = vmatprep.subr.bf16.mxu0 0
      %3205 = vmatpush1.bf16.msra.mxu0 0
      %3206 = vmatprep.subr.bf16.mxu0 0
      %3207 = vmatpush1.bf16.msra.mxu0 0
      %3208 = vmatprep.subr.bf16.mxu0 0
      %3209 = vmatpush1.bf16.msra.mxu0 0
      %3210 = vmatprep.subr.bf16.mxu0 0
      %3211 = vmatpush1.bf16.msra.mxu0 0
      %3212 = vmatprep.subr.bf16.mxu0 0
      %3213 = vmatpush1.bf16.msra.mxu0 0
      %3214 = vmatprep.subr.bf16.mxu0 0
      %3215 = vmatpush1.bf16.msra.mxu0 0
      %3216 = vmatprep.subr.bf16.mxu0 0
      %3217 = vmatpush1.bf16.msra.mxu0 0
      %3218 = vmatprep.mubr.bf16.mxu0 0
      %3219 = vmatmul.mubr.bf16.gmra.mrb[0].mxu0 %v2760
      %v3220 = vpop.f32.mrb[0].mxu0
      %v3221 = vadd.f32 0.0, %v3220
      %v3222 = vpop.f32.mrb[0].mxu0
      %v3223 = vpop.f32.mrb[0].mxu0
      %v3224 = vadd.f32 0.0, %v3223
      %v3225 = vpop.f32.mrb[0].mxu0
      %3226 = vmatprep.mubr.bf16.mxu0 0
      %3227 = vmatmul.mubr.bf16.gmra.mrb[0].mxu0 %v2763
      %v3228 = vpop.f32.mrb[0].mxu0
      %v3229 = vadd.f32 0.0, %v3228
      %v3230 = vpop.f32.mrb[0].mxu0
      %v3231 = vpop.f32.mrb[0].mxu0
      %v3232 = vadd.f32 0.0, %v3231
      %v3233 = vpop.f32.mrb[0].mxu0
      %3234 = vdwg.mxu0
      %v3235 = vmul.f32 %v3221, 0.25
      %v3236 = vmul.f32 %v3224, 0.25
      %v3237 = vmul.f32 %v3229, 0.25
      %v3238 = vmul.f32 %v3232, 0.25
      %v3239 = vpack.c.bf16 %v3236, %v3235
      %v3240 = vpack.c.bf16 %v3238, %v3237
      %s3241 = scalar_lea.vmem %s41, 32
      %v3242 = vld [vmem:[%s3241] sm:$0xf]
      %v3243 = vld [vmem:[%s3241 + $0x4] sm:$0xf]
      %v3244 = vld [vmem:[%s3241 + $0x8] sm:$0xf]
      %v3245 = vld [vmem:[%s3241 + $0xc] sm:$0xf]
      %v3246 = vld [vmem:[%s3241 + $0x10] sm:$0xf]
      %v3247 = vld [vmem:[%s3241 + $0x14] sm:$0xf]
      %v3248 = vld [vmem:[%s3241 + $0x18] sm:$0xf]
      %v3249 = vld [vmem:[%s3241 + $0x1c] sm:$0xf]
      %v3258 = vunpack.c.l.b16 %v3242
      %v3259 = vunpack.c.l.b16 %v3243
      %v3260 = vunpack.c.l.b16 %v3244
      %v3261 = vunpack.c.l.b16 %v3245
      %v3262 = vunpack.c.l.b16 %v3246
      %v3263 = vunpack.c.l.b16 %v3247
      %v3264 = vunpack.c.l.b16 %v3248
      %v3265 = vunpack.c.l.b16 %v3249
      %v3266 = vpack.c.b16 %v3259, %v3258
      %v3267 = vpack.c.b16 %v3261, %v3260
      %v3268 = vpack.c.b16 %v3263, %v3262
      %v3269 = vpack.c.b16 %v3265, %v3264
      %3274 = vmatprep.subr.bf16.mxu0 0
      %3275 = vmatpush1.bf16.msra.mxu0 %v3266
      %3276 = vmatprep.subr.bf16.mxu0 0
      %3277 = vmatpush1.bf16.msra.mxu0 %v3267
      %3278 = vmatprep.subr.bf16.mxu0 0
      %3279 = vmatpush1.bf16.msra.mxu0 %v3268
      %3280 = vmatprep.subr.bf16.mxu0 0
      %3281 = vmatpush1.bf16.msra.mxu0 %v3269
      %3282 = vmatprep.subr.bf16.mxu0 0
      %3283 = vmatpush1.bf16.msra.mxu0 0
      %3284 = vmatprep.subr.bf16.mxu0 0
      %3285 = vmatpush1.bf16.msra.mxu0 0
      %3286 = vmatprep.subr.bf16.mxu0 0
      %3287 = vmatpush1.bf16.msra.mxu0 0
      %3288 = vmatprep.subr.bf16.mxu0 0
      %3289 = vmatpush1.bf16.msra.mxu0 0
      %3290 = vmatprep.subr.bf16.mxu0 0
      %3291 = vmatpush1.bf16.msra.mxu0 0
      %3292 = vmatprep.subr.bf16.mxu0 0
      %3293 = vmatpush1.bf16.msra.mxu0 0
      %3294 = vmatprep.subr.bf16.mxu0 0
      %3295 = vmatpush1.bf16.msra.mxu0 0
      %3296 = vmatprep.subr.bf16.mxu0 0
      %3297 = vmatpush1.bf16.msra.mxu0 0
      %3298 = vmatprep.subr.bf16.mxu0 0
      %3299 = vmatpush1.bf16.msra.mxu0 0
      %3300 = vmatprep.subr.bf16.mxu0 0
      %3301 = vmatpush1.bf16.msra.mxu0 0
      %3302 = vmatprep.subr.bf16.mxu0 0
      %3303 = vmatpush1.bf16.msra.mxu0 0
      %3304 = vmatprep.subr.bf16.mxu0 0
      %3305 = vmatpush1.bf16.msra.mxu0 0
      %3306 = vmatprep.mubr.bf16.mxu0 0
      %3307 = vmatmul.mubr.bf16.gmra.mrb[0].mxu0 %v2760
      %v3308 = vpop.f32.mrb[0].mxu0
      %v3309 = vadd.f32 0.0, %v3308
      %v3310 = vpop.f32.mrb[0].mxu0
      %v3311 = vpop.f32.mrb[0].mxu0
      %v3312 = vadd.f32 0.0, %v3311
      %v3313 = vpop.f32.mrb[0].mxu0
      %3314 = vmatprep.mubr.bf16.mxu0 0
      %3315 = vmatmul.mubr.bf16.gmra.mrb[0].mxu0 %v2763
      %v3316 = vpop.f32.mrb[0].mxu0
      %v3317 = vadd.f32 0.0, %v3316
      %v3318 = vpop.f32.mrb[0].mxu0
      %v3319 = vpop.f32.mrb[0].mxu0
      %v3320 = vadd.f32 0.0, %v3319
      %v3321 = vpop.f32.mrb[0].mxu0
      %3322 = vdwg.mxu0
      %v3323 = vpack.c.bf16 %v3312, %v3309
      %v3324 = vpack.c.bf16 %v3320, %v3317
      %s3325 = scalar_lea.vmem %s43, 32
      %v3326 = vld [vmem:[%s3325] sm:$0xf]
      %v3327 = vld [vmem:[%s3325 + $0x4] sm:$0xf]
      %v3328 = vld [vmem:[%s3325 + $0x8] sm:$0xf]
      %v3329 = vld [vmem:[%s3325 + $0xc] sm:$0xf]
      %v3330 = vld [vmem:[%s3325 + $0x10] sm:$0xf]
      %v3331 = vld [vmem:[%s3325 + $0x14] sm:$0xf]
      %v3332 = vld [vmem:[%s3325 + $0x18] sm:$0xf]
      %v3333 = vld [vmem:[%s3325 + $0x1c] sm:$0xf]
      %v3342 = vunpack.c.l.b16 %v3326
      %v3343 = vunpack.c.l.b16 %v3327
      %v3344 = vunpack.c.l.b16 %v3328
      %v3345 = vunpack.c.l.b16 %v3329
      %v3346 = vunpack.c.l.b16 %v3330
      %v3347 = vunpack.c.l.b16 %v3331
      %v3348 = vunpack.c.l.b16 %v3332
      %v3349 = vunpack.c.l.b16 %v3333
      %v3350 = vpack.c.b16 %v3343, %v3342
      %v3351 = vpack.c.b16 %v3345, %v3344
      %v3352 = vpack.c.b16 %v3347, %v3346
      %v3353 = vpack.c.b16 %v3349, %v3348
      %3358 = vmatprep.subr.bf16.mxu0 0
      %3359 = vmatpush1.bf16.msra.mxu0 %v3350
      %3360 = vmatprep.subr.bf16.mxu0 0
      %3361 = vmatpush1.bf16.msra.mxu0 %v3351
      %3362 = vmatprep.subr.bf16.mxu0 0
      %3363 = vmatpush1.bf16.msra.mxu0 %v3352
      %3364 = vmatprep.subr.bf16.mxu0 0
      %3365 = vmatpush1.bf16.msra.mxu0 %v3353
      %3366 = vmatprep.subr.bf16.mxu0 0
      %3367 = vmatpush1.bf16.msra.mxu0 0
      %3368 = vmatprep.subr.bf16.mxu0 0
      %3369 = vmatpush1.bf16.msra.mxu0 0
      %3370 = vmatprep.subr.bf16.mxu0 0
      %3371 = vmatpush1.bf16.msra.mxu0 0
      %3372 = vmatprep.subr.bf16.mxu0 0
      %3373 = vmatpush1.bf16.msra.mxu0 0
      %3374 = vmatprep.subr.bf16.mxu0 0
      %3375 = vmatpush1.bf16.msra.mxu0 0
      %3376 = vmatprep.subr.bf16.mxu0 0
      %3377 = vmatpush1.bf16.msra.mxu0 0
      %3378 = vmatprep.subr.bf16.mxu0 0
      %3379 = vmatpush1.bf16.msra.mxu0 0
      %3380 = vmatprep.subr.bf16.mxu0 0
      %3381 = vmatpush1.bf16.msra.mxu0 0
      %3382 = vmatprep.subr.bf16.mxu0 0
      %3383 = vmatpush1.bf16.msra.mxu0 0
      %3384 = vmatprep.subr.bf16.mxu0 0
      %3385 = vmatpush1.bf16.msra.mxu0 0
      %3386 = vmatprep.subr.bf16.mxu0 0
      %3387 = vmatpush1.bf16.msra.mxu0 0
      %3388 = vmatprep.subr.bf16.mxu0 0
      %3389 = vmatpush1.bf16.msra.mxu0 0
      %3390 = vmatprep.mubr.bf16.mxu0 0
      %3391 = vmatmul.mubr.bf16.gmra.mrb[0].mxu0 %v2760
      %v3392 = vpop.f32.mrb[0].mxu0
      %v3393 = vadd.f32 0.0, %v3392
      %v3394 = vpop.f32.mrb[0].mxu0
      %v3395 = vpop.f32.mrb[0].mxu0
      %v3396 = vadd.f32 0.0, %v3395
      %v3397 = vpop.f32.mrb[0].mxu0
      %3398 = vmatprep.mubr.bf16.mxu0 0
      %3399 = vmatmul.mubr.bf16.gmra.mrb[0].mxu0 %v2763
      %v3400 = vpop.f32.mrb[0].mxu0
      %v3401 = vadd.f32 0.0, %v3400
      %v3402 = vpop.f32.mrb[0].mxu0
      %v3403 = vpop.f32.mrb[0].mxu0
      %v3404 = vadd.f32 0.0, %v3403
      %v3405 = vpop.f32.mrb[0].mxu0
      %3406 = vdwg.mxu0
      %v3407 = vpack.c.bf16 %v3396, %v3393
      %v3408 = vpack.c.bf16 %v3404, %v3401
      %v3410 = vsel %vm1482, %v3239, 0
      %v3413 = vsel %vm1482, %v3240, 0
      %v3416 = vsel %vm1482, %v3323, 0
      %v3419 = vsel %vm1482, %v3324, 0
      %3421 = vmatprep.subr.bf16.mxu0 0
      %3422 = vmatpush1.bf16.xpose.msra.mxu0 %v3416
      %3423 = vmatprep.subr.bf16.mxu0 0
      %3424 = vmatpush1.bf16.xpose.msra.mxu0 %v3419
      %3425 = vmatprep.subr.bf16.mxu0 0
      %3426 = vmatpush1.bf16.xpose.msra.mxu0 0
      %3427 = vmatprep.subr.bf16.mxu0 0
      %3428 = vmatpush1.bf16.xpose.msra.mxu0 0
      %3429 = vmatprep.subr.bf16.mxu0 0
      %3430 = vmatpush1.bf16.xpose.msra.mxu0 0
      %3431 = vmatprep.subr.bf16.mxu0 0
      %3432 = vmatpush1.bf16.xpose.msra.mxu0 0
      %3433 = vmatprep.subr.bf16.mxu0 0
      %3434 = vmatpush1.bf16.xpose.msra.mxu0 0
      %3435 = vmatprep.subr.bf16.mxu0 0
      %3436 = vmatpush1.bf16.xpose.msra.mxu0 0
      %3437 = vmatprep.subr.bf16.mxu0 0
      %3438 = vmatpush1.bf16.xpose.msra.mxu0 0
      %3439 = vmatprep.subr.bf16.mxu0 0
      %3440 = vmatpush1.bf16.xpose.msra.mxu0 0
      %3441 = vmatprep.subr.bf16.mxu0 0
      %3442 = vmatpush1.bf16.xpose.msra.mxu0 0
      %3443 = vmatprep.subr.bf16.mxu0 0
      %3444 = vmatpush1.bf16.xpose.msra.mxu0 0
      %3445 = vmatprep.subr.bf16.mxu0 0
      %3446 = vmatpush1.bf16.xpose.msra.mxu0 0
      %3447 = vmatprep.subr.bf16.mxu0 0
      %3448 = vmatpush1.bf16.xpose.msra.mxu0 0
      %3449 = vmatprep.subr.bf16.mxu0 0
      %3450 = vmatpush1.bf16.xpose.msra.mxu0 0
      %3451 = vmatprep.subr.bf16.mxu0 0
      %3452 = vmatpush1.bf16.xpose.msra.mxu0 0
      %3453 = vmatprep.mubr.bf16.mxu0 0
      %3454 = vmatmul.mubr.bf16.gmra.mrb[0].mxu0 %v3410
      %v3455 = vpop.f32.mrb[0].mxu0
      %v3456 = vadd.f32 0.0, %v3455
      %v3457 = vpop.f32.mrb[0].mxu0
      %v3458 = vpop.f32.mrb[0].mxu0
      %v3459 = vadd.f32 0.0, %v3458
      %v3460 = vpop.f32.mrb[0].mxu0
      %3461 = vmatprep.mubr.bf16.mxu0 0
      %3462 = vmatmul.mubr.bf16.gmra.mrb[0].mxu0 %v3413
      %v3463 = vpop.f32.mrb[0].mxu0
      %v3464 = vadd.f32 0.0, %v3463
      %v3465 = vpop.f32.mrb[0].mxu0
      %v3466 = vpop.f32.mrb[0].mxu0
      %v3467 = vadd.f32 0.0, %v3466
      %v3468 = vpop.f32.mrb[0].mxu0
      %3469 = vdwg.mxu0
      %v3470 = vsel %vm3047, %v3456, -inf
      %3471 = vmax.xlane.f32.xlu0 %v3470
      %v3472 = vpop.xlane.xlu0 %3471
      %v3473 = vsel %vm3047, %v3459, -inf
      %3474 = vmax.xlane.f32.xlu0 %v3473
      %v3475 = vpop.xlane.xlu0 %3474
      %v3476 = vsel %vm3047, %v3464, -inf
      %3477 = vmax.xlane.f32.xlu0 %v3476
      %v3478 = vpop.xlane.xlu0 %3477
      %v3479 = vsel %vm3047, %v3467, -inf
      %3480 = vmax.xlane.f32.xlu0 %v3479
      %v3481 = vpop.xlane.xlu0 %3480
      %v3482 = vsub.f32 %v3456, %v3472
      %v3483 = vsub.f32 %v3459, %v3475
      %v3484 = vsub.f32 %v3464, %v3478
      %v3485 = vsub.f32 %v3467, %v3481
      %v3486 = vmul.f32 %v3482, 1.442695
      %v3487 = vpow.pop %v3486
      %v3488 = vmul.f32 %v3483, 1.442695
      %v3489 = vpow.pop %v3488
      %v3490 = vmul.f32 %v3484, 1.442695
      %v3491 = vpow.pop %v3490
      %v3492 = vmul.f32 %v3485, 1.442695
      %v3493 = vpow.pop %v3492
      %v3494 = vsel %vm3047, %v3487, 0.0
      %3495 = vadd.xlane.f32.xlu0 %v3494
      %v3496 = vpop.xlane.xlu0 %3495
      %v3497 = vsel %vm3047, %v3489, 0.0
      %3498 = vadd.xlane.f32.xlu0 %v3497
      %v3499 = vpop.xlane.xlu0 %3498
      %v3500 = vsel %vm3047, %v3491, 0.0
      %3501 = vadd.xlane.f32.xlu0 %v3500
      %v3502 = vpop.xlane.xlu0 %3501
      %v3503 = vsel %vm3047, %v3493, 0.0
      %3504 = vadd.xlane.f32.xlu0 %v3503
      %v3505 = vpop.xlane.xlu0 %3504
      %v3506 = vrcp.pop %v3496
      %v3507 = vrcp.pop %v3499
      %v3508 = vrcp.pop %v3502
      %v3509 = vrcp.pop %v3505
      %v3510 = vmul.f32 %v3487, %v3506
      %v3511 = vmul.f32 %v3489, %v3507
      %v3512 = vmul.f32 %v3491, %v3508
      %v3513 = vmul.f32 %v3493, %v3509
      %v3514 = vpack.c.bf16 %v3511, %v3510
      %v3515 = vpack.c.bf16 %v3513, %v3512
      %v3517 = vsel %vm3047, %v3514, 0
      %v3520 = vsel %vm3047, %v3515, 0
      %3522 = vmatprep.subr.bf16.mxu0 0
      %3523 = vmatpush1.bf16.msra.mxu0 %v3407
      %3524 = vmatprep.subr.bf16.mxu0 0
      %3525 = vmatpush1.bf16.msra.mxu0 %v3408
      %3526 = vmatprep.subr.bf16.mxu0 0
      %3527 = vmatpush1.bf16.msra.mxu0 0
      %3528 = vmatprep.subr.bf16.mxu0 0
      %3529 = vmatpush1.bf16.msra.mxu0 0
      %3530 = vmatprep.subr.bf16.mxu0 0
      %3531 = vmatpush1.bf16.msra.mxu0 0
      %3532 = vmatprep.subr.bf16.mxu0 0
      %3533 = vmatpush1.bf16.msra.mxu0 0
      %3534 = vmatprep.subr.bf16.mxu0 0
      %3535 = vmatpush1.bf16.msra.mxu0 0
      %3536 = vmatprep.subr.bf16.mxu0 0
      %3537 = vmatpush1.bf16.msra.mxu0 0
      %3538 = vmatprep.subr.bf16.mxu0 0
      %3539 = vmatpush1.bf16.msra.mxu0 0
      %3540 = vmatprep.subr.bf16.mxu0 0
      %3541 = vmatpush1.bf16.msra.mxu0 0
      %3542 = vmatprep.subr.bf16.mxu0 0
      %3543 = vmatpush1.bf16.msra.mxu0 0
      %3544 = vmatprep.subr.bf16.mxu0 0
      %3545 = vmatpush1.bf16.msra.mxu0 0
      %3546 = vmatprep.subr.bf16.mxu0 0
      %3547 = vmatpush1.bf16.msra.mxu0 0
      %3548 = vmatprep.subr.bf16.mxu0 0
      %3549 = vmatpush1.bf16.msra.mxu0 0
      %3550 = vmatprep.subr.bf16.mxu0 0
      %3551 = vmatpush1.bf16.msra.mxu0 0
      %3552 = vmatprep.subr.bf16.mxu0 0
      %3553 = vmatpush1.bf16.msra.mxu0 0
      %3554 = vmatprep.mubr.bf16.mxu0 0
      %3555 = vmatmul.mubr.bf16.gmra.mrb[0].mxu0 %v3517
      %v3556 = vpop.f32.mrb[0].mxu0
      %v3557 = vadd.f32 0.0, %v3556
      %v3558 = vpop.f32.mrb[0].mxu0
      %v3559 = vpop.f32.mrb[0].mxu0
      %v3560 = vadd.f32 0.0, %v3559
      %v3561 = vpop.f32.mrb[0].mxu0
      %3562 = vmatprep.mubr.bf16.mxu0 0
      %3563 = vmatmul.mubr.bf16.gmra.mrb[0].mxu0 %v3520
      %v3564 = vpop.f32.mrb[0].mxu0
      %v3565 = vadd.f32 0.0, %v3564
      %v3566 = vpop.f32.mrb[0].mxu0
      %v3567 = vpop.f32.mrb[0].mxu0
      %v3568 = vadd.f32 0.0, %v3567
      %v3569 = vpop.f32.mrb[0].mxu0
      %3570 = vdwg.mxu0
      %v3571 = vpack.c.bf16 %v3560, %v3557
      %v3572 = vpack.c.bf16 %v3568, %v3565
      %s3573 = scalar_lea.vmem %s45, 8
      %v3574 = vld [vmem:[%s3573] sm:$0xf]
      %v3575 = vld [vmem:[%s3573 + $0x4] sm:$0xf]
      %v3578 = vunpack.c.l.b16 %v3574
      %v3579 = vunpack.c.l.b16 %v3575
      %v3580 = vpack.c.b16 %v3579, %v3578
      %v3583 = vsel %vm1482, %v3571, 0
      %v3586 = vsel %vm1482, %v3572, 0
      %3588 = vmatprep.subr.bf16.mxu0 0
      %3589 = vmatpush1.bf16.msra.mxu0 %v3580
      %3590 = vmatprep.subr.bf16.mxu0 0
      %3591 = vmatpush1.bf16.msra.mxu0 0
      %3592 = vmatprep.subr.bf16.mxu0 0
      %3593 = vmatpush1.bf16.msra.mxu0 0
      %3594 = vmatprep.subr.bf16.mxu0 0
      %3595 = vmatpush1.bf16.msra.mxu0 0
      %3596 = vmatprep.subr.bf16.mxu0 0
      %3597 = vmatpush1.bf16.msra.mxu0 0
      %3598 = vmatprep.subr.bf16.mxu0 0
      %3599 = vmatpush1.bf16.msra.mxu0 0
      %3600 = vmatprep.subr.bf16.mxu0 0
      %3601 = vmatpush1.bf16.msra.mxu0 0
      %3602 = vmatprep.subr.bf16.mxu0 0
      %3603 = vmatpush1.bf16.msra.mxu0 0
      %3604 = vmatprep.subr.bf16.mxu0 0
      %3605 = vmatpush1.bf16.msra.mxu0 0
      %3606 = vmatprep.subr.bf16.mxu0 0
      %3607 = vmatpush1.bf16.msra.mxu0 0
      %3608 = vmatprep.subr.bf16.mxu0 0
      %3609 = vmatpush1.bf16.msra.mxu0 0
      %3610 = vmatprep.subr.bf16.mxu0 0
      %3611 = vmatpush1.bf16.msra.mxu0 0
      %3612 = vmatprep.subr.bf16.mxu0 0
      %3613 = vmatpush1.bf16.msra.mxu0 0
      %3614 = vmatprep.subr.bf16.mxu0 0
      %3615 = vmatpush1.bf16.msra.mxu0 0
      %3616 = vmatprep.subr.bf16.mxu0 0
      %3617 = vmatpush1.bf16.msra.mxu0 0
      %3618 = vmatprep.subr.bf16.mxu0 0
      %3619 = vmatpush1.bf16.msra.mxu0 0
      %3620 = vmatprep.mubr.bf16.mxu0 0
      %3621 = vmatmul.mubr.bf16.gmra.mrb[0].mxu0 %v3583
      %v3622 = vpop.f32.mrb[0].mxu0
      %v3623 = vadd.f32 0.0, %v3622
      %v3624 = vpop.f32.mrb[0].mxu0
      %v3625 = vpop.f32.mrb[0].mxu0
      %v3626 = vadd.f32 0.0, %v3625
      %v3627 = vpop.f32.mrb[0].mxu0
      %3628 = vmatprep.mubr.bf16.mxu0 0
      %3629 = vmatmul.mubr.bf16.gmra.mrb[0].mxu0 %v3586
      %v3630 = vpop.f32.mrb[0].mxu0
      %v3631 = vadd.f32 0.0, %v3630
      %v3632 = vpop.f32.mrb[0].mxu0
      %v3633 = vpop.f32.mrb[0].mxu0
      %v3634 = vadd.f32 0.0, %v3633
      %v3635 = vpop.f32.mrb[0].mxu0
      %3636 = vdwg.mxu0
      %v3639 = vunpack.c.l.b16 %v3151
      %v3640 = vunpack.c.l.b16 %v3152
      %v3641 = vpack.c.b16 %v3640, %v3639
      %v3644 = vsel %vm1482, %v3149, 0
      %v3647 = vsel %vm1482, %v3150, 0
      %3649 = vmatprep.subr.bf16.mxu0 0
      %3650 = vmatpush1.bf16.msra.mxu0 %v3641
      %3651 = vmatprep.subr.bf16.mxu0 0
      %3652 = vmatpush1.bf16.msra.mxu0 0
      %3653 = vmatprep.subr.bf16.mxu0 0
      %3654 = vmatpush1.bf16.msra.mxu0 0
      %3655 = vmatprep.subr.bf16.mxu0 0
      %3656 = vmatpush1.bf16.msra.mxu0 0
      %3657 = vmatprep.subr.bf16.mxu0 0
      %3658 = vmatpush1.bf16.msra.mxu0 0
      %3659 = vmatprep.subr.bf16.mxu0 0
      %3660 = vmatpush1.bf16.msra.mxu0 0
      %3661 = vmatprep.subr.bf16.mxu0 0
      %3662 = vmatpush1.bf16.msra.mxu0 0
      %3663 = vmatprep.subr.bf16.mxu0 0
      %3664 = vmatpush1.bf16.msra.mxu0 0
      %3665 = vmatprep.subr.bf16.mxu0 0
      %3666 = vmatpush1.bf16.msra.mxu0 0
      %3667 = vmatprep.subr.bf16.mxu0 0
      %3668 = vmatpush1.bf16.msra.mxu0 0
      %3669 = vmatprep.subr.bf16.mxu0 0
      %3670 = vmatpush1.bf16.msra.mxu0 0
      %3671 = vmatprep.subr.bf16.mxu0 0
      %3672 = vmatpush1.bf16.msra.mxu0 0
      %3673 = vmatprep.subr.bf16.mxu0 0
      %3674 = vmatpush1.bf16.msra.mxu0 0
      %3675 = vmatprep.subr.bf16.mxu0 0
      %3676 = vmatpush1.bf16.msra.mxu0 0
      %3677 = vmatprep.subr.bf16.mxu0 0
      %3678 = vmatpush1.bf16.msra.mxu0 0
      %3679 = vmatprep.subr.bf16.mxu0 0
      %3680 = vmatpush1.bf16.msra.mxu0 0
      %3681 = vmatprep.mubr.bf16.mxu0 0
      %3682 = vmatmul.mubr.bf16.gmra.mrb[0].mxu0 %v3644
      %v3683 = vpop.f32.mrb[0].mxu0
      %v3684 = vadd.f32 %v3623, %v3683
      %v3685 = vpop.f32.mrb[0].mxu0
      %v3686 = vpop.f32.mrb[0].mxu0
      %v3687 = vadd.f32 %v3626, %v3686
      %v3688 = vpop.f32.mrb[0].mxu0
      %3689 = vmatprep.mubr.bf16.mxu0 0
      %3690 = vmatmul.mubr.bf16.gmra.mrb[0].mxu0 %v3647
      %v3691 = vpop.f32.mrb[0].mxu0
      %v3692 = vadd.f32 %v3631, %v3691
      %v3693 = vpop.f32.mrb[0].mxu0
      %v3694 = vpop.f32.mrb[0].mxu0
      %v3695 = vadd.f32 %v3634, %v3694
      %v3696 = vpop.f32.mrb[0].mxu0
      %3697 = vdwg.mxu0
      %v3699 = vlaneseq
      %v3700 = vshrl.u32 %v3699, 7
      %v3701 = vsub.s32 0, %v3700
      %v3702 = vrot.slane %v2724, %v3701
      %v3704 = vadd.f32 %v3684, %v3702
      %v3705 = vadd.f32 %v3687, %v3702
      %v3706 = vadd.f32 %v3692, %v3702
      %v3707 = vadd.f32 %v3695, %v3702
      %v3708 = vadd.f32 %v3704, %v2646
      %v3709 = vadd.f32 %v3705, %v2647
      %v3710 = vadd.f32 %v3706, %v2648
      %v3711 = vadd.f32 %v3707, %v2649
      %v3712 = vld [vmem:[%s49] sm:$0x1]
      %v3713 = vld [vmem:[%s51] sm:$0x1]
      %v3714 = vld [vmem:[%s53] sm:$0xff]
      %v3715 = vld [vmem:[%s53 + $0x8] sm:$0xff]
      %v3716 = vld [vmem:[%s53 + $0x10] sm:$0xff]
      %v3717 = vld [vmem:[%s53 + $0x18] sm:$0xff]
      %v3718 = vld [vmem:[%s53 + $0x20] sm:$0xff]
      %v3719 = vld [vmem:[%s53 + $0x28] sm:$0xff]
      %v3720 = vld [vmem:[%s53 + $0x30] sm:$0xff]
      %v3721 = vld [vmem:[%s53 + $0x38] sm:$0xff]
      %v3722 = vld [vmem:[%s53 + $0x40] sm:$0xff]
      %v3723 = vld [vmem:[%s53 + $0x48] sm:$0xff]
      %v3724 = vld [vmem:[%s53 + $0x50] sm:$0xff]
      %v3725 = vld [vmem:[%s53 + $0x58] sm:$0xff]
      %v3726 = vld [vmem:[%s53 + $0x60] sm:$0xff]
      %v3727 = vld [vmem:[%s53 + $0x68] sm:$0xff]
      %v3728 = vld [vmem:[%s53 + $0x70] sm:$0xff]
      %v3729 = vld [vmem:[%s53 + $0x78] sm:$0xff]
      %v3730 = vld [vmem:[%s55] sm:$0xf]
      %v3731 = vld [vmem:[%s57] sm:$0xf]
      %v3732 = vld [vmem:[%s57 + $0x4] sm:$0xf]
      %v3733 = vld [vmem:[%s57 + $0x8] sm:$0xf]
      %v3734 = vld [vmem:[%s57 + $0xc] sm:$0xf]
      %v3735 = vld [vmem:[%s57 + $0x10] sm:$0xf]
      %v3736 = vld [vmem:[%s57 + $0x14] sm:$0xf]
      %v3737 = vld [vmem:[%s57 + $0x18] sm:$0xf]
      %v3738 = vld [vmem:[%s57 + $0x1c] sm:$0xf]
      %v3739 = vld [vmem:[%s57 + $0x20] sm:$0xf]
      %v3740 = vld [vmem:[%s57 + $0x24] sm:$0xf]
      %v3741 = vld [vmem:[%s57 + $0x28] sm:$0xf]
      %v3742 = vld [vmem:[%s57 + $0x2c] sm:$0xf]
      %v3743 = vld [vmem:[%s57 + $0x30] sm:$0xf]
      %v3744 = vld [vmem:[%s57 + $0x34] sm:$0xf]
      %v3745 = vld [vmem:[%s57 + $0x38] sm:$0xf]
      %v3746 = vld [vmem:[%s57 + $0x3c] sm:$0xf]
      %v3747 = vld [vmem:[%s57 + $0x40] sm:$0xf]
      %v3748 = vld [vmem:[%s57 + $0x44] sm:$0xf]
      %v3749 = vld [vmem:[%s57 + $0x48] sm:$0xf]
      %v3750 = vld [vmem:[%s57 + $0x4c] sm:$0xf]
      %v3751 = vld [vmem:[%s57 + $0x50] sm:$0xf]
      %v3752 = vld [vmem:[%s57 + $0x54] sm:$0xf]
      %v3753 = vld [vmem:[%s57 + $0x58] sm:$0xf]
      %v3754 = vld [vmem:[%s57 + $0x5c] sm:$0xf]
      %v3755 = vld [vmem:[%s57 + $0x60] sm:$0xf]
      %v3756 = vld [vmem:[%s57 + $0x64] sm:$0xf]
      %v3757 = vld [vmem:[%s57 + $0x68] sm:$0xf]
      %v3758 = vld [vmem:[%s57 + $0x6c] sm:$0xf]
      %v3759 = vld [vmem:[%s57 + $0x70] sm:$0xf]
      %v3760 = vld [vmem:[%s57 + $0x74] sm:$0xf]
      %v3761 = vld [vmem:[%s57 + $0x78] sm:$0xf]
      %v3762 = vld [vmem:[%s57 + $0x7c] sm:$0xf]
      %v3763 = vld [vmem:[%s59] sm:$0x1]
      %v3764 = vsel %vm1244, %v3708, 0.0
      %3765 = vadd.xlane.f32.xlu0 %v3764
      %v3766 = vpop.xlane.xlu0 %3765
      %v3767 = vsel %vm1244, %v3709, 0.0
      %3768 = vadd.xlane.f32.xlu0 %v3767
      %v3769 = vpop.xlane.xlu0 %3768
      %v3770 = vsel %vm1244, %v3710, 0.0
      %3771 = vadd.xlane.f32.xlu0 %v3770
      %v3772 = vpop.xlane.xlu0 %3771
      %v3773 = vsel %vm1244, %v3711, 0.0
      %3774 = vadd.xlane.f32.xlu0 %v3773
      %v3775 = vpop.xlane.xlu0 %3774
      %v3776 = vmul.f32 %v3766, %v1257
      %v3777 = vmul.f32 %v3769, %v1257
      %v3778 = vmul.f32 %v3772, %v1257
      %v3779 = vmul.f32 %v3775, %v1257
      %v3780 = vsub.f32 %v3708, %v3776
      %v3781 = vsub.f32 %v3709, %v3777
      %v3782 = vsub.f32 %v3710, %v3778
      %v3783 = vsub.f32 %v3711, %v3779
      %v3784 = vmul.f32 %v3780, %v3780
      %v3785 = vmul.f32 %v3781, %v3781
      %v3786 = vmul.f32 %v3782, %v3782
      %v3787 = vmul.f32 %v3783, %v3783
      %v3788 = vsel %vm1244, %v3784, 0.0
      %3789 = vadd.xlane.f32.xlu0 %v3788
      %v3790 = vpop.xlane.xlu0 %3789
      %v3791 = vsel %vm1244, %v3785, 0.0
      %3792 = vadd.xlane.f32.xlu0 %v3791
      %v3793 = vpop.xlane.xlu0 %3792
      %v3794 = vsel %vm1244, %v3786, 0.0
      %3795 = vadd.xlane.f32.xlu0 %v3794
      %v3796 = vpop.xlane.xlu0 %3795
      %v3797 = vsel %vm1244, %v3787, 0.0
      %3798 = vadd.xlane.f32.xlu0 %v3797
      %v3799 = vpop.xlane.xlu0 %3798
      %v3800 = vmul.f32 %v3790, %v1257
      %v3801 = vmul.f32 %v3793, %v1257
      %v3802 = vmul.f32 %v3796, %v1257
      %v3803 = vmul.f32 %v3799, %v1257
      %v3804 = vadd.f32 %v3800, 1e-05
      %v3805 = vadd.f32 %v3801, 1e-05
      %v3806 = vadd.f32 %v3802, 1e-05
      %v3807 = vadd.f32 %v3803, 1e-05
      %v3808 = vrsqrt.pop %v3804
      %v3809 = vrsqrt.pop %v3805
      %v3810 = vrsqrt.pop %v3806
      %v3811 = vrsqrt.pop %v3807
      %v3812 = vmul.f32 %v3780, %v3808
      %v3813 = vmul.f32 %v3781, %v3809
      %v3814 = vmul.f32 %v3782, %v3810
      %v3815 = vmul.f32 %v3783, %v3811
      %v3817 = vlaneseq
      %v3818 = vshrl.u32 %v3817, 7
      %v3819 = vsub.s32 0, %v3818
      %v3820 = vrot.slane %v3712, %v3819
      %v3822 = vmul.f32 %v3812, %v3820
      %v3823 = vmul.f32 %v3813, %v3820
      %v3824 = vmul.f32 %v3814, %v3820
      %v3825 = vmul.f32 %v3815, %v3820
      %v3827 = vlaneseq
      %v3828 = vshrl.u32 %v3827, 7
      %v3829 = vsub.s32 0, %v3828
      %v3830 = vrot.slane %v3713, %v3829
      %v3832 = vadd.f32 %v3822, %v3830
      %v3833 = vadd.f32 %v3823, %v3830
      %v3834 = vadd.f32 %v3824, %v3830
      %v3835 = vadd.f32 %v3825, %v3830
      %v3836 = vpack.c.bf16 %v3833, %v3832
      %v3837 = vpack.c.bf16 %v3835, %v3834
      %v3839 = vlaneseq
      %v3840 = vshrl.u32 %v3839, 7
      %v3841 = vsub.s32 0, %v3840
      %v3842 = vrot.slane %v3730, %v3841
      %v3843 = vlaneseq
      %v3844 = vshrl.u32 %v3843, 7
      %v3845 = vsub.s32 1, %v3844
      %v3846 = vrot.slane %v3730, %v3845
      %v3847 = vlaneseq
      %v3848 = vshrl.u32 %v3847, 7
      %v3849 = vsub.s32 2, %v3848
      %v3850 = vrot.slane %v3730, %v3849
      %v3851 = vlaneseq
      %v3852 = vshrl.u32 %v3851, 7
      %v3853 = vsub.s32 3, %v3852
      %v3854 = vrot.slane %v3730, %v3853
      %v3875 = vunpack.c.l.b16 %v3714
      %v3876 = vunpack.c.h.b16 %v3714
      %v3877 = vunpack.c.l.b16 %v3715
      %v3878 = vunpack.c.h.b16 %v3715
      %v3879 = vunpack.c.l.b16 %v3716
      %v3880 = vunpack.c.h.b16 %v3716
      %v3881 = vunpack.c.l.b16 %v3717
      %v3882 = vunpack.c.h.b16 %v3717
      %v3883 = vunpack.c.l.b16 %v3718
      %v3884 = vunpack.c.h.b16 %v3718
      %v3885 = vunpack.c.l.b16 %v3719
      %v3886 = vunpack.c.h.b16 %v3719
      %v3887 = vunpack.c.l.b16 %v3720
      %v3888 = vunpack.c.h.b16 %v3720
      %v3889 = vunpack.c.l.b16 %v3721
      %v3890 = vunpack.c.h.b16 %v3721
      %v3891 = vunpack.c.l.b16 %v3722
      %v3892 = vunpack.c.h.b16 %v3722
      %v3893 = vunpack.c.l.b16 %v3723
      %v3894 = vunpack.c.h.b16 %v3723
      %v3895 = vunpack.c.l.b16 %v3724
      %v3896 = vunpack.c.h.b16 %v3724
      %v3897 = vunpack.c.l.b16 %v3725
      %v3898 = vunpack.c.h.b16 %v3725
      %v3899 = vunpack.c.l.b16 %v3726
      %v3900 = vunpack.c.h.b16 %v3726
      %v3901 = vunpack.c.l.b16 %v3727
      %v3902 = vunpack.c.h.b16 %v3727
      %v3903 = vunpack.c.l.b16 %v3728
      %v3904 = vunpack.c.h.b16 %v3728
      %v3905 = vunpack.c.l.b16 %v3729
      %v3906 = vunpack.c.h.b16 %v3729
      %v3907 = vpack.c.b16 %v3879, %v3875
      %v3908 = vpack.c.b16 %v3880, %v3876
      %v3909 = vpack.c.b16 %v3881, %v3877
      %v3910 = vpack.c.b16 %v3882, %v3878
      %v3911 = vpack.c.b16 %v3887, %v3883
      %v3912 = vpack.c.b16 %v3888, %v3884
      %v3913 = vpack.c.b16 %v3889, %v3885
      %v3914 = vpack.c.b16 %v3890, %v3886
      %v3915 = vpack.c.b16 %v3895, %v3891
      %v3916 = vpack.c.b16 %v3896, %v3892
      %v3917 = vpack.c.b16 %v3897, %v3893
      %v3918 = vpack.c.b16 %v3898, %v3894
      %v3919 = vpack.c.b16 %v3903, %v3899
      %v3920 = vpack.c.b16 %v3904, %v3900
      %v3921 = vpack.c.b16 %v3905, %v3901
      %v3922 = vpack.c.b16 %v3906, %v3902
      %v3940 = vsel %vm1244, %v3836, 0
      %v3943 = vsel %vm1244, %v3837, 0
      %3945 = vmatprep.subr.bf16.mxu0 %v3908
      %3946 = vmatpush1.bf16.msra.mxu0 %v3907
      %3947 = vmatprep.subr.bf16.mxu0 %v3912
      %3948 = vmatpush1.bf16.msra.mxu0 %v3911
      %3949 = vmatprep.subr.bf16.mxu0 %v3916
      %3950 = vmatpush1.bf16.msra.mxu0 %v3915
      %3951 = vmatprep.subr.bf16.mxu0 %v3920
      %3952 = vmatpush1.bf16.msra.mxu0 %v3919
      %3953 = vmatprep.subr.bf16.mxu0 0
      %3954 = vmatpush1.bf16.msra.mxu0 0
      %3955 = vmatprep.subr.bf16.mxu0 0
      %3956 = vmatpush1.bf16.msra.mxu0 0
      %3957 = vmatprep.subr.bf16.mxu0 0
      %3958 = vmatpush1.bf16.msra.mxu0 0
      %3959 = vmatprep.subr.bf16.mxu0 0
      %3960 = vmatpush1.bf16.msra.mxu0 0
      %3961 = vmatprep.subr.bf16.mxu0 0
      %3962 = vmatpush1.bf16.msra.mxu0 0
      %3963 = vmatprep.subr.bf16.mxu0 0
      %3964 = vmatpush1.bf16.msra.mxu0 0
      %3965 = vmatprep.subr.bf16.mxu0 0
      %3966 = vmatpush1.bf16.msra.mxu0 0
      %3967 = vmatprep.subr.bf16.mxu0 0
      %3968 = vmatpush1.bf16.msra.mxu0 0
      %3969 = vmatprep.subr.bf16.mxu0 0
      %3970 = vmatpush1.bf16.msra.mxu0 0
      %3971 = vmatprep.subr.bf16.mxu0 0
      %3972 = vmatpush1.bf16.msra.mxu0 0
      %3973 = vmatprep.subr.bf16.mxu0 0
      %3974 = vmatpush1.bf16.msra.mxu0 0
      %3975 = vmatprep.subr.bf16.mxu0 0
      %3976 = vmatpush1.bf16.msra.mxu0 0
      %3977 = vmatprep.mubr.bf16.mxu0 0
      %3978 = vmatmul.mubr.bf16.gmra.mrb[0].mxu0 %v3940
      %v3979 = vpop.f32.mrb[0].mxu0
      %v3980 = vadd.f32 %v3842, %v3979
      %v3981 = vpop.f32.mrb[0].mxu0
      %v3982 = vadd.f32 %v3846, %v3981
      %v3983 = vpop.f32.mrb[0].mxu0
      %v3984 = vadd.f32 %v3842, %v3983
      %v3985 = vpop.f32.mrb[0].mxu0
      %v3986 = vadd.f32 %v3846, %v3985
      %3987 = vmatprep.mubr.bf16.mxu0 0
      %3988 = vmatmul.mubr.bf16.gmra.mrb[0].mxu0 %v3943
      %v3989 = vpop.f32.mrb[0].mxu0
      %v3990 = vadd.f32 %v3842, %v3989
      %v3991 = vpop.f32.mrb[0].mxu0
      %v3992 = vadd.f32 %v3846, %v3991
      %v3993 = vpop.f32.mrb[0].mxu0
      %v3994 = vadd.f32 %v3842, %v3993
      %v3995 = vpop.f32.mrb[0].mxu0
      %v3996 = vadd.f32 %v3846, %v3995
      %3997 = vdwg.mxu0
      %3998 = vmatprep.subr.bf16.mxu0 %v3910
      %3999 = vmatpush1.bf16.msra.mxu0 %v3909
      %4000 = vmatprep.subr.bf16.mxu0 %v3914
      %4001 = vmatpush1.bf16.msra.mxu0 %v3913
      %4002 = vmatprep.subr.bf16.mxu0 %v3918
      %4003 = vmatpush1.bf16.msra.mxu0 %v3917
      %4004 = vmatprep.subr.bf16.mxu0 %v3922
      %4005 = vmatpush1.bf16.msra.mxu0 %v3921
      %4006 = vmatprep.subr.bf16.mxu0 0
      %4007 = vmatpush1.bf16.msra.mxu0 0
      %4008 = vmatprep.subr.bf16.mxu0 0
      %4009 = vmatpush1.bf16.msra.mxu0 0
      %4010 = vmatprep.subr.bf16.mxu0 0
      %4011 = vmatpush1.bf16.msra.mxu0 0
      %4012 = vmatprep.subr.bf16.mxu0 0
      %4013 = vmatpush1.bf16.msra.mxu0 0
      %4014 = vmatprep.subr.bf16.mxu0 0
      %4015 = vmatpush1.bf16.msra.mxu0 0
      %4016 = vmatprep.subr.bf16.mxu0 0
      %4017 = vmatpush1.bf16.msra.mxu0 0
      %4018 = vmatprep.subr.bf16.mxu0 0
      %4019 = vmatpush1.bf16.msra.mxu0 0
      %4020 = vmatprep.subr.bf16.mxu0 0
      %4021 = vmatpush1.bf16.msra.mxu0 0
      %4022 = vmatprep.subr.bf16.mxu0 0
      %4023 = vmatpush1.bf16.msra.mxu0 0
      %4024 = vmatprep.subr.bf16.mxu0 0
      %4025 = vmatpush1.bf16.msra.mxu0 0
      %4026 = vmatprep.subr.bf16.mxu0 0
      %4027 = vmatpush1.bf16.msra.mxu0 0
      %4028 = vmatprep.subr.bf16.mxu0 0
      %4029 = vmatpush1.bf16.msra.mxu0 0
      %4030 = vmatprep.mubr.bf16.mxu0 0
      %4031 = vmatmul.mubr.bf16.gmra.mrb[0].mxu0 %v3940
      %v4032 = vpop.f32.mrb[0].mxu0
      %v4033 = vadd.f32 %v3850, %v4032
      %v4034 = vpop.f32.mrb[0].mxu0
      %v4035 = vadd.f32 %v3854, %v4034
      %v4036 = vpop.f32.mrb[0].mxu0
      %v4037 = vadd.f32 %v3850, %v4036
      %v4038 = vpop.f32.mrb[0].mxu0
      %v4039 = vadd.f32 %v3854, %v4038
      %4040 = vmatprep.mubr.bf16.mxu0 0
      %4041 = vmatmul.mubr.bf16.gmra.mrb[0].mxu0 %v3943
      %v4042 = vpop.f32.mrb[0].mxu0
      %v4043 = vadd.f32 %v3850, %v4042
      %v4044 = vpop.f32.mrb[0].mxu0
      %v4045 = vadd.f32 %v3854, %v4044
      %v4046 = vpop.f32.mrb[0].mxu0
      %v4047 = vadd.f32 %v3850, %v4046
      %v4048 = vpop.f32.mrb[0].mxu0
      %v4049 = vadd.f32 %v3854, %v4048
      %4050 = vdwg.mxu0
      %v4051 = vmul.f32 %v4033, %v4033
      %v4052 = vmul.f32 %v4035, %v4035
      %v4053 = vmul.f32 %v4037, %v4037
      %v4054 = vmul.f32 %v4039, %v4039
      %v4055 = vmul.f32 %v4043, %v4043
      %v4056 = vmul.f32 %v4045, %v4045
      %v4057 = vmul.f32 %v4047, %v4047
      %v4058 = vmul.f32 %v4049, %v4049
      %v4059 = vmul.f32 %v4033, %v4051
      %v4060 = vmul.f32 %v4035, %v4052
      %v4061 = vmul.f32 %v4037, %v4053
      %v4062 = vmul.f32 %v4039, %v4054
      %v4063 = vmul.f32 %v4043, %v4055
      %v4064 = vmul.f32 %v4045, %v4056
      %v4065 = vmul.f32 %v4047, %v4057
      %v4066 = vmul.f32 %v4049, %v4058
      %v4067 = vmul.f32 %v4059, 0.044715
      %v4068 = vmul.f32 %v4060, 0.044715
      %v4069 = vmul.f32 %v4061, 0.044715
      %v4070 = vmul.f32 %v4062, 0.044715
      %v4071 = vmul.f32 %v4063, 0.044715
      %v4072 = vmul.f32 %v4064, 0.044715
      %v4073 = vmul.f32 %v4065, 0.044715
      %v4074 = vmul.f32 %v4066, 0.044715
      %v4075 = vadd.f32 %v4033, %v4067
      %v4076 = vadd.f32 %v4035, %v4068
      %v4077 = vadd.f32 %v4037, %v4069
      %v4078 = vadd.f32 %v4039, %v4070
      %v4079 = vadd.f32 %v4043, %v4071
      %v4080 = vadd.f32 %v4045, %v4072
      %v4081 = vadd.f32 %v4047, %v4073
      %v4082 = vadd.f32 %v4049, %v4074
      %v4083 = vmul.f32 %v4075, 0.7978846
      %v4084 = vmul.f32 %v4076, 0.7978846
      %v4085 = vmul.f32 %v4077, 0.7978846
      %v4086 = vmul.f32 %v4078, 0.7978846
      %v4087 = vmul.f32 %v4079, 0.7978846
      %v4088 = vmul.f32 %v4080, 0.7978846
      %v4089 = vmul.f32 %v4081, 0.7978846
      %v4090 = vmul.f32 %v4082, 0.7978846
      %v4091 = vtanh.pop %v4083
      %v4092 = vtanh.pop %v4084
      %v4093 = vtanh.pop %v4085
      %v4094 = vtanh.pop %v4086
      %v4095 = vtanh.pop %v4087
      %v4096 = vtanh.pop %v4088
      %v4097 = vtanh.pop %v4089
      %v4098 = vtanh.pop %v4090
      %v4099 = vadd.f32 %v4091, 1.0
      %v4100 = vadd.f32 %v4092, 1.0
      %v4101 = vadd.f32 %v4093, 1.0
      %v4102 = vadd.f32 %v4094, 1.0
      %v4103 = vadd.f32 %v4095, 1.0
      %v4104 = vadd.f32 %v4096, 1.0
      %v4105 = vadd.f32 %v4097, 1.0
      %v4106 = vadd.f32 %v4098, 1.0
      %v4107 = vmul.f32 %v4099, 0.5
      %v4108 = vmul.f32 %v4100, 0.5
      %v4109 = vmul.f32 %v4101, 0.5
      %v4110 = vmul.f32 %v4102, 0.5
      %v4111 = vmul.f32 %v4103, 0.5
      %v4112 = vmul.f32 %v4104, 0.5
      %v4113 = vmul.f32 %v4105, 0.5
      %v4114 = vmul.f32 %v4106, 0.5
      %v4115 = vmul.f32 %v4033, %v4107
      %v4116 = vmul.f32 %v4035, %v4108
      %v4117 = vmul.f32 %v4037, %v4109
      %v4118 = vmul.f32 %v4039, %v4110
      %v4119 = vmul.f32 %v4043, %v4111
      %v4120 = vmul.f32 %v4045, %v4112
      %v4121 = vmul.f32 %v4047, %v4113
      %v4122 = vmul.f32 %v4049, %v4114
      %v4123 = vmul.f32 %v3980, %v4115
      %v4124 = vmul.f32 %v3982, %v4116
      %v4125 = vmul.f32 %v3984, %v4117
      %v4126 = vmul.f32 %v3986, %v4118
      %v4127 = vmul.f32 %v3990, %v4119
      %v4128 = vmul.f32 %v3992, %v4120
      %v4129 = vmul.f32 %v3994, %v4121
      %v4130 = vmul.f32 %v3996, %v4122
      %v4131 = vpack.c.bf16 %v4125, %v4123
      %v4132 = vpack.c.bf16 %v4126, %v4124
      %v4133 = vpack.c.bf16 %v4129, %v4127
      %v4134 = vpack.c.bf16 %v4130, %v4128
      %v4136 = vlaneseq
      %v4137 = vshrl.u32 %v4136, 7
      %v4138 = vsub.s32 0, %v4137
      %v4139 = vrot.slane %v3763, %v4138
      %v4173 = vunpack.c.l.b16 %v3731
      %v4174 = vunpack.c.l.b16 %v3732
      %v4175 = vunpack.c.l.b16 %v3733
      %v4176 = vunpack.c.l.b16 %v3734
      %v4177 = vunpack.c.l.b16 %v3735
      %v4178 = vunpack.c.l.b16 %v3736
      %v4179 = vunpack.c.l.b16 %v3737
      %v4180 = vunpack.c.l.b16 %v3738
      %v4181 = vunpack.c.l.b16 %v3739
      %v4182 = vunpack.c.l.b16 %v3740
      %v4183 = vunpack.c.l.b16 %v3741
      %v4184 = vunpack.c.l.b16 %v3742
      %v4185 = vunpack.c.l.b16 %v3743
      %v4186 = vunpack.c.l.b16 %v3744
      %v4187 = vunpack.c.l.b16 %v3745
      %v4188 = vunpack.c.l.b16 %v3746
      %v4189 = vunpack.c.l.b16 %v3747
      %v4190 = vunpack.c.l.b16 %v3748
      %v4191 = vunpack.c.l.b16 %v3749
      %v4192 = vunpack.c.l.b16 %v3750
      %v4193 = vunpack.c.l.b16 %v3751
      %v4194 = vunpack.c.l.b16 %v3752
      %v4195 = vunpack.c.l.b16 %v3753
      %v4196 = vunpack.c.l.b16 %v3754
      %v4197 = vunpack.c.l.b16 %v3755
      %v4198 = vunpack.c.l.b16 %v3756
      %v4199 = vunpack.c.l.b16 %v3757
      %v4200 = vunpack.c.l.b16 %v3758
      %v4201 = vunpack.c.l.b16 %v3759
      %v4202 = vunpack.c.l.b16 %v3760
      %v4203 = vunpack.c.l.b16 %v3761
      %v4204 = vunpack.c.l.b16 %v3762
      %v4205 = vpack.c.b16 %v4174, %v4173
      %v4206 = vpack.c.b16 %v4176, %v4175
      %v4207 = vpack.c.b16 %v4178, %v4177
      %v4208 = vpack.c.b16 %v4180, %v4179
      %v4209 = vpack.c.b16 %v4182, %v4181
      %v4210 = vpack.c.b16 %v4184, %v4183
      %v4211 = vpack.c.b16 %v4186, %v4185
      %v4212 = vpack.c.b16 %v4188, %v4187
      %v4213 = vpack.c.b16 %v4190, %v4189
      %v4214 = vpack.c.b16 %v4192, %v4191
      %v4215 = vpack.c.b16 %v4194, %v4193
      %v4216 = vpack.c.b16 %v4196, %v4195
      %v4217 = vpack.c.b16 %v4198, %v4197
      %v4218 = vpack.c.b16 %v4200, %v4199
      %v4219 = vpack.c.b16 %v4202, %v4201
      %v4220 = vpack.c.b16 %v4204, %v4203
      %4237 = vmatprep.subr.bf16.mxu0 0
      %4238 = vmatpush1.bf16.msra.mxu0 %v4205
      %4239 = vmatprep.subr.bf16.mxu0 0
      %4240 = vmatpush1.bf16.msra.mxu0 %v4206
      %4241 = vmatprep.subr.bf16.mxu0 0
      %4242 = vmatpush1.bf16.msra.mxu0 %v4207
      %4243 = vmatprep.subr.bf16.mxu0 0
      %4244 = vmatpush1.bf16.msra.mxu0 %v4208
      %4245 = vmatprep.subr.bf16.mxu0 0
      %4246 = vmatpush1.bf16.msra.mxu0 %v4209
      %4247 = vmatprep.subr.bf16.mxu0 0
      %4248 = vmatpush1.bf16.msra.mxu0 %v4210
      %4249 = vmatprep.subr.bf16.mxu0 0
      %4250 = vmatpush1.bf16.msra.mxu0 %v4211
      %4251 = vmatprep.subr.bf16.mxu0 0
      %4252 = vmatpush1.bf16.msra.mxu0 %v4212
      %4253 = vmatprep.subr.bf16.mxu0 0
      %4254 = vmatpush1.bf16.msra.mxu0 %v4213
      %4255 = vmatprep.subr.bf16.mxu0 0
      %4256 = vmatpush1.bf16.msra.mxu0 %v4214
      %4257 = vmatprep.subr.bf16.mxu0 0
      %4258 = vmatpush1.bf16.msra.mxu0 %v4215
      %4259 = vmatprep.subr.bf16.mxu0 0
      %4260 = vmatpush1.bf16.msra.mxu0 %v4216
      %4261 = vmatprep.subr.bf16.mxu0 0
      %4262 = vmatpush1.bf16.msra.mxu0 %v4217
      %4263 = vmatprep.subr.bf16.mxu0 0
      %4264 = vmatpush1.bf16.msra.mxu0 %v4218
      %4265 = vmatprep.subr.bf16.mxu0 0
      %4266 = vmatpush1.bf16.msra.mxu0 %v4219
      %4267 = vmatprep.subr.bf16.mxu0 0
      %4268 = vmatpush1.bf16.msra.mxu0 %v4220
      %4269 = vmatprep.mubr.bf16.mxu0 %v4132
      %4270 = vmatmul.mubr.bf16.gmra.mrb[0].mxu0 %v4131
      %v4271 = vpop.f32.mrb[0].mxu0
      %v4272 = vadd.f32 %v4139, %v4271
      %v4273 = vpop.f32.mrb[0].mxu0
      %v4274 = vpop.f32.mrb[0].mxu0
      %v4275 = vadd.f32 %v4139, %v4274
      %v4276 = vpop.f32.mrb[0].mxu0
      %4277 = vmatprep.mubr.bf16.mxu0 %v4134
      %4278 = vmatmul.mubr.bf16.gmra.mrb[0].mxu0 %v4133
      %v4279 = vpop.f32.mrb[0].mxu0
      %v4280 = vadd.f32 %v4139, %v4279
      %v4281 = vpop.f32.mrb[0].mxu0
      %v4282 = vpop.f32.mrb[0].mxu0
      %v4283 = vadd.f32 %v4139, %v4282
      %v4284 = vpop.f32.mrb[0].mxu0
      %4285 = vdwg.mxu0
      %v4286 = vadd.f32 %v4272, %v3708
      %v4287 = vadd.f32 %v4275, %v3709
      %v4288 = vadd.f32 %v4280, %v3710
      %v4289 = vadd.f32 %v4283, %v3711
      %s4290 = scalar_lea.vmem %s35, 1
      %v4291 = vld [vmem:[%s4290] sm:$0x1]
      %s4292 = scalar_lea.vmem %s37, 1
      %v4293 = vld [vmem:[%s4292] sm:$0x1]
      %v4294 = vsel %vm1244, %v4286, 0.0
      %4295 = vadd.xlane.f32.xlu0 %v4294
      %v4296 = vpop.xlane.xlu0 %4295
      %v4297 = vsel %vm1244, %v4287, 0.0
      %4298 = vadd.xlane.f32.xlu0 %v4297
      %v4299 = vpop.xlane.xlu0 %4298
      %v4300 = vsel %vm1244, %v4288, 0.0
      %4301 = vadd.xlane.f32.xlu0 %v4300
      %v4302 = vpop.xlane.xlu0 %4301
      %v4303 = vsel %vm1244, %v4289, 0.0
      %4304 = vadd.xlane.f32.xlu0 %v4303
      %v4305 = vpop.xlane.xlu0 %4304
      %v4306 = vmul.f32 %v4296, %v1257
      %v4307 = vmul.f32 %v4299, %v1257
      %v4308 = vmul.f32 %v4302, %v1257
      %v4309 = vmul.f32 %v4305, %v1257
      %v4310 = vsub.f32 %v4286, %v4306
      %v4311 = vsub.f32 %v4287, %v4307
      %v4312 = vsub.f32 %v4288, %v4308
      %v4313 = vsub.f32 %v4289, %v4309
      %v4314 = vmul.f32 %v4310, %v4310
      %v4315 = vmul.f32 %v4311, %v4311
      %v4316 = vmul.f32 %v4312, %v4312
      %v4317 = vmul.f32 %v4313, %v4313
      %v4318 = vsel %vm1244, %v4314, 0.0
      %4319 = vadd.xlane.f32.xlu0 %v4318
      %v4320 = vpop.xlane.xlu0 %4319
      %v4321 = vsel %vm1244, %v4315, 0.0
      %4322 = vadd.xlane.f32.xlu0 %v4321
      %v4323 = vpop.xlane.xlu0 %4322
      %v4324 = vsel %vm1244, %v4316, 0.0
      %4325 = vadd.xlane.f32.xlu0 %v4324
      %v4326 = vpop.xlane.xlu0 %4325
      %v4327 = vsel %vm1244, %v4317, 0.0
      %4328 = vadd.xlane.f32.xlu0 %v4327
      %v4329 = vpop.xlane.xlu0 %4328
      %v4330 = vmul.f32 %v4320, %v1257
      %v4331 = vmul.f32 %v4323, %v1257
      %v4332 = vmul.f32 %v4326, %v1257
      %v4333 = vmul.f32 %v4329, %v1257
      %v4334 = vadd.f32 %v4330, 1e-05
      %v4335 = vadd.f32 %v4331, 1e-05
      %v4336 = vadd.f32 %v4332, 1e-05
      %v4337 = vadd.f32 %v4333, 1e-05
      %v4338 = vrsqrt.pop %v4334
      %v4339 = vrsqrt.pop %v4335
      %v4340 = vrsqrt.pop %v4336
      %v4341 = vrsqrt.pop %v4337
      %v4342 = vmul.f32 %v4310, %v4338
      %v4343 = vmul.f32 %v4311, %v4339
      %v4344 = vmul.f32 %v4312, %v4340
      %v4345 = vmul.f32 %v4313, %v4341
      %v4347 = vlaneseq
      %v4348 = vshrl.u32 %v4347, 7
      %v4349 = vsub.s32 0, %v4348
      %v4350 = vrot.slane %v4291, %v4349
      %v4352 = vmul.f32 %v4342, %v4350
      %v4353 = vmul.f32 %v4343, %v4350
      %v4354 = vmul.f32 %v4344, %v4350
      %v4355 = vmul.f32 %v4345, %v4350
      %v4357 = vlaneseq
      %v4358 = vshrl.u32 %v4357, 7
      %v4359 = vsub.s32 0, %v4358
      %v4360 = vrot.slane %v4293, %v4359
      %v4362 = vadd.f32 %v4352, %v4360
      %v4363 = vadd.f32 %v4353, %v4360
      %v4364 = vadd.f32 %v4354, %v4360
      %v4365 = vadd.f32 %v4355, %v4360
      %s4366 = scalar_lea.vmem %s47, 1
      %v4367 = vld [vmem:[%s4366] sm:$0x1]
      %s4368 = scalar_lea.vmem %s39, 64
      %v4369 = vld [vmem:[%s4368] sm:$0xf]
      %v4370 = vld [vmem:[%s4368 + $0x4] sm:$0xf]
      %v4371 = vld [vmem:[%s4368 + $0x8] sm:$0xf]
      %v4372 = vld [vmem:[%s4368 + $0xc] sm:$0xf]
      %v4373 = vld [vmem:[%s4368 + $0x10] sm:$0xf]
      %v4374 = vld [vmem:[%s4368 + $0x14] sm:$0xf]
      %v4375 = vld [vmem:[%s4368 + $0x18] sm:$0xf]
      %v4376 = vld [vmem:[%s4368 + $0x1c] sm:$0xf]
      %v4377 = vpack.c.bf16 %v4363, %v4362
      %v4378 = vpack.c.bf16 %v4365, %v4364
      %v4387 = vunpack.c.l.b16 %v4369
      %v4388 = vunpack.c.l.b16 %v4370
      %v4389 = vunpack.c.l.b16 %v4371
      %v4390 = vunpack.c.l.b16 %v4372
      %v4391 = vunpack.c.l.b16 %v4373
      %v4392 = vunpack.c.l.b16 %v4374
      %v4393 = vunpack.c.l.b16 %v4375
      %v4394 = vunpack.c.l.b16 %v4376
      %v4395 = vpack.c.b16 %v4388, %v4387
      %v4396 = vpack.c.b16 %v4390, %v4389
      %v4397 = vpack.c.b16 %v4392, %v4391
      %v4398 = vpack.c.b16 %v4394, %v4393
      %v4404 = vsel %vm1244, %v4377, 0
      %v4407 = vsel %vm1244, %v4378, 0
      %4409 = vmatprep.subr.bf16.mxu0 0
      %4410 = vmatpush1.bf16.msra.mxu0 %v4395
      %4411 = vmatprep.subr.bf16.mxu0 0
      %4412 = vmatpush1.bf16.msra.mxu0 %v4396
      %4413 = vmatprep.subr.bf16.mxu0 0
      %4414 = vmatpush1.bf16.msra.mxu0 %v4397
      %4415 = vmatprep.subr.bf16.mxu0 0
      %4416 = vmatpush1.bf16.msra.mxu0 %v4398
      %4417 = vmatprep.subr.bf16.mxu0 0
      %4418 = vmatpush1.bf16.msra.mxu0 0
      %4419 = vmatprep.subr.bf16.mxu0 0
      %4420 = vmatpush1.bf16.msra.mxu0 0
      %4421 = vmatprep.subr.bf16.mxu0 0
      %4422 = vmatpush1.bf16.msra.mxu0 0
      %4423 = vmatprep.subr.bf16.mxu0 0
      %4424 = vmatpush1.bf16.msra.mxu0 0
      %4425 = vmatprep.subr.bf16.mxu0 0
      %4426 = vmatpush1.bf16.msra.mxu0 0
      %4427 = vmatprep.subr.bf16.mxu0 0
      %4428 = vmatpush1.bf16.msra.mxu0 0
      %4429 = vmatprep.subr.bf16.mxu0 0
      %4430 = vmatpush1.bf16.msra.mxu0 0
      %4431 = vmatprep.subr.bf16.mxu0 0
      %4432 = vmatpush1.bf16.msra.mxu0 0
      %4433 = vmatprep.subr.bf16.mxu0 0
      %4434 = vmatpush1.bf16.msra.mxu0 0
      %4435 = vmatprep.subr.bf16.mxu0 0
      %4436 = vmatpush1.bf16.msra.mxu0 0
      %4437 = vmatprep.subr.bf16.mxu0 0
      %4438 = vmatpush1.bf16.msra.mxu0 0
      %4439 = vmatprep.subr.bf16.mxu0 0
      %4440 = vmatpush1.bf16.msra.mxu0 0
      %4441 = vmatprep.mubr.bf16.mxu0 0
      %4442 = vmatmul.mubr.bf16.gmra.mrb[0].mxu0 %v4404
      %v4443 = vpop.f32.mrb[0].mxu0
      %v4444 = vadd.f32 0.0, %v4443
      %v4445 = vpop.f32.mrb[0].mxu0
      %v4446 = vpop.f32.mrb[0].mxu0
      %v4447 = vadd.f32 0.0, %v4446
      %v4448 = vpop.f32.mrb[0].mxu0
      %4449 = vmatprep.mubr.bf16.mxu0 0
      %4450 = vmatmul.mubr.bf16.gmra.mrb[0].mxu0 %v4407
      %v4451 = vpop.f32.mrb[0].mxu0
      %v4452 = vadd.f32 0.0, %v4451
      %v4453 = vpop.f32.mrb[0].mxu0
      %v4454 = vpop.f32.mrb[0].mxu0
      %v4455 = vadd.f32 0.0, %v4454
      %v4456 = vpop.f32.mrb[0].mxu0
      %4457 = vdwg.mxu0
      %v4458 = vmul.f32 %v4444, 0.25
      %v4459 = vmul.f32 %v4447, 0.25
      %v4460 = vmul.f32 %v4452, 0.25
      %v4461 = vmul.f32 %v4455, 0.25
      %v4462 = vpack.c.bf16 %v4459, %v4458
      %v4463 = vpack.c.bf16 %v4461, %v4460
      %s4464 = scalar_lea.vmem %s41, 64
      %v4465 = vld [vmem:[%s4464] sm:$0xf]
      %v4466 = vld [vmem:[%s4464 + $0x4] sm:$0xf]
      %v4467 = vld [vmem:[%s4464 + $0x8] sm:$0xf]
      %v4468 = vld [vmem:[%s4464 + $0xc] sm:$0xf]
      %v4469 = vld [vmem:[%s4464 + $0x10] sm:$0xf]
      %v4470 = vld [vmem:[%s4464 + $0x14] sm:$0xf]
      %v4471 = vld [vmem:[%s4464 + $0x18] sm:$0xf]
      %v4472 = vld [vmem:[%s4464 + $0x1c] sm:$0xf]
      %v4481 = vunpack.c.l.b16 %v4465
      %v4482 = vunpack.c.l.b16 %v4466
      %v4483 = vunpack.c.l.b16 %v4467
      %v4484 = vunpack.c.l.b16 %v4468
      %v4485 = vunpack.c.l.b16 %v4469
      %v4486 = vunpack.c.l.b16 %v4470
      %v4487 = vunpack.c.l.b16 %v4471
      %v4488 = vunpack.c.l.b16 %v4472
      %v4489 = vpack.c.b16 %v4482, %v4481
      %v4490 = vpack.c.b16 %v4484, %v4483
      %v4491 = vpack.c.b16 %v4486, %v4485
      %v4492 = vpack.c.b16 %v4488, %v4487
      %4497 = vmatprep.subr.bf16.mxu0 0
      %4498 = vmatpush1.bf16.msra.mxu0 %v4489
      %4499 = vmatprep.subr.bf16.mxu0 0
      %4500 = vmatpush1.bf16.msra.mxu0 %v4490
      %4501 = vmatprep.subr.bf16.mxu0 0
      %4502 = vmatpush1.bf16.msra.mxu0 %v4491
      %4503 = vmatprep.subr.bf16.mxu0 0
      %4504 = vmatpush1.bf16.msra.mxu0 %v4492
      %4505 = vmatprep.subr.bf16.mxu0 0
      %4506 = vmatpush1.bf16.msra.mxu0 0
      %4507 = vmatprep.subr.bf16.mxu0 0
      %4508 = vmatpush1.bf16.msra.mxu0 0
      %4509 = vmatprep.subr.bf16.mxu0 0
      %4510 = vmatpush1.bf16.msra.mxu0 0
      %4511 = vmatprep.subr.bf16.mxu0 0
      %4512 = vmatpush1.bf16.msra.mxu0 0
      %4513 = vmatprep.subr.bf16.mxu0 0
      %4514 = vmatpush1.bf16.msra.mxu0 0
      %4515 = vmatprep.subr.bf16.mxu0 0
      %4516 = vmatpush1.bf16.msra.mxu0 0
      %4517 = vmatprep.subr.bf16.mxu0 0
      %4518 = vmatpush1.bf16.msra.mxu0 0
      %4519 = vmatprep.subr.bf16.mxu0 0
      %4520 = vmatpush1.bf16.msra.mxu0 0
      %4521 = vmatprep.subr.bf16.mxu0 0
      %4522 = vmatpush1.bf16.msra.mxu0 0
      %4523 = vmatprep.subr.bf16.mxu0 0
      %4524 = vmatpush1.bf16.msra.mxu0 0
      %4525 = vmatprep.subr.bf16.mxu0 0
      %4526 = vmatpush1.bf16.msra.mxu0 0
      %4527 = vmatprep.subr.bf16.mxu0 0
      %4528 = vmatpush1.bf16.msra.mxu0 0
      %4529 = vmatprep.mubr.bf16.mxu0 0
      %4530 = vmatmul.mubr.bf16.gmra.mrb[0].mxu0 %v4404
      %v4531 = vpop.f32.mrb[0].mxu0
      %v4532 = vadd.f32 0.0, %v4531
      %v4533 = vpop.f32.mrb[0].mxu0
      %v4534 = vpop.f32.mrb[0].mxu0
      %v4535 = vadd.f32 0.0, %v4534
      %v4536 = vpop.f32.mrb[0].mxu0
      %4537 = vmatprep.mubr.bf16.mxu0 0
      %4538 = vmatmul.mubr.bf16.gmra.mrb[0].mxu0 %v4407
      %v4539 = vpop.f32.mrb[0].mxu0
      %v4540 = vadd.f32 0.0, %v4539
      %v4541 = vpop.f32.mrb[0].mxu0
      %v4542 = vpop.f32.mrb[0].mxu0
      %v4543 = vadd.f32 0.0, %v4542
      %v4544 = vpop.f32.mrb[0].mxu0
      %4545 = vdwg.mxu0
      %v4546 = vpack.c.bf16 %v4535, %v4532
      %v4547 = vpack.c.bf16 %v4543, %v4540
      %s4548 = scalar_lea.vmem %s43, 64
      %v4549 = vld [vmem:[%s4548] sm:$0xf]
      %v4550 = vld [vmem:[%s4548 + $0x4] sm:$0xf]
      %v4551 = vld [vmem:[%s4548 + $0x8] sm:$0xf]
      %v4552 = vld [vmem:[%s4548 + $0xc] sm:$0xf]
      %v4553 = vld [vmem:[%s4548 + $0x10] sm:$0xf]
      %v4554 = vld [vmem:[%s4548 + $0x14] sm:$0xf]
      %v4555 = vld [vmem:[%s4548 + $0x18] sm:$0xf]
      %v4556 = vld [vmem:[%s4548 + $0x1c] sm:$0xf]
      %v4565 = vunpack.c.l.b16 %v4549
      %v4566 = vunpack.c.l.b16 %v4550
      %v4567 = vunpack.c.l.b16 %v4551
      %v4568 = vunpack.c.l.b16 %v4552
      %v4569 = vunpack.c.l.b16 %v4553
      %v4570 = vunpack.c.l.b16 %v4554
      %v4571 = vunpack.c.l.b16 %v4555
      %v4572 = vunpack.c.l.b16 %v4556
      %v4573 = vpack.c.b16 %v4566, %v4565
      %v4574 = vpack.c.b16 %v4568, %v4567
      %v4575 = vpack.c.b16 %v4570, %v4569
      %v4576 = vpack.c.b16 %v4572, %v4571
      %4581 = vmatprep.subr.bf16.mxu0 0
      %4582 = vmatpush1.bf16.msra.mxu0 %v4573
      %4583 = vmatprep.subr.bf16.mxu0 0
      %4584 = vmatpush1.bf16.msra.mxu0 %v4574
      %4585 = vmatprep.subr.bf16.mxu0 0
      %4586 = vmatpush1.bf16.msra.mxu0 %v4575
      %4587 = vmatprep.subr.bf16.mxu0 0
      %4588 = vmatpush1.bf16.msra.mxu0 %v4576
      %4589 = vmatprep.subr.bf16.mxu0 0
      %4590 = vmatpush1.bf16.msra.mxu0 0
      %4591 = vmatprep.subr.bf16.mxu0 0
      %4592 = vmatpush1.bf16.msra.mxu0 0
      %4593 = vmatprep.subr.bf16.mxu0 0
      %4594 = vmatpush1.bf16.msra.mxu0 0
      %4595 = vmatprep.subr.bf16.mxu0 0
      %4596 = vmatpush1.bf16.msra.mxu0 0
      %4597 = vmatprep.subr.bf16.mxu0 0
      %4598 = vmatpush1.bf16.msra.mxu0 0
      %4599 = vmatprep.subr.bf16.mxu0 0
      %4600 = vmatpush1.bf16.msra.mxu0 0
      %4601 = vmatprep.subr.bf16.mxu0 0
      %4602 = vmatpush1.bf16.msra.mxu0 0
      %4603 = vmatprep.subr.bf16.mxu0 0
      %4604 = vmatpush1.bf16.msra.mxu0 0
      %4605 = vmatprep.subr.bf16.mxu0 0
      %4606 = vmatpush1.bf16.msra.mxu0 0
      %4607 = vmatprep.subr.bf16.mxu0 0
      %4608 = vmatpush1.bf16.msra.mxu0 0
      %4609 = vmatprep.subr.bf16.mxu0 0
      %4610 = vmatpush1.bf16.msra.mxu0 0
      %4611 = vmatprep.subr.bf16.mxu0 0
      %4612 = vmatpush1.bf16.msra.mxu0 0
      %4613 = vmatprep.mubr.bf16.mxu0 0
      %4614 = vmatmul.mubr.bf16.gmra.mrb[0].mxu0 %v4404
      %v4615 = vpop.f32.mrb[0].mxu0
      %v4616 = vadd.f32 0.0, %v4615
      %v4617 = vpop.f32.mrb[0].mxu0
      %v4618 = vpop.f32.mrb[0].mxu0
      %v4619 = vadd.f32 0.0, %v4618
      %v4620 = vpop.f32.mrb[0].mxu0
      %4621 = vmatprep.mubr.bf16.mxu0 0
      %4622 = vmatmul.mubr.bf16.gmra.mrb[0].mxu0 %v4407
      %v4623 = vpop.f32.mrb[0].mxu0
      %v4624 = vadd.f32 0.0, %v4623
      %v4625 = vpop.f32.mrb[0].mxu0
      %v4626 = vpop.f32.mrb[0].mxu0
      %v4627 = vadd.f32 0.0, %v4626
      %v4628 = vpop.f32.mrb[0].mxu0
      %4629 = vdwg.mxu0
      %v4630 = vpack.c.bf16 %v4619, %v4616
      %v4631 = vpack.c.bf16 %v4627, %v4624
      %v4633 = vsel %vm1482, %v4462, 0
      %v4636 = vsel %vm1482, %v4463, 0
      %v4639 = vsel %vm1482, %v4546, 0
      %v4642 = vsel %vm1482, %v4547, 0
      %4644 = vmatprep.subr.bf16.mxu0 0
      %4645 = vmatpush1.bf16.xpose.msra.mxu0 %v4639
      %4646 = vmatprep.subr.bf16.mxu0 0
      %4647 = vmatpush1.bf16.xpose.msra.mxu0 %v4642
      %4648 = vmatprep.subr.bf16.mxu0 0
      %4649 = vmatpush1.bf16.xpose.msra.mxu0 0
      %4650 = vmatprep.subr.bf16.mxu0 0
      %4651 = vmatpush1.bf16.xpose.msra.mxu0 0
      %4652 = vmatprep.subr.bf16.mxu0 0
      %4653 = vmatpush1.bf16.xpose.msra.mxu0 0
      %4654 = vmatprep.subr.bf16.mxu0 0
      %4655 = vmatpush1.bf16.xpose.msra.mxu0 0
      %4656 = vmatprep.subr.bf16.mxu0 0
      %4657 = vmatpush1.bf16.xpose.msra.mxu0 0
      %4658 = vmatprep.subr.bf16.mxu0 0
      %4659 = vmatpush1.bf16.xpose.msra.mxu0 0
      %4660 = vmatprep.subr.bf16.mxu0 0
      %4661 = vmatpush1.bf16.xpose.msra.mxu0 0
      %4662 = vmatprep.subr.bf16.mxu0 0
      %4663 = vmatpush1.bf16.xpose.msra.mxu0 0
      %4664 = vmatprep.subr.bf16.mxu0 0
      %4665 = vmatpush1.bf16.xpose.msra.mxu0 0
      %4666 = vmatprep.subr.bf16.mxu0 0
      %4667 = vmatpush1.bf16.xpose.msra.mxu0 0
      %4668 = vmatprep.subr.bf16.mxu0 0
      %4669 = vmatpush1.bf16.xpose.msra.mxu0 0
      %4670 = vmatprep.subr.bf16.mxu0 0
      %4671 = vmatpush1.bf16.xpose.msra.mxu0 0
      %4672 = vmatprep.subr.bf16.mxu0 0
      %4673 = vmatpush1.bf16.xpose.msra.mxu0 0
      %4674 = vmatprep.subr.bf16.mxu0 0
      %4675 = vmatpush1.bf16.xpose.msra.mxu0 0
      %4676 = vmatprep.mubr.bf16.mxu0 0
      %4677 = vmatmul.mubr.bf16.gmra.mrb[0].mxu0 %v4633
      %v4678 = vpop.f32.mrb[0].mxu0
      %v4679 = vadd.f32 0.0, %v4678
      %v4680 = vpop.f32.mrb[0].mxu0
      %v4681 = vpop.f32.mrb[0].mxu0
      %v4682 = vadd.f32 0.0, %v4681
      %v4683 = vpop.f32.mrb[0].mxu0
      %4684 = vmatprep.mubr.bf16.mxu0 0
      %4685 = vmatmul.mubr.bf16.gmra.mrb[0].mxu0 %v4636
      %v4686 = vpop.f32.mrb[0].mxu0
      %v4687 = vadd.f32 0.0, %v4686
      %v4688 = vpop.f32.mrb[0].mxu0
      %v4689 = vpop.f32.mrb[0].mxu0
      %v4690 = vadd.f32 0.0, %v4689
      %v4691 = vpop.f32.mrb[0].mxu0
      %4692 = vdwg.mxu0
      %v4693 = vsel %vm3047, %v4679, -inf
      %4694 = vmax.xlane.f32.xlu0 %v4693
      %v4695 = vpop.xlane.xlu0 %4694
      %v4696 = vsel %vm3047, %v4682, -inf
      %4697 = vmax.xlane.f32.xlu0 %v4696
      %v4698 = vpop.xlane.xlu0 %4697
      %v4699 = vsel %vm3047, %v4687, -inf
      %4700 = vmax.xlane.f32.xlu0 %v4699
      %v4701 = vpop.xlane.xlu0 %4700
      %v4702 = vsel %vm3047, %v4690, -inf
      %4703 = vmax.xlane.f32.xlu0 %v4702
      %v4704 = vpop.xlane.xlu0 %4703
      %v4705 = vsub.f32 %v4679, %v4695
      %v4706 = vsub.f32 %v4682, %v4698
      %v4707 = vsub.f32 %v4687, %v4701
      %v4708 = vsub.f32 %v4690, %v4704
      %v4709 = vmul.f32 %v4705, 1.442695
      %v4710 = vpow.pop %v4709
      %v4711 = vmul.f32 %v4706, 1.442695
      %v4712 = vpow.pop %v4711
      %v4713 = vmul.f32 %v4707, 1.442695
      %v4714 = vpow.pop %v4713
      %v4715 = vmul.f32 %v4708, 1.442695
      %v4716 = vpow.pop %v4715
      %v4717 = vsel %vm3047, %v4710, 0.0
      %4718 = vadd.xlane.f32.xlu0 %v4717
      %v4719 = vpop.xlane.xlu0 %4718
      %v4720 = vsel %vm3047, %v4712, 0.0
      %4721 = vadd.xlane.f32.xlu0 %v4720
      %v4722 = vpop.xlane.xlu0 %4721
      %v4723 = vsel %vm3047, %v4714, 0.0
      %4724 = vadd.xlane.f32.xlu0 %v4723
      %v4725 = vpop.xlane.xlu0 %4724
      %v4726 = vsel %vm3047, %v4716, 0.0
      %4727 = vadd.xlane.f32.xlu0 %v4726
      %v4728 = vpop.xlane.xlu0 %4727
      %v4729 = vrcp.pop %v4719
      %v4730 = vrcp.pop %v4722
      %v4731 = vrcp.pop %v4725
      %v4732 = vrcp.pop %v4728
      %v4733 = vmul.f32 %v4710, %v4729
      %v4734 = vmul.f32 %v4712, %v4730
      %v4735 = vmul.f32 %v4714, %v4731
      %v4736 = vmul.f32 %v4716, %v4732
      %v4737 = vpack.c.bf16 %v4734, %v4733
      %v4738 = vpack.c.bf16 %v4736, %v4735
      %v4740 = vsel %vm3047, %v4737, 0
      %v4743 = vsel %vm3047, %v4738, 0
      %4745 = vmatprep.subr.bf16.mxu0 0
      %4746 = vmatpush1.bf16.msra.mxu0 %v4630
      %4747 = vmatprep.subr.bf16.mxu0 0
      %4748 = vmatpush1.bf16.msra.mxu0 %v4631
      %4749 = vmatprep.subr.bf16.mxu0 0
      %4750 = vmatpush1.bf16.msra.mxu0 0
      %4751 = vmatprep.subr.bf16.mxu0 0
      %4752 = vmatpush1.bf16.msra.mxu0 0
      %4753 = vmatprep.subr.bf16.mxu0 0
      %4754 = vmatpush1.bf16.msra.mxu0 0
      %4755 = vmatprep.subr.bf16.mxu0 0
      %4756 = vmatpush1.bf16.msra.mxu0 0
      %4757 = vmatprep.subr.bf16.mxu0 0
      %4758 = vmatpush1.bf16.msra.mxu0 0
      %4759 = vmatprep.subr.bf16.mxu0 0
      %4760 = vmatpush1.bf16.msra.mxu0 0
      %4761 = vmatprep.subr.bf16.mxu0 0
      %4762 = vmatpush1.bf16.msra.mxu0 0
      %4763 = vmatprep.subr.bf16.mxu0 0
      %4764 = vmatpush1.bf16.msra.mxu0 0
      %4765 = vmatprep.subr.bf16.mxu0 0
      %4766 = vmatpush1.bf16.msra.mxu0 0
      %4767 = vmatprep.subr.bf16.mxu0 0
      %4768 = vmatpush1.bf16.msra.mxu0 0
      %4769 = vmatprep.subr.bf16.mxu0 0
      %4770 = vmatpush1.bf16.msra.mxu0 0
      %4771 = vmatprep.subr.bf16.mxu0 0
      %4772 = vmatpush1.bf16.msra.mxu0 0
      %4773 = vmatprep.subr.bf16.mxu0 0
      %4774 = vmatpush1.bf16.msra.mxu0 0
      %4775 = vmatprep.subr.bf16.mxu0 0
      %4776 = vmatpush1.bf16.msra.mxu0 0
      %4777 = vmatprep.mubr.bf16.mxu0 0
      %4778 = vmatmul.mubr.bf16.gmra.mrb[0].mxu0 %v4740
      %v4779 = vpop.f32.mrb[0].mxu0
      %v4780 = vadd.f32 0.0, %v4779
      %v4781 = vpop.f32.mrb[0].mxu0
      %v4782 = vpop.f32.mrb[0].mxu0
      %v4783 = vadd.f32 0.0, %v4782
      %v4784 = vpop.f32.mrb[0].mxu0
      %4785 = vmatprep.mubr.bf16.mxu0 0
      %4786 = vmatmul.mubr.bf16.gmra.mrb[0].mxu0 %v4743
      %v4787 = vpop.f32.mrb[0].mxu0
      %v4788 = vadd.f32 0.0, %v4787
      %v4789 = vpop.f32.mrb[0].mxu0
      %v4790 = vpop.f32.mrb[0].mxu0
      %v4791 = vadd.f32 0.0, %v4790
      %v4792 = vpop.f32.mrb[0].mxu0
      %4793 = vdwg.mxu0
      %v4794 = vpack.c.bf16 %v4783, %v4780
      %v4795 = vpack.c.bf16 %v4791, %v4788
      %s4796 = scalar_lea.vmem %s45, 16
      %v4797 = vld [vmem:[%s4796] sm:$0xf]
      %v4798 = vld [vmem:[%s4796 + $0x4] sm:$0xf]
      %s4799 = scalar_lea.vmem %s39, 96
      %v4800 = vld [vmem:[%s4799] sm:$0xf]
      %v4801 = vld [vmem:[%s4799 + $0x4] sm:$0xf]
      %v4802 = vld [vmem:[%s4799 + $0x8] sm:$0xf]
      %v4803 = vld [vmem:[%s4799 + $0xc] sm:$0xf]
      %v4804 = vld [vmem:[%s4799 + $0x10] sm:$0xf]
      %v4805 = vld [vmem:[%s4799 + $0x14] sm:$0xf]
      %v4806 = vld [vmem:[%s4799 + $0x18] sm:$0xf]
      %v4807 = vld [vmem:[%s4799 + $0x1c] sm:$0xf]
      %v4816 = vunpack.c.l.b16 %v4800
      %v4817 = vunpack.c.l.b16 %v4801
      %v4818 = vunpack.c.l.b16 %v4802
      %v4819 = vunpack.c.l.b16 %v4803
      %v4820 = vunpack.c.l.b16 %v4804
      %v4821 = vunpack.c.l.b16 %v4805
      %v4822 = vunpack.c.l.b16 %v4806
      %v4823 = vunpack.c.l.b16 %v4807
      %v4824 = vpack.c.b16 %v4817, %v4816
      %v4825 = vpack.c.b16 %v4819, %v4818
      %v4826 = vpack.c.b16 %v4821, %v4820
      %v4827 = vpack.c.b16 %v4823, %v4822
      %4832 = vmatprep.subr.bf16.mxu0 0
      %4833 = vmatpush1.bf16.msra.mxu0 %v4824
      %4834 = vmatprep.subr.bf16.mxu0 0
      %4835 = vmatpush1.bf16.msra.mxu0 %v4825
      %4836 = vmatprep.subr.bf16.mxu0 0
      %4837 = vmatpush1.bf16.msra.mxu0 %v4826
      %4838 = vmatprep.subr.bf16.mxu0 0
      %4839 = vmatpush1.bf16.msra.mxu0 %v4827
      %4840 = vmatprep.subr.bf16.mxu0 0
      %4841 = vmatpush1.bf16.msra.mxu0 0
      %4842 = vmatprep.subr.bf16.mxu0 0
      %4843 = vmatpush1.bf16.msra.mxu0 0
      %4844 = vmatprep.subr.bf16.mxu0 0
      %4845 = vmatpush1.bf16.msra.mxu0 0
      %4846 = vmatprep.subr.bf16.mxu0 0
      %4847 = vmatpush1.bf16.msra.mxu0 0
      %4848 = vmatprep.subr.bf16.mxu0 0
      %4849 = vmatpush1.bf16.msra.mxu0 0
      %4850 = vmatprep.subr.bf16.mxu0 0
      %4851 = vmatpush1.bf16.msra.mxu0 0
      %4852 = vmatprep.subr.bf16.mxu0 0
      %4853 = vmatpush1.bf16.msra.mxu0 0
      %4854 = vmatprep.subr.bf16.mxu0 0
      %4855 = vmatpush1.bf16.msra.mxu0 0
      %4856 = vmatprep.subr.bf16.mxu0 0
      %4857 = vmatpush1.bf16.msra.mxu0 0
      %4858 = vmatprep.subr.bf16.mxu0 0
      %4859 = vmatpush1.bf16.msra.mxu0 0
      %4860 = vmatprep.subr.bf16.mxu0 0
      %4861 = vmatpush1.bf16.msra.mxu0 0
      %4862 = vmatprep.subr.bf16.mxu0 0
      %4863 = vmatpush1.bf16.msra.mxu0 0
      %4864 = vmatprep.mubr.bf16.mxu0 0
      %4865 = vmatmul.mubr.bf16.gmra.mrb[0].mxu0 %v4404
      %v4866 = vpop.f32.mrb[0].mxu0
      %v4867 = vadd.f32 0.0, %v4866
      %v4868 = vpop.f32.mrb[0].mxu0
      %v4869 = vpop.f32.mrb[0].mxu0
      %v4870 = vadd.f32 0.0, %v4869
      %v4871 = vpop.f32.mrb[0].mxu0
      %4872 = vmatprep.mubr.bf16.mxu0 0
      %4873 = vmatmul.mubr.bf16.gmra.mrb[0].mxu0 %v4407
      %v4874 = vpop.f32.mrb[0].mxu0
      %v4875 = vadd.f32 0.0, %v4874
      %v4876 = vpop.f32.mrb[0].mxu0
      %v4877 = vpop.f32.mrb[0].mxu0
      %v4878 = vadd.f32 0.0, %v4877
      %v4879 = vpop.f32.mrb[0].mxu0
      %4880 = vdwg.mxu0
      %v4881 = vmul.f32 %v4867, 0.25
      %v4882 = vmul.f32 %v4870, 0.25
      %v4883 = vmul.f32 %v4875, 0.25
      %v4884 = vmul.f32 %v4878, 0.25
      %v4885 = vpack.c.bf16 %v4882, %v4881
      %v4886 = vpack.c.bf16 %v4884, %v4883
      %s4887 = scalar_lea.vmem %s41, 96
      %v4888 = vld [vmem:[%s4887] sm:$0xf]
      %v4889 = vld [vmem:[%s4887 + $0x4] sm:$0xf]
      %v4890 = vld [vmem:[%s4887 + $0x8] sm:$0xf]
      %v4891 = vld [vmem:[%s4887 + $0xc] sm:$0xf]
      %v4892 = vld [vmem:[%s4887 + $0x10] sm:$0xf]
      %v4893 = vld [vmem:[%s4887 + $0x14] sm:$0xf]
      %v4894 = vld [vmem:[%s4887 + $0x18] sm:$0xf]
      %v4895 = vld [vmem:[%s4887 + $0x1c] sm:$0xf]
      %v4904 = vunpack.c.l.b16 %v4888
      %v4905 = vunpack.c.l.b16 %v4889
      %v4906 = vunpack.c.l.b16 %v4890
      %v4907 = vunpack.c.l.b16 %v4891
      %v4908 = vunpack.c.l.b16 %v4892
      %v4909 = vunpack.c.l.b16 %v4893
      %v4910 = vunpack.c.l.b16 %v4894
      %v4911 = vunpack.c.l.b16 %v4895
      %v4912 = vpack.c.b16 %v4905, %v4904
      %v4913 = vpack.c.b16 %v4907, %v4906
      %v4914 = vpack.c.b16 %v4909, %v4908
      %v4915 = vpack.c.b16 %v4911, %v4910
      %4920 = vmatprep.subr.bf16.mxu0 0
      %4921 = vmatpush1.bf16.msra.mxu0 %v4912
      %4922 = vmatprep.subr.bf16.mxu0 0
      %4923 = vmatpush1.bf16.msra.mxu0 %v4913
      %4924 = vmatprep.subr.bf16.mxu0 0
      %4925 = vmatpush1.bf16.msra.mxu0 %v4914
      %4926 = vmatprep.subr.bf16.mxu0 0
      %4927 = vmatpush1.bf16.msra.mxu0 %v4915
      %4928 = vmatprep.subr.bf16.mxu0 0
      %4929 = vmatpush1.bf16.msra.mxu0 0
      %4930 = vmatprep.subr.bf16.mxu0 0
      %4931 = vmatpush1.bf16.msra.mxu0 0
      %4932 = vmatprep.subr.bf16.mxu0 0
      %4933 = vmatpush1.bf16.msra.mxu0 0
      %4934 = vmatprep.subr.bf16.mxu0 0
      %4935 = vmatpush1.bf16.msra.mxu0 0
      %4936 = vmatprep.subr.bf16.mxu0 0
      %4937 = vmatpush1.bf16.msra.mxu0 0
      %4938 = vmatprep.subr.bf16.mxu0 0
      %4939 = vmatpush1.bf16.msra.mxu0 0
      %4940 = vmatprep.subr.bf16.mxu0 0
      %4941 = vmatpush1.bf16.msra.mxu0 0
      %4942 = vmatprep.subr.bf16.mxu0 0
      %4943 = vmatpush1.bf16.msra.mxu0 0
      %4944 = vmatprep.subr.bf16.mxu0 0
      %4945 = vmatpush1.bf16.msra.mxu0 0
      %4946 = vmatprep.subr.bf16.mxu0 0
      %4947 = vmatpush1.bf16.msra.mxu0 0
      %4948 = vmatprep.subr.bf16.mxu0 0
      %4949 = vmatpush1.bf16.msra.mxu0 0
      %4950 = vmatprep.subr.bf16.mxu0 0
      %4951 = vmatpush1.bf16.msra.mxu0 0
      %4952 = vmatprep.mubr.bf16.mxu0 0
      %4953 = vmatmul.mubr.bf16.gmra.mrb[0].mxu0 %v4404
      %v4954 = vpop.f32.mrb[0].mxu0
      %v4955 = vadd.f32 0.0, %v4954
      %v4956 = vpop.f32.mrb[0].mxu0
      %v4957 = vpop.f32.mrb[0].mxu0
      %v4958 = vadd.f32 0.0, %v4957
      %v4959 = vpop.f32.mrb[0].mxu0
      %4960 = vmatprep.mubr.bf16.mxu0 0
      %4961 = vmatmul.mubr.bf16.gmra.mrb[0].mxu0 %v4407
      %v4962 = vpop.f32.mrb[0].mxu0
      %v4963 = vadd.f32 0.0, %v4962
      %v4964 = vpop.f32.mrb[0].mxu0
      %v4965 = vpop.f32.mrb[0].mxu0
      %v4966 = vadd.f32 0.0, %v4965
      %v4967 = vpop.f32.mrb[0].mxu0
      %4968 = vdwg.mxu0
      %v4969 = vpack.c.bf16 %v4958, %v4955
      %v4970 = vpack.c.bf16 %v4966, %v4963
      %s4971 = scalar_lea.vmem %s43, 96
      %v4972 = vld [vmem:[%s4971] sm:$0xf]
      %v4973 = vld [vmem:[%s4971 + $0x4] sm:$0xf]
      %v4974 = vld [vmem:[%s4971 + $0x8] sm:$0xf]
      %v4975 = vld [vmem:[%s4971 + $0xc] sm:$0xf]
      %v4976 = vld [vmem:[%s4971 + $0x10] sm:$0xf]
      %v4977 = vld [vmem:[%s4971 + $0x14] sm:$0xf]
      %v4978 = vld [vmem:[%s4971 + $0x18] sm:$0xf]
      %v4979 = vld [vmem:[%s4971 + $0x1c] sm:$0xf]
      %v4988 = vunpack.c.l.b16 %v4972
      %v4989 = vunpack.c.l.b16 %v4973
      %v4990 = vunpack.c.l.b16 %v4974
      %v4991 = vunpack.c.l.b16 %v4975
      %v4992 = vunpack.c.l.b16 %v4976
      %v4993 = vunpack.c.l.b16 %v4977
      %v4994 = vunpack.c.l.b16 %v4978
      %v4995 = vunpack.c.l.b16 %v4979
      %v4996 = vpack.c.b16 %v4989, %v4988
      %v4997 = vpack.c.b16 %v4991, %v4990
      %v4998 = vpack.c.b16 %v4993, %v4992
      %v4999 = vpack.c.b16 %v4995, %v4994
      %5004 = vmatprep.subr.bf16.mxu0 0
      %5005 = vmatpush1.bf16.msra.mxu0 %v4996
      %5006 = vmatprep.subr.bf16.mxu0 0
      %5007 = vmatpush1.bf16.msra.mxu0 %v4997
      %5008 = vmatprep.subr.bf16.mxu0 0
      %5009 = vmatpush1.bf16.msra.mxu0 %v4998
      %5010 = vmatprep.subr.bf16.mxu0 0
      %5011 = vmatpush1.bf16.msra.mxu0 %v4999
      %5012 = vmatprep.subr.bf16.mxu0 0
      %5013 = vmatpush1.bf16.msra.mxu0 0
      %5014 = vmatprep.subr.bf16.mxu0 0
      %5015 = vmatpush1.bf16.msra.mxu0 0
      %5016 = vmatprep.subr.bf16.mxu0 0
      %5017 = vmatpush1.bf16.msra.mxu0 0
      %5018 = vmatprep.subr.bf16.mxu0 0
      %5019 = vmatpush1.bf16.msra.mxu0 0
      %5020 = vmatprep.subr.bf16.mxu0 0
      %5021 = vmatpush1.bf16.msra.mxu0 0
      %5022 = vmatprep.subr.bf16.mxu0 0
      %5023 = vmatpush1.bf16.msra.mxu0 0
      %5024 = vmatprep.subr.bf16.mxu0 0
      %5025 = vmatpush1.bf16.msra.mxu0 0
      %5026 = vmatprep.subr.bf16.mxu0 0
      %5027 = vmatpush1.bf16.msra.mxu0 0
      %5028 = vmatprep.subr.bf16.mxu0 0
      %5029 = vmatpush1.bf16.msra.mxu0 0
      %5030 = vmatprep.subr.bf16.mxu0 0
      %5031 = vmatpush1.bf16.msra.mxu0 0
      %5032 = vmatprep.subr.bf16.mxu0 0
      %5033 = vmatpush1.bf16.msra.mxu0 0
      %5034 = vmatprep.subr.bf16.mxu0 0
      %5035 = vmatpush1.bf16.msra.mxu0 0
      %5036 = vmatprep.mubr.bf16.mxu0 0
      %5037 = vmatmul.mubr.bf16.gmra.mrb[0].mxu0 %v4404
      %v5038 = vpop.f32.mrb[0].mxu0
      %v5039 = vadd.f32 0.0, %v5038
      %v5040 = vpop.f32.mrb[0].mxu0
      %v5041 = vpop.f32.mrb[0].mxu0
      %v5042 = vadd.f32 0.0, %v5041
      %v5043 = vpop.f32.mrb[0].mxu0
      %5044 = vmatprep.mubr.bf16.mxu0 0
      %5045 = vmatmul.mubr.bf16.gmra.mrb[0].mxu0 %v4407
      %v5046 = vpop.f32.mrb[0].mxu0
      %v5047 = vadd.f32 0.0, %v5046
      %v5048 = vpop.f32.mrb[0].mxu0
      %v5049 = vpop.f32.mrb[0].mxu0
      %v5050 = vadd.f32 0.0, %v5049
      %v5051 = vpop.f32.mrb[0].mxu0
      %5052 = vdwg.mxu0
      %v5053 = vpack.c.bf16 %v5042, %v5039
      %v5054 = vpack.c.bf16 %v5050, %v5047
      %v5056 = vsel %vm1482, %v4885, 0
      %v5059 = vsel %vm1482, %v4886, 0
      %v5062 = vsel %vm1482, %v4969, 0
      %v5065 = vsel %vm1482, %v4970, 0
      %5067 = vmatprep.subr.bf16.mxu0 0
      %5068 = vmatpush1.bf16.xpose.msra.mxu0 %v5062
      %5069 = vmatprep.subr.bf16.mxu0 0
      %5070 = vmatpush1.bf16.xpose.msra.mxu0 %v5065
      %5071 = vmatprep.subr.bf16.mxu0 0
      %5072 = vmatpush1.bf16.xpose.msra.mxu0 0
      %5073 = vmatprep.subr.bf16.mxu0 0
      %5074 = vmatpush1.bf16.xpose.msra.mxu0 0
      %5075 = vmatprep.subr.bf16.mxu0 0
      %5076 = vmatpush1.bf16.xpose.msra.mxu0 0
      %5077 = vmatprep.subr.bf16.mxu0 0
      %5078 = vmatpush1.bf16.xpose.msra.mxu0 0
      %5079 = vmatprep.subr.bf16.mxu0 0
      %5080 = vmatpush1.bf16.xpose.msra.mxu0 0
      %5081 = vmatprep.subr.bf16.mxu0 0
      %5082 = vmatpush1.bf16.xpose.msra.mxu0 0
      %5083 = vmatprep.subr.bf16.mxu0 0
      %5084 = vmatpush1.bf16.xpose.msra.mxu0 0
      %5085 = vmatprep.subr.bf16.mxu0 0
      %5086 = vmatpush1.bf16.xpose.msra.mxu0 0
      %5087 = vmatprep.subr.bf16.mxu0 0
      %5088 = vmatpush1.bf16.xpose.msra.mxu0 0
      %5089 = vmatprep.subr.bf16.mxu0 0
      %5090 = vmatpush1.bf16.xpose.msra.mxu0 0
      %5091 = vmatprep.subr.bf16.mxu0 0
      %5092 = vmatpush1.bf16.xpose.msra.mxu0 0
      %5093 = vmatprep.subr.bf16.mxu0 0
      %5094 = vmatpush1.bf16.xpose.msra.mxu0 0
      %5095 = vmatprep.subr.bf16.mxu0 0
      %5096 = vmatpush1.bf16.xpose.msra.mxu0 0
      %5097 = vmatprep.subr.bf16.mxu0 0
      %5098 = vmatpush1.bf16.xpose.msra.mxu0 0
      %5099 = vmatprep.mubr.bf16.mxu0 0
      %5100 = vmatmul.mubr.bf16.gmra.mrb[0].mxu0 %v5056
      %v5101 = vpop.f32.mrb[0].mxu0
      %v5102 = vadd.f32 0.0, %v5101
      %v5103 = vpop.f32.mrb[0].mxu0
      %v5104 = vpop.f32.mrb[0].mxu0
      %v5105 = vadd.f32 0.0, %v5104
      %v5106 = vpop.f32.mrb[0].mxu0
      %5107 = vmatprep.mubr.bf16.mxu0 0
      %5108 = vmatmul.mubr.bf16.gmra.mrb[0].mxu0 %v5059
      %v5109 = vpop.f32.mrb[0].mxu0
      %v5110 = vadd.f32 0.0, %v5109
      %v5111 = vpop.f32.mrb[0].mxu0
      %v5112 = vpop.f32.mrb[0].mxu0
      %v5113 = vadd.f32 0.0, %v5112
      %v5114 = vpop.f32.mrb[0].mxu0
      %5115 = vdwg.mxu0
      %v5116 = vsel %vm3047, %v5102, -inf
      %5117 = vmax.xlane.f32.xlu0 %v5116
      %v5118 = vpop.xlane.xlu0 %5117
      %v5119 = vsel %vm3047, %v5105, -inf
      %5120 = vmax.xlane.f32.xlu0 %v5119
      %v5121 = vpop.xlane.xlu0 %5120
      %v5122 = vsel %vm3047, %v5110, -inf
      %5123 = vmax.xlane.f32.xlu0 %v5122
      %v5124 = vpop.xlane.xlu0 %5123
      %v5125 = vsel %vm3047, %v5113, -inf
      %5126 = vmax.xlane.f32.xlu0 %v5125
      %v5127 = vpop.xlane.xlu0 %5126
      %v5128 = vsub.f32 %v5102, %v5118
      %v5129 = vsub.f32 %v5105, %v5121
      %v5130 = vsub.f32 %v5110, %v5124
      %v5131 = vsub.f32 %v5113, %v5127
      %v5132 = vmul.f32 %v5128, 1.442695
      %v5133 = vpow.pop %v5132
      %v5134 = vmul.f32 %v5129, 1.442695
      %v5135 = vpow.pop %v5134
      %v5136 = vmul.f32 %v5130, 1.442695
      %v5137 = vpow.pop %v5136
      %v5138 = vmul.f32 %v5131, 1.442695
      %v5139 = vpow.pop %v5138
      %v5140 = vsel %vm3047, %v5133, 0.0
      %5141 = vadd.xlane.f32.xlu0 %v5140
      %v5142 = vpop.xlane.xlu0 %5141
      %v5143 = vsel %vm3047, %v5135, 0.0
      %5144 = vadd.xlane.f32.xlu0 %v5143
      %v5145 = vpop.xlane.xlu0 %5144
      %v5146 = vsel %vm3047, %v5137, 0.0
      %5147 = vadd.xlane.f32.xlu0 %v5146
      %v5148 = vpop.xlane.xlu0 %5147
      %v5149 = vsel %vm3047, %v5139, 0.0
      %5150 = vadd.xlane.f32.xlu0 %v5149
      %v5151 = vpop.xlane.xlu0 %5150
      %v5152 = vrcp.pop %v5142
      %v5153 = vrcp.pop %v5145
      %v5154 = vrcp.pop %v5148
      %v5155 = vrcp.pop %v5151
      %v5156 = vmul.f32 %v5133, %v5152
      %v5157 = vmul.f32 %v5135, %v5153
      %v5158 = vmul.f32 %v5137, %v5154
      %v5159 = vmul.f32 %v5139, %v5155
      %v5160 = vpack.c.bf16 %v5157, %v5156
      %v5161 = vpack.c.bf16 %v5159, %v5158
      %v5163 = vsel %vm3047, %v5160, 0
      %v5166 = vsel %vm3047, %v5161, 0
      %5168 = vmatprep.subr.bf16.mxu0 0
      %5169 = vmatpush1.bf16.msra.mxu0 %v5053
      %5170 = vmatprep.subr.bf16.mxu0 0
      %5171 = vmatpush1.bf16.msra.mxu0 %v5054
      %5172 = vmatprep.subr.bf16.mxu0 0
      %5173 = vmatpush1.bf16.msra.mxu0 0
      %5174 = vmatprep.subr.bf16.mxu0 0
      %5175 = vmatpush1.bf16.msra.mxu0 0
      %5176 = vmatprep.subr.bf16.mxu0 0
      %5177 = vmatpush1.bf16.msra.mxu0 0
      %5178 = vmatprep.subr.bf16.mxu0 0
      %5179 = vmatpush1.bf16.msra.mxu0 0
      %5180 = vmatprep.subr.bf16.mxu0 0
      %5181 = vmatpush1.bf16.msra.mxu0 0
      %5182 = vmatprep.subr.bf16.mxu0 0
      %5183 = vmatpush1.bf16.msra.mxu0 0
      %5184 = vmatprep.subr.bf16.mxu0 0
      %5185 = vmatpush1.bf16.msra.mxu0 0
      %5186 = vmatprep.subr.bf16.mxu0 0
      %5187 = vmatpush1.bf16.msra.mxu0 0
      %5188 = vmatprep.subr.bf16.mxu0 0
      %5189 = vmatpush1.bf16.msra.mxu0 0
      %5190 = vmatprep.subr.bf16.mxu0 0
      %5191 = vmatpush1.bf16.msra.mxu0 0
      %5192 = vmatprep.subr.bf16.mxu0 0
      %5193 = vmatpush1.bf16.msra.mxu0 0
      %5194 = vmatprep.subr.bf16.mxu0 0
      %5195 = vmatpush1.bf16.msra.mxu0 0
      %5196 = vmatprep.subr.bf16.mxu0 0
      %5197 = vmatpush1.bf16.msra.mxu0 0
      %5198 = vmatprep.subr.bf16.mxu0 0
      %5199 = vmatpush1.bf16.msra.mxu0 0
      %5200 = vmatprep.mubr.bf16.mxu0 0
      %5201 = vmatmul.mubr.bf16.gmra.mrb[0].mxu0 %v5163
      %v5202 = vpop.f32.mrb[0].mxu0
      %v5203 = vadd.f32 0.0, %v5202
      %v5204 = vpop.f32.mrb[0].mxu0
      %v5205 = vpop.f32.mrb[0].mxu0
      %v5206 = vadd.f32 0.0, %v5205
      %v5207 = vpop.f32.mrb[0].mxu0
      %5208 = vmatprep.mubr.bf16.mxu0 0
      %5209 = vmatmul.mubr.bf16.gmra.mrb[0].mxu0 %v5166
      %v5210 = vpop.f32.mrb[0].mxu0
      %v5211 = vadd.f32 0.0, %v5210
      %v5212 = vpop.f32.mrb[0].mxu0
      %v5213 = vpop.f32.mrb[0].mxu0
      %v5214 = vadd.f32 0.0, %v5213
      %v5215 = vpop.f32.mrb[0].mxu0
      %5216 = vdwg.mxu0
      %v5217 = vpack.c.bf16 %v5206, %v5203
      %v5218 = vpack.c.bf16 %v5214, %v5211
      %s5219 = scalar_lea.vmem %s45, 24
      %v5220 = vld [vmem:[%s5219] sm:$0xf]
      %v5221 = vld [vmem:[%s5219 + $0x4] sm:$0xf]
      %v5224 = vunpack.c.l.b16 %v5220
      %v5225 = vunpack.c.l.b16 %v5221
      %v5226 = vpack.c.b16 %v5225, %v5224
      %v5229 = vsel %vm1482, %v5217, 0
      %v5232 = vsel %vm1482, %v5218, 0
      %5234 = vmatprep.subr.bf16.mxu0 0
      %5235 = vmatpush1.bf16.msra.mxu0 %v5226
      %5236 = vmatprep.subr.bf16.mxu0 0
      %5237 = vmatpush1.bf16.msra.mxu0 0
      %5238 = vmatprep.subr.bf16.mxu0 0
      %5239 = vmatpush1.bf16.msra.mxu0 0
      %5240 = vmatprep.subr.bf16.mxu0 0
      %5241 = vmatpush1.bf16.msra.mxu0 0
      %5242 = vmatprep.subr.bf16.mxu0 0
      %5243 = vmatpush1.bf16.msra.mxu0 0
      %5244 = vmatprep.subr.bf16.mxu0 0
      %5245 = vmatpush1.bf16.msra.mxu0 0
      %5246 = vmatprep.subr.bf16.mxu0 0
      %5247 = vmatpush1.bf16.msra.mxu0 0
      %5248 = vmatprep.subr.bf16.mxu0 0
      %5249 = vmatpush1.bf16.msra.mxu0 0
      %5250 = vmatprep.subr.bf16.mxu0 0
      %5251 = vmatpush1.bf16.msra.mxu0 0
      %5252 = vmatprep.subr.bf16.mxu0 0
      %5253 = vmatpush1.bf16.msra.mxu0 0
      %5254 = vmatprep.subr.bf16.mxu0 0
      %5255 = vmatpush1.bf16.msra.mxu0 0
      %5256 = vmatprep.subr.bf16.mxu0 0
      %5257 = vmatpush1.bf16.msra.mxu0 0
      %5258 = vmatprep.subr.bf16.mxu0 0
      %5259 = vmatpush1.bf16.msra.mxu0 0
      %5260 = vmatprep.subr.bf16.mxu0 0
      %5261 = vmatpush1.bf16.msra.mxu0 0
      %5262 = vmatprep.subr.bf16.mxu0 0
      %5263 = vmatpush1.bf16.msra.mxu0 0
      %5264 = vmatprep.subr.bf16.mxu0 0
      %5265 = vmatpush1.bf16.msra.mxu0 0
      %5266 = vmatprep.mubr.bf16.mxu0 0
      %5267 = vmatmul.mubr.bf16.gmra.mrb[0].mxu0 %v5229
      %v5268 = vpop.f32.mrb[0].mxu0
      %v5269 = vadd.f32 0.0, %v5268
      %v5270 = vpop.f32.mrb[0].mxu0
      %v5271 = vpop.f32.mrb[0].mxu0
      %v5272 = vadd.f32 0.0, %v5271
      %v5273 = vpop.f32.mrb[0].mxu0
      %5274 = vmatprep.mubr.bf16.mxu0 0
      %5275 = vmatmul.mubr.bf16.gmra.mrb[0].mxu0 %v5232
      %v5276 = vpop.f32.mrb[0].mxu0
      %v5277 = vadd.f32 0.0, %v5276
      %v5278 = vpop.f32.mrb[0].mxu0
      %v5279 = vpop.f32.mrb[0].mxu0
      %v5280 = vadd.f32 0.0, %v5279
      %v5281 = vpop.f32.mrb[0].mxu0
      %5282 = vdwg.mxu0
      %v5285 = vunpack.c.l.b16 %v4797
      %v5286 = vunpack.c.l.b16 %v4798
      %v5287 = vpack.c.b16 %v5286, %v5285
      %v5290 = vsel %vm1482, %v4794, 0
      %v5293 = vsel %vm1482, %v4795, 0
      %5295 = vmatprep.subr.bf16.mxu0 0
      %5296 = vmatpush1.bf16.msra.mxu0 %v5287
      %5297 = vmatprep.subr.bf16.mxu0 0
      %5298 = vmatpush1.bf16.msra.mxu0 0
      %5299 = vmatprep.subr.bf16.mxu0 0
      %5300 = vmatpush1.bf16.msra.mxu0 0
      %5301 = vmatprep.subr.bf16.mxu0 0
      %5302 = vmatpush1.bf16.msra.mxu0 0
      %5303 = vmatprep.subr.bf16.mxu0 0
      %5304 = vmatpush1.bf16.msra.mxu0 0
      %5305 = vmatprep.subr.bf16.mxu0 0
      %5306 = vmatpush1.bf16.msra.mxu0 0
      %5307 = vmatprep.subr.bf16.mxu0 0
      %5308 = vmatpush1.bf16.msra.mxu0 0
      %5309 = vmatprep.subr.bf16.mxu0 0
      %5310 = vmatpush1.bf16.msra.mxu0 0
      %5311 = vmatprep.subr.bf16.mxu0 0
      %5312 = vmatpush1.bf16.msra.mxu0 0
      %5313 = vmatprep.subr.bf16.mxu0 0
      %5314 = vmatpush1.bf16.msra.mxu0 0
      %5315 = vmatprep.subr.bf16.mxu0 0
      %5316 = vmatpush1.bf16.msra.mxu0 0
      %5317 = vmatprep.subr.bf16.mxu0 0
      %5318 = vmatpush1.bf16.msra.mxu0 0
      %5319 = vmatprep.subr.bf16.mxu0 0
      %5320 = vmatpush1.bf16.msra.mxu0 0
      %5321 = vmatprep.subr.bf16.mxu0 0
      %5322 = vmatpush1.bf16.msra.mxu0 0
      %5323 = vmatprep.subr.bf16.mxu0 0
      %5324 = vmatpush1.bf16.msra.mxu0 0
      %5325 = vmatprep.subr.bf16.mxu0 0
      %5326 = vmatpush1.bf16.msra.mxu0 0
      %5327 = vmatprep.mubr.bf16.mxu0 0
      %5328 = vmatmul.mubr.bf16.gmra.mrb[0].mxu0 %v5290
      %v5329 = vpop.f32.mrb[0].mxu0
      %v5330 = vadd.f32 %v5269, %v5329
      %v5331 = vpop.f32.mrb[0].mxu0
      %v5332 = vpop.f32.mrb[0].mxu0
      %v5333 = vadd.f32 %v5272, %v5332
      %v5334 = vpop.f32.mrb[0].mxu0
      %5335 = vmatprep.mubr.bf16.mxu0 0
      %5336 = vmatmul.mubr.bf16.gmra.mrb[0].mxu0 %v5293
      %v5337 = vpop.f32.mrb[0].mxu0
      %v5338 = vadd.f32 %v5277, %v5337
      %v5339 = vpop.f32.mrb[0].mxu0
      %v5340 = vpop.f32.mrb[0].mxu0
      %v5341 = vadd.f32 %v5280, %v5340
      %v5342 = vpop.f32.mrb[0].mxu0
      %5343 = vdwg.mxu0
      %v5345 = vlaneseq
      %v5346 = vshrl.u32 %v5345, 7
      %v5347 = vsub.s32 0, %v5346
      %v5348 = vrot.slane %v4367, %v5347
      %v5350 = vadd.f32 %v5330, %v5348
      %v5351 = vadd.f32 %v5333, %v5348
      %v5352 = vadd.f32 %v5338, %v5348
      %v5353 = vadd.f32 %v5341, %v5348
      %v5354 = vadd.f32 %v5350, %v4286
      %v5355 = vadd.f32 %v5351, %v4287
      %v5356 = vadd.f32 %v5352, %v4288
      %v5357 = vadd.f32 %v5353, %v4289
      %s5358 = scalar_lea.vmem %s49, 1
      %v5359 = vld [vmem:[%s5358] sm:$0x1]
      %s5360 = scalar_lea.vmem %s51, 1
      %v5361 = vld [vmem:[%s5360] sm:$0x1]
      %s5362 = scalar_lea.vmem %s53, 128
      %v5363 = vld [vmem:[%s5362] sm:$0xff]
      %v5364 = vld [vmem:[%s5362 + $0x8] sm:$0xff]
      %v5365 = vld [vmem:[%s5362 + $0x10] sm:$0xff]
      %v5366 = vld [vmem:[%s5362 + $0x18] sm:$0xff]
      %v5367 = vld [vmem:[%s5362 + $0x20] sm:$0xff]
      %v5368 = vld [vmem:[%s5362 + $0x28] sm:$0xff]
      %v5369 = vld [vmem:[%s5362 + $0x30] sm:$0xff]
      %v5370 = vld [vmem:[%s5362 + $0x38] sm:$0xff]
      %v5371 = vld [vmem:[%s5362 + $0x40] sm:$0xff]
      %v5372 = vld [vmem:[%s5362 + $0x48] sm:$0xff]
      %v5373 = vld [vmem:[%s5362 + $0x50] sm:$0xff]
      %v5374 = vld [vmem:[%s5362 + $0x58] sm:$0xff]
      %v5375 = vld [vmem:[%s5362 + $0x60] sm:$0xff]
      %v5376 = vld [vmem:[%s5362 + $0x68] sm:$0xff]
      %v5377 = vld [vmem:[%s5362 + $0x70] sm:$0xff]
      %v5378 = vld [vmem:[%s5362 + $0x78] sm:$0xff]
      %s5379 = scalar_lea.vmem %s55, 4
      %v5380 = vld [vmem:[%s5379] sm:$0xf]
      %s5381 = scalar_lea.vmem %s57, 128
      %v5382 = vld [vmem:[%s5381] sm:$0xf]
      %v5383 = vld [vmem:[%s5381 + $0x4] sm:$0xf]
      %v5384 = vld [vmem:[%s5381 + $0x8] sm:$0xf]
      %v5385 = vld [vmem:[%s5381 + $0xc] sm:$0xf]
      %v5386 = vld [vmem:[%s5381 + $0x10] sm:$0xf]
      %v5387 = vld [vmem:[%s5381 + $0x14] sm:$0xf]
      %v5388 = vld [vmem:[%s5381 + $0x18] sm:$0xf]
      %v5389 = vld [vmem:[%s5381 + $0x1c] sm:$0xf]
      %v5390 = vld [vmem:[%s5381 + $0x20] sm:$0xf]
      %v5391 = vld [vmem:[%s5381 + $0x24] sm:$0xf]
      %v5392 = vld [vmem:[%s5381 + $0x28] sm:$0xf]
      %v5393 = vld [vmem:[%s5381 + $0x2c] sm:$0xf]
      %v5394 = vld [vmem:[%s5381 + $0x30] sm:$0xf]
      %v5395 = vld [vmem:[%s5381 + $0x34] sm:$0xf]
      %v5396 = vld [vmem:[%s5381 + $0x38] sm:$0xf]
      %v5397 = vld [vmem:[%s5381 + $0x3c] sm:$0xf]
      %v5398 = vld [vmem:[%s5381 + $0x40] sm:$0xf]
      %v5399 = vld [vmem:[%s5381 + $0x44] sm:$0xf]
      %v5400 = vld [vmem:[%s5381 + $0x48] sm:$0xf]
      %v5401 = vld [vmem:[%s5381 + $0x4c] sm:$0xf]
      %v5402 = vld [vmem:[%s5381 + $0x50] sm:$0xf]
      %v5403 = vld [vmem:[%s5381 + $0x54] sm:$0xf]
      %v5404 = vld [vmem:[%s5381 + $0x58] sm:$0xf]
      %v5405 = vld [vmem:[%s5381 + $0x5c] sm:$0xf]
      %v5406 = vld [vmem:[%s5381 + $0x60] sm:$0xf]
      %v5407 = vld [vmem:[%s5381 + $0x64] sm:$0xf]
      %v5408 = vld [vmem:[%s5381 + $0x68] sm:$0xf]
      %v5409 = vld [vmem:[%s5381 + $0x6c] sm:$0xf]
      %v5410 = vld [vmem:[%s5381 + $0x70] sm:$0xf]
      %v5411 = vld [vmem:[%s5381 + $0x74] sm:$0xf]
      %v5412 = vld [vmem:[%s5381 + $0x78] sm:$0xf]
      %v5413 = vld [vmem:[%s5381 + $0x7c] sm:$0xf]
      %s5414 = scalar_lea.vmem %s59, 1
      %v5415 = vld [vmem:[%s5414] sm:$0x1]
      %v5416 = vsel %vm1244, %v5354, 0.0
      %5417 = vadd.xlane.f32.xlu0 %v5416
      %v5418 = vpop.xlane.xlu0 %5417
      %v5419 = vsel %vm1244, %v5355, 0.0
      %5420 = vadd.xlane.f32.xlu0 %v5419
      %v5421 = vpop.xlane.xlu0 %5420
      %v5422 = vsel %vm1244, %v5356, 0.0
      %5423 = vadd.xlane.f32.xlu0 %v5422
      %v5424 = vpop.xlane.xlu0 %5423
      %v5425 = vsel %vm1244, %v5357, 0.0
      %5426 = vadd.xlane.f32.xlu0 %v5425
      %v5427 = vpop.xlane.xlu0 %5426
      %v5428 = vmul.f32 %v5418, %v1257
      %v5429 = vmul.f32 %v5421, %v1257
      %v5430 = vmul.f32 %v5424, %v1257
      %v5431 = vmul.f32 %v5427, %v1257
      %v5432 = vsub.f32 %v5354, %v5428
      %v5433 = vsub.f32 %v5355, %v5429
      %v5434 = vsub.f32 %v5356, %v5430
      %v5435 = vsub.f32 %v5357, %v5431
      %v5436 = vmul.f32 %v5432, %v5432
      %v5437 = vmul.f32 %v5433, %v5433
      %v5438 = vmul.f32 %v5434, %v5434
      %v5439 = vmul.f32 %v5435, %v5435
      %v5440 = vsel %vm1244, %v5436, 0.0
      %5441 = vadd.xlane.f32.xlu0 %v5440
      %v5442 = vpop.xlane.xlu0 %5441
      %v5443 = vsel %vm1244, %v5437, 0.0
      %5444 = vadd.xlane.f32.xlu0 %v5443
      %v5445 = vpop.xlane.xlu0 %5444
      %v5446 = vsel %vm1244, %v5438, 0.0
      %5447 = vadd.xlane.f32.xlu0 %v5446
      %v5448 = vpop.xlane.xlu0 %5447
      %v5449 = vsel %vm1244, %v5439, 0.0
      %5450 = vadd.xlane.f32.xlu0 %v5449
      %v5451 = vpop.xlane.xlu0 %5450
      %v5452 = vmul.f32 %v5442, %v1257
      %v5453 = vmul.f32 %v5445, %v1257
      %v5454 = vmul.f32 %v5448, %v1257
      %v5455 = vmul.f32 %v5451, %v1257
      %v5456 = vadd.f32 %v5452, 1e-05
      %v5457 = vadd.f32 %v5453, 1e-05
      %v5458 = vadd.f32 %v5454, 1e-05
      %v5459 = vadd.f32 %v5455, 1e-05
      %v5460 = vrsqrt.pop %v5456
      %v5461 = vrsqrt.pop %v5457
      %v5462 = vrsqrt.pop %v5458
      %v5463 = vrsqrt.pop %v5459
      %v5464 = vmul.f32 %v5432, %v5460
      %v5465 = vmul.f32 %v5433, %v5461
      %v5466 = vmul.f32 %v5434, %v5462
      %v5467 = vmul.f32 %v5435, %v5463
      %v5469 = vlaneseq
      %v5470 = vshrl.u32 %v5469, 7
      %v5471 = vsub.s32 0, %v5470
      %v5472 = vrot.slane %v5359, %v5471
      %v5474 = vmul.f32 %v5464, %v5472
      %v5475 = vmul.f32 %v5465, %v5472
      %v5476 = vmul.f32 %v5466, %v5472
      %v5477 = vmul.f32 %v5467, %v5472
      %v5479 = vlaneseq
      %v5480 = vshrl.u32 %v5479, 7
      %v5481 = vsub.s32 0, %v5480
      %v5482 = vrot.slane %v5361, %v5481
      %v5484 = vadd.f32 %v5474, %v5482
      %v5485 = vadd.f32 %v5475, %v5482
      %v5486 = vadd.f32 %v5476, %v5482
      %v5487 = vadd.f32 %v5477, %v5482
      %v5488 = vpack.c.bf16 %v5485, %v5484
      %v5489 = vpack.c.bf16 %v5487, %v5486
      %v5491 = vlaneseq
      %v5492 = vshrl.u32 %v5491, 7
      %v5493 = vsub.s32 0, %v5492
      %v5494 = vrot.slane %v5380, %v5493
      %v5495 = vlaneseq
      %v5496 = vshrl.u32 %v5495, 7
      %v5497 = vsub.s32 1, %v5496
      %v5498 = vrot.slane %v5380, %v5497
      %v5499 = vlaneseq
      %v5500 = vshrl.u32 %v5499, 7
      %v5501 = vsub.s32 2, %v5500
      %v5502 = vrot.slane %v5380, %v5501
      %v5503 = vlaneseq
      %v5504 = vshrl.u32 %v5503, 7
      %v5505 = vsub.s32 3, %v5504
      %v5506 = vrot.slane %v5380, %v5505
      %v5527 = vunpack.c.l.b16 %v5363
      %v5528 = vunpack.c.h.b16 %v5363
      %v5529 = vunpack.c.l.b16 %v5364
      %v5530 = vunpack.c.h.b16 %v5364
      %v5531 = vunpack.c.l.b16 %v5365
      %v5532 = vunpack.c.h.b16 %v5365
      %v5533 = vunpack.c.l.b16 %v5366
      %v5534 = vunpack.c.h.b16 %v5366
      %v5535 = vunpack.c.l.b16 %v5367
      %v5536 = vunpack.c.h.b16 %v5367
      %v5537 = vunpack.c.l.b16 %v5368
      %v5538 = vunpack.c.h.b16 %v5368
      %v5539 = vunpack.c.l.b16 %v5369
      %v5540 = vunpack.c.h.b16 %v5369
      %v5541 = vunpack.c.l.b16 %v5370
      %v5542 = vunpack.c.h.b16 %v5370
      %v5543 = vunpack.c.l.b16 %v5371
      %v5544 = vunpack.c.h.b16 %v5371
      %v5545 = vunpack.c.l.b16 %v5372
      %v5546 = vunpack.c.h.b16 %v5372
      %v5547 = vunpack.c.l.b16 %v5373
      %v5548 = vunpack.c.h.b16 %v5373
      %v5549 = vunpack.c.l.b16 %v5374
      %v5550 = vunpack.c.h.b16 %v5374
      %v5551 = vunpack.c.l.b16 %v5375
      %v5552 = vunpack.c.h.b16 %v5375
      %v5553 = vunpack.c.l.b16 %v5376
      %v5554 = vunpack.c.h.b16 %v5376
      %v5555 = vunpack.c.l.b16 %v5377
      %v5556 = vunpack.c.h.b16 %v5377
      %v5557 = vunpack.c.l.b16 %v5378
      %v5558 = vunpack.c.h.b16 %v5378
      %v5559 = vpack.c.b16 %v5531, %v5527
      %v5560 = vpack.c.b16 %v5532, %v5528
      %v5561 = vpack.c.b16 %v5533, %v5529
      %v5562 = vpack.c.b16 %v5534, %v5530
      %v5563 = vpack.c.b16 %v5539, %v5535
      %v5564 = vpack.c.b16 %v5540, %v5536
      %v5565 = vpack.c.b16 %v5541, %v5537
      %v5566 = vpack.c.b16 %v5542, %v5538
      %v5567 = vpack.c.b16 %v5547, %v5543
      %v5568 = vpack.c.b16 %v5548, %v5544
      %v5569 = vpack.c.b16 %v5549, %v5545
      %v5570 = vpack.c.b16 %v5550, %v5546
      %v5571 = vpack.c.b16 %v5555, %v5551
      %v5572 = vpack.c.b16 %v5556, %v5552
      %v5573 = vpack.c.b16 %v5557, %v5553
      %v5574 = vpack.c.b16 %v5558, %v5554
      %v5592 = vsel %vm1244, %v5488, 0
      %v5595 = vsel %vm1244, %v5489, 0
      %5597 = vmatprep.subr.bf16.mxu0 %v5560
      %5598 = vmatpush1.bf16.msra.mxu0 %v5559
      %5599 = vmatprep.subr.bf16.mxu0 %v5564
      %5600 = vmatpush1.bf16.msra.mxu0 %v5563
      %5601 = vmatprep.subr.bf16.mxu0 %v5568
      %5602 = vmatpush1.bf16.msra.mxu0 %v5567
      %5603 = vmatprep.subr.bf16.mxu0 %v5572
      %5604 = vmatpush1.bf16.msra.mxu0 %v5571
      %5605 = vmatprep.subr.bf16.mxu0 0
      %5606 = vmatpush1.bf16.msra.mxu0 0
      %5607 = vmatprep.subr.bf16.mxu0 0
      %5608 = vmatpush1.bf16.msra.mxu0 0
      %5609 = vmatprep.subr.bf16.mxu0 0
      %5610 = vmatpush1.bf16.msra.mxu0 0
      %5611 = vmatprep.subr.bf16.mxu0 0
      %5612 = vmatpush1.bf16.msra.mxu0 0
      %5613 = vmatprep.subr.bf16.mxu0 0
      %5614 = vmatpush1.bf16.msra.mxu0 0
      %5615 = vmatprep.subr.bf16.mxu0 0
      %5616 = vmatpush1.bf16.msra.mxu0 0
      %5617 = vmatprep.subr.bf16.mxu0 0
      %5618 = vmatpush1.bf16.msra.mxu0 0
      %5619 = vmatprep.subr.bf16.mxu0 0
      %5620 = vmatpush1.bf16.msra.mxu0 0
      %5621 = vmatprep.subr.bf16.mxu0 0
      %5622 = vmatpush1.bf16.msra.mxu0 0
      %5623 = vmatprep.subr.bf16.mxu0 0
      %5624 = vmatpush1.bf16.msra.mxu0 0
      %5625 = vmatprep.subr.bf16.mxu0 0
      %5626 = vmatpush1.bf16.msra.mxu0 0
      %5627 = vmatprep.subr.bf16.mxu0 0
      %5628 = vmatpush1.bf16.msra.mxu0 0
      %5629 = vmatprep.mubr.bf16.mxu0 0
      %5630 = vmatmul.mubr.bf16.gmra.mrb[0].mxu0 %v5592
      %v5631 = vpop.f32.mrb[0].mxu0
      %v5632 = vadd.f32 %v5494, %v5631
      %v5633 = vpop.f32.mrb[0].mxu0
      %v5634 = vadd.f32 %v5498, %v5633
      %v5635 = vpop.f32.mrb[0].mxu0
      %v5636 = vadd.f32 %v5494, %v5635
      %v5637 = vpop.f32.mrb[0].mxu0
      %v5638 = vadd.f32 %v5498, %v5637
      %5639 = vmatprep.mubr.bf16.mxu0 0
      %5640 = vmatmul.mubr.bf16.gmra.mrb[0].mxu0 %v5595
      %v5641 = vpop.f32.mrb[0].mxu0
      %v5642 = vadd.f32 %v5494, %v5641
      %v5643 = vpop.f32.mrb[0].mxu0
      %v5644 = vadd.f32 %v5498, %v5643
      %v5645 = vpop.f32.mrb[0].mxu0
      %v5646 = vadd.f32 %v5494, %v5645
      %v5647 = vpop.f32.mrb[0].mxu0
      %v5648 = vadd.f32 %v5498, %v5647
      %5649 = vdwg.mxu0
      %5650 = vmatprep.subr.bf16.mxu0 %v5562
      %5651 = vmatpush1.bf16.msra.mxu0 %v5561
      %5652 = vmatprep.subr.bf16.mxu0 %v5566
      %5653 = vmatpush1.bf16.msra.mxu0 %v5565
      %5654 = vmatprep.subr.bf16.mxu0 %v5570
      %5655 = vmatpush1.bf16.msra.mxu0 %v5569
      %5656 = vmatprep.subr.bf16.mxu0 %v5574
      %5657 = vmatpush1.bf16.msra.mxu0 %v5573
      %5658 = vmatprep.subr.bf16.mxu0 0
      %5659 = vmatpush1.bf16.msra.mxu0 0
      %5660 = vmatprep.subr.bf16.mxu0 0
      %5661 = vmatpush1.bf16.msra.mxu0 0
      %5662 = vmatprep.subr.bf16.mxu0 0
      %5663 = vmatpush1.bf16.msra.mxu0 0
      %5664 = vmatprep.subr.bf16.mxu0 0
      %5665 = vmatpush1.bf16.msra.mxu0 0
      %5666 = vmatprep.subr.bf16.mxu0 0
      %5667 = vmatpush1.bf16.msra.mxu0 0
      %5668 = vmatprep.subr.bf16.mxu0 0
      %5669 = vmatpush1.bf16.msra.mxu0 0
      %5670 = vmatprep.subr.bf16.mxu0 0
      %5671 = vmatpush1.bf16.msra.mxu0 0
      %5672 = vmatprep.subr.bf16.mxu0 0
      %5673 = vmatpush1.bf16.msra.mxu0 0
      %5674 = vmatprep.subr.bf16.mxu0 0
      %5675 = vmatpush1.bf16.msra.mxu0 0
      %5676 = vmatprep.subr.bf16.mxu0 0
      %5677 = vmatpush1.bf16.msra.mxu0 0
      %5678 = vmatprep.subr.bf16.mxu0 0
      %5679 = vmatpush1.bf16.msra.mxu0 0
      %5680 = vmatprep.subr.bf16.mxu0 0
      %5681 = vmatpush1.bf16.msra.mxu0 0
      %5682 = vmatprep.mubr.bf16.mxu0 0
      %5683 = vmatmul.mubr.bf16.gmra.mrb[0].mxu0 %v5592
      %v5684 = vpop.f32.mrb[0].mxu0
      %v5685 = vadd.f32 %v5502, %v5684
      %v5686 = vpop.f32.mrb[0].mxu0
      %v5687 = vadd.f32 %v5506, %v5686
      %v5688 = vpop.f32.mrb[0].mxu0
      %v5689 = vadd.f32 %v5502, %v5688
      %v5690 = vpop.f32.mrb[0].mxu0
      %v5691 = vadd.f32 %v5506, %v5690
      %5692 = vmatprep.mubr.bf16.mxu0 0
      %5693 = vmatmul.mubr.bf16.gmra.mrb[0].mxu0 %v5595
      %v5694 = vpop.f32.mrb[0].mxu0
      %v5695 = vadd.f32 %v5502, %v5694
      %v5696 = vpop.f32.mrb[0].mxu0
      %v5697 = vadd.f32 %v5506, %v5696
      %v5698 = vpop.f32.mrb[0].mxu0
      %v5699 = vadd.f32 %v5502, %v5698
      %v5700 = vpop.f32.mrb[0].mxu0
      %v5701 = vadd.f32 %v5506, %v5700
      %5702 = vdwg.mxu0
      %v5703 = vmul.f32 %v5685, %v5685
      %v5704 = vmul.f32 %v5687, %v5687
      %v5705 = vmul.f32 %v5689, %v5689
      %v5706 = vmul.f32 %v5691, %v5691
      %v5707 = vmul.f32 %v5695, %v5695
      %v5708 = vmul.f32 %v5697, %v5697
      %v5709 = vmul.f32 %v5699, %v5699
      %v5710 = vmul.f32 %v5701, %v5701
      %v5711 = vmul.f32 %v5685, %v5703
      %v5712 = vmul.f32 %v5687, %v5704
      %v5713 = vmul.f32 %v5689, %v5705
      %v5714 = vmul.f32 %v5691, %v5706
      %v5715 = vmul.f32 %v5695, %v5707
      %v5716 = vmul.f32 %v5697, %v5708
      %v5717 = vmul.f32 %v5699, %v5709
      %v5718 = vmul.f32 %v5701, %v5710
      %v5719 = vmul.f32 %v5711, 0.044715
      %v5720 = vmul.f32 %v5712, 0.044715
      %v5721 = vmul.f32 %v5713, 0.044715
      %v5722 = vmul.f32 %v5714, 0.044715
      %v5723 = vmul.f32 %v5715, 0.044715
      %v5724 = vmul.f32 %v5716, 0.044715
      %v5725 = vmul.f32 %v5717, 0.044715
      %v5726 = vmul.f32 %v5718, 0.044715
      %v5727 = vadd.f32 %v5685, %v5719
      %v5728 = vadd.f32 %v5687, %v5720
      %v5729 = vadd.f32 %v5689, %v5721
      %v5730 = vadd.f32 %v5691, %v5722
      %v5731 = vadd.f32 %v5695, %v5723
      %v5732 = vadd.f32 %v5697, %v5724
      %v5733 = vadd.f32 %v5699, %v5725
      %v5734 = vadd.f32 %v5701, %v5726
      %v5735 = vmul.f32 %v5727, 0.7978846
      %v5736 = vmul.f32 %v5728, 0.7978846
      %v5737 = vmul.f32 %v5729, 0.7978846
      %v5738 = vmul.f32 %v5730, 0.7978846
      %v5739 = vmul.f32 %v5731, 0.7978846
      %v5740 = vmul.f32 %v5732, 0.7978846
      %v5741 = vmul.f32 %v5733, 0.7978846
      %v5742 = vmul.f32 %v5734, 0.7978846
      %v5743 = vtanh.pop %v5735
      %v5744 = vtanh.pop %v5736
      %v5745 = vtanh.pop %v5737
      %v5746 = vtanh.pop %v5738
      %v5747 = vtanh.pop %v5739
      %v5748 = vtanh.pop %v5740
      %v5749 = vtanh.pop %v5741
      %v5750 = vtanh.pop %v5742
      %v5751 = vadd.f32 %v5743, 1.0
      %v5752 = vadd.f32 %v5744, 1.0
      %v5753 = vadd.f32 %v5745, 1.0
      %v5754 = vadd.f32 %v5746, 1.0
      %v5755 = vadd.f32 %v5747, 1.0
      %v5756 = vadd.f32 %v5748, 1.0
      %v5757 = vadd.f32 %v5749, 1.0
      %v5758 = vadd.f32 %v5750, 1.0
      %v5759 = vmul.f32 %v5751, 0.5
      %v5760 = vmul.f32 %v5752, 0.5
      %v5761 = vmul.f32 %v5753, 0.5
      %v5762 = vmul.f32 %v5754, 0.5
      %v5763 = vmul.f32 %v5755, 0.5
      %v5764 = vmul.f32 %v5756, 0.5
      %v5765 = vmul.f32 %v5757, 0.5
      %v5766 = vmul.f32 %v5758, 0.5
      %v5767 = vmul.f32 %v5685, %v5759
      %v5768 = vmul.f32 %v5687, %v5760
      %v5769 = vmul.f32 %v5689, %v5761
      %v5770 = vmul.f32 %v5691, %v5762
      %v5771 = vmul.f32 %v5695, %v5763
      %v5772 = vmul.f32 %v5697, %v5764
      %v5773 = vmul.f32 %v5699, %v5765
      %v5774 = vmul.f32 %v5701, %v5766
      %v5775 = vmul.f32 %v5632, %v5767
      %v5776 = vmul.f32 %v5634, %v5768
      %v5777 = vmul.f32 %v5636, %v5769
      %v5778 = vmul.f32 %v5638, %v5770
      %v5779 = vmul.f32 %v5642, %v5771
      %v5780 = vmul.f32 %v5644, %v5772
      %v5781 = vmul.f32 %v5646, %v5773
      %v5782 = vmul.f32 %v5648, %v5774
      %v5783 = vpack.c.bf16 %v5777, %v5775
      %v5784 = vpack.c.bf16 %v5778, %v5776
      %v5785 = vpack.c.bf16 %v5781, %v5779
      %v5786 = vpack.c.bf16 %v5782, %v5780
      %v5788 = vlaneseq
      %v5789 = vshrl.u32 %v5788, 7
      %v5790 = vsub.s32 0, %v5789
      %v5791 = vrot.slane %v5415, %v5790
      %v5825 = vunpack.c.l.b16 %v5382
      %v5826 = vunpack.c.l.b16 %v5383
      %v5827 = vunpack.c.l.b16 %v5384
      %v5828 = vunpack.c.l.b16 %v5385
      %v5829 = vunpack.c.l.b16 %v5386
      %v5830 = vunpack.c.l.b16 %v5387
      %v5831 = vunpack.c.l.b16 %v5388
      %v5832 = vunpack.c.l.b16 %v5389
      %v5833 = vunpack.c.l.b16 %v5390
      %v5834 = vunpack.c.l.b16 %v5391
      %v5835 = vunpack.c.l.b16 %v5392
      %v5836 = vunpack.c.l.b16 %v5393
      %v5837 = vunpack.c.l.b16 %v5394
      %v5838 = vunpack.c.l.b16 %v5395
      %v5839 = vunpack.c.l.b16 %v5396
      %v5840 = vunpack.c.l.b16 %v5397
      %v5841 = vunpack.c.l.b16 %v5398
      %v5842 = vunpack.c.l.b16 %v5399
      %v5843 = vunpack.c.l.b16 %v5400
      %v5844 = vunpack.c.l.b16 %v5401
      %v5845 = vunpack.c.l.b16 %v5402
      %v5846 = vunpack.c.l.b16 %v5403
      %v5847 = vunpack.c.l.b16 %v5404
      %v5848 = vunpack.c.l.b16 %v5405
      %v5849 = vunpack.c.l.b16 %v5406
      %v5850 = vunpack.c.l.b16 %v5407
      %v5851 = vunpack.c.l.b16 %v5408
      %v5852 = vunpack.c.l.b16 %v5409
      %v5853 = vunpack.c.l.b16 %v5410
      %v5854 = vunpack.c.l.b16 %v5411
      %v5855 = vunpack.c.l.b16 %v5412
      %v5856 = vunpack.c.l.b16 %v5413
      %v5857 = vpack.c.b16 %v5826, %v5825
      %v5858 = vpack.c.b16 %v5828, %v5827
      %v5859 = vpack.c.b16 %v5830, %v5829
      %v5860 = vpack.c.b16 %v5832, %v5831
      %v5861 = vpack.c.b16 %v5834, %v5833
      %v5862 = vpack.c.b16 %v5836, %v5835
      %v5863 = vpack.c.b16 %v5838, %v5837
      %v5864 = vpack.c.b16 %v5840, %v5839
      %v5865 = vpack.c.b16 %v5842, %v5841
      %v5866 = vpack.c.b16 %v5844, %v5843
      %v5867 = vpack.c.b16 %v5846, %v5845
      %v5868 = vpack.c.b16 %v5848, %v5847
      %v5869 = vpack.c.b16 %v5850, %v5849
      %v5870 = vpack.c.b16 %v5852, %v5851
      %v5871 = vpack.c.b16 %v5854, %v5853
      %v5872 = vpack.c.b16 %v5856, %v5855
      %5889 = vmatprep.subr.bf16.mxu0 0
      %5890 = vmatpush1.bf16.msra.mxu0 %v5857
      %5891 = vmatprep.subr.bf16.mxu0 0
      %5892 = vmatpush1.bf16.msra.mxu0 %v5858
      %5893 = vmatprep.subr.bf16.mxu0 0
      %5894 = vmatpush1.bf16.msra.mxu0 %v5859
      %5895 = vmatprep.subr.bf16.mxu0 0
      %5896 = vmatpush1.bf16.msra.mxu0 %v5860
      %5897 = vmatprep.subr.bf16.mxu0 0
      %5898 = vmatpush1.bf16.msra.mxu0 %v5861
      %5899 = vmatprep.subr.bf16.mxu0 0
      %5900 = vmatpush1.bf16.msra.mxu0 %v5862
      %5901 = vmatprep.subr.bf16.mxu0 0
      %5902 = vmatpush1.bf16.msra.mxu0 %v5863
      %5903 = vmatprep.subr.bf16.mxu0 0
      %5904 = vmatpush1.bf16.msra.mxu0 %v5864
      %5905 = vmatprep.subr.bf16.mxu0 0
      %5906 = vmatpush1.bf16.msra.mxu0 %v5865
      %5907 = vmatprep.subr.bf16.mxu0 0
      %5908 = vmatpush1.bf16.msra.mxu0 %v5866
      %5909 = vmatprep.subr.bf16.mxu0 0
      %5910 = vmatpush1.bf16.msra.mxu0 %v5867
      %5911 = vmatprep.subr.bf16.mxu0 0
      %5912 = vmatpush1.bf16.msra.mxu0 %v5868
      %5913 = vmatprep.subr.bf16.mxu0 0
      %5914 = vmatpush1.bf16.msra.mxu0 %v5869
      %5915 = vmatprep.subr.bf16.mxu0 0
      %5916 = vmatpush1.bf16.msra.mxu0 %v5870
      %5917 = vmatprep.subr.bf16.mxu0 0
      %5918 = vmatpush1.bf16.msra.mxu0 %v5871
      %5919 = vmatprep.subr.bf16.mxu0 0
      %5920 = vmatpush1.bf16.msra.mxu0 %v5872
      %5921 = vmatprep.mubr.bf16.mxu0 %v5784
      %5922 = vmatmul.mubr.bf16.gmra.mrb[0].mxu0 %v5783
      %v5923 = vpop.f32.mrb[0].mxu0
      %v5924 = vadd.f32 %v5791, %v5923
      %v5925 = vpop.f32.mrb[0].mxu0
      %v5926 = vpop.f32.mrb[0].mxu0
      %v5927 = vadd.f32 %v5791, %v5926
      %v5928 = vpop.f32.mrb[0].mxu0
      %5929 = vmatprep.mubr.bf16.mxu0 %v5786
      %5930 = vmatmul.mubr.bf16.gmra.mrb[0].mxu0 %v5785
      %v5931 = vpop.f32.mrb[0].mxu0
      %v5932 = vadd.f32 %v5791, %v5931
      %v5933 = vpop.f32.mrb[0].mxu0
      %v5934 = vpop.f32.mrb[0].mxu0
      %v5935 = vadd.f32 %v5791, %v5934
      %v5936 = vpop.f32.mrb[0].mxu0
      %5937 = vdwg.mxu0
      %v5938 = vadd.f32 %v5924, %v5354
      %v5939 = vadd.f32 %v5927, %v5355
      %v5940 = vadd.f32 %v5932, %v5356
      %v5941 = vadd.f32 %v5935, %v5357
      %v5942 = vld [vmem:[%s61] sm:$0x1]
      %v5943 = vld [vmem:[%s63] sm:$0x1]
      %v5945 = vlaneseq
      %v5946 = vshrl.u32 %v5945, 7
      %v5947 = vsub.s32 0, %v5946
      %v5948 = vrot.slane %v5942, %v5947
      %v5950 = vmul.f32 %v1334, %v5948
      %v5952 = vlaneseq
      %v5953 = vshrl.u32 %v5952, 7
      %v5954 = vsub.s32 0, %v5953
      %v5955 = vrot.slane %v5943, %v5954
      %v5957 = vadd.f32 %v5950, %v5955
      %v5958 = vld [vmem:[%s65] sm:$0x1]
      %v5959 = vld [vmem:[%s67] sm:$0x1]
      %v5960 = vsel %vm1244, %v5938, 0.0
      %5961 = vadd.xlane.f32.xlu0 %v5960
      %v5962 = vpop.xlane.xlu0 %5961
      %v5963 = vsel %vm1244, %v5939, 0.0
      %5964 = vadd.xlane.f32.xlu0 %v5963
      %v5965 = vpop.xlane.xlu0 %5964
      %v5966 = vsel %vm1244, %v5940, 0.0
      %5967 = vadd.xlane.f32.xlu0 %v5966
      %v5968 = vpop.xlane.xlu0 %5967
      %v5969 = vsel %vm1244, %v5941, 0.0
      %5970 = vadd.xlane.f32.xlu0 %v5969
      %v5971 = vpop.xlane.xlu0 %5970
      %v5972 = vmul.f32 %v5962, %v1257
      %v5973 = vmul.f32 %v5965, %v1257
      %v5974 = vmul.f32 %v5968, %v1257
      %v5975 = vmul.f32 %v5971, %v1257
      %v5976 = vsub.f32 %v5938, %v5972
      %v5977 = vsub.f32 %v5939, %v5973
      %v5978 = vsub.f32 %v5940, %v5974
      %v5979 = vsub.f32 %v5941, %v5975
      %v5980 = vmul.f32 %v5976, %v5976
      %v5981 = vmul.f32 %v5977, %v5977
      %v5982 = vmul.f32 %v5978, %v5978
      %v5983 = vmul.f32 %v5979, %v5979
      %v5984 = vsel %vm1244, %v5980, 0.0
      %5985 = vadd.xlane.f32.xlu0 %v5984
      %v5986 = vpop.xlane.xlu0 %5985
      %v5987 = vsel %vm1244, %v5981, 0.0
      %5988 = vadd.xlane.f32.xlu0 %v5987
      %v5989 = vpop.xlane.xlu0 %5988
      %v5990 = vsel %vm1244, %v5982, 0.0
      %5991 = vadd.xlane.f32.xlu0 %v5990
      %v5992 = vpop.xlane.xlu0 %5991
      %v5993 = vsel %vm1244, %v5983, 0.0
      %5994 = vadd.xlane.f32.xlu0 %v5993
      %v5995 = vpop.xlane.xlu0 %5994
      %v5996 = vmul.f32 %v5986, %v1257
      %v5997 = vmul.f32 %v5989, %v1257
      %v5998 = vmul.f32 %v5992, %v1257
      %v5999 = vmul.f32 %v5995, %v1257
      %v6000 = vadd.f32 %v5996, 1e-05
      %v6001 = vadd.f32 %v5997, 1e-05
      %v6002 = vadd.f32 %v5998, 1e-05
      %v6003 = vadd.f32 %v5999, 1e-05
      %v6004 = vrsqrt.pop %v6000
      %v6005 = vrsqrt.pop %v6001
      %v6006 = vrsqrt.pop %v6002
      %v6007 = vrsqrt.pop %v6003
      %v6008 = vmul.f32 %v5976, %v6004
      %v6009 = vmul.f32 %v5977, %v6005
      %v6010 = vmul.f32 %v5978, %v6006
      %v6011 = vmul.f32 %v5979, %v6007
      %v6013 = vlaneseq
      %v6014 = vshrl.u32 %v6013, 7
      %v6015 = vsub.s32 0, %v6014
      %v6016 = vrot.slane %v5958, %v6015
      %v6018 = vmul.f32 %v6008, %v6016
      %v6019 = vmul.f32 %v6009, %v6016
      %v6020 = vmul.f32 %v6010, %v6016
      %v6021 = vmul.f32 %v6011, %v6016
      %v6023 = vlaneseq
      %v6024 = vshrl.u32 %v6023, 7
      %v6025 = vsub.s32 0, %v6024
      %v6026 = vrot.slane %v5959, %v6025
      %v6028 = vadd.f32 %v6018, %v6026
      %v6029 = vadd.f32 %v6019, %v6026
      %v6030 = vadd.f32 %v6020, %v6026
      %v6031 = vadd.f32 %v6021, %v6026
      %v6032 = vld [vmem:[%s77] sm:$0x1]
      %v6033 = vld [vmem:[%s69] sm:$0x1]
      %v6034 = vunpack.c.l.bf16 %v6033
      %6036 = vset.pattern.permute.xlu0 0
      %6037 = vperm.xlu0 %6036, %v5957
      %v6038 = vpop.permute.xlu0 %6037
      %v6040 = vlaneseq
      %v6041 = vshrl.u32 %v6040, 7
      %v6042 = vsub.s32 0, %v6041
      %v6043 = vrot.slane %v6034, %v6042
      %v6044 = vmul.f32 %v6038, %v6043
      %6045 = vset.pattern.permute.xlu0 1
      %6046 = vperm.xlu0 %6045, %v5957
      %v6047 = vpop.permute.xlu0 %6046
      %v6049 = vlaneseq
      %v6050 = vshrl.u32 %v6049, 7
      %v6051 = vsub.s32 1, %v6050
      %v6052 = vrot.slane %v6034, %v6051
      %v6053 = vmul.f32 %v6047, %v6052
      %v6054 = vadd.f32 %v6044, %v6053
      %v6055 = vmul.f32 %v6054, 0.25
      %v6056 = vpack.c.bf16 %v6055, %v6055
      %v6057 = vld [vmem:[%s71] sm:$0xf]
      %v6058 = vld [vmem:[%s71 + $0x4] sm:$0xf]
      %v6059 = vld [vmem:[%s71 + $0x8] sm:$0xf]
      %v6060 = vld [vmem:[%s71 + $0xc] sm:$0xf]
      %v6061 = vld [vmem:[%s71 + $0x10] sm:$0xf]
      %v6062 = vld [vmem:[%s71 + $0x14] sm:$0xf]
      %v6063 = vld [vmem:[%s71 + $0x18] sm:$0xf]
      %v6064 = vld [vmem:[%s71 + $0x1c] sm:$0xf]
      %v6065 = vpack.c.bf16 %v6029, %v6028
      %v6066 = vpack.c.bf16 %v6031, %v6030
      %v6075 = vunpack.c.l.b16 %v6057
      %v6076 = vunpack.c.l.b16 %v6058
      %v6077 = vunpack.c.l.b16 %v6059
      %v6078 = vunpack.c.l.b16 %v6060
      %v6079 = vunpack.c.l.b16 %v6061
      %v6080 = vunpack.c.l.b16 %v6062
      %v6081 = vunpack.c.l.b16 %v6063
      %v6082 = vunpack.c.l.b16 %v6064
      %v6083 = vpack.c.b16 %v6076, %v6075
      %v6084 = vpack.c.b16 %v6078, %v6077
      %v6085 = vpack.c.b16 %v6080, %v6079
      %v6086 = vpack.c.b16 %v6082, %v6081
      %v6092 = vsel %vm1244, %v6065, 0
      %v6095 = vsel %vm1244, %v6066, 0
      %6097 = vmatprep.subr.bf16.mxu0 0
      %6098 = vmatpush1.bf16.msra.mxu0 %v6083
      %6099 = vmatprep.subr.bf16.mxu0 0
      %6100 = vmatpush1.bf16.msra.mxu0 %v6084
      %6101 = vmatprep.subr.bf16.mxu0 0
      %6102 = vmatpush1.bf16.msra.mxu0 %v6085
      %6103 = vmatprep.subr.bf16.mxu0 0
      %6104 = vmatpush1.bf16.msra.mxu0 %v6086
      %6105 = vmatprep.subr.bf16.mxu0 0
      %6106 = vmatpush1.bf16.msra.mxu0 0
      %6107 = vmatprep.subr.bf16.mxu0 0
      %6108 = vmatpush1.bf16.msra.mxu0 0
      %6109 = vmatprep.subr.bf16.mxu0 0
      %6110 = vmatpush1.bf16.msra.mxu0 0
      %6111 = vmatprep.subr.bf16.mxu0 0
      %6112 = vmatpush1.bf16.msra.mxu0 0
      %6113 = vmatprep.subr.bf16.mxu0 0
      %6114 = vmatpush1.bf16.msra.mxu0 0
      %6115 = vmatprep.subr.bf16.mxu0 0
      %6116 = vmatpush1.bf16.msra.mxu0 0
      %6117 = vmatprep.subr.bf16.mxu0 0
      %6118 = vmatpush1.bf16.msra.mxu0 0
      %6119 = vmatprep.subr.bf16.mxu0 0
      %6120 = vmatpush1.bf16.msra.mxu0 0
      %6121 = vmatprep.subr.bf16.mxu0 0
      %6122 = vmatpush1.bf16.msra.mxu0 0
      %6123 = vmatprep.subr.bf16.mxu0 0
      %6124 = vmatpush1.bf16.msra.mxu0 0
      %6125 = vmatprep.subr.bf16.mxu0 0
      %6126 = vmatpush1.bf16.msra.mxu0 0
      %6127 = vmatprep.subr.bf16.mxu0 0
      %6128 = vmatpush1.bf16.msra.mxu0 0
      %6129 = vmatprep.mubr.bf16.mxu0 0
      %6130 = vmatmul.mubr.bf16.gmra.mrb[0].mxu0 %v6092
      %v6131 = vpop.f32.mrb[0].mxu0
      %v6132 = vadd.f32 0.0, %v6131
      %v6133 = vpop.f32.mrb[0].mxu0
      %v6134 = vpop.f32.mrb[0].mxu0
      %v6135 = vadd.f32 0.0, %v6134
      %v6136 = vpop.f32.mrb[0].mxu0
      %6137 = vmatprep.mubr.bf16.mxu0 0
      %6138 = vmatmul.mubr.bf16.gmra.mrb[0].mxu0 %v6095
      %v6139 = vpop.f32.mrb[0].mxu0
      %v6140 = vadd.f32 0.0, %v6139
      %v6141 = vpop.f32.mrb[0].mxu0
      %v6142 = vpop.f32.mrb[0].mxu0
      %v6143 = vadd.f32 0.0, %v6142
      %v6144 = vpop.f32.mrb[0].mxu0
      %6145 = vdwg.mxu0
      %v6146 = vpack.c.bf16 %v6135, %v6132
      %v6147 = vpack.c.bf16 %v6143, %v6140
      %v6148 = vld [vmem:[%s73] sm:$0xf]
      %v6149 = vld [vmem:[%s73 + $0x4] sm:$0xf]
      %v6150 = vld [vmem:[%s73 + $0x8] sm:$0xf]
      %v6151 = vld [vmem:[%s73 + $0xc] sm:$0xf]
      %v6152 = vld [vmem:[%s73 + $0x10] sm:$0xf]
      %v6153 = vld [vmem:[%s73 + $0x14] sm:$0xf]
      %v6154 = vld [vmem:[%s73 + $0x18] sm:$0xf]
      %v6155 = vld [vmem:[%s73 + $0x1c] sm:$0xf]
      %v6164 = vunpack.c.l.b16 %v6148
      %v6165 = vunpack.c.l.b16 %v6149
      %v6166 = vunpack.c.l.b16 %v6150
      %v6167 = vunpack.c.l.b16 %v6151
      %v6168 = vunpack.c.l.b16 %v6152
      %v6169 = vunpack.c.l.b16 %v6153
      %v6170 = vunpack.c.l.b16 %v6154
      %v6171 = vunpack.c.l.b16 %v6155
      %v6172 = vpack.c.b16 %v6165, %v6164
      %v6173 = vpack.c.b16 %v6167, %v6166
      %v6174 = vpack.c.b16 %v6169, %v6168
      %v6175 = vpack.c.b16 %v6171, %v6170
      %6180 = vmatprep.subr.bf16.mxu0 0
      %6181 = vmatpush1.bf16.msra.mxu0 %v6172
      %6182 = vmatprep.subr.bf16.mxu0 0
      %6183 = vmatpush1.bf16.msra.mxu0 %v6173
      %6184 = vmatprep.subr.bf16.mxu0 0
      %6185 = vmatpush1.bf16.msra.mxu0 %v6174
      %6186 = vmatprep.subr.bf16.mxu0 0
      %6187 = vmatpush1.bf16.msra.mxu0 %v6175
      %6188 = vmatprep.subr.bf16.mxu0 0
      %6189 = vmatpush1.bf16.msra.mxu0 0
      %6190 = vmatprep.subr.bf16.mxu0 0
      %6191 = vmatpush1.bf16.msra.mxu0 0
      %6192 = vmatprep.subr.bf16.mxu0 0
      %6193 = vmatpush1.bf16.msra.mxu0 0
      %6194 = vmatprep.subr.bf16.mxu0 0
      %6195 = vmatpush1.bf16.msra.mxu0 0
      %6196 = vmatprep.subr.bf16.mxu0 0
      %6197 = vmatpush1.bf16.msra.mxu0 0
      %6198 = vmatprep.subr.bf16.mxu0 0
      %6199 = vmatpush1.bf16.msra.mxu0 0
      %6200 = vmatprep.subr.bf16.mxu0 0
      %6201 = vmatpush1.bf16.msra.mxu0 0
      %6202 = vmatprep.subr.bf16.mxu0 0
      %6203 = vmatpush1.bf16.msra.mxu0 0
      %6204 = vmatprep.subr.bf16.mxu0 0
      %6205 = vmatpush1.bf16.msra.mxu0 0
      %6206 = vmatprep.subr.bf16.mxu0 0
      %6207 = vmatpush1.bf16.msra.mxu0 0
      %6208 = vmatprep.subr.bf16.mxu0 0
      %6209 = vmatpush1.bf16.msra.mxu0 0
      %6210 = vmatprep.subr.bf16.mxu0 0
      %6211 = vmatpush1.bf16.msra.mxu0 0
      %6212 = vmatprep.mubr.bf16.mxu0 0
      %6213 = vmatmul.mubr.bf16.gmra.mrb[0].mxu0 %v6092
      %v6214 = vpop.f32.mrb[0].mxu0
      %v6215 = vadd.f32 0.0, %v6214
      %v6216 = vpop.f32.mrb[0].mxu0
      %v6217 = vpop.f32.mrb[0].mxu0
      %v6218 = vadd.f32 0.0, %v6217
      %v6219 = vpop.f32.mrb[0].mxu0
      %6220 = vmatprep.mubr.bf16.mxu0 0
      %6221 = vmatmul.mubr.bf16.gmra.mrb[0].mxu0 %v6095
      %v6222 = vpop.f32.mrb[0].mxu0
      %v6223 = vadd.f32 0.0, %v6222
      %v6224 = vpop.f32.mrb[0].mxu0
      %v6225 = vpop.f32.mrb[0].mxu0
      %v6226 = vadd.f32 0.0, %v6225
      %v6227 = vpop.f32.mrb[0].mxu0
      %6228 = vdwg.mxu0
      %v6229 = vpack.c.bf16 %v6218, %v6215
      %v6230 = vpack.c.bf16 %v6226, %v6223
      %v6232 = vsel %vm1482, %v6056, 0
      %v6235 = vsel %vm1482, %v6146, 0
      %v6238 = vsel %vm1482, %v6147, 0
      %6240 = vmatprep.subr.bf16.mxu0 0
      %6241 = vmatpush1.bf16.xpose.msra.mxu0 %v6235
      %6242 = vmatprep.subr.bf16.mxu0 0
      %6243 = vmatpush1.bf16.xpose.msra.mxu0 %v6238
      %6244 = vmatprep.subr.bf16.mxu0 0
      %6245 = vmatpush1.bf16.xpose.msra.mxu0 0
      %6246 = vmatprep.subr.bf16.mxu0 0
      %6247 = vmatpush1.bf16.xpose.msra.mxu0 0
      %6248 = vmatprep.subr.bf16.mxu0 0
      %6249 = vmatpush1.bf16.xpose.msra.mxu0 0
      %6250 = vmatprep.subr.bf16.mxu0 0
      %6251 = vmatpush1.bf16.xpose.msra.mxu0 0
      %6252 = vmatprep.subr.bf16.mxu0 0
      %6253 = vmatpush1.bf16.xpose.msra.mxu0 0
      %6254 = vmatprep.subr.bf16.mxu0 0
      %6255 = vmatpush1.bf16.xpose.msra.mxu0 0
      %6256 = vmatprep.subr.bf16.mxu0 0
      %6257 = vmatpush1.bf16.xpose.msra.mxu0 0
      %6258 = vmatprep.subr.bf16.mxu0 0
      %6259 = vmatpush1.bf16.xpose.msra.mxu0 0
      %6260 = vmatprep.subr.bf16.mxu0 0
      %6261 = vmatpush1.bf16.xpose.msra.mxu0 0
      %6262 = vmatprep.subr.bf16.mxu0 0
      %6263 = vmatpush1.bf16.xpose.msra.mxu0 0
      %6264 = vmatprep.subr.bf16.mxu0 0
      %6265 = vmatpush1.bf16.xpose.msra.mxu0 0
      %6266 = vmatprep.subr.bf16.mxu0 0
      %6267 = vmatpush1.bf16.xpose.msra.mxu0 0
      %6268 = vmatprep.subr.bf16.mxu0 0
      %6269 = vmatpush1.bf16.xpose.msra.mxu0 0
      %6270 = vmatprep.subr.bf16.mxu0 0
      %6271 = vmatpush1.bf16.xpose.msra.mxu0 0
      %6272 = vmatprep.mubr.bf16.mxu0 0
      %6273 = vmatmul.mubr.bf16.gmra.mrb[0].mxu0 %v6232
      %v6274 = vpop.f32.mrb[0].mxu0
      %v6275 = vadd.f32 0.0, %v6274
      %v6276 = vpop.f32.mrb[0].mxu0
      %v6277 = vpop.f32.mrb[0].mxu0
      %v6278 = vpop.f32.mrb[0].mxu0
      %6279 = vdwg.mxu0
      %v6280 = vsel %vm3047, %v6275, -inf
      %6281 = vmax.xlane.f32.xlu0 %v6280
      %v6282 = vpop.xlane.xlu0 %6281
      %v6283 = vsub.f32 %v6275, %v6282
      %v6284 = vmul.f32 %v6283, 1.442695
      %v6285 = vpow.pop %v6284
      %v6286 = vsel %vm3047, %v6285, 0.0
      %6287 = vadd.xlane.f32.xlu0 %v6286
      %v6288 = vpop.xlane.xlu0 %6287
      %v6289 = vrcp.pop %v6288
      %v6290 = vmul.f32 %v6285, %v6289
      %v6291 = vpack.c.bf16 %v6290, %v6290
      %v6293 = vsel %vm3047, %v6291, 0
      %6295 = vmatprep.subr.bf16.mxu0 0
      %6296 = vmatpush1.bf16.msra.mxu0 %v6229
      %6297 = vmatprep.subr.bf16.mxu0 0
      %6298 = vmatpush1.bf16.msra.mxu0 %v6230
      %6299 = vmatprep.subr.bf16.mxu0 0
      %6300 = vmatpush1.bf16.msra.mxu0 0
      %6301 = vmatprep.subr.bf16.mxu0 0
      %6302 = vmatpush1.bf16.msra.mxu0 0
      %6303 = vmatprep.subr.bf16.mxu0 0
      %6304 = vmatpush1.bf16.msra.mxu0 0
      %6305 = vmatprep.subr.bf16.mxu0 0
      %6306 = vmatpush1.bf16.msra.mxu0 0
      %6307 = vmatprep.subr.bf16.mxu0 0
      %6308 = vmatpush1.bf16.msra.mxu0 0
      %6309 = vmatprep.subr.bf16.mxu0 0
      %6310 = vmatpush1.bf16.msra.mxu0 0
      %6311 = vmatprep.subr.bf16.mxu0 0
      %6312 = vmatpush1.bf16.msra.mxu0 0
      %6313 = vmatprep.subr.bf16.mxu0 0
      %6314 = vmatpush1.bf16.msra.mxu0 0
      %6315 = vmatprep.subr.bf16.mxu0 0
      %6316 = vmatpush1.bf16.msra.mxu0 0
      %6317 = vmatprep.subr.bf16.mxu0 0
      %6318 = vmatpush1.bf16.msra.mxu0 0
      %6319 = vmatprep.subr.bf16.mxu0 0
      %6320 = vmatpush1.bf16.msra.mxu0 0
      %6321 = vmatprep.subr.bf16.mxu0 0
      %6322 = vmatpush1.bf16.msra.mxu0 0
      %6323 = vmatprep.subr.bf16.mxu0 0
      %6324 = vmatpush1.bf16.msra.mxu0 0
      %6325 = vmatprep.subr.bf16.mxu0 0
      %6326 = vmatpush1.bf16.msra.mxu0 0
      %6327 = vmatprep.mubr.bf16.mxu0 0
      %6328 = vmatmul.mubr.bf16.gmra.mrb[0].mxu0 %v6293
      %v6329 = vpop.f32.mrb[0].mxu0
      %v6330 = vadd.f32 0.0, %v6329
      %v6331 = vpop.f32.mrb[0].mxu0
      %v6332 = vpop.f32.mrb[0].mxu0
      %v6333 = vpop.f32.mrb[0].mxu0
      %6334 = vdwg.mxu0
      %v6335 = vpack.c.bf16 %v6330, %v6330
      %v6336 = vld [vmem:[%s75] sm:$0xf]
      %v6337 = vld [vmem:[%s75 + $0x4] sm:$0xf]
      %s6338 = scalar_lea.vmem %s69, 1
      %v6339 = vld [vmem:[%s6338] sm:$0x1]
      %v6340 = vunpack.c.l.bf16 %v6339
      %v6341 = vlaneseq
      %v6342 = vshrl.u32 %v6341, 7
      %v6343 = vsub.s32 0, %v6342
      %v6344 = vrot.slane %v6340, %v6343
      %v6345 = vmul.f32 %v6038, %v6344
      %v6346 = vlaneseq
      %v6347 = vshrl.u32 %v6346, 7
      %v6348 = vsub.s32 1, %v6347
      %v6349 = vrot.slane %v6340, %v6348
      %v6350 = vmul.f32 %v6047, %v6349
      %v6351 = vadd.f32 %v6345, %v6350
      %v6352 = vmul.f32 %v6351, 0.25
      %v6353 = vpack.c.bf16 %v6352, %v6352
      %s6354 = scalar_lea.vmem %s71, 32
      %v6355 = vld [vmem:[%s6354] sm:$0xf]
      %v6356 = vld [vmem:[%s6354 + $0x4] sm:$0xf]
      %v6357 = vld [vmem:[%s6354 + $0x8] sm:$0xf]
      %v6358 = vld [vmem:[%s6354 + $0xc] sm:$0xf]
      %v6359 = vld [vmem:[%s6354 + $0x10] sm:$0xf]
      %v6360 = vld [vmem:[%s6354 + $0x14] sm:$0xf]
      %v6361 = vld [vmem:[%s6354 + $0x18] sm:$0xf]
      %v6362 = vld [vmem:[%s6354 + $0x1c] sm:$0xf]
      %v6371 = vunpack.c.l.b16 %v6355
      %v6372 = vunpack.c.l.b16 %v6356
      %v6373 = vunpack.c.l.b16 %v6357
      %v6374 = vunpack.c.l.b16 %v6358
      %v6375 = vunpack.c.l.b16 %v6359
      %v6376 = vunpack.c.l.b16 %v6360
      %v6377 = vunpack.c.l.b16 %v6361
      %v6378 = vunpack.c.l.b16 %v6362
      %v6379 = vpack.c.b16 %v6372, %v6371
      %v6380 = vpack.c.b16 %v6374, %v6373
      %v6381 = vpack.c.b16 %v6376, %v6375
      %v6382 = vpack.c.b16 %v6378, %v6377
      %6387 = vmatprep.subr.bf16.mxu0 0
      %6388 = vmatpush1.bf16.msra.mxu0 %v6379
      %6389 = vmatprep.subr.bf16.mxu0 0
      %6390 = vmatpush1.bf16.msra.mxu0 %v6380
      %6391 = vmatprep.subr.bf16.mxu0 0
      %6392 = vmatpush1.bf16.msra.mxu0 %v6381
      %6393 = vmatprep.subr.bf16.mxu0 0
      %6394 = vmatpush1.bf16.msra.mxu0 %v6382
      %6395 = vmatprep.subr.bf16.mxu0 0
      %6396 = vmatpush1.bf16.msra.mxu0 0
      %6397 = vmatprep.subr.bf16.mxu0 0
      %6398 = vmatpush1.bf16.msra.mxu0 0
      %6399 = vmatprep.subr.bf16.mxu0 0
      %6400 = vmatpush1.bf16.msra.mxu0 0
      %6401 = vmatprep.subr.bf16.mxu0 0
      %6402 = vmatpush1.bf16.msra.mxu0 0
      %6403 = vmatprep.subr.bf16.mxu0 0
      %6404 = vmatpush1.bf16.msra.mxu0 0
      %6405 = vmatprep.subr.bf16.mxu0 0
      %6406 = vmatpush1.bf16.msra.mxu0 0
      %6407 = vmatprep.subr.bf16.mxu0 0
      %6408 = vmatpush1.bf16.msra.mxu0 0
      %6409 = vmatprep.subr.bf16.mxu0 0
      %6410 = vmatpush1.bf16.msra.mxu0 0
      %6411 = vmatprep.subr.bf16.mxu0 0
      %6412 = vmatpush1.bf16.msra.mxu0 0
      %6413 = vmatprep.subr.bf16.mxu0 0
      %6414 = vmatpush1.bf16.msra.mxu0 0
      %6415 = vmatprep.subr.bf16.mxu0 0
      %6416 = vmatpush1.bf16.msra.mxu0 0
      %6417 = vmatprep.subr.bf16.mxu0 0
      %6418 = vmatpush1.bf16.msra.mxu0 0
      %6419 = vmatprep.mubr.bf16.mxu0 0
      %6420 = vmatmul.mubr.bf16.gmra.mrb[0].mxu0 %v6092
      %v6421 = vpop.f32.mrb[0].mxu0
      %v6422 = vadd.f32 0.0, %v6421
      %v6423 = vpop.f32.mrb[0].mxu0
      %v6424 = vpop.f32.mrb[0].mxu0
      %v6425 = vadd.f32 0.0, %v6424
      %v6426 = vpop.f32.mrb[0].mxu0
      %6427 = vmatprep.mubr.bf16.mxu0 0
      %6428 = vmatmul.mubr.bf16.gmra.mrb[0].mxu0 %v6095
      %v6429 = vpop.f32.mrb[0].mxu0
      %v6430 = vadd.f32 0.0, %v6429
      %v6431 = vpop.f32.mrb[0].mxu0
      %v6432 = vpop.f32.mrb[0].mxu0
      %v6433 = vadd.f32 0.0, %v6432
      %v6434 = vpop.f32.mrb[0].mxu0
      %6435 = vdwg.mxu0
      %v6436 = vpack.c.bf16 %v6425, %v6422
      %v6437 = vpack.c.bf16 %v6433, %v6430
      %s6438 = scalar_lea.vmem %s73, 32
      %v6439 = vld [vmem:[%s6438] sm:$0xf]
      %v6440 = vld [vmem:[%s6438 + $0x4] sm:$0xf]
      %v6441 = vld [vmem:[%s6438 + $0x8] sm:$0xf]
      %v6442 = vld [vmem:[%s6438 + $0xc] sm:$0xf]
      %v6443 = vld [vmem:[%s6438 + $0x10] sm:$0xf]
      %v6444 = vld [vmem:[%s6438 + $0x14] sm:$0xf]
      %v6445 = vld [vmem:[%s6438 + $0x18] sm:$0xf]
      %v6446 = vld [vmem:[%s6438 + $0x1c] sm:$0xf]
      %v6455 = vunpack.c.l.b16 %v6439
      %v6456 = vunpack.c.l.b16 %v6440
      %v6457 = vunpack.c.l.b16 %v6441
      %v6458 = vunpack.c.l.b16 %v6442
      %v6459 = vunpack.c.l.b16 %v6443
      %v6460 = vunpack.c.l.b16 %v6444
      %v6461 = vunpack.c.l.b16 %v6445
      %v6462 = vunpack.c.l.b16 %v6446
      %v6463 = vpack.c.b16 %v6456, %v6455
      %v6464 = vpack.c.b16 %v6458, %v6457
      %v6465 = vpack.c.b16 %v6460, %v6459
      %v6466 = vpack.c.b16 %v6462, %v6461
      %6471 = vmatprep.subr.bf16.mxu0 0
      %6472 = vmatpush1.bf16.msra.mxu0 %v6463
      %6473 = vmatprep.subr.bf16.mxu0 0
      %6474 = vmatpush1.bf16.msra.mxu0 %v6464
      %6475 = vmatprep.subr.bf16.mxu0 0
      %6476 = vmatpush1.bf16.msra.mxu0 %v6465
      %6477 = vmatprep.subr.bf16.mxu0 0
      %6478 = vmatpush1.bf16.msra.mxu0 %v6466
      %6479 = vmatprep.subr.bf16.mxu0 0
      %6480 = vmatpush1.bf16.msra.mxu0 0
      %6481 = vmatprep.subr.bf16.mxu0 0
      %6482 = vmatpush1.bf16.msra.mxu0 0
      %6483 = vmatprep.subr.bf16.mxu0 0
      %6484 = vmatpush1.bf16.msra.mxu0 0
      %6485 = vmatprep.subr.bf16.mxu0 0
      %6486 = vmatpush1.bf16.msra.mxu0 0
      %6487 = vmatprep.subr.bf16.mxu0 0
      %6488 = vmatpush1.bf16.msra.mxu0 0
      %6489 = vmatprep.subr.bf16.mxu0 0
      %6490 = vmatpush1.bf16.msra.mxu0 0
      %6491 = vmatprep.subr.bf16.mxu0 0
      %6492 = vmatpush1.bf16.msra.mxu0 0
      %6493 = vmatprep.subr.bf16.mxu0 0
      %6494 = vmatpush1.bf16.msra.mxu0 0
      %6495 = vmatprep.subr.bf16.mxu0 0
      %6496 = vmatpush1.bf16.msra.mxu0 0
      %6497 = vmatprep.subr.bf16.mxu0 0
      %6498 = vmatpush1.bf16.msra.mxu0 0
      %6499 = vmatprep.subr.bf16.mxu0 0
      %6500 = vmatpush1.bf16.msra.mxu0 0
      %6501 = vmatprep.subr.bf16.mxu0 0
      %6502 = vmatpush1.bf16.msra.mxu0 0
      %6503 = vmatprep.mubr.bf16.mxu0 0
      %6504 = vmatmul.mubr.bf16.gmra.mrb[0].mxu0 %v6092
      %v6505 = vpop.f32.mrb[0].mxu0
      %v6506 = vadd.f32 0.0, %v6505
      %v6507 = vpop.f32.mrb[0].mxu0
      %v6508 = vpop.f32.mrb[0].mxu0
      %v6509 = vadd.f32 0.0, %v6508
      %v6510 = vpop.f32.mrb[0].mxu0
      %6511 = vmatprep.mubr.bf16.mxu0 0
      %6512 = vmatmul.mubr.bf16.gmra.mrb[0].mxu0 %v6095
      %v6513 = vpop.f32.mrb[0].mxu0
      %v6514 = vadd.f32 0.0, %v6513
      %v6515 = vpop.f32.mrb[0].mxu0
      %v6516 = vpop.f32.mrb[0].mxu0
      %v6517 = vadd.f32 0.0, %v6516
      %v6518 = vpop.f32.mrb[0].mxu0
      %6519 = vdwg.mxu0
      %v6520 = vpack.c.bf16 %v6509, %v6506
      %v6521 = vpack.c.bf16 %v6517, %v6514
      %v6523 = vsel %vm1482, %v6353, 0
      %v6526 = vsel %vm1482, %v6436, 0
      %v6529 = vsel %vm1482, %v6437, 0
      %6531 = vmatprep.subr.bf16.mxu0 0
      %6532 = vmatpush1.bf16.xpose.msra.mxu0 %v6526
      %6533 = vmatprep.subr.bf16.mxu0 0
      %6534 = vmatpush1.bf16.xpose.msra.mxu0 %v6529
      %6535 = vmatprep.subr.bf16.mxu0 0
      %6536 = vmatpush1.bf16.xpose.msra.mxu0 0
      %6537 = vmatprep.subr.bf16.mxu0 0
      %6538 = vmatpush1.bf16.xpose.msra.mxu0 0
      %6539 = vmatprep.subr.bf16.mxu0 0
      %6540 = vmatpush1.bf16.xpose.msra.mxu0 0
      %6541 = vmatprep.subr.bf16.mxu0 0
      %6542 = vmatpush1.bf16.xpose.msra.mxu0 0
      %6543 = vmatprep.subr.bf16.mxu0 0
      %6544 = vmatpush1.bf16.xpose.msra.mxu0 0
      %6545 = vmatprep.subr.bf16.mxu0 0
      %6546 = vmatpush1.bf16.xpose.msra.mxu0 0
      %6547 = vmatprep.subr.bf16.mxu0 0
      %6548 = vmatpush1.bf16.xpose.msra.mxu0 0
      %6549 = vmatprep.subr.bf16.mxu0 0
      %6550 = vmatpush1.bf16.xpose.msra.mxu0 0
      %6551 = vmatprep.subr.bf16.mxu0 0
      %6552 = vmatpush1.bf16.xpose.msra.mxu0 0
      %6553 = vmatprep.subr.bf16.mxu0 0
      %6554 = vmatpush1.bf16.xpose.msra.mxu0 0
      %6555 = vmatprep.subr.bf16.mxu0 0
      %6556 = vmatpush1.bf16.xpose.msra.mxu0 0
      %6557 = vmatprep.subr.bf16.mxu0 0
      %6558 = vmatpush1.bf16.xpose.msra.mxu0 0
      %6559 = vmatprep.subr.bf16.mxu0 0
      %6560 = vmatpush1.bf16.xpose.msra.mxu0 0
      %6561 = vmatprep.subr.bf16.mxu0 0
      %6562 = vmatpush1.bf16.xpose.msra.mxu0 0
      %6563 = vmatprep.mubr.bf16.mxu0 0
      %6564 = vmatmul.mubr.bf16.gmra.mrb[0].mxu0 %v6523
      %v6565 = vpop.f32.mrb[0].mxu0
      %v6566 = vadd.f32 0.0, %v6565
      %v6567 = vpop.f32.mrb[0].mxu0
      %v6568 = vpop.f32.mrb[0].mxu0
      %v6569 = vpop.f32.mrb[0].mxu0
      %6570 = vdwg.mxu0
      %v6571 = vsel %vm3047, %v6566, -inf
      %6572 = vmax.xlane.f32.xlu0 %v6571
      %v6573 = vpop.xlane.xlu0 %6572
      %v6574 = vsub.f32 %v6566, %v6573
      %v6575 = vmul.f32 %v6574, 1.442695
      %v6576 = vpow.pop %v6575
      %v6577 = vsel %vm3047, %v6576, 0.0
      %6578 = vadd.xlane.f32.xlu0 %v6577
      %v6579 = vpop.xlane.xlu0 %6578
      %v6580 = vrcp.pop %v6579
      %v6581 = vmul.f32 %v6576, %v6580
      %v6582 = vpack.c.bf16 %v6581, %v6581
      %v6584 = vsel %vm3047, %v6582, 0
      %6586 = vmatprep.subr.bf16.mxu0 0
      %6587 = vmatpush1.bf16.msra.mxu0 %v6520
      %6588 = vmatprep.subr.bf16.mxu0 0
      %6589 = vmatpush1.bf16.msra.mxu0 %v6521
      %6590 = vmatprep.subr.bf16.mxu0 0
      %6591 = vmatpush1.bf16.msra.mxu0 0
      %6592 = vmatprep.subr.bf16.mxu0 0
      %6593 = vmatpush1.bf16.msra.mxu0 0
      %6594 = vmatprep.subr.bf16.mxu0 0
      %6595 = vmatpush1.bf16.msra.mxu0 0
      %6596 = vmatprep.subr.bf16.mxu0 0
      %6597 = vmatpush1.bf16.msra.mxu0 0
      %6598 = vmatprep.subr.bf16.mxu0 0
      %6599 = vmatpush1.bf16.msra.mxu0 0
      %6600 = vmatprep.subr.bf16.mxu0 0
      %6601 = vmatpush1.bf16.msra.mxu0 0
      %6602 = vmatprep.subr.bf16.mxu0 0
      %6603 = vmatpush1.bf16.msra.mxu0 0
      %6604 = vmatprep.subr.bf16.mxu0 0
      %6605 = vmatpush1.bf16.msra.mxu0 0
      %6606 = vmatprep.subr.bf16.mxu0 0
      %6607 = vmatpush1.bf16.msra.mxu0 0
      %6608 = vmatprep.subr.bf16.mxu0 0
      %6609 = vmatpush1.bf16.msra.mxu0 0
      %6610 = vmatprep.subr.bf16.mxu0 0
      %6611 = vmatpush1.bf16.msra.mxu0 0
      %6612 = vmatprep.subr.bf16.mxu0 0
      %6613 = vmatpush1.bf16.msra.mxu0 0
      %6614 = vmatprep.subr.bf16.mxu0 0
      %6615 = vmatpush1.bf16.msra.mxu0 0
      %6616 = vmatprep.subr.bf16.mxu0 0
      %6617 = vmatpush1.bf16.msra.mxu0 0
      %6618 = vmatprep.mubr.bf16.mxu0 0
      %6619 = vmatmul.mubr.bf16.gmra.mrb[0].mxu0 %v6584
      %v6620 = vpop.f32.mrb[0].mxu0
      %v6621 = vadd.f32 0.0, %v6620
      %v6622 = vpop.f32.mrb[0].mxu0
      %v6623 = vpop.f32.mrb[0].mxu0
      %v6624 = vpop.f32.mrb[0].mxu0
      %6625 = vdwg.mxu0
      %v6626 = vpack.c.bf16 %v6621, %v6621
      %s6627 = scalar_lea.vmem %s75, 8
      %v6628 = vld [vmem:[%s6627] sm:$0xf]
      %v6629 = vld [vmem:[%s6627 + $0x4] sm:$0xf]
      %v6632 = vunpack.c.l.b16 %v6628
      %v6633 = vunpack.c.l.b16 %v6629
      %v6634 = vpack.c.b16 %v6633, %v6632
      %v6637 = vsel %vm1482, %v6626, 0
      %6639 = vmatprep.subr.bf16.mxu0 0
      %6640 = vmatpush1.bf16.msra.mxu0 %v6634
      %6641 = vmatprep.subr.bf16.mxu0 0
      %6642 = vmatpush1.bf16.msra.mxu0 0
      %6643 = vmatprep.subr.bf16.mxu0 0
      %6644 = vmatpush1.bf16.msra.mxu0 0
      %6645 = vmatprep.subr.bf16.mxu0 0
      %6646 = vmatpush1.bf16.msra.mxu0 0
      %6647 = vmatprep.subr.bf16.mxu0 0
      %6648 = vmatpush1.bf16.msra.mxu0 0
      %6649 = vmatprep.subr.bf16.mxu0 0
      %6650 = vmatpush1.bf16.msra.mxu0 0
      %6651 = vmatprep.subr.bf16.mxu0 0
      %6652 = vmatpush1.bf16.msra.mxu0 0
      %6653 = vmatprep.subr.bf16.mxu0 0
      %6654 = vmatpush1.bf16.msra.mxu0 0
      %6655 = vmatprep.subr.bf16.mxu0 0
      %6656 = vmatpush1.bf16.msra.mxu0 0
      %6657 = vmatprep.subr.bf16.mxu0 0
      %6658 = vmatpush1.bf16.msra.mxu0 0
      %6659 = vmatprep.subr.bf16.mxu0 0
      %6660 = vmatpush1.bf16.msra.mxu0 0
      %6661 = vmatprep.subr.bf16.mxu0 0
      %6662 = vmatpush1.bf16.msra.mxu0 0
      %6663 = vmatprep.subr.bf16.mxu0 0
      %6664 = vmatpush1.bf16.msra.mxu0 0
      %6665 = vmatprep.subr.bf16.mxu0 0
      %6666 = vmatpush1.bf16.msra.mxu0 0
      %6667 = vmatprep.subr.bf16.mxu0 0
      %6668 = vmatpush1.bf16.msra.mxu0 0
      %6669 = vmatprep.subr.bf16.mxu0 0
      %6670 = vmatpush1.bf16.msra.mxu0 0
      %6671 = vmatprep.mubr.bf16.mxu0 0
      %6672 = vmatmul.mubr.bf16.gmra.mrb[0].mxu0 %v6637
      %v6673 = vpop.f32.mrb[0].mxu0
      %v6674 = vadd.f32 0.0, %v6673
      %v6675 = vpop.f32.mrb[0].mxu0
      %v6676 = vpop.f32.mrb[0].mxu0
      %v6677 = vpop.f32.mrb[0].mxu0
      %6678 = vdwg.mxu0
      %v6681 = vunpack.c.l.b16 %v6336
      %v6682 = vunpack.c.l.b16 %v6337
      %v6683 = vpack.c.b16 %v6682, %v6681
      %v6686 = vsel %vm1482, %v6335, 0
      %6688 = vmatprep.subr.bf16.mxu0 0
      %6689 = vmatpush1.bf16.msra.mxu0 %v6683
      %6690 = vmatprep.subr.bf16.mxu0 0
      %6691 = vmatpush1.bf16.msra.mxu0 0
      %6692 = vmatprep.subr.bf16.mxu0 0
      %6693 = vmatpush1.bf16.msra.mxu0 0
      %6694 = vmatprep.subr.bf16.mxu0 0
      %6695 = vmatpush1.bf16.msra.mxu0 0
      %6696 = vmatprep.subr.bf16.mxu0 0
      %6697 = vmatpush1.bf16.msra.mxu0 0
      %6698 = vmatprep.subr.bf16.mxu0 0
      %6699 = vmatpush1.bf16.msra.mxu0 0
      %6700 = vmatprep.subr.bf16.mxu0 0
      %6701 = vmatpush1.bf16.msra.mxu0 0
      %6702 = vmatprep.subr.bf16.mxu0 0
      %6703 = vmatpush1.bf16.msra.mxu0 0
      %6704 = vmatprep.subr.bf16.mxu0 0
      %6705 = vmatpush1.bf16.msra.mxu0 0
      %6706 = vmatprep.subr.bf16.mxu0 0
      %6707 = vmatpush1.bf16.msra.mxu0 0
      %6708 = vmatprep.subr.bf16.mxu0 0
      %6709 = vmatpush1.bf16.msra.mxu0 0
      %6710 = vmatprep.subr.bf16.mxu0 0
      %6711 = vmatpush1.bf16.msra.mxu0 0
      %6712 = vmatprep.subr.bf16.mxu0 0
      %6713 = vmatpush1.bf16.msra.mxu0 0
      %6714 = vmatprep.subr.bf16.mxu0 0
      %6715 = vmatpush1.bf16.msra.mxu0 0
      %6716 = vmatprep.subr.bf16.mxu0 0
      %6717 = vmatpush1.bf16.msra.mxu0 0
      %6718 = vmatprep.subr.bf16.mxu0 0
      %6719 = vmatpush1.bf16.msra.mxu0 0
      %6720 = vmatprep.mubr.bf16.mxu0 0
      %6721 = vmatmul.mubr.bf16.gmra.mrb[0].mxu0 %v6686
      %v6722 = vpop.f32.mrb[0].mxu0
      %v6723 = vadd.f32 %v6674, %v6722
      %v6724 = vpop.f32.mrb[0].mxu0
      %v6725 = vpop.f32.mrb[0].mxu0
      %v6726 = vpop.f32.mrb[0].mxu0
      %6727 = vdwg.mxu0
      %v6729 = vlaneseq
      %v6730 = vshrl.u32 %v6729, 7
      %v6731 = vsub.s32 0, %v6730
      %v6732 = vrot.slane %v6032, %v6731
      %v6734 = vadd.f32 %v6723, %v6732
      %v6735 = vld [vmem:[%s79] sm:$0x1]
      %v6737 = vlaneseq
      %v6738 = vshrl.u32 %v6737, 7
      %v6739 = vsub.s32 0, %v6738
      %v6740 = vrot.slane %v6735, %v6739
      %v6742 = vmul.f32 %v6734, %v6740
      %v6743 = vsel %vm1320, %v6742, 0.0
      %6744 = vadd.xlane.f32.xlu0 %v6743
      %v6745 = vpop.xlane.xlu0 %6744
      %v6746 = vld [vmem:[#allocation2] sm:$0x1]
      %v6748 = vlaneseq
      %v6749 = vshrl.u32 %v6748, 7
      %v6750 = vsub.s32 0, %v6749
      %v6751 = vrot.slane %v6746, %v6750
      %v6753 = vadd.f32 %v6745, %v6751
      %vm6754 = vcmask 7168
      %6755 = vst.msk [vmem:[%s1235] sm:$0xff] %vm6754, %v6753
      %p6756 = scmp.lt.s32.totalorder %s96, 1
      %s6757 = scalar_select %p6756, %s96, 1
      %s6758 = smul.addr %s6757, 8
      %s6759 = scalar_lea.vmem %s83, %s6758
      // Predicated region
      $region185: #{_lambda_.1} parent=183 // pred_check
        %p6760 = pneg %p980
      $region186: #{_lambda_.1} parent=183 // pred_check_branch
        %6762 = sbr.rel (%p6760) target = $region188
      $region187: #{_lambda_.1} parent=183 // pred_region
        _
      $region188: #{_lambda_.1} parent=183 // pred_fallthru
        _
    $region184: #{_lambda_.1} parent=5 // pred_fallthru
      _
    %p6763 = scmp.le.s32.totalorder 2, %s91
    // Predicated region
    $region189: #{_lambda_.1} parent=5 // pred_check
      %p6764 = pneg %p6763
    $region190: #{_lambda_.1} parent=5 // pred_check_branch
      %6766 = sbr.rel (%p6764) target = $region192
    $region191: #{_lambda_.1} parent=5 // pred_region
      %s6767 = ssub.s32 %s91, 2
      // Predicated region
      $region193: #{_lambda_.1} parent=191 // pred_check
        %p6768 = pneg %p986
      $region194: #{_lambda_.1} parent=191 // pred_check_branch
        %6770 = sbr.rel (%p6768) target = $region196
      $region195: #{_lambda_.1} parent=191 // pred_region
        %p6771 = scmp.lt.s32.totalorder %s97, 1
        %s6772 = scalar_select %p6771, %s97, 1
        %s6773 = smul.addr %s6772, 8
        %s6774 = scalar_lea.vmem %s83, %s6773
      $region196: #{_lambda_.1} parent=191 // pred_fallthru
        _
    $region192: #{_lambda_.1} parent=5 // pred_fallthru
      _
  $region6: #{_lambda_.1} parent=0 // loop_footer
    %s95 = sadd.s32 1, %s91
  $region7: #{_lambda_.1} parent=0 // loop_footer_branch
    %90 = sbr.rel target = $region3
  $region8: #{_lambda_.1} parent=0 // loop_exit
    _

</llo_original>
